<compile_context>
chip_gen: v7x
topology: tpu7x:2x2x1
jax: 0.10.0
libtpu: 0.0.40
codegen_flags: <defaults>
</compile_context>

<pallas_src>
import math

import numpy as np

import jax
import jax.numpy as jnp
from jax.experimental import pallas as pl
from jax.experimental.pallas import tpu as pltpu


# Padded (lane-dense) layer widths.
K_PAD = 16        # latent dim 10 -> 16
N1 = 128          # already a multiple of 128
N2 = 384          # 288  -> 384
N3 = 896          # 784  -> 896   (16 x 7 x 7)
N4 = 1664         # 1568 -> 1664  ( 8 x 14 x 14)
N5 = 896          # 784  -> 896   ( 1 x 28 x 28), sliced back to 784
IMG = 28 * 28


# ----------------------------------------------------------------------------
# Fused Pallas kernel: the whole decoder forward pass for one batch tile.
# ----------------------------------------------------------------------------
def _decoder_kernel(z_ref, w1_ref, b1_ref, w2_ref, b2_ref,
                    m1_ref, c1_ref, m2_hbm, c2_ref, m3_hbm, c3_ref,
                    o_ref,
                    m2_vmem, m3_vmem, dma_sem):
    f32 = jnp.float32
    bf16 = jnp.bfloat16
    step = pl.program_id(0)

    # Kick off the two big conv-as-dense weight DMAs; they overlap with the
    # first three matmuls.  Scratch persists across (sequential) grid steps,
    # so only step 0 pays for the transfer.
    @pl.when(step == 0)
    def _():
        pltpu.make_async_copy(m2_hbm, m2_vmem, dma_sem.at[0]).start()
        pltpu.make_async_copy(m3_hbm, m3_vmem, dma_sem.at[1]).start()

    def dense(h, w_ref, b_ref, relu, out_bf16):
        # bf16 MXU matmul, f32 accumulation, bias add (+ optional ReLU) in f32.
        acc = jnp.dot(h, w_ref[...], preferred_element_type=f32) + b_ref[...]
        if relu:
            acc = jnp.maximum(acc, 0.0)
        return acc.astype(bf16) if out_bf16 else acc

    h = z_ref[...].astype(bf16)               # (TB, 16)
    h = dense(h, w1_ref, b1_ref, True, True)  # (TB, 128)   Linear + ReLU
    h = dense(h, w2_ref, b2_ref, True, True)  # (TB, 384)   Linear + ReLU
    h = dense(h, m1_ref, c1_ref, True, True)  # (TB, 896)   ConvT(32->16) + ReLU

    @pl.when(step == 0)
    def _():
        pltpu.make_async_copy(m2_hbm, m2_vmem, dma_sem.at[0]).wait()
    h = dense(h, m2_vmem, c2_ref, True, True)   # (TB, 1664)  ConvT(16->8) + ReLU

    @pl.when(step == 0)
    def _():
        pltpu.make_async_copy(m3_hbm, m3_vmem, dma_sem.at[1]).wait()
    h = dense(h, m3_vmem, c3_ref, False, False)  # (TB, 896)  ConvT(8->1), f32

    # sigmoid: exp on the EUP, approximate reciprocal (EUP vrcp).
    o_ref[...] = pl.reciprocal(1.0 + jnp.exp(-h), approx=True).astype(o_ref.dtype)


def decoder_forward(packed, z):
    """z: (B, latent_dim) f32 -> (B, 1, 28, 28) f32."""
    B, L = z.shape
    assert L <= K_PAD

    TB = min(256, B)                      # 256-row batch tiles (MXU-friendly)
    B_pad = -(-B // TB) * TB
    z_pad = jnp.pad(z, ((0, B_pad - B), (0, K_PAD - L)))

    arg_order = ("w1", "b1", "w2", "b2", "m1", "c1", "m2", "c2", "m3", "c3")
    args = [z_pad] + [packed[k] for k in arg_order]

    def resident(shape):
        # Weight/bias tile: same block for every grid step -> VMEM-resident.
        return pl.BlockSpec(shape, lambda i: (0,) * len(shape))

    in_specs = [
        pl.BlockSpec((TB, K_PAD), lambda i: (i, 0)),   # z         (batch-tiled)
        resident((K_PAD, N1)),                         # w1
        resident((1, N1)),                             # b1
        resident((N1, N2)),                            # w2
        resident((1, N2)),                             # b2
        resident((N2, N3)),                            # m1
        resident((1, N3)),                             # c1
        pl.BlockSpec(memory_space=pl.ANY),             # m2 (HBM, manual DMA)
        resident((1, N4)),                             # c2
        pl.BlockSpec(memory_space=pl.ANY),             # m3 (HBM, manual DMA)
        resident((1, N5)),                             # c3
    ]

    flat = pl.pallas_call(
        _decoder_kernel,
        out_shape=jax.ShapeDtypeStruct((B_pad, N5), jnp.float32),
        grid_spec=pltpu.PrefetchScalarGridSpec(
            num_scalar_prefetch=0,
            grid=(B_pad // TB,),
            in_specs=in_specs,
            out_specs=pl.BlockSpec((TB, N5), lambda i: (i, 0)),
            scratch_shapes=[
                pltpu.VMEM((N3, N4), jnp.bfloat16),    # m2 staging
                pltpu.VMEM((N4, N5), jnp.bfloat16),    # m3 staging
                pltpu.SemaphoreType.DMA((2,)),
            ]),
        compiler_params=pltpu.CompilerParams(
            # "arbitrary": the grid axis is a sequential loop so the
            # program_id==0 load-once guard on m2/m3 is valid on all chips.
            dimension_semantics=("arbitrary",),
            # Re-derived budget: resident weights+biases ~1.2 MB (double-
            # buffered), m2/m3 scratch ~6 MB, 2x (z, out) batch tiles ~1.8 MB,
            # plus f32 accumulators / bf16 intermediates for one TB tile.
            vmem_limit_bytes=32 * 1024 * 1024),
    )(*args)

    return flat[:B, :IMG].reshape(B, 1, 28, 28)


# ----------------------------------------------------------------------------
# Host-side (one-time) parameter packing.
# ----------------------------------------------------------------------------
def _convT_as_dense(weight, hi, wi, stride, pad, out_pad):
    """Expand ConvTranspose2d into a dense matrix on CHW-flattened activations.

    weight: (C_in, C_out, k, k) numpy f32.
    Returns M with shape (C_in*hi*wi, C_out*Ho*Wo) such that
    out_flat = in_flat @ M (both channel-major flat), matching torch exactly
    (bias excluded).
    """
    c_in, c_out, k, _ = weight.shape
    ho = (hi - 1) * stride - 2 * pad + k + out_pad
    wo = (wi - 1) * stride - 2 * pad + k + out_pad
    m = np.zeros((c_in * hi * wi, c_out * ho * wo), np.float32)
    co_idx = np.arange(c_out)
    for ci in range(c_in):
        for ih in range(hi):
            for iw in range(wi):
                in_idx = (ci * hi + ih) * wi + iw
                for kh in range(k):
                    oh = ih * stride - pad + kh
                    if oh < 0 or oh >= ho:
                        continue
                    for kw in range(k):
                        ow = iw * stride - pad + kw
                        if ow < 0 or ow >= wo:
                            continue
                        out_idx = (co_idx * ho + oh) * wo + ow
                        m[in_idx, out_idx] += weight[ci, :, kh, kw]
    return m, ho, wo


def _pad2(a, rows, cols):
    a = np.asarray(a, np.float32)
    return np.pad(a, ((0, rows - a.shape[0]), (0, cols - a.shape[1])))


def pack_decoder_params(params):
    """Convert torch-layout params into the fused kernel's operands (once).

    All matmul widths are zero-padded to the lane-dense sizes K_PAD/N2..N5;
    padded weight columns AND padded bias lanes are zero, so padded lanes
    stay exactly zero through ReLU and cannot leak into later layers.
    """
    ct1 = np.asarray(params["ct1_w"], np.float32)
    ct2 = np.asarray(params["ct2_w"], np.float32)
    ct3 = np.asarray(params["ct3_w"], np.float32)

    m1, h1, w1 = _convT_as_dense(ct1, 3, 3, stride=2, pad=0, out_pad=0)    # -> 7x7
    m2, h2, w2 = _convT_as_dense(ct2, h1, w1, stride=2, pad=1, out_pad=1)  # -> 14x14
    m3, h3, w3 = _convT_as_dense(ct3, h2, w2, stride=2, pad=1, out_pad=1)  # -> 28x28
    assert (h1, w1, h2, w2, h3, w3) == (7, 7, 14, 14, 28, 28)

    def bias_chw(b, ho, wo, n_pad):   # channel-major flat bias, zero-padded
        flat = np.repeat(np.asarray(b, np.float32), ho * wo)[None, :]
        return _pad2(flat, 1, n_pad)

    lin1_w = np.asarray(params["lin1_w"], np.float32).T   # (10, 128)
    lin2_w = np.asarray(params["lin2_w"], np.float32).T   # (128, 288)

    return {
        "w1": jnp.asarray(_pad2(lin1_w, K_PAD, N1), jnp.bfloat16),          # (16, 128)
        "b1": jnp.asarray(_pad2(np.asarray(params["lin1_b"])[None, :], 1, N1),
                          jnp.float32),                                      # (1, 128)
        "w2": jnp.asarray(_pad2(lin2_w, N1, N2), jnp.bfloat16),              # (128, 384)
        "b2": jnp.asarray(_pad2(np.asarray(params["lin2_b"])[None, :], 1, N2),
                          jnp.float32),                                      # (1, 384)
        "m1": jnp.asarray(_pad2(m1, N2, N3), jnp.bfloat16),                  # (384, 896)
        "c1": jnp.asarray(bias_chw(params["ct1_b"], h1, w1, N3), jnp.float32),
        "m2": jnp.asarray(_pad2(m2, N3, N4), jnp.bfloat16),                  # (896, 1664)
        "c2": jnp.asarray(bias_chw(params["ct2_b"], h2, w2, N4), jnp.float32),
        "m3": jnp.asarray(_pad2(m3, N4, N5), jnp.bfloat16),                  # (1664, 896)
        "c3": jnp.asarray(bias_chw(params["ct3_b"], h3, w3, N5), jnp.float32),
    }


# ----------------------------------------------------------------------------
# Deterministic init (torch-default-style uniform bounds, torch layouts).
# ----------------------------------------------------------------------------
def init_decoder_params(key, latent_dim=10):
    ks = jax.random.split(key, 5)

    def linear(k, in_f, out_f):
        k1, k2 = jax.random.split(k)
        bound = 1.0 / math.sqrt(in_f)
        w = jax.random.uniform(k1, (out_f, in_f), jnp.float32, -bound, bound)
        b = jax.random.uniform(k2, (out_f,), jnp.float32, -bound, bound)
        return w, b

    def convT(k, c_in, c_out, ksz):
        k1, k2 = jax.random.split(k)
        fan_in = c_out * ksz * ksz  # torch fan_in convention for ConvTranspose2d
        bound = 1.0 / math.sqrt(fan_in)
        w = jax.random.uniform(k1, (c_in, c_out, ksz, ksz), jnp.float32, -bound, bound)
        b = jax.random.uniform(k2, (c_out,), jnp.float32, -bound, bound)
        return w, b

    p = {}
    p["lin1_w"], p["lin1_b"] = linear(ks[0], latent_dim, 128)
    p["lin2_w"], p["lin2_b"] = linear(ks[1], 128, 3 * 3 * 32)
    p["ct1_w"], p["ct1_b"] = convT(ks[2], 32, 16, 3)
    p["ct2_w"], p["ct2_b"] = convT(ks[3], 16, 8, 3)
    p["ct3_w"], p["ct3_b"] = convT(ks[4], 8, 1, 3)
    return p


# ----------------------------------------------------------------------------
# Plain-numpy reference of the original torch math (for self-check only).
# ----------------------------------------------------------------------------
def _convT_ref(x, w, b, stride, pad, out_pad):
    bsz, c_in, hi, wi = x.shape
    _, c_out, k, _ = w.shape
    ho = (hi - 1) * stride - 2 * pad + k + out_pad
    wo = (wi - 1) * stride - 2 * pad + k + out_pad
    y = np.zeros((bsz, c_out, ho, wo), np.float32) + b.reshape(1, c_out, 1, 1)
    for ih in range(hi):
        for iw in range(wi):
            for kh in range(k):
                oh = ih * stride - pad + kh
                if oh < 0 or oh >= ho:
                    continue
                for kw in range(k):
                    ow = iw * stride - pad + kw
                    if ow < 0 or ow >= wo:
                        continue
                    y[:, :, oh, ow] += x[:, :, ih, iw] @ w[:, :, kh, kw]
    return y


def decoder_reference(params, z):
    p = {k: np.asarray(v, np.float32) for k, v in params.items()}
    z = np.asarray(z, np.float32)
    h = np.maximum(z @ p["lin1_w"].T + p["lin1_b"], 0.0)
    h = np.maximum(h @ p["lin2_w"].T + p["lin2_b"], 0.0)
    x = h.reshape(z.shape[0], 32, 3, 3)
    x = np.maximum(_convT_ref(x, p["ct1_w"], p["ct1_b"], 2, 0, 0), 0.0)
    x = np.maximum(_convT_ref(x, p["ct2_w"], p["ct2_b"], 2, 1, 1), 0.0)
    x = _convT_ref(x, p["ct3_w"], p["ct3_b"], 2, 1, 1)
    return 1.0 / (1.0 + np.exp(-x))


if __name__ == "__main__":
    key = jax.random.PRNGKey(0)
    k_params, k_input = jax.random.split(key)

    latent_dim = 10
    B = 2

    params = init_decoder_params(k_params, latent_dim=latent_dim)
    packed = pack_decoder_params(params)

    z = jax.random.normal(k_input, (B, latent_dim), dtype=jnp.float32)

    fwd = jax.jit(decoder_forward)
    out = jax.block_until_ready(fwd(packed, z))

    assert out.shape == (B, 1, 28, 28), out.shape
    assert bool(jnp.all(jnp.isfinite(out)))

    ref = decoder_reference(params, z)
    max_err = float(np.max(np.abs(np.asarray(out, dtype=np.float32) - ref)))
    assert max_err < 2e-2, f"max abs err vs reference: {max_err}"

    print("KERNEL_OK")
</pallas_src>

<mosaic_0001>
module attributes {stable_mosaic.version = 11 : i64} {
  func.func @_decoder_kernel(%arg0: i32, %arg1: memref<2x16xf32, #tpu.memory_space<vmem>>, %arg2: memref<16x128xbf16, #tpu.memory_space<vmem>>, %arg3: memref<1x128xf32, #tpu.memory_space<vmem>>, %arg4: memref<128x384xbf16, #tpu.memory_space<vmem>>, %arg5: memref<1x384xf32, #tpu.memory_space<vmem>>, %arg6: memref<384x896xbf16, #tpu.memory_space<vmem>>, %arg7: memref<1x896xf32, #tpu.memory_space<vmem>>, %arg8: memref<896x1664xbf16, #tpu.memory_space<any>>, %arg9: memref<1x1664xf32, #tpu.memory_space<vmem>>, %arg10: memref<1664x896xbf16, #tpu.memory_space<any>>, %arg11: memref<1x896xf32, #tpu.memory_space<vmem>>, %arg12: memref<2x896xf32, #tpu.memory_space<vmem>>, %arg13: memref<896x1664xbf16, #tpu.memory_space<vmem>>, %arg14: memref<1664x896xbf16, #tpu.memory_space<vmem>>, %arg15: memref<2x!tpu.dma_semaphore, #tpu.memory_space<semaphore_mem>>) attributes {dimension_semantics = [#tpu.dimension_semantics<arbitrary>], iteration_bounds = array<i64: 1>, scalar_prefetch = 0 : i64, scratch_operands = 3 : i64, tpu.core_type = #tpu.core_type<tc>, window_params = [{transform_indices = @transform_0, window_bounds = array<i64: 2, 16>}, {pipeline_mode = #tpu.pipeline_mode<synchronous>, transform_indices = @transform_1, window_bounds = array<i64: 16, 128>}, {pipeline_mode = #tpu.pipeline_mode<synchronous>, transform_indices = @transform_2, window_bounds = array<i64: 1, 128>}, {pipeline_mode = #tpu.pipeline_mode<synchronous>, transform_indices = @transform_3, window_bounds = array<i64: 128, 384>}, {pipeline_mode = #tpu.pipeline_mode<synchronous>, transform_indices = @transform_4, window_bounds = array<i64: 1, 384>}, {pipeline_mode = #tpu.pipeline_mode<synchronous>, transform_indices = @transform_5, window_bounds = array<i64: 384, 896>}, {pipeline_mode = #tpu.pipeline_mode<synchronous>, transform_indices = @transform_6, window_bounds = array<i64: 1, 896>}, {}, {pipeline_mode = #tpu.pipeline_mode<synchronous>, transform_indices = @transform_8, window_bounds = array<i64: 1, 1664>}, {}, {pipeline_mode = #tpu.pipeline_mode<synchronous>, transform_indices = @transform_10, window_bounds = array<i64: 1, 896>}, {transform_indices = @transform_11, window_bounds = array<i64: 2, 896>}]} {
    %c0_i32 = arith.constant 0 : i32
    %0 = arith.cmpi eq, %arg0, %c0_i32 : i32
    %1 = arith.extui %0 : i1 to i32
    %c0_i32_0 = arith.constant 0 : i32
    %2 = arith.cmpi ne, %1, %c0_i32_0 : i32
    scf.if %2 {
      %c0_i32_38 = arith.constant 0 : i32
      %55 = tpu.memref_slice %arg15[%c0_i32_38] : memref<2x!tpu.dma_semaphore, #tpu.memory_space<semaphore_mem>> -> memref<1x!tpu.dma_semaphore, #tpu.memory_space<semaphore_mem>>
      %56 = tpu.memref_squeeze %55 : memref<1x!tpu.dma_semaphore, #tpu.memory_space<semaphore_mem>> -> memref<!tpu.dma_semaphore, #tpu.memory_space<semaphore_mem>>
      tpu.enqueue_dma source(%arg8 : memref<896x1664xbf16, #tpu.memory_space<any>>) target(%arg13 : memref<896x1664xbf16, #tpu.memory_space<vmem>>) target_semaphore(%56 : memref<!tpu.dma_semaphore, #tpu.memory_space<semaphore_mem>>)
      %c1_i32 = arith.constant 1 : i32
      %57 = tpu.memref_slice %arg15[%c1_i32] : memref<2x!tpu.dma_semaphore, #tpu.memory_space<semaphore_mem>> -> memref<1x!tpu.dma_semaphore, #tpu.memory_space<semaphore_mem>>
      %58 = tpu.memref_squeeze %57 : memref<1x!tpu.dma_semaphore, #tpu.memory_space<semaphore_mem>> -> memref<!tpu.dma_semaphore, #tpu.memory_space<semaphore_mem>>
      tpu.enqueue_dma source(%arg10 : memref<1664x896xbf16, #tpu.memory_space<any>>) target(%arg14 : memref<1664x896xbf16, #tpu.memory_space<vmem>>) target_semaphore(%58 : memref<!tpu.dma_semaphore, #tpu.memory_space<semaphore_mem>>)
    } else {
    }
    %c0 = arith.constant 0 : index
    %c0_1 = arith.constant 0 : index
    %3 = vector.load %arg1[%c0, %c0_1] : memref<2x16xf32, #tpu.memory_space<vmem>>, vector<2x16xf32>
    %4 = arith.truncf %3 : vector<2x16xf32> to vector<2x16xbf16>
    %c0_2 = arith.constant 0 : index
    %c0_3 = arith.constant 0 : index
    %5 = vector.load %arg2[%c0_2, %c0_3] : memref<16x128xbf16, #tpu.memory_space<vmem>>, vector<16x128xbf16>
    %cst = arith.constant dense<0.000000e+00> : vector<2x128xf32>
    %6 = tpu.matmul %4, %5, %cst {dimension_numbers = #tpu.dot_dimension_numbers<[1], [0], [0], [1], [0, 0, 1, 1], [], []>} : vector<2x16xbf16>, vector<16x128xbf16>, vector<2x128xf32> -> vector<2x128xf32>
    %c0_4 = arith.constant 0 : index
    %c0_5 = arith.constant 0 : index
    %7 = vector.load %arg3[%c0_4, %c0_5] : memref<1x128xf32, #tpu.memory_space<vmem>>, vector<1x128xf32>
    %8 = vector.broadcast %7 : vector<1x128xf32> to vector<2x128xf32>
    %9 = arith.addf %6, %8 : vector<2x128xf32>
    %cst_6 = arith.constant 0.000000e+00 : f32
    %10 = vector.broadcast %cst_6 : f32 to vector<2x128xf32>
    %11 = arith.maximumf %9, %10 : vector<2x128xf32>
    %12 = arith.truncf %11 : vector<2x128xf32> to vector<2x128xbf16>
    %c0_7 = arith.constant 0 : index
    %c0_8 = arith.constant 0 : index
    %13 = vector.load %arg4[%c0_7, %c0_8] : memref<128x384xbf16, #tpu.memory_space<vmem>>, vector<128x384xbf16>
    %cst_9 = arith.constant dense<0.000000e+00> : vector<2x384xf32>
    %14 = tpu.matmul %12, %13, %cst_9 {dimension_numbers = #tpu.dot_dimension_numbers<[1], [0], [0], [1], [0, 0, 1, 1], [], []>} : vector<2x128xbf16>, vector<128x384xbf16>, vector<2x384xf32> -> vector<2x384xf32>
    %c0_10 = arith.constant 0 : index
    %c0_11 = arith.constant 0 : index
    %15 = vector.load %arg5[%c0_10, %c0_11] : memref<1x384xf32, #tpu.memory_space<vmem>>, vector<1x384xf32>
    %16 = vector.broadcast %15 : vector<1x384xf32> to vector<2x384xf32>
    %17 = arith.addf %14, %16 : vector<2x384xf32>
    %cst_12 = arith.constant 0.000000e+00 : f32
    %18 = vector.broadcast %cst_12 : f32 to vector<2x384xf32>
    %19 = arith.maximumf %17, %18 : vector<2x384xf32>
    %20 = arith.truncf %19 : vector<2x384xf32> to vector<2x384xbf16>
    %c0_13 = arith.constant 0 : index
    %c0_14 = arith.constant 0 : index
    %21 = vector.load %arg6[%c0_13, %c0_14] : memref<384x896xbf16, #tpu.memory_space<vmem>>, vector<384x896xbf16>
    %cst_15 = arith.constant dense<0.000000e+00> : vector<2x896xf32>
    %22 = tpu.matmul %20, %21, %cst_15 {dimension_numbers = #tpu.dot_dimension_numbers<[1], [0], [0], [1], [0, 0, 1, 1], [], []>} : vector<2x384xbf16>, vector<384x896xbf16>, vector<2x896xf32> -> vector<2x896xf32>
    %c0_16 = arith.constant 0 : index
    %c0_17 = arith.constant 0 : index
    %23 = vector.load %arg7[%c0_16, %c0_17] : memref<1x896xf32, #tpu.memory_space<vmem>>, vector<1x896xf32>
    %24 = vector.broadcast %23 : vector<1x896xf32> to vector<2x896xf32>
    %25 = arith.addf %22, %24 : vector<2x896xf32>
    %cst_18 = arith.constant 0.000000e+00 : f32
    %26 = vector.broadcast %cst_18 : f32 to vector<2x896xf32>
    %27 = arith.maximumf %25, %26 : vector<2x896xf32>
    %28 = arith.truncf %27 : vector<2x896xf32> to vector<2x896xbf16>
    %c0_i32_19 = arith.constant 0 : i32
    %29 = arith.cmpi eq, %arg0, %c0_i32_19 : i32
    %30 = arith.extui %29 : i1 to i32
    %c0_i32_20 = arith.constant 0 : i32
    %31 = arith.cmpi ne, %30, %c0_i32_20 : i32
    scf.if %31 {
      %c0_i32_38 = arith.constant 0 : i32
      %55 = tpu.memref_slice %arg15[%c0_i32_38] : memref<2x!tpu.dma_semaphore, #tpu.memory_space<semaphore_mem>> -> memref<1x!tpu.dma_semaphore, #tpu.memory_space<semaphore_mem>>
      %56 = tpu.memref_squeeze %55 : memref<1x!tpu.dma_semaphore, #tpu.memory_space<semaphore_mem>> -> memref<!tpu.dma_semaphore, #tpu.memory_space<semaphore_mem>>
      tpu.wait_dma2 semaphore(%56 : memref<!tpu.dma_semaphore, #tpu.memory_space<semaphore_mem>>) src(%arg8 : memref<896x1664xbf16, #tpu.memory_space<any>>) dst(%arg13 : memref<896x1664xbf16, #tpu.memory_space<vmem>>)
    } else {
    }
    %c0_21 = arith.constant 0 : index
    %c0_22 = arith.constant 0 : index
    %32 = vector.load %arg13[%c0_21, %c0_22] : memref<896x1664xbf16, #tpu.memory_space<vmem>>, vector<896x1664xbf16>
    %cst_23 = arith.constant dense<0.000000e+00> : vector<2x1664xf32>
    %33 = tpu.matmul %28, %32, %cst_23 {dimension_numbers = #tpu.dot_dimension_numbers<[1], [0], [0], [1], [0, 0, 1, 1], [], []>} : vector<2x896xbf16>, vector<896x1664xbf16>, vector<2x1664xf32> -> vector<2x1664xf32>
    %c0_24 = arith.constant 0 : index
    %c0_25 = arith.constant 0 : index
    %34 = vector.load %arg9[%c0_24, %c0_25] : memref<1x1664xf32, #tpu.memory_space<vmem>>, vector<1x1664xf32>
    %35 = vector.broadcast %34 : vector<1x1664xf32> to vector<2x1664xf32>
    %36 = arith.addf %33, %35 : vector<2x1664xf32>
    %cst_26 = arith.constant 0.000000e+00 : f32
    %37 = vector.broadcast %cst_26 : f32 to vector<2x1664xf32>
    %38 = arith.maximumf %36, %37 : vector<2x1664xf32>
    %39 = arith.truncf %38 : vector<2x1664xf32> to vector<2x1664xbf16>
    %c0_i32_27 = arith.constant 0 : i32
    %40 = arith.cmpi eq, %arg0, %c0_i32_27 : i32
    %41 = arith.extui %40 : i1 to i32
    %c0_i32_28 = arith.constant 0 : i32
    %42 = arith.cmpi ne, %41, %c0_i32_28 : i32
    scf.if %42 {
      %c1_i32 = arith.constant 1 : i32
      %55 = tpu.memref_slice %arg15[%c1_i32] : memref<2x!tpu.dma_semaphore, #tpu.memory_space<semaphore_mem>> -> memref<1x!tpu.dma_semaphore, #tpu.memory_space<semaphore_mem>>
      %56 = tpu.memref_squeeze %55 : memref<1x!tpu.dma_semaphore, #tpu.memory_space<semaphore_mem>> -> memref<!tpu.dma_semaphore, #tpu.memory_space<semaphore_mem>>
      tpu.wait_dma2 semaphore(%56 : memref<!tpu.dma_semaphore, #tpu.memory_space<semaphore_mem>>) src(%arg10 : memref<1664x896xbf16, #tpu.memory_space<any>>) dst(%arg14 : memref<1664x896xbf16, #tpu.memory_space<vmem>>)
    } else {
    }
    %c0_29 = arith.constant 0 : index
    %c0_30 = arith.constant 0 : index
    %43 = vector.load %arg14[%c0_29, %c0_30] : memref<1664x896xbf16, #tpu.memory_space<vmem>>, vector<1664x896xbf16>
    %cst_31 = arith.constant dense<0.000000e+00> : vector<2x896xf32>
    %44 = tpu.matmul %39, %43, %cst_31 {dimension_numbers = #tpu.dot_dimension_numbers<[1], [0], [0], [1], [0, 0, 1, 1], [], []>} : vector<2x1664xbf16>, vector<1664x896xbf16>, vector<2x896xf32> -> vector<2x896xf32>
    %c0_32 = arith.constant 0 : index
    %c0_33 = arith.constant 0 : index
    %45 = vector.load %arg11[%c0_32, %c0_33] : memref<1x896xf32, #tpu.memory_space<vmem>>, vector<1x896xf32>
    %46 = vector.broadcast %45 : vector<1x896xf32> to vector<2x896xf32>
    %47 = arith.addf %44, %46 : vector<2x896xf32>
    %cst_34 = arith.constant 0.000000e+00 : f32
    %48 = vector.broadcast %cst_34 : f32 to vector<2x896xf32>
    %49 = arith.subf %48, %47 : vector<2x896xf32>
    %50 = math.exp %49 : vector<2x896xf32>
    %cst_35 = arith.constant 1.000000e+00 : f32
    %51 = vector.broadcast %cst_35 : f32 to vector<2x896xf32>
    %52 = arith.addf %51, %50 : vector<2x896xf32>
    %53 = tpu.reciprocal %52 {approx = true} : vector<2x896xf32> -> vector<2x896xf32>
    %c0_36 = arith.constant 0 : index
    %c0_37 = arith.constant 0 : index
    %54 = vector.load %arg12[%c0_36, %c0_37] : memref<2x896xf32, #tpu.memory_space<vmem>>, vector<2x896xf32>
    tpu.vector_store %arg12[%c0_36, %c0_37], %53 {strides = array<i32>} : memref<2x896xf32, #tpu.memory_space<vmem>>, vector<2x896xf32>,
    return
  }
  func.func @transform_0(%arg0: i32) -> (i32, i32) {
    %c0_i32 = arith.constant 0 : i32
    %c0_i32_0 = arith.constant 0 : i32
    return %arg0, %c0_i32 : i32, i32
  }
  func.func @transform_1(%arg0: i32) -> (i32, i32) {
    %c0_i32 = arith.constant 0 : i32
    %c0_i32_0 = arith.constant 0 : i32
    %c0_i32_1 = arith.constant 0 : i32
    return %c0_i32, %c0_i32_0 : i32, i32
  }
  func.func @transform_2(%arg0: i32) -> (i32, i32) {
    %c0_i32 = arith.constant 0 : i32
    %c0_i32_0 = arith.constant 0 : i32
    %c0_i32_1 = arith.constant 0 : i32
    return %c0_i32, %c0_i32_0 : i32, i32
  }
  func.func @transform_3(%arg0: i32) -> (i32, i32) {
    %c0_i32 = arith.constant 0 : i32
    %c0_i32_0 = arith.constant 0 : i32
    %c0_i32_1 = arith.constant 0 : i32
    return %c0_i32, %c0_i32_0 : i32, i32
  }
  func.func @transform_4(%arg0: i32) -> (i32, i32) {
    %c0_i32 = arith.constant 0 : i32
    %c0_i32_0 = arith.constant 0 : i32
    %c0_i32_1 = arith.constant 0 : i32
    return %c0_i32, %c0_i32_0 : i32, i32
  }
  func.func @transform_5(%arg0: i32) -> (i32, i32) {
    %c0_i32 = arith.constant 0 : i32
    %c0_i32_0 = arith.constant 0 : i32
    %c0_i32_1 = arith.constant 0 : i32
    return %c0_i32, %c0_i32_0 : i32, i32
  }
  func.func @transform_6(%arg0: i32) -> (i32, i32) {
    %c0_i32 = arith.constant 0 : i32
    %c0_i32_0 = arith.constant 0 : i32
    %c0_i32_1 = arith.constant 0 : i32
    return %c0_i32, %c0_i32_0 : i32, i32
  }
  func.func @transform_8(%arg0: i32) -> (i32, i32) {
    %c0_i32 = arith.constant 0 : i32
    %c0_i32_0 = arith.constant 0 : i32
    %c0_i32_1 = arith.constant 0 : i32
    return %c0_i32, %c0_i32_0 : i32, i32
  }
  func.func @transform_10(%arg0: i32) -> (i32, i32) {
    %c0_i32 = arith.constant 0 : i32
    %c0_i32_0 = arith.constant 0 : i32
    %c0_i32_1 = arith.constant 0 : i32
    return %c0_i32, %c0_i32_0 : i32, i32
  }
  func.func @transform_11(%arg0: i32) -> (i32, i32) {
    %c0_i32 = arith.constant 0 : i32
    %c0_i32_0 = arith.constant 0 : i32
    return %arg0, %c0_i32 : i32, i32
  }
}

</mosaic_0001>

<llo_original>
// kernel: decoder_forward.1
$region0: #{decoder_forward.1}
  #allocation0 [shape = 'u32[]', space=smem, size = 0x4, offset = 0x4, fixed_abs, tag = 'smem constant byte address 0x4 - core index']
  #allocation1 [shape = 'u32[144,128]{1,0:T(1,128)}', space=vmem, size = 0x12000, scoped, tag = 'internal scratch']
  #allocation2 [shape = 'bf16[896,1664]{1,0:T(16,128)(2,1)}', space=vmem, size = 0x2d8000, scoped, tag = 'scratch operand']
  #allocation3 [shape = 'bf16[1664,896]{1,0:T(16,128)(2,1)}', space=vmem, size = 0x2d8000, scoped, tag = 'scratch operand']
  #allocation4 [shape = 's32[2]{0}', space=sflag, size = 0x8, scoped, tag = 'scratch operand']
  #allocation18 [shape = 's32[]', space=sflag, size = 0x4, offset = 0, fixed_abs, tag = 'sflag constant byte address 0x0 - dummy sync flag']
  #allocation20 [shape = 's32[]', space=sflag, size = 0x4, offset = 0, fixed_abs, tag = 'sflag constant byte address 0x0 - dummy sync flag']
  %s0 = inlined_call_operand.vmem [shape: f32[2,16], index: 0, kind: input, shape index: {}]
  %s1 = inlined_call_operand.hbm [shape: bf16[16,128], index: 1, kind: input, shape index: {}]
  %s2 = inlined_call_operand.hbm [shape: f32[1,128], index: 2, kind: input, shape index: {}]
  %s3 = inlined_call_operand.hbm [shape: bf16[128,384], index: 3, kind: input, shape index: {}]
  %s4 = inlined_call_operand.hbm [shape: f32[1,384], index: 4, kind: input, shape index: {}]
  %s5 = inlined_call_operand.hbm [shape: bf16[384,896], index: 5, kind: input, shape index: {}]
  %s6 = inlined_call_operand.hbm [shape: f32[1,896], index: 6, kind: input, shape index: {}]
  %s7 = inlined_call_operand.hbm [shape: bf16[896,1664], index: 7, kind: input, shape index: {}]
  %s8 = inlined_call_operand.hbm [shape: f32[1,1664], index: 8, kind: input, shape index: {}]
  %s9 = inlined_call_operand.hbm [shape: bf16[1664,896], index: 9, kind: input, shape index: {}]
  %s10 = inlined_call_operand.hbm [shape: f32[1,896], index: 10, kind: input, shape index: {}]
  %s11 = inlined_call_operand.vmem [shape: f32[2,896], index: 11, kind: output, shape index: {}]
  %s12 = sld [smem:[#allocation0]]
  $region90: #{decoder_forward.1} parent=0
    _
  %s14 = ssub.s32 1, %s12
  %s15 = scalar_select 0, %s14, %s12
  $region1: #{decoder_forward.1} parent=0
    #allocation5 [shape = 'u8[4096]{0}', space=vmem, size = 0x1000, scoped, tag = 'input window, operand 1, single buffered']
    #allocation6 [shape = 's32[1]{0}', space=sflag, size = 0x4, scoped, tag = 'scoped memory for decoder_forward.1']
    #allocation7 [shape = 'u8[512]{0}', space=vmem, size = 0x400, scoped, tag = 'input window, operand 2, single buffered']
    #allocation8 [shape = 's32[1]{0}', space=sflag, size = 0x4, scoped, tag = 'scoped memory for decoder_forward.1']
    #allocation9 [shape = 'u8[98304]{0}', space=vmem, size = 0x18000, scoped, tag = 'input window, operand 3, single buffered']
    #allocation10 [shape = 'u8[1536]{0}', space=vmem, size = 0x800, scoped, tag = 'input window, operand 4, single buffered']
    #allocation11 [shape = 's32[1]{0}', space=sflag, size = 0x4, scoped, tag = 'scoped memory for decoder_forward.1']
    #allocation12 [shape = 'u8[688128]{0}', space=vmem, size = 0xa8000, scoped, tag = 'input window, operand 5, single buffered']
    #allocation13 [shape = 'u8[3584]{0}', space=vmem, size = 0x1000, scoped, tag = 'input window, operand 6, single buffered']
    #allocation14 [shape = 's32[1]{0}', space=sflag, size = 0x4, scoped, tag = 'scoped memory for decoder_forward.1']
    #allocation15 [shape = 'u8[6656]{0}', space=vmem, size = 0x1c00, scoped, tag = 'input window, operand 8, single buffered']
    #allocation16 [shape = 'u8[3584]{0}', space=vmem, size = 0x1000, scoped, tag = 'input window, operand 10, single buffered']
    #allocation17 [shape = 's32[1]{0}', space=sflag, size = 0x4, scoped, tag = 'scoped memory for decoder_forward.1']
    %16 = vsyncpa [#allocation6], 0
    %17 = vsyncpa [#allocation8], 0
    %18 = vsyncpa [#allocation11], 0
    %19 = vsyncpa [#allocation14], 0
    %20 = vsyncpa [#allocation17], 0
    // Predicated region
    $region2: #{decoder_forward.1} parent=1 // pred_check
      _
    $region3: #{decoder_forward.1} parent=1 // pred_check_branch
      %22 = sbr.rel (0) target = $region5
    $region4: #{decoder_forward.1} parent=1 // pred_region
      _
    $region5: #{decoder_forward.1} parent=1 // pred_fallthru
      _
    // Predicated region
    $region6: #{decoder_forward.1} parent=1 // pred_check
      _
    $region7: #{decoder_forward.1} parent=1 // pred_check_branch
      %24 = sbr.rel (0) target = $region9
    $region8: #{decoder_forward.1} parent=1 // pred_region
      %s26 = ssub.s32 128, 128
      %27 = vsyncadd [#allocation6], %s26
      %s28 = sshll.u32 [#allocation5], 4
      %s29 = int_to_ptr.vmem [resolvable:$true] %s28
      %34 = dma.hbm_to_vmem [thread:$0]  %s1, 128, %s29, [#allocation6], 64, 64, 4
    $region9: #{decoder_forward.1} parent=1 // pred_fallthru
      _
    // Predicated region
    $region10: #{decoder_forward.1} parent=1 // pred_check
      _
    $region11: #{decoder_forward.1} parent=1 // pred_check_branch
      %36 = sbr.rel (0) target = $region13
    $region12: #{decoder_forward.1} parent=1 // pred_region
      %s38 = ssub.s32 16, 16
      %39 = vsyncadd [#allocation8], %s38
      %s41 = sshll.u32 [#allocation7], 4
      %s42 = int_to_ptr.vmem [resolvable:$true] %s41
      %44 = dma.hbm_to_vmem [thread:$0]  %s2, 16, %s42, [#allocation8]
    $region13: #{decoder_forward.1} parent=1 // pred_fallthru
      _
    // Predicated region
    $region14: #{decoder_forward.1} parent=1 // pred_check
      _
    $region15: #{decoder_forward.1} parent=1 // pred_check_branch
      %46 = sbr.rel (0) target = $region17
    $region16: #{decoder_forward.1} parent=1 // pred_region
      %s48 = ssub.s32 3072, 3072
      %49 = vsyncadd [#allocation8], %s48
      %s50 = sshll.u32 [#allocation9], 4
      %s51 = int_to_ptr.vmem [resolvable:$true] %s50
      %56 = dma.hbm_to_vmem [thread:$0]  %s3, 3072, %s51, [#allocation8], 192, 192, 12
    $region17: #{decoder_forward.1} parent=1 // pred_fallthru
      _
    // Predicated region
    $region18: #{decoder_forward.1} parent=1 // pred_check
      _
    $region19: #{decoder_forward.1} parent=1 // pred_check_branch
      %58 = sbr.rel (0) target = $region21
    $region20: #{decoder_forward.1} parent=1 // pred_region
      %s60 = ssub.s32 48, 48
      %61 = vsyncadd [#allocation11], %s60
      %s63 = sshll.u32 [#allocation10], 4
      %s64 = int_to_ptr.vmem [resolvable:$true] %s63
      %66 = dma.hbm_to_vmem [thread:$0]  %s4, 48, %s64, [#allocation11]
    $region21: #{decoder_forward.1} parent=1 // pred_fallthru
      _
    // Predicated region
    $region22: #{decoder_forward.1} parent=1 // pred_check
      _
    $region23: #{decoder_forward.1} parent=1 // pred_check_branch
      %68 = sbr.rel (0) target = $region25
    $region24: #{decoder_forward.1} parent=1 // pred_region
      %s70 = ssub.s32 21504, 21504
      %71 = vsyncadd [#allocation11], %s70
      %s72 = sshll.u32 [#allocation12], 4
      %s73 = int_to_ptr.vmem [resolvable:$true] %s72
      %78 = dma.hbm_to_vmem [thread:$0]  %s5, 21504, %s73, [#allocation11], 448, 448, 28
    $region25: #{decoder_forward.1} parent=1 // pred_fallthru
      _
    // Predicated region
    $region26: #{decoder_forward.1} parent=1 // pred_check
      _
    $region27: #{decoder_forward.1} parent=1 // pred_check_branch
      %80 = sbr.rel (0) target = $region29
    $region28: #{decoder_forward.1} parent=1 // pred_region
      %s82 = ssub.s32 112, 112
      %83 = vsyncadd [#allocation14], %s82
      %s85 = sshll.u32 [#allocation13], 4
      %s86 = int_to_ptr.vmem [resolvable:$true] %s85
      %88 = dma.hbm_to_vmem [thread:$0]  %s6, 112, %s86, [#allocation14]
    $region29: #{decoder_forward.1} parent=1 // pred_fallthru
      _
    // Predicated region
    $region30: #{decoder_forward.1} parent=1 // pred_check
      _
    $region31: #{decoder_forward.1} parent=1 // pred_check_branch
      %90 = sbr.rel (0) target = $region33
    $region32: #{decoder_forward.1} parent=1 // pred_region
      %s92 = ssub.s32 208, 208
      %93 = vsyncadd [#allocation14], %s92
      %s95 = sshll.u32 [#allocation15], 4
      %s96 = int_to_ptr.vmem [resolvable:$true] %s95
      %98 = dma.hbm_to_vmem [thread:$0]  %s8, 208, %s96, [#allocation14]
    $region33: #{decoder_forward.1} parent=1 // pred_fallthru
      _
    // Predicated region
    $region34: #{decoder_forward.1} parent=1 // pred_check
      _
    $region35: #{decoder_forward.1} parent=1 // pred_check_branch
      %100 = sbr.rel (0) target = $region37
    $region36: #{decoder_forward.1} parent=1 // pred_region
      %s102 = ssub.s32 112, 112
      %103 = vsyncadd [#allocation17], %s102
      %s105 = sshll.u32 [#allocation16], 4
      %s106 = int_to_ptr.vmem [resolvable:$true] %s105
      %108 = dma.hbm_to_vmem [thread:$0]  %s10, 112, %s106, [#allocation17]
    $region37: #{decoder_forward.1} parent=1 // pred_fallthru
      _
    // Predicated region
    $region38: #{decoder_forward.1} parent=1 // pred_check
      _
    $region39: #{decoder_forward.1} parent=1 // pred_check_branch
      %110 = sbr.rel (0) target = $region41
    $region40: #{decoder_forward.1} parent=1 // pred_region
      %111 = dma.done [#allocation6], 128
    $region41: #{decoder_forward.1} parent=1 // pred_fallthru
      _
    // Predicated region
    $region42: #{decoder_forward.1} parent=1 // pred_check
      _
    $region43: #{decoder_forward.1} parent=1 // pred_check_branch
      %113 = sbr.rel (0) target = $region45
    $region44: #{decoder_forward.1} parent=1 // pred_region
      %114 = dma.done [#allocation8], 16
    $region45: #{decoder_forward.1} parent=1 // pred_fallthru
      _
    // Predicated region
    $region46: #{decoder_forward.1} parent=1 // pred_check
      _
    $region47: #{decoder_forward.1} parent=1 // pred_check_branch
      %116 = sbr.rel (0) target = $region49
    $region48: #{decoder_forward.1} parent=1 // pred_region
      %117 = dma.done [#allocation8], 3072
    $region49: #{decoder_forward.1} parent=1 // pred_fallthru
      _
    // Predicated region
    $region50: #{decoder_forward.1} parent=1 // pred_check
      _
    $region51: #{decoder_forward.1} parent=1 // pred_check_branch
      %119 = sbr.rel (0) target = $region53
    $region52: #{decoder_forward.1} parent=1 // pred_region
      %120 = dma.done [#allocation11], 48
    $region53: #{decoder_forward.1} parent=1 // pred_fallthru
      _
    // Predicated region
    $region54: #{decoder_forward.1} parent=1 // pred_check
      _
    $region55: #{decoder_forward.1} parent=1 // pred_check_branch
      %122 = sbr.rel (0) target = $region57
    $region56: #{decoder_forward.1} parent=1 // pred_region
      %123 = dma.done [#allocation11], 21504
    $region57: #{decoder_forward.1} parent=1 // pred_fallthru
      _
    // Predicated region
    $region58: #{decoder_forward.1} parent=1 // pred_check
      _
    $region59: #{decoder_forward.1} parent=1 // pred_check_branch
      %125 = sbr.rel (0) target = $region61
    $region60: #{decoder_forward.1} parent=1 // pred_region
      %126 = dma.done [#allocation14], 112
    $region61: #{decoder_forward.1} parent=1 // pred_fallthru
      _
    // Predicated region
    $region62: #{decoder_forward.1} parent=1 // pred_check
      _
    $region63: #{decoder_forward.1} parent=1 // pred_check_branch
      %128 = sbr.rel (0) target = $region65
    $region64: #{decoder_forward.1} parent=1 // pred_region
      %129 = dma.done [#allocation14], 208
    $region65: #{decoder_forward.1} parent=1 // pred_fallthru
      _
    // Predicated region
    $region66: #{decoder_forward.1} parent=1 // pred_check
      _
    $region67: #{decoder_forward.1} parent=1 // pred_check_branch
      %131 = sbr.rel (0) target = $region69
    $region68: #{decoder_forward.1} parent=1 // pred_region
      %132 = dma.done [#allocation17], 112
    $region69: #{decoder_forward.1} parent=1 // pred_fallthru
      _
    %p134 = scmp.eq.s32.totalorder 0, 0
    // Predicated region
    $region70: #{decoder_forward.1} parent=1 // pred_check
      %p135 = pneg %p134
    $region71: #{decoder_forward.1} parent=1 // pred_check_branch
      %137 = sbr.rel (%p135) target = $region73
    $region72: #{decoder_forward.1} parent=1 // pred_region
      #allocation19 [shape = 'u32[9]{0}', space=smem, size = 0x24, scoped, tag = 'DMA stride descriptor']
      #allocation21 [shape = 'u32[9]{0}', space=smem, size = 0x24, scoped, tag = 'DMA stride descriptor']
      %s139 = sshll.u32 1, 14
      %s140 = sxor.u32 4294967295, %s139
      %s142 = sld [smem:[#allocation0]]
      %s143 = sadd.s32 2, %s142
      %s145 = sshll.u32 7, 26
      %s146 = sxor.u32 4294967295, %s145
      %s147 = sand.u32 0, %s146
      %s148 = sshll.u32 %s143, 26
      %s149 = sor.u32 %s147, %s148
      %s150 = sshll.u32 [#allocation2], 4
      %s151 = int_to_ptr.vmem [resolvable:$true] %s150
      %154 = sst [smem:[#allocation19]] 1664
      %s155 = scalar_lea.smem [#allocation19], 1
      %156 = sst [smem:[%s155]] 1664
      %s157 = scalar_lea.smem [#allocation19], 2
      %158 = sst [smem:[%s157]] 13
      %s159 = scalar_lea.smem [#allocation19], 3
      %160 = sst [smem:[%s159]] 64
      %s161 = scalar_lea.smem [#allocation19], 4
      %162 = sst [smem:[%s161]] 128
      %s163 = scalar_lea.smem [#allocation19], 5
      %164 = sst [smem:[%s163]] 2
      %s165 = scalar_lea.smem [#allocation19], 6
      %166 = sst [smem:[%s165]] 832
      %s167 = scalar_lea.smem [#allocation19], 7
      %168 = sst [smem:[%s167]] 64
      %s169 = scalar_lea.smem [#allocation19], 8
      %170 = sst [smem:[%s169]] 4
      %172 = dma.general %s7, 93184, %s151, [#allocation4], [#allocation18], [#allocation19], %s149, 0
      %s173 = scalar_lea.sflag [#allocation4], 1
      %s175 = sshll.u32 1, 14
      %s176 = sxor.u32 4294967295, %s175
      %s178 = sadd.s32 2, %s142
      %s180 = sshll.u32 7, 26
      %s181 = sxor.u32 4294967295, %s180
      %s182 = sand.u32 0, %s181
      %s183 = sshll.u32 %s178, 26
      %s184 = sor.u32 %s182, %s183
      %s185 = sshll.u32 [#allocation3], 4
      %s186 = int_to_ptr.vmem [resolvable:$true] %s185
      %189 = sst [smem:[#allocation21]] 896
      %s190 = scalar_lea.smem [#allocation21], 1
      %191 = sst [smem:[%s190]] 896
      %s192 = scalar_lea.smem [#allocation21], 2
      %193 = sst [smem:[%s192]] 7
      %s194 = scalar_lea.smem [#allocation21], 3
      %195 = sst [smem:[%s194]] 64
      %s196 = scalar_lea.smem [#allocation21], 4
      %197 = sst [smem:[%s196]] 128
      %s198 = scalar_lea.smem [#allocation21], 5
      %199 = sst [smem:[%s198]] 2
      %s200 = scalar_lea.smem [#allocation21], 6
      %201 = sst [smem:[%s200]] 448
      %s202 = scalar_lea.smem [#allocation21], 7
      %203 = sst [smem:[%s202]] 64
      %s204 = scalar_lea.smem [#allocation21], 8
      %205 = sst [smem:[%s204]] 4
      %207 = dma.general %s9, 93184, %s186, %s173, [#allocation20], [#allocation21], %s184, 0
    $region73: #{decoder_forward.1} parent=1 // pred_fallthru
      _
    %v208 = vld [vmem:[%s0] sm:$0x3]
    %v209 = vpack.c.bf16 %v208, %v208
    %v210 = vld [vmem:[#allocation5] sm:$0xf]
    %v211 = vld [vmem:[#allocation5 + $0x4] sm:$0xf]
    %v212 = vld [vmem:[#allocation7] sm:$0x1]
    %v214 = vlaneseq
    %v215 = vshrl.u32 %v214, 7
    %v216 = vsub.s32 0, %v215
    %v217 = vrot.slane %v212, %v216
    %v221 = vunpack.c.l.b16 %v210
    %v222 = vunpack.c.l.b16 %v211
    %v223 = vpack.c.b16 %v222, %v221
    %vm225 = vcmask 130048
    %v227 = vsel %vm225, %v209, 0
    %229 = vmatprep.subr.bf16.mxu0 0
    %230 = vmatpush1.bf16.msra.mxu0 %v223
    %231 = vmatprep.subr.bf16.mxu0 0
    %232 = vmatpush1.bf16.msra.mxu0 0
    %233 = vmatprep.subr.bf16.mxu0 0
    %234 = vmatpush1.bf16.msra.mxu0 0
    %235 = vmatprep.subr.bf16.mxu0 0
    %236 = vmatpush1.bf16.msra.mxu0 0
    %237 = vmatprep.subr.bf16.mxu0 0
    %238 = vmatpush1.bf16.msra.mxu0 0
    %239 = vmatprep.subr.bf16.mxu0 0
    %240 = vmatpush1.bf16.msra.mxu0 0
    %241 = vmatprep.subr.bf16.mxu0 0
    %242 = vmatpush1.bf16.msra.mxu0 0
    %243 = vmatprep.subr.bf16.mxu0 0
    %244 = vmatpush1.bf16.msra.mxu0 0
    %245 = vmatprep.subr.bf16.mxu0 0
    %246 = vmatpush1.bf16.msra.mxu0 0
    %247 = vmatprep.subr.bf16.mxu0 0
    %248 = vmatpush1.bf16.msra.mxu0 0
    %249 = vmatprep.subr.bf16.mxu0 0
    %250 = vmatpush1.bf16.msra.mxu0 0
    %251 = vmatprep.subr.bf16.mxu0 0
    %252 = vmatpush1.bf16.msra.mxu0 0
    %253 = vmatprep.subr.bf16.mxu0 0
    %254 = vmatpush1.bf16.msra.mxu0 0
    %255 = vmatprep.subr.bf16.mxu0 0
    %256 = vmatpush1.bf16.msra.mxu0 0
    %257 = vmatprep.subr.bf16.mxu0 0
    %258 = vmatpush1.bf16.msra.mxu0 0
    %259 = vmatprep.subr.bf16.mxu0 0
    %260 = vmatpush1.bf16.msra.mxu0 0
    %261 = vmatprep.mubr.bf16.mxu0 0
    %262 = vmatmul.mubr.bf16.gmra.mrb[0].mxu0 %v227
    %v263 = vpop.f32.mrb[0].mxu0
    %v264 = vadd.f32 %v217, %v263
    %v265 = vpop.f32.mrb[0].mxu0
    %v266 = vpop.f32.mrb[0].mxu0
    %v267 = vpop.f32.mrb[0].mxu0
    %268 = vdwg.mxu0
    %v269 = vmax.f32 %v264, 0.0
    %v270 = vpack.c.bf16 %v269, %v269
    %v271 = vld [vmem:[#allocation9] sm:$0xff]
    %v272 = vld [vmem:[#allocation9 + $0x8] sm:$0xf]
    %v273 = vld [vmem:[#allocation9 + $0xc] sm:$0xff]
    %v274 = vld [vmem:[#allocation9 + $0x14] sm:$0xf]
    %v275 = vld [vmem:[#allocation9 + $0x18] sm:$0xff]
    %v276 = vld [vmem:[#allocation9 + $0x20] sm:$0xf]
    %v277 = vld [vmem:[#allocation9 + $0x24] sm:$0xff]
    %v278 = vld [vmem:[#allocation9 + $0x2c] sm:$0xf]
    %v279 = vld [vmem:[#allocation9 + $0x30] sm:$0xff]
    %v280 = vld [vmem:[#allocation9 + $0x38] sm:$0xf]
    %v281 = vld [vmem:[#allocation9 + $0x3c] sm:$0xff]
    %v282 = vld [vmem:[#allocation9 + $0x44] sm:$0xf]
    %v283 = vld [vmem:[#allocation9 + $0x48] sm:$0xff]
    %v284 = vld [vmem:[#allocation9 + $0x50] sm:$0xf]
    %v285 = vld [vmem:[#allocation9 + $0x54] sm:$0xff]
    %v286 = vld [vmem:[#allocation9 + $0x5c] sm:$0xf]
    %v287 = vld [vmem:[#allocation9 + $0x60] sm:$0xff]
    %v288 = vld [vmem:[#allocation9 + $0x68] sm:$0xf]
    %v289 = vld [vmem:[#allocation9 + $0x6c] sm:$0xff]
    %v290 = vld [vmem:[#allocation9 + $0x74] sm:$0xf]
    %v291 = vld [vmem:[#allocation9 + $0x78] sm:$0xff]
    %v292 = vld [vmem:[#allocation9 + $0x80] sm:$0xf]
    %v293 = vld [vmem:[#allocation9 + $0x84] sm:$0xff]
    %v294 = vld [vmem:[#allocation9 + $0x8c] sm:$0xf]
    %v295 = vld [vmem:[#allocation9 + $0x90] sm:$0xff]
    %v296 = vld [vmem:[#allocation9 + $0x98] sm:$0xf]
    %v297 = vld [vmem:[#allocation9 + $0x9c] sm:$0xff]
    %v298 = vld [vmem:[#allocation9 + $0xa4] sm:$0xf]
    %v299 = vld [vmem:[#allocation9 + $0xa8] sm:$0xff]
    %v300 = vld [vmem:[#allocation9 + $0xb0] sm:$0xf]
    %v301 = vld [vmem:[#allocation9 + $0xb4] sm:$0xff]
    %v302 = vld [vmem:[#allocation9 + $0xbc] sm:$0xf]
    %v303 = vld [vmem:[#allocation10] sm:$0x7]
    %v305 = vlaneseq
    %v306 = vshrl.u32 %v305, 7
    %v307 = vsub.s32 0, %v306
    %v308 = vrot.slane %v303, %v307
    %v309 = vlaneseq
    %v310 = vshrl.u32 %v309, 7
    %v311 = vsub.s32 1, %v310
    %v312 = vrot.slane %v303, %v311
    %v313 = vlaneseq
    %v314 = vshrl.u32 %v313, 7
    %v315 = vsub.s32 2, %v314
    %v316 = vrot.slane %v303, %v315
    %v352 = vunpack.c.l.b16 %v271
    %v353 = vunpack.c.h.b16 %v271
    %v354 = vunpack.c.l.b16 %v272
    %v355 = vunpack.c.l.b16 %v273
    %v356 = vunpack.c.h.b16 %v273
    %v357 = vunpack.c.l.b16 %v274
    %v358 = vunpack.c.l.b16 %v275
    %v359 = vunpack.c.h.b16 %v275
    %v360 = vunpack.c.l.b16 %v276
    %v361 = vunpack.c.l.b16 %v277
    %v362 = vunpack.c.h.b16 %v277
    %v363 = vunpack.c.l.b16 %v278
    %v364 = vunpack.c.l.b16 %v279
    %v365 = vunpack.c.h.b16 %v279
    %v366 = vunpack.c.l.b16 %v280
    %v367 = vunpack.c.l.b16 %v281
    %v368 = vunpack.c.h.b16 %v281
    %v369 = vunpack.c.l.b16 %v282
    %v370 = vunpack.c.l.b16 %v283
    %v371 = vunpack.c.h.b16 %v283
    %v372 = vunpack.c.l.b16 %v284
    %v373 = vunpack.c.l.b16 %v285
    %v374 = vunpack.c.h.b16 %v285
    %v375 = vunpack.c.l.b16 %v286
    %v376 = vunpack.c.l.b16 %v287
    %v377 = vunpack.c.h.b16 %v287
    %v378 = vunpack.c.l.b16 %v288
    %v379 = vunpack.c.l.b16 %v289
    %v380 = vunpack.c.h.b16 %v289
    %v381 = vunpack.c.l.b16 %v290
    %v382 = vunpack.c.l.b16 %v291
    %v383 = vunpack.c.h.b16 %v291
    %v384 = vunpack.c.l.b16 %v292
    %v385 = vunpack.c.l.b16 %v293
    %v386 = vunpack.c.h.b16 %v293
    %v387 = vunpack.c.l.b16 %v294
    %v388 = vunpack.c.l.b16 %v295
    %v389 = vunpack.c.h.b16 %v295
    %v390 = vunpack.c.l.b16 %v296
    %v391 = vunpack.c.l.b16 %v297
    %v392 = vunpack.c.h.b16 %v297
    %v393 = vunpack.c.l.b16 %v298
    %v394 = vunpack.c.l.b16 %v299
    %v395 = vunpack.c.h.b16 %v299
    %v396 = vunpack.c.l.b16 %v300
    %v397 = vunpack.c.l.b16 %v301
    %v398 = vunpack.c.h.b16 %v301
    %v399 = vunpack.c.l.b16 %v302
    %v400 = vpack.c.b16 %v355, %v352
    %v401 = vpack.c.b16 %v356, %v353
    %v402 = vpack.c.b16 %v357, %v354
    %v403 = vpack.c.b16 %v361, %v358
    %v404 = vpack.c.b16 %v362, %v359
    %v405 = vpack.c.b16 %v363, %v360
    %v406 = vpack.c.b16 %v367, %v364
    %v407 = vpack.c.b16 %v368, %v365
    %v408 = vpack.c.b16 %v369, %v366
    %v409 = vpack.c.b16 %v373, %v370
    %v410 = vpack.c.b16 %v374, %v371
    %v411 = vpack.c.b16 %v375, %v372
    %v412 = vpack.c.b16 %v379, %v376
    %v413 = vpack.c.b16 %v380, %v377
    %v414 = vpack.c.b16 %v381, %v378
    %v415 = vpack.c.b16 %v385, %v382
    %v416 = vpack.c.b16 %v386, %v383
    %v417 = vpack.c.b16 %v387, %v384
    %v418 = vpack.c.b16 %v391, %v388
    %v419 = vpack.c.b16 %v392, %v389
    %v420 = vpack.c.b16 %v393, %v390
    %v421 = vpack.c.b16 %v397, %v394
    %v422 = vpack.c.b16 %v398, %v395
    %v423 = vpack.c.b16 %v399, %v396
    %448 = vmatprep.subr.bf16.mxu0 %v401
    %449 = vmatpush1.bf16.msra.mxu0 %v400
    %450 = vmatprep.subr.bf16.mxu0 %v404
    %451 = vmatpush1.bf16.msra.mxu0 %v403
    %452 = vmatprep.subr.bf16.mxu0 %v407
    %453 = vmatpush1.bf16.msra.mxu0 %v406
    %454 = vmatprep.subr.bf16.mxu0 %v410
    %455 = vmatpush1.bf16.msra.mxu0 %v409
    %456 = vmatprep.subr.bf16.mxu0 %v413
    %457 = vmatpush1.bf16.msra.mxu0 %v412
    %458 = vmatprep.subr.bf16.mxu0 %v416
    %459 = vmatpush1.bf16.msra.mxu0 %v415
    %460 = vmatprep.subr.bf16.mxu0 %v419
    %461 = vmatpush1.bf16.msra.mxu0 %v418
    %462 = vmatprep.subr.bf16.mxu0 %v422
    %463 = vmatpush1.bf16.msra.mxu0 %v421
    %464 = vmatprep.subr.bf16.mxu0 0
    %465 = vmatpush1.bf16.msra.mxu0 0
    %466 = vmatprep.subr.bf16.mxu0 0
    %467 = vmatpush1.bf16.msra.mxu0 0
    %468 = vmatprep.subr.bf16.mxu0 0
    %469 = vmatpush1.bf16.msra.mxu0 0
    %470 = vmatprep.subr.bf16.mxu0 0
    %471 = vmatpush1.bf16.msra.mxu0 0
    %472 = vmatprep.subr.bf16.mxu0 0
    %473 = vmatpush1.bf16.msra.mxu0 0
    %474 = vmatprep.subr.bf16.mxu0 0
    %475 = vmatpush1.bf16.msra.mxu0 0
    %476 = vmatprep.subr.bf16.mxu0 0
    %477 = vmatpush1.bf16.msra.mxu0 0
    %478 = vmatprep.subr.bf16.mxu0 0
    %479 = vmatpush1.bf16.msra.mxu0 0
    %480 = vmatprep.mubr.bf16.mxu0 0
    %481 = vmatmul.mubr.bf16.gmra.mrb[0].mxu0 %v270
    %v482 = vpop.f32.mrb[0].mxu0
    %v483 = vadd.f32 %v308, %v482
    %v484 = vpop.f32.mrb[0].mxu0
    %v485 = vadd.f32 %v312, %v484
    %v486 = vpop.f32.mrb[0].mxu0
    %v487 = vpop.f32.mrb[0].mxu0
    %488 = vdwg.mxu0
    %489 = vmatprep.subr.bf16.mxu0 0
    %490 = vmatpush1.bf16.msra.mxu0 %v402
    %491 = vmatprep.subr.bf16.mxu0 0
    %492 = vmatpush1.bf16.msra.mxu0 %v405
    %493 = vmatprep.subr.bf16.mxu0 0
    %494 = vmatpush1.bf16.msra.mxu0 %v408
    %495 = vmatprep.subr.bf16.mxu0 0
    %496 = vmatpush1.bf16.msra.mxu0 %v411
    %497 = vmatprep.subr.bf16.mxu0 0
    %498 = vmatpush1.bf16.msra.mxu0 %v414
    %499 = vmatprep.subr.bf16.mxu0 0
    %500 = vmatpush1.bf16.msra.mxu0 %v417
    %501 = vmatprep.subr.bf16.mxu0 0
    %502 = vmatpush1.bf16.msra.mxu0 %v420
    %503 = vmatprep.subr.bf16.mxu0 0
    %504 = vmatpush1.bf16.msra.mxu0 %v423
    %505 = vmatprep.subr.bf16.mxu0 0
    %506 = vmatpush1.bf16.msra.mxu0 0
    %507 = vmatprep.subr.bf16.mxu0 0
    %508 = vmatpush1.bf16.msra.mxu0 0
    %509 = vmatprep.subr.bf16.mxu0 0
    %510 = vmatpush1.bf16.msra.mxu0 0
    %511 = vmatprep.subr.bf16.mxu0 0
    %512 = vmatpush1.bf16.msra.mxu0 0
    %513 = vmatprep.subr.bf16.mxu0 0
    %514 = vmatpush1.bf16.msra.mxu0 0
    %515 = vmatprep.subr.bf16.mxu0 0
    %516 = vmatpush1.bf16.msra.mxu0 0
    %517 = vmatprep.subr.bf16.mxu0 0
    %518 = vmatpush1.bf16.msra.mxu0 0
    %519 = vmatprep.subr.bf16.mxu0 0
    %520 = vmatpush1.bf16.msra.mxu0 0
    %521 = vmatprep.mubr.bf16.mxu0 0
    %522 = vmatmul.mubr.bf16.gmra.mrb[0].mxu0 %v270
    %v523 = vpop.f32.mrb[0].mxu0
    %v524 = vadd.f32 %v316, %v523
    %v525 = vpop.f32.mrb[0].mxu0
    %v526 = vpop.f32.mrb[0].mxu0
    %v527 = vpop.f32.mrb[0].mxu0
    %528 = vdwg.mxu0
    %v529 = vmax.f32 %v483, 0.0
    %v530 = vmax.f32 %v485, 0.0
    %v531 = vmax.f32 %v524, 0.0
    %v532 = vpack.c.bf16 %v529, %v529
    %v533 = vpack.c.bf16 %v530, %v530
    %v534 = vpack.c.bf16 %v531, %v531
    %v535 = vld [vmem:[#allocation12] sm:$0xff]
    %v536 = vld [vmem:[#allocation12 + $0x8] sm:$0xff]
    %v537 = vld [vmem:[#allocation12 + $0x10] sm:$0xff]
    %v538 = vld [vmem:[#allocation12 + $0x18] sm:$0xf]
    %v539 = vld [vmem:[#allocation12 + $0x1c] sm:$0xff]
    %v540 = vld [vmem:[#allocation12 + $0x24] sm:$0xff]
    %v541 = vld [vmem:[#allocation12 + $0x2c] sm:$0xff]
    %v542 = vld [vmem:[#allocation12 + $0x34] sm:$0xf]
    %v543 = vld [vmem:[#allocation12 + $0x38] sm:$0xff]
    %v544 = vld [vmem:[#allocation12 + $0x40] sm:$0xff]
    %v545 = vld [vmem:[#allocation12 + $0x48] sm:$0xff]
    %v546 = vld [vmem:[#allocation12 + $0x50] sm:$0xf]
    %v547 = vld [vmem:[#allocation12 + $0x54] sm:$0xff]
    %v548 = vld [vmem:[#allocation12 + $0x5c] sm:$0xff]
    %v549 = vld [vmem:[#allocation12 + $0x64] sm:$0xff]
    %v550 = vld [vmem:[#allocation12 + $0x6c] sm:$0xf]
    %v551 = vld [vmem:[#allocation12 + $0x70] sm:$0xff]
    %v552 = vld [vmem:[#allocation12 + $0x78] sm:$0xff]
    %v553 = vld [vmem:[#allocation12 + $0x80] sm:$0xff]
    %v554 = vld [vmem:[#allocation12 + $0x88] sm:$0xf]
    %v555 = vld [vmem:[#allocation12 + $0x8c] sm:$0xff]
    %v556 = vld [vmem:[#allocation12 + $0x94] sm:$0xff]
    %v557 = vld [vmem:[#allocation12 + $0x9c] sm:$0xff]
    %v558 = vld [vmem:[#allocation12 + $0xa4] sm:$0xf]
    %v559 = vld [vmem:[#allocation12 + $0xa8] sm:$0xff]
    %v560 = vld [vmem:[#allocation12 + $0xb0] sm:$0xff]
    %v561 = vld [vmem:[#allocation12 + $0xb8] sm:$0xff]
    %v562 = vld [vmem:[#allocation12 + $0xc0] sm:$0xf]
    %v563 = vld [vmem:[#allocation12 + $0xc4] sm:$0xff]
    %v564 = vld [vmem:[#allocation12 + $0xcc] sm:$0xff]
    %v565 = vld [vmem:[#allocation12 + $0xd4] sm:$0xff]
    %v566 = vld [vmem:[#allocation12 + $0xdc] sm:$0xf]
    %v567 = vld [vmem:[#allocation12 + $0xe0] sm:$0xff]
    %v568 = vld [vmem:[#allocation12 + $0xe8] sm:$0xff]
    %v569 = vld [vmem:[#allocation12 + $0xf0] sm:$0xff]
    %v570 = vld [vmem:[#allocation12 + $0xf8] sm:$0xf]
    %v571 = vld [vmem:[#allocation12 + $0xfc] sm:$0xff]
    %v572 = vld [vmem:[#allocation12 + $0x104] sm:$0xff]
    %v573 = vld [vmem:[#allocation12 + $0x10c] sm:$0xff]
    %v574 = vld [vmem:[#allocation12 + $0x114] sm:$0xf]
    %v575 = vld [vmem:[#allocation12 + $0x118] sm:$0xff]
    %v576 = vld [vmem:[#allocation12 + $0x120] sm:$0xff]
    %v577 = vld [vmem:[#allocation12 + $0x128] sm:$0xff]
    %v578 = vld [vmem:[#allocation12 + $0x130] sm:$0xf]
    %v579 = vld [vmem:[#allocation12 + $0x134] sm:$0xff]
    %v580 = vld [vmem:[#allocation12 + $0x13c] sm:$0xff]
    %v581 = vld [vmem:[#allocation12 + $0x144] sm:$0xff]
    %v582 = vld [vmem:[#allocation12 + $0x14c] sm:$0xf]
    %v583 = vld [vmem:[#allocation12 + $0x150] sm:$0xff]
    %v584 = vld [vmem:[#allocation12 + $0x158] sm:$0xff]
    %v585 = vld [vmem:[#allocation12 + $0x160] sm:$0xff]
    %v586 = vld [vmem:[#allocation12 + $0x168] sm:$0xf]
    %v587 = vld [vmem:[#allocation12 + $0x16c] sm:$0xff]
    %v588 = vld [vmem:[#allocation12 + $0x174] sm:$0xff]
    %v589 = vld [vmem:[#allocation12 + $0x17c] sm:$0xff]
    %v590 = vld [vmem:[#allocation12 + $0x184] sm:$0xf]
    %v591 = vld [vmem:[#allocation12 + $0x188] sm:$0xff]
    %v592 = vld [vmem:[#allocation12 + $0x190] sm:$0xff]
    %v593 = vld [vmem:[#allocation12 + $0x198] sm:$0xff]
    %v594 = vld [vmem:[#allocation12 + $0x1a0] sm:$0xf]
    %v595 = vld [vmem:[#allocation12 + $0x1a4] sm:$0xff]
    %v596 = vld [vmem:[#allocation12 + $0x1ac] sm:$0xff]
    %v597 = vld [vmem:[#allocation12 + $0x1b4] sm:$0xff]
    %v598 = vld [vmem:[#allocation12 + $0x1bc] sm:$0xf]
    %v599 = vld [vmem:[#allocation12 + $0x1c0] sm:$0xff]
    %v600 = vld [vmem:[#allocation12 + $0x1c8] sm:$0xff]
    %v601 = vld [vmem:[#allocation12 + $0x1d0] sm:$0xff]
    %v602 = vld [vmem:[#allocation12 + $0x1d8] sm:$0xf]
    %v603 = vld [vmem:[#allocation12 + $0x1dc] sm:$0xff]
    %v604 = vld [vmem:[#allocation12 + $0x1e4] sm:$0xff]
    %v605 = vld [vmem:[#allocation12 + $0x1ec] sm:$0xff]
    %v606 = vld [vmem:[#allocation12 + $0x1f4] sm:$0xf]
    %v607 = vld [vmem:[#allocation12 + $0x1f8] sm:$0xff]
    %v608 = vld [vmem:[#allocation12 + $0x200] sm:$0xff]
    %v609 = vld [vmem:[#allocation12 + $0x208] sm:$0xff]
    %v610 = vld [vmem:[#allocation12 + $0x210] sm:$0xf]
    %v611 = vld [vmem:[#allocation12 + $0x214] sm:$0xff]
    %v612 = vld [vmem:[#allocation12 + $0x21c] sm:$0xff]
    %v613 = vld [vmem:[#allocation12 + $0x224] sm:$0xff]
    %v614 = vld [vmem:[#allocation12 + $0x22c] sm:$0xf]
    %v615 = vld [vmem:[#allocation12 + $0x230] sm:$0xff]
    %v616 = vld [vmem:[#allocation12 + $0x238] sm:$0xff]
    %v617 = vld [vmem:[#allocation12 + $0x240] sm:$0xff]
    %v618 = vld [vmem:[#allocation12 + $0x248] sm:$0xf]
    %v619 = vld [vmem:[#allocation12 + $0x24c] sm:$0xff]
    %v620 = vld [vmem:[#allocation12 + $0x254] sm:$0xff]
    %v621 = vld [vmem:[#allocation12 + $0x25c] sm:$0xff]
    %v622 = vld [vmem:[#allocation12 + $0x264] sm:$0xf]
    %v623 = vld [vmem:[#allocation12 + $0x268] sm:$0xff]
    %v624 = vld [vmem:[#allocation12 + $0x270] sm:$0xff]
    %v625 = vld [vmem:[#allocation12 + $0x278] sm:$0xff]
    %v626 = vld [vmem:[#allocation12 + $0x280] sm:$0xf]
    %v627 = vld [vmem:[#allocation12 + $0x284] sm:$0xff]
    %v628 = vld [vmem:[#allocation12 + $0x28c] sm:$0xff]
    %v629 = vld [vmem:[#allocation12 + $0x294] sm:$0xff]
    %v630 = vld [vmem:[#allocation12 + $0x29c] sm:$0xf]
    %v631 = vld [vmem:[#allocation12 + $0x2a0] sm:$0xff]
    %v632 = vld [vmem:[#allocation12 + $0x2a8] sm:$0xff]
    %v633 = vld [vmem:[#allocation12 + $0x2b0] sm:$0xff]
    %v634 = vld [vmem:[#allocation12 + $0x2b8] sm:$0xf]
    %v635 = vld [vmem:[#allocation12 + $0x2bc] sm:$0xff]
    %v636 = vld [vmem:[#allocation12 + $0x2c4] sm:$0xff]
    %v637 = vld [vmem:[#allocation12 + $0x2cc] sm:$0xff]
    %v638 = vld [vmem:[#allocation12 + $0x2d4] sm:$0xf]
    %v639 = vld [vmem:[#allocation12 + $0x2d8] sm:$0xff]
    %v640 = vld [vmem:[#allocation12 + $0x2e0] sm:$0xff]
    %v641 = vld [vmem:[#allocation12 + $0x2e8] sm:$0xff]
    %v642 = vld [vmem:[#allocation12 + $0x2f0] sm:$0xf]
    %v643 = vld [vmem:[#allocation12 + $0x2f4] sm:$0xff]
    %v644 = vld [vmem:[#allocation12 + $0x2fc] sm:$0xff]
    %v645 = vld [vmem:[#allocation12 + $0x304] sm:$0xff]
    %v646 = vld [vmem:[#allocation12 + $0x30c] sm:$0xf]
    %v647 = vld [vmem:[#allocation12 + $0x310] sm:$0xff]
    %v648 = vld [vmem:[#allocation12 + $0x318] sm:$0xff]
    %v649 = vld [vmem:[#allocation12 + $0x320] sm:$0xff]
    %v650 = vld [vmem:[#allocation12 + $0x328] sm:$0xf]
    %v651 = vld [vmem:[#allocation12 + $0x32c] sm:$0xff]
    %v652 = vld [vmem:[#allocation12 + $0x334] sm:$0xff]
    %v653 = vld [vmem:[#allocation12 + $0x33c] sm:$0xff]
    %v654 = vld [vmem:[#allocation12 + $0x344] sm:$0xf]
    %v655 = vld [vmem:[#allocation12 + $0x348] sm:$0xff]
    %v656 = vld [vmem:[#allocation12 + $0x350] sm:$0xff]
    %v657 = vld [vmem:[#allocation12 + $0x358] sm:$0xff]
    %v658 = vld [vmem:[#allocation12 + $0x360] sm:$0xf]
    %v659 = vld [vmem:[#allocation12 + $0x364] sm:$0xff]
    %v660 = vld [vmem:[#allocation12 + $0x36c] sm:$0xff]
    %v661 = vld [vmem:[#allocation12 + $0x374] sm:$0xff]
    %v662 = vld [vmem:[#allocation12 + $0x37c] sm:$0xf]
    %v663 = vld [vmem:[#allocation12 + $0x380] sm:$0xff]
    %v664 = vld [vmem:[#allocation12 + $0x388] sm:$0xff]
    %v665 = vld [vmem:[#allocation12 + $0x390] sm:$0xff]
    %v666 = vld [vmem:[#allocation12 + $0x398] sm:$0xf]
    %v667 = vld [vmem:[#allocation12 + $0x39c] sm:$0xff]
    %v668 = vld [vmem:[#allocation12 + $0x3a4] sm:$0xff]
    %v669 = vld [vmem:[#allocation12 + $0x3ac] sm:$0xff]
    %v670 = vld [vmem:[#allocation12 + $0x3b4] sm:$0xf]
    %v671 = vld [vmem:[#allocation12 + $0x3b8] sm:$0xff]
    %v672 = vld [vmem:[#allocation12 + $0x3c0] sm:$0xff]
    %v673 = vld [vmem:[#allocation12 + $0x3c8] sm:$0xff]
    %v674 = vld [vmem:[#allocation12 + $0x3d0] sm:$0xf]
    %v675 = vld [vmem:[#allocation12 + $0x3d4] sm:$0xff]
    %v676 = vld [vmem:[#allocation12 + $0x3dc] sm:$0xff]
    %v677 = vld [vmem:[#allocation12 + $0x3e4] sm:$0xff]
    %v678 = vld [vmem:[#allocation12 + $0x3ec] sm:$0xf]
    %v679 = vld [vmem:[#allocation12 + $0x3f0] sm:$0xff]
    %v680 = vld [vmem:[#allocation12 + $0x3f8] sm:$0xff]
    %v681 = vld [vmem:[#allocation12 + $0x400] sm:$0xff]
    %v682 = vld [vmem:[#allocation12 + $0x408] sm:$0xf]
    %v683 = vld [vmem:[#allocation12 + $0x40c] sm:$0xff]
    %v684 = vld [vmem:[#allocation12 + $0x414] sm:$0xff]
    %v685 = vld [vmem:[#allocation12 + $0x41c] sm:$0xff]
    %v686 = vld [vmem:[#allocation12 + $0x424] sm:$0xf]
    %v687 = vld [vmem:[#allocation12 + $0x428] sm:$0xff]
    %v688 = vld [vmem:[#allocation12 + $0x430] sm:$0xff]
    %v689 = vld [vmem:[#allocation12 + $0x438] sm:$0xff]
    %v690 = vld [vmem:[#allocation12 + $0x440] sm:$0xf]
    %v691 = vld [vmem:[#allocation12 + $0x444] sm:$0xff]
    %v692 = vld [vmem:[#allocation12 + $0x44c] sm:$0xff]
    %v693 = vld [vmem:[#allocation12 + $0x454] sm:$0xff]
    %v694 = vld [vmem:[#allocation12 + $0x45c] sm:$0xf]
    %v695 = vld [vmem:[#allocation12 + $0x460] sm:$0xff]
    %v696 = vld [vmem:[#allocation12 + $0x468] sm:$0xff]
    %v697 = vld [vmem:[#allocation12 + $0x470] sm:$0xff]
    %v698 = vld [vmem:[#allocation12 + $0x478] sm:$0xf]
    %v699 = vld [vmem:[#allocation12 + $0x47c] sm:$0xff]
    %v700 = vld [vmem:[#allocation12 + $0x484] sm:$0xff]
    %v701 = vld [vmem:[#allocation12 + $0x48c] sm:$0xff]
    %v702 = vld [vmem:[#allocation12 + $0x494] sm:$0xf]
    %v703 = vld [vmem:[#allocation12 + $0x498] sm:$0xff]
    %v704 = vld [vmem:[#allocation12 + $0x4a0] sm:$0xff]
    %v705 = vld [vmem:[#allocation12 + $0x4a8] sm:$0xff]
    %v706 = vld [vmem:[#allocation12 + $0x4b0] sm:$0xf]
    %v707 = vld [vmem:[#allocation12 + $0x4b4] sm:$0xff]
    %v708 = vld [vmem:[#allocation12 + $0x4bc] sm:$0xff]
    %v709 = vld [vmem:[#allocation12 + $0x4c4] sm:$0xff]
    %v710 = vld [vmem:[#allocation12 + $0x4cc] sm:$0xf]
    %v711 = vld [vmem:[#allocation12 + $0x4d0] sm:$0xff]
    %v712 = vld [vmem:[#allocation12 + $0x4d8] sm:$0xff]
    %v713 = vld [vmem:[#allocation12 + $0x4e0] sm:$0xff]
    %v714 = vld [vmem:[#allocation12 + $0x4e8] sm:$0xf]
    %v715 = vld [vmem:[#allocation12 + $0x4ec] sm:$0xff]
    %v716 = vld [vmem:[#allocation12 + $0x4f4] sm:$0xff]
    %v717 = vld [vmem:[#allocation12 + $0x4fc] sm:$0xff]
    %v718 = vld [vmem:[#allocation12 + $0x504] sm:$0xf]
    %v719 = vld [vmem:[#allocation12 + $0x508] sm:$0xff]
    %v720 = vld [vmem:[#allocation12 + $0x510] sm:$0xff]
    %v721 = vld [vmem:[#allocation12 + $0x518] sm:$0xff]
    %v722 = vld [vmem:[#allocation12 + $0x520] sm:$0xf]
    %v723 = vld [vmem:[#allocation12 + $0x524] sm:$0xff]
    %v724 = vld [vmem:[#allocation12 + $0x52c] sm:$0xff]
    %v725 = vld [vmem:[#allocation12 + $0x534] sm:$0xff]
    %v726 = vld [vmem:[#allocation12 + $0x53c] sm:$0xf]
    %v727 = vld [vmem:[#allocation13] sm:$0xff]
    %v729 = vlaneseq
    %v730 = vshrl.u32 %v729, 7
    %v731 = vsub.s32 0, %v730
    %v732 = vrot.slane %v727, %v731
    %v733 = vlaneseq
    %v734 = vshrl.u32 %v733, 7
    %v735 = vsub.s32 1, %v734
    %v736 = vrot.slane %v727, %v735
    %v737 = vlaneseq
    %v738 = vshrl.u32 %v737, 7
    %v739 = vsub.s32 2, %v738
    %v740 = vrot.slane %v727, %v739
    %v741 = vlaneseq
    %v742 = vshrl.u32 %v741, 7
    %v743 = vsub.s32 3, %v742
    %v744 = vrot.slane %v727, %v743
    %v745 = vlaneseq
    %v746 = vshrl.u32 %v745, 7
    %v747 = vsub.s32 4, %v746
    %v748 = vrot.slane %v727, %v747
    %v749 = vlaneseq
    %v750 = vshrl.u32 %v749, 7
    %v751 = vsub.s32 5, %v750
    %v752 = vrot.slane %v727, %v751
    %v753 = vlaneseq
    %v754 = vshrl.u32 %v753, 7
    %v755 = vsub.s32 6, %v754
    %v756 = vrot.slane %v727, %v755
    %v956 = vunpack.c.l.b16 %v535
    %v957 = vunpack.c.h.b16 %v535
    %v958 = vunpack.c.l.b16 %v536
    %v959 = vunpack.c.h.b16 %v536
    %v960 = vunpack.c.l.b16 %v537
    %v961 = vunpack.c.h.b16 %v537
    %v962 = vunpack.c.l.b16 %v538
    %v963 = vunpack.c.l.b16 %v539
    %v964 = vunpack.c.h.b16 %v539
    %v965 = vunpack.c.l.b16 %v540
    %v966 = vunpack.c.h.b16 %v540
    %v967 = vunpack.c.l.b16 %v541
    %v968 = vunpack.c.h.b16 %v541
    %v969 = vunpack.c.l.b16 %v542
    %v970 = vunpack.c.l.b16 %v543
    %v971 = vunpack.c.h.b16 %v543
    %v972 = vunpack.c.l.b16 %v544
    %v973 = vunpack.c.h.b16 %v544
    %v974 = vunpack.c.l.b16 %v545
    %v975 = vunpack.c.h.b16 %v545
    %v976 = vunpack.c.l.b16 %v546
    %v977 = vunpack.c.l.b16 %v547
    %v978 = vunpack.c.h.b16 %v547
    %v979 = vunpack.c.l.b16 %v548
    %v980 = vunpack.c.h.b16 %v548
    %v981 = vunpack.c.l.b16 %v549
    %v982 = vunpack.c.h.b16 %v549
    %v983 = vunpack.c.l.b16 %v550
    %v984 = vunpack.c.l.b16 %v551
    %v985 = vunpack.c.h.b16 %v551
    %v986 = vunpack.c.l.b16 %v552
    %v987 = vunpack.c.h.b16 %v552
    %v988 = vunpack.c.l.b16 %v553
    %v989 = vunpack.c.h.b16 %v553
    %v990 = vunpack.c.l.b16 %v554
    %v991 = vunpack.c.l.b16 %v555
    %v992 = vunpack.c.h.b16 %v555
    %v993 = vunpack.c.l.b16 %v556
    %v994 = vunpack.c.h.b16 %v556
    %v995 = vunpack.c.l.b16 %v557
    %v996 = vunpack.c.h.b16 %v557
    %v997 = vunpack.c.l.b16 %v558
    %v998 = vunpack.c.l.b16 %v559
    %v999 = vunpack.c.h.b16 %v559
    %v1000 = vunpack.c.l.b16 %v560
    %v1001 = vunpack.c.h.b16 %v560
    %v1002 = vunpack.c.l.b16 %v561
    %v1003 = vunpack.c.h.b16 %v561
    %v1004 = vunpack.c.l.b16 %v562
    %v1005 = vunpack.c.l.b16 %v563
    %v1006 = vunpack.c.h.b16 %v563
    %v1007 = vunpack.c.l.b16 %v564
    %v1008 = vunpack.c.h.b16 %v564
    %v1009 = vunpack.c.l.b16 %v565
    %v1010 = vunpack.c.h.b16 %v565
    %v1011 = vunpack.c.l.b16 %v566
    %v1012 = vunpack.c.l.b16 %v567
    %v1013 = vunpack.c.h.b16 %v567
    %v1014 = vunpack.c.l.b16 %v568
    %v1015 = vunpack.c.h.b16 %v568
    %v1016 = vunpack.c.l.b16 %v569
    %v1017 = vunpack.c.h.b16 %v569
    %v1018 = vunpack.c.l.b16 %v570
    %v1019 = vunpack.c.l.b16 %v571
    %v1020 = vunpack.c.h.b16 %v571
    %v1021 = vunpack.c.l.b16 %v572
    %v1022 = vunpack.c.h.b16 %v572
    %v1023 = vunpack.c.l.b16 %v573
    %v1024 = vunpack.c.h.b16 %v573
    %v1025 = vunpack.c.l.b16 %v574
    %v1026 = vunpack.c.l.b16 %v575
    %v1027 = vunpack.c.h.b16 %v575
    %v1028 = vunpack.c.l.b16 %v576
    %v1029 = vunpack.c.h.b16 %v576
    %v1030 = vunpack.c.l.b16 %v577
    %v1031 = vunpack.c.h.b16 %v577
    %v1032 = vunpack.c.l.b16 %v578
    %v1033 = vunpack.c.l.b16 %v579
    %v1034 = vunpack.c.h.b16 %v579
    %v1035 = vunpack.c.l.b16 %v580
    %v1036 = vunpack.c.h.b16 %v580
    %v1037 = vunpack.c.l.b16 %v581
    %v1038 = vunpack.c.h.b16 %v581
    %v1039 = vunpack.c.l.b16 %v582
    %v1040 = vunpack.c.l.b16 %v583
    %v1041 = vunpack.c.h.b16 %v583
    %v1042 = vunpack.c.l.b16 %v584
    %v1043 = vunpack.c.h.b16 %v584
    %v1044 = vunpack.c.l.b16 %v585
    %v1045 = vunpack.c.h.b16 %v585
    %v1046 = vunpack.c.l.b16 %v586
    %v1047 = vunpack.c.l.b16 %v587
    %v1048 = vunpack.c.h.b16 %v587
    %v1049 = vunpack.c.l.b16 %v588
    %v1050 = vunpack.c.h.b16 %v588
    %v1051 = vunpack.c.l.b16 %v589
    %v1052 = vunpack.c.h.b16 %v589
    %v1053 = vunpack.c.l.b16 %v590
    %v1054 = vunpack.c.l.b16 %v591
    %v1055 = vunpack.c.h.b16 %v591
    %v1056 = vunpack.c.l.b16 %v592
    %v1057 = vunpack.c.h.b16 %v592
    %v1058 = vunpack.c.l.b16 %v593
    %v1059 = vunpack.c.h.b16 %v593
    %v1060 = vunpack.c.l.b16 %v594
    %v1061 = vunpack.c.l.b16 %v595
    %v1062 = vunpack.c.h.b16 %v595
    %v1063 = vunpack.c.l.b16 %v596
    %v1064 = vunpack.c.h.b16 %v596
    %v1065 = vunpack.c.l.b16 %v597
    %v1066 = vunpack.c.h.b16 %v597
    %v1067 = vunpack.c.l.b16 %v598
    %v1068 = vunpack.c.l.b16 %v599
    %v1069 = vunpack.c.h.b16 %v599
    %v1070 = vunpack.c.l.b16 %v600
    %v1071 = vunpack.c.h.b16 %v600
    %v1072 = vunpack.c.l.b16 %v601
    %v1073 = vunpack.c.h.b16 %v601
    %v1074 = vunpack.c.l.b16 %v602
    %v1075 = vunpack.c.l.b16 %v603
    %v1076 = vunpack.c.h.b16 %v603
    %v1077 = vunpack.c.l.b16 %v604
    %v1078 = vunpack.c.h.b16 %v604
    %v1079 = vunpack.c.l.b16 %v605
    %v1080 = vunpack.c.h.b16 %v605
    %v1081 = vunpack.c.l.b16 %v606
    %v1082 = vunpack.c.l.b16 %v607
    %v1083 = vunpack.c.h.b16 %v607
    %v1084 = vunpack.c.l.b16 %v608
    %v1085 = vunpack.c.h.b16 %v608
    %v1086 = vunpack.c.l.b16 %v609
    %v1087 = vunpack.c.h.b16 %v609
    %v1088 = vunpack.c.l.b16 %v610
    %v1089 = vunpack.c.l.b16 %v611
    %v1090 = vunpack.c.h.b16 %v611
    %v1091 = vunpack.c.l.b16 %v612
    %v1092 = vunpack.c.h.b16 %v612
    %v1093 = vunpack.c.l.b16 %v613
    %v1094 = vunpack.c.h.b16 %v613
    %v1095 = vunpack.c.l.b16 %v614
    %v1096 = vunpack.c.l.b16 %v615
    %v1097 = vunpack.c.h.b16 %v615
    %v1098 = vunpack.c.l.b16 %v616
    %v1099 = vunpack.c.h.b16 %v616
    %v1100 = vunpack.c.l.b16 %v617
    %v1101 = vunpack.c.h.b16 %v617
    %v1102 = vunpack.c.l.b16 %v618
    %v1103 = vunpack.c.l.b16 %v619
    %v1104 = vunpack.c.h.b16 %v619
    %v1105 = vunpack.c.l.b16 %v620
    %v1106 = vunpack.c.h.b16 %v620
    %v1107 = vunpack.c.l.b16 %v621
    %v1108 = vunpack.c.h.b16 %v621
    %v1109 = vunpack.c.l.b16 %v622
    %v1110 = vunpack.c.l.b16 %v623
    %v1111 = vunpack.c.h.b16 %v623
    %v1112 = vunpack.c.l.b16 %v624
    %v1113 = vunpack.c.h.b16 %v624
    %v1114 = vunpack.c.l.b16 %v625
    %v1115 = vunpack.c.h.b16 %v625
    %v1116 = vunpack.c.l.b16 %v626
    %v1117 = vunpack.c.l.b16 %v627
    %v1118 = vunpack.c.h.b16 %v627
    %v1119 = vunpack.c.l.b16 %v628
    %v1120 = vunpack.c.h.b16 %v628
    %v1121 = vunpack.c.l.b16 %v629
    %v1122 = vunpack.c.h.b16 %v629
    %v1123 = vunpack.c.l.b16 %v630
    %v1124 = vunpack.c.l.b16 %v631
    %v1125 = vunpack.c.h.b16 %v631
    %v1126 = vunpack.c.l.b16 %v632
    %v1127 = vunpack.c.h.b16 %v632
    %v1128 = vunpack.c.l.b16 %v633
    %v1129 = vunpack.c.h.b16 %v633
    %v1130 = vunpack.c.l.b16 %v634
    %v1131 = vunpack.c.l.b16 %v635
    %v1132 = vunpack.c.h.b16 %v635
    %v1133 = vunpack.c.l.b16 %v636
    %v1134 = vunpack.c.h.b16 %v636
    %v1135 = vunpack.c.l.b16 %v637
    %v1136 = vunpack.c.h.b16 %v637
    %v1137 = vunpack.c.l.b16 %v638
    %v1138 = vunpack.c.l.b16 %v639
    %v1139 = vunpack.c.h.b16 %v639
    %v1140 = vunpack.c.l.b16 %v640
    %v1141 = vunpack.c.h.b16 %v640
    %v1142 = vunpack.c.l.b16 %v641
    %v1143 = vunpack.c.h.b16 %v641
    %v1144 = vunpack.c.l.b16 %v642
    %v1145 = vunpack.c.l.b16 %v643
    %v1146 = vunpack.c.h.b16 %v643
    %v1147 = vunpack.c.l.b16 %v644
    %v1148 = vunpack.c.h.b16 %v644
    %v1149 = vunpack.c.l.b16 %v645
    %v1150 = vunpack.c.h.b16 %v645
    %v1151 = vunpack.c.l.b16 %v646
    %v1152 = vunpack.c.l.b16 %v647
    %v1153 = vunpack.c.h.b16 %v647
    %v1154 = vunpack.c.l.b16 %v648
    %v1155 = vunpack.c.h.b16 %v648
    %v1156 = vunpack.c.l.b16 %v649
    %v1157 = vunpack.c.h.b16 %v649
    %v1158 = vunpack.c.l.b16 %v650
    %v1159 = vunpack.c.l.b16 %v651
    %v1160 = vunpack.c.h.b16 %v651
    %v1161 = vunpack.c.l.b16 %v652
    %v1162 = vunpack.c.h.b16 %v652
    %v1163 = vunpack.c.l.b16 %v653
    %v1164 = vunpack.c.h.b16 %v653
    %v1165 = vunpack.c.l.b16 %v654
    %v1166 = vunpack.c.l.b16 %v655
    %v1167 = vunpack.c.h.b16 %v655
    %v1168 = vunpack.c.l.b16 %v656
    %v1169 = vunpack.c.h.b16 %v656
    %v1170 = vunpack.c.l.b16 %v657
    %v1171 = vunpack.c.h.b16 %v657
    %v1172 = vunpack.c.l.b16 %v658
    %v1173 = vunpack.c.l.b16 %v659
    %v1174 = vunpack.c.h.b16 %v659
    %v1175 = vunpack.c.l.b16 %v660
    %v1176 = vunpack.c.h.b16 %v660
    %v1177 = vunpack.c.l.b16 %v661
    %v1178 = vunpack.c.h.b16 %v661
    %v1179 = vunpack.c.l.b16 %v662
    %v1180 = vunpack.c.l.b16 %v663
    %v1181 = vunpack.c.h.b16 %v663
    %v1182 = vunpack.c.l.b16 %v664
    %v1183 = vunpack.c.h.b16 %v664
    %v1184 = vunpack.c.l.b16 %v665
    %v1185 = vunpack.c.h.b16 %v665
    %v1186 = vunpack.c.l.b16 %v666
    %v1187 = vunpack.c.l.b16 %v667
    %v1188 = vunpack.c.h.b16 %v667
    %v1189 = vunpack.c.l.b16 %v668
    %v1190 = vunpack.c.h.b16 %v668
    %v1191 = vunpack.c.l.b16 %v669
    %v1192 = vunpack.c.h.b16 %v669
    %v1193 = vunpack.c.l.b16 %v670
    %v1194 = vunpack.c.l.b16 %v671
    %v1195 = vunpack.c.h.b16 %v671
    %v1196 = vunpack.c.l.b16 %v672
    %v1197 = vunpack.c.h.b16 %v672
    %v1198 = vunpack.c.l.b16 %v673
    %v1199 = vunpack.c.h.b16 %v673
    %v1200 = vunpack.c.l.b16 %v674
    %v1201 = vunpack.c.l.b16 %v675
    %v1202 = vunpack.c.h.b16 %v675
    %v1203 = vunpack.c.l.b16 %v676
    %v1204 = vunpack.c.h.b16 %v676
    %v1205 = vunpack.c.l.b16 %v677
    %v1206 = vunpack.c.h.b16 %v677
    %v1207 = vunpack.c.l.b16 %v678
    %v1208 = vunpack.c.l.b16 %v679
    %v1209 = vunpack.c.h.b16 %v679
    %v1210 = vunpack.c.l.b16 %v680
    %v1211 = vunpack.c.h.b16 %v680
    %v1212 = vunpack.c.l.b16 %v681
    %v1213 = vunpack.c.h.b16 %v681
    %v1214 = vunpack.c.l.b16 %v682
    %v1215 = vunpack.c.l.b16 %v683
    %v1216 = vunpack.c.h.b16 %v683
    %v1217 = vunpack.c.l.b16 %v684
    %v1218 = vunpack.c.h.b16 %v684
    %v1219 = vunpack.c.l.b16 %v685
    %v1220 = vunpack.c.h.b16 %v685
    %v1221 = vunpack.c.l.b16 %v686
    %v1222 = vunpack.c.l.b16 %v687
    %v1223 = vunpack.c.h.b16 %v687
    %v1224 = vunpack.c.l.b16 %v688
    %v1225 = vunpack.c.h.b16 %v688
    %v1226 = vunpack.c.l.b16 %v689
    %v1227 = vunpack.c.h.b16 %v689
    %v1228 = vunpack.c.l.b16 %v690
    %v1229 = vunpack.c.l.b16 %v691
    %v1230 = vunpack.c.h.b16 %v691
    %v1231 = vunpack.c.l.b16 %v692
    %v1232 = vunpack.c.h.b16 %v692
    %v1233 = vunpack.c.l.b16 %v693
    %v1234 = vunpack.c.h.b16 %v693
    %v1235 = vunpack.c.l.b16 %v694
    %v1236 = vunpack.c.l.b16 %v695
    %v1237 = vunpack.c.h.b16 %v695
    %v1238 = vunpack.c.l.b16 %v696
    %v1239 = vunpack.c.h.b16 %v696
    %v1240 = vunpack.c.l.b16 %v697
    %v1241 = vunpack.c.h.b16 %v697
    %v1242 = vunpack.c.l.b16 %v698
    %v1243 = vunpack.c.l.b16 %v699
    %v1244 = vunpack.c.h.b16 %v699
    %v1245 = vunpack.c.l.b16 %v700
    %v1246 = vunpack.c.h.b16 %v700
    %v1247 = vunpack.c.l.b16 %v701
    %v1248 = vunpack.c.h.b16 %v701
    %v1249 = vunpack.c.l.b16 %v702
    %v1250 = vunpack.c.l.b16 %v703
    %v1251 = vunpack.c.h.b16 %v703
    %v1252 = vunpack.c.l.b16 %v704
    %v1253 = vunpack.c.h.b16 %v704
    %v1254 = vunpack.c.l.b16 %v705
    %v1255 = vunpack.c.h.b16 %v705
    %v1256 = vunpack.c.l.b16 %v706
    %v1257 = vunpack.c.l.b16 %v707
    %v1258 = vunpack.c.h.b16 %v707
    %v1259 = vunpack.c.l.b16 %v708
    %v1260 = vunpack.c.h.b16 %v708
    %v1261 = vunpack.c.l.b16 %v709
    %v1262 = vunpack.c.h.b16 %v709
    %v1263 = vunpack.c.l.b16 %v710
    %v1264 = vunpack.c.l.b16 %v711
    %v1265 = vunpack.c.h.b16 %v711
    %v1266 = vunpack.c.l.b16 %v712
    %v1267 = vunpack.c.h.b16 %v712
    %v1268 = vunpack.c.l.b16 %v713
    %v1269 = vunpack.c.h.b16 %v713
    %v1270 = vunpack.c.l.b16 %v714
    %v1271 = vunpack.c.l.b16 %v715
    %v1272 = vunpack.c.h.b16 %v715
    %v1273 = vunpack.c.l.b16 %v716
    %v1274 = vunpack.c.h.b16 %v716
    %v1275 = vunpack.c.l.b16 %v717
    %v1276 = vunpack.c.h.b16 %v717
    %v1277 = vunpack.c.l.b16 %v718
    %v1278 = vunpack.c.l.b16 %v719
    %v1279 = vunpack.c.h.b16 %v719
    %v1280 = vunpack.c.l.b16 %v720
    %v1281 = vunpack.c.h.b16 %v720
    %v1282 = vunpack.c.l.b16 %v721
    %v1283 = vunpack.c.h.b16 %v721
    %v1284 = vunpack.c.l.b16 %v722
    %v1285 = vunpack.c.l.b16 %v723
    %v1286 = vunpack.c.h.b16 %v723
    %v1287 = vunpack.c.l.b16 %v724
    %v1288 = vunpack.c.h.b16 %v724
    %v1289 = vunpack.c.l.b16 %v725
    %v1290 = vunpack.c.h.b16 %v725
    %v1291 = vunpack.c.l.b16 %v726
    %v1292 = vpack.c.b16 %v963, %v956
    %v1293 = vpack.c.b16 %v964, %v957
    %v1294 = vpack.c.b16 %v965, %v958
    %v1295 = vpack.c.b16 %v966, %v959
    %v1296 = vpack.c.b16 %v967, %v960
    %v1297 = vpack.c.b16 %v968, %v961
    %v1298 = vpack.c.b16 %v969, %v962
    %v1299 = vpack.c.b16 %v977, %v970
    %v1300 = vpack.c.b16 %v978, %v971
    %v1301 = vpack.c.b16 %v979, %v972
    %v1302 = vpack.c.b16 %v980, %v973
    %v1303 = vpack.c.b16 %v981, %v974
    %v1304 = vpack.c.b16 %v982, %v975
    %v1305 = vpack.c.b16 %v983, %v976
    %v1306 = vpack.c.b16 %v991, %v984
    %v1307 = vpack.c.b16 %v992, %v985
    %v1308 = vpack.c.b16 %v993, %v986
    %v1309 = vpack.c.b16 %v994, %v987
    %v1310 = vpack.c.b16 %v995, %v988
    %v1311 = vpack.c.b16 %v996, %v989
    %v1312 = vpack.c.b16 %v997, %v990
    %v1313 = vpack.c.b16 %v1005, %v998
    %v1314 = vpack.c.b16 %v1006, %v999
    %v1315 = vpack.c.b16 %v1007, %v1000
    %v1316 = vpack.c.b16 %v1008, %v1001
    %v1317 = vpack.c.b16 %v1009, %v1002
    %v1318 = vpack.c.b16 %v1010, %v1003
    %v1319 = vpack.c.b16 %v1011, %v1004
    %v1320 = vpack.c.b16 %v1019, %v1012
    %v1321 = vpack.c.b16 %v1020, %v1013
    %v1322 = vpack.c.b16 %v1021, %v1014
    %v1323 = vpack.c.b16 %v1022, %v1015
    %v1324 = vpack.c.b16 %v1023, %v1016
    %v1325 = vpack.c.b16 %v1024, %v1017
    %v1326 = vpack.c.b16 %v1025, %v1018
    %v1327 = vpack.c.b16 %v1033, %v1026
    %v1328 = vpack.c.b16 %v1034, %v1027
    %v1329 = vpack.c.b16 %v1035, %v1028
    %v1330 = vpack.c.b16 %v1036, %v1029
    %v1331 = vpack.c.b16 %v1037, %v1030
    %v1332 = vpack.c.b16 %v1038, %v1031
    %v1333 = vpack.c.b16 %v1039, %v1032
    %v1334 = vpack.c.b16 %v1047, %v1040
    %v1335 = vpack.c.b16 %v1048, %v1041
    %v1336 = vpack.c.b16 %v1049, %v1042
    %v1337 = vpack.c.b16 %v1050, %v1043
    %v1338 = vpack.c.b16 %v1051, %v1044
    %v1339 = vpack.c.b16 %v1052, %v1045
    %v1340 = vpack.c.b16 %v1053, %v1046
    %v1341 = vpack.c.b16 %v1061, %v1054
    %v1342 = vpack.c.b16 %v1062, %v1055
    %v1343 = vpack.c.b16 %v1063, %v1056
    %v1344 = vpack.c.b16 %v1064, %v1057
    %v1345 = vpack.c.b16 %v1065, %v1058
    %v1346 = vpack.c.b16 %v1066, %v1059
    %v1347 = vpack.c.b16 %v1067, %v1060
    %v1348 = vpack.c.b16 %v1075, %v1068
    %v1349 = vpack.c.b16 %v1076, %v1069
    %v1350 = vpack.c.b16 %v1077, %v1070
    %v1351 = vpack.c.b16 %v1078, %v1071
    %v1352 = vpack.c.b16 %v1079, %v1072
    %v1353 = vpack.c.b16 %v1080, %v1073
    %v1354 = vpack.c.b16 %v1081, %v1074
    %v1355 = vpack.c.b16 %v1089, %v1082
    %v1356 = vpack.c.b16 %v1090, %v1083
    %v1357 = vpack.c.b16 %v1091, %v1084
    %v1358 = vpack.c.b16 %v1092, %v1085
    %v1359 = vpack.c.b16 %v1093, %v1086
    %v1360 = vpack.c.b16 %v1094, %v1087
    %v1361 = vpack.c.b16 %v1095, %v1088
    %v1362 = vpack.c.b16 %v1103, %v1096
    %v1363 = vpack.c.b16 %v1104, %v1097
    %v1364 = vpack.c.b16 %v1105, %v1098
    %v1365 = vpack.c.b16 %v1106, %v1099
    %v1366 = vpack.c.b16 %v1107, %v1100
    %v1367 = vpack.c.b16 %v1108, %v1101
    %v1368 = vpack.c.b16 %v1109, %v1102
    %v1369 = vpack.c.b16 %v1117, %v1110
    %v1370 = vpack.c.b16 %v1118, %v1111
    %v1371 = vpack.c.b16 %v1119, %v1112
    %v1372 = vpack.c.b16 %v1120, %v1113
    %v1373 = vpack.c.b16 %v1121, %v1114
    %v1374 = vpack.c.b16 %v1122, %v1115
    %v1375 = vpack.c.b16 %v1123, %v1116
    %v1376 = vpack.c.b16 %v1131, %v1124
    %v1377 = vpack.c.b16 %v1132, %v1125
    %v1378 = vpack.c.b16 %v1133, %v1126
    %v1379 = vpack.c.b16 %v1134, %v1127
    %v1380 = vpack.c.b16 %v1135, %v1128
    %v1381 = vpack.c.b16 %v1136, %v1129
    %v1382 = vpack.c.b16 %v1137, %v1130
    %v1383 = vpack.c.b16 %v1145, %v1138
    %v1384 = vpack.c.b16 %v1146, %v1139
    %v1385 = vpack.c.b16 %v1147, %v1140
    %v1386 = vpack.c.b16 %v1148, %v1141
    %v1387 = vpack.c.b16 %v1149, %v1142
    %v1388 = vpack.c.b16 %v1150, %v1143
    %v1389 = vpack.c.b16 %v1151, %v1144
    %v1390 = vpack.c.b16 %v1159, %v1152
    %v1391 = vpack.c.b16 %v1160, %v1153
    %v1392 = vpack.c.b16 %v1161, %v1154
    %v1393 = vpack.c.b16 %v1162, %v1155
    %v1394 = vpack.c.b16 %v1163, %v1156
    %v1395 = vpack.c.b16 %v1164, %v1157
    %v1396 = vpack.c.b16 %v1165, %v1158
    %v1397 = vpack.c.b16 %v1173, %v1166
    %v1398 = vpack.c.b16 %v1174, %v1167
    %v1399 = vpack.c.b16 %v1175, %v1168
    %v1400 = vpack.c.b16 %v1176, %v1169
    %v1401 = vpack.c.b16 %v1177, %v1170
    %v1402 = vpack.c.b16 %v1178, %v1171
    %v1403 = vpack.c.b16 %v1179, %v1172
    %v1404 = vpack.c.b16 %v1187, %v1180
    %v1405 = vpack.c.b16 %v1188, %v1181
    %v1406 = vpack.c.b16 %v1189, %v1182
    %v1407 = vpack.c.b16 %v1190, %v1183
    %v1408 = vpack.c.b16 %v1191, %v1184
    %v1409 = vpack.c.b16 %v1192, %v1185
    %v1410 = vpack.c.b16 %v1193, %v1186
    %v1411 = vpack.c.b16 %v1201, %v1194
    %v1412 = vpack.c.b16 %v1202, %v1195
    %v1413 = vpack.c.b16 %v1203, %v1196
    %v1414 = vpack.c.b16 %v1204, %v1197
    %v1415 = vpack.c.b16 %v1205, %v1198
    %v1416 = vpack.c.b16 %v1206, %v1199
    %v1417 = vpack.c.b16 %v1207, %v1200
    %v1418 = vpack.c.b16 %v1215, %v1208
    %v1419 = vpack.c.b16 %v1216, %v1209
    %v1420 = vpack.c.b16 %v1217, %v1210
    %v1421 = vpack.c.b16 %v1218, %v1211
    %v1422 = vpack.c.b16 %v1219, %v1212
    %v1423 = vpack.c.b16 %v1220, %v1213
    %v1424 = vpack.c.b16 %v1221, %v1214
    %v1425 = vpack.c.b16 %v1229, %v1222
    %v1426 = vpack.c.b16 %v1230, %v1223
    %v1427 = vpack.c.b16 %v1231, %v1224
    %v1428 = vpack.c.b16 %v1232, %v1225
    %v1429 = vpack.c.b16 %v1233, %v1226
    %v1430 = vpack.c.b16 %v1234, %v1227
    %v1431 = vpack.c.b16 %v1235, %v1228
    %v1432 = vpack.c.b16 %v1243, %v1236
    %v1433 = vpack.c.b16 %v1244, %v1237
    %v1434 = vpack.c.b16 %v1245, %v1238
    %v1435 = vpack.c.b16 %v1246, %v1239
    %v1436 = vpack.c.b16 %v1247, %v1240
    %v1437 = vpack.c.b16 %v1248, %v1241
    %v1438 = vpack.c.b16 %v1249, %v1242
    %v1439 = vpack.c.b16 %v1257, %v1250
    %v1440 = vpack.c.b16 %v1258, %v1251
    %v1441 = vpack.c.b16 %v1259, %v1252
    %v1442 = vpack.c.b16 %v1260, %v1253
    %v1443 = vpack.c.b16 %v1261, %v1254
    %v1444 = vpack.c.b16 %v1262, %v1255
    %v1445 = vpack.c.b16 %v1263, %v1256
    %v1446 = vpack.c.b16 %v1271, %v1264
    %v1447 = vpack.c.b16 %v1272, %v1265
    %v1448 = vpack.c.b16 %v1273, %v1266
    %v1449 = vpack.c.b16 %v1274, %v1267
    %v1450 = vpack.c.b16 %v1275, %v1268
    %v1451 = vpack.c.b16 %v1276, %v1269
    %v1452 = vpack.c.b16 %v1277, %v1270
    %v1453 = vpack.c.b16 %v1285, %v1278
    %v1454 = vpack.c.b16 %v1286, %v1279
    %v1455 = vpack.c.b16 %v1287, %v1280
    %v1456 = vpack.c.b16 %v1288, %v1281
    %v1457 = vpack.c.b16 %v1289, %v1282
    %v1458 = vpack.c.b16 %v1290, %v1283
    %v1459 = vpack.c.b16 %v1291, %v1284
    %1628 = vmatprep.subr.bf16.mxu0 %v1293
    %1629 = vmatpush1.bf16.msra.mxu0 %v1292
    %1630 = vmatprep.subr.bf16.mxu0 %v1300
    %1631 = vmatpush1.bf16.msra.mxu0 %v1299
    %1632 = vmatprep.subr.bf16.mxu0 %v1307
    %1633 = vmatpush1.bf16.msra.mxu0 %v1306
    %1634 = vmatprep.subr.bf16.mxu0 %v1314
    %1635 = vmatpush1.bf16.msra.mxu0 %v1313
    %1636 = vmatprep.subr.bf16.mxu0 %v1321
    %1637 = vmatpush1.bf16.msra.mxu0 %v1320
    %1638 = vmatprep.subr.bf16.mxu0 %v1328
    %1639 = vmatpush1.bf16.msra.mxu0 %v1327
    %1640 = vmatprep.subr.bf16.mxu0 %v1335
    %1641 = vmatpush1.bf16.msra.mxu0 %v1334
    %1642 = vmatprep.subr.bf16.mxu0 %v1342
    %1643 = vmatpush1.bf16.msra.mxu0 %v1341
    %1644 = vmatprep.subr.bf16.mxu0 %v1349
    %1645 = vmatpush1.bf16.msra.mxu0 %v1348
    %1646 = vmatprep.subr.bf16.mxu0 %v1356
    %1647 = vmatpush1.bf16.msra.mxu0 %v1355
    %1648 = vmatprep.subr.bf16.mxu0 %v1363
    %1649 = vmatpush1.bf16.msra.mxu0 %v1362
    %1650 = vmatprep.subr.bf16.mxu0 %v1370
    %1651 = vmatpush1.bf16.msra.mxu0 %v1369
    %1652 = vmatprep.subr.bf16.mxu0 %v1377
    %1653 = vmatpush1.bf16.msra.mxu0 %v1376
    %1654 = vmatprep.subr.bf16.mxu0 %v1384
    %1655 = vmatpush1.bf16.msra.mxu0 %v1383
    %1656 = vmatprep.subr.bf16.mxu0 %v1391
    %1657 = vmatpush1.bf16.msra.mxu0 %v1390
    %1658 = vmatprep.subr.bf16.mxu0 %v1398
    %1659 = vmatpush1.bf16.msra.mxu0 %v1397
    %1660 = vmatprep.mubr.bf16.mxu0 %v533
    %1661 = vmatmul.mubr.bf16.gmra.mrb[0].mxu0 %v532
    %v1662 = vpop.f32.mrb[0].mxu0
    %v1663 = vadd.f32 %v732, %v1662
    %v1664 = vpop.f32.mrb[0].mxu0
    %v1665 = vadd.f32 %v736, %v1664
    %v1666 = vpop.f32.mrb[0].mxu0
    %v1667 = vpop.f32.mrb[0].mxu0
    %1668 = vdwg.mxu0
    %1669 = vmatprep.subr.bf16.mxu0 %v1405
    %1670 = vmatpush1.bf16.msra.mxu0 %v1404
    %1671 = vmatprep.subr.bf16.mxu0 %v1412
    %1672 = vmatpush1.bf16.msra.mxu0 %v1411
    %1673 = vmatprep.subr.bf16.mxu0 %v1419
    %1674 = vmatpush1.bf16.msra.mxu0 %v1418
    %1675 = vmatprep.subr.bf16.mxu0 %v1426
    %1676 = vmatpush1.bf16.msra.mxu0 %v1425
    %1677 = vmatprep.subr.bf16.mxu0 %v1433
    %1678 = vmatpush1.bf16.msra.mxu0 %v1432
    %1679 = vmatprep.subr.bf16.mxu0 %v1440
    %1680 = vmatpush1.bf16.msra.mxu0 %v1439
    %1681 = vmatprep.subr.bf16.mxu0 %v1447
    %1682 = vmatpush1.bf16.msra.mxu0 %v1446
    %1683 = vmatprep.subr.bf16.mxu0 %v1454
    %1684 = vmatpush1.bf16.msra.mxu0 %v1453
    %1685 = vmatprep.subr.bf16.mxu0 0
    %1686 = vmatpush1.bf16.msra.mxu0 0
    %1687 = vmatprep.subr.bf16.mxu0 0
    %1688 = vmatpush1.bf16.msra.mxu0 0
    %1689 = vmatprep.subr.bf16.mxu0 0
    %1690 = vmatpush1.bf16.msra.mxu0 0
    %1691 = vmatprep.subr.bf16.mxu0 0
    %1692 = vmatpush1.bf16.msra.mxu0 0
    %1693 = vmatprep.subr.bf16.mxu0 0
    %1694 = vmatpush1.bf16.msra.mxu0 0
    %1695 = vmatprep.subr.bf16.mxu0 0
    %1696 = vmatpush1.bf16.msra.mxu0 0
    %1697 = vmatprep.subr.bf16.mxu0 0
    %1698 = vmatpush1.bf16.msra.mxu0 0
    %1699 = vmatprep.subr.bf16.mxu0 0
    %1700 = vmatpush1.bf16.msra.mxu0 0
    %1701 = vmatprep.mubr.bf16.mxu0 0
    %1702 = vmatmul.mubr.bf16.gmra.mrb[0].mxu0 %v534
    %v1703 = vpop.f32.mrb[0].mxu0
    %v1704 = vadd.f32 %v1663, %v1703
    %v1705 = vpop.f32.mrb[0].mxu0
    %v1706 = vadd.f32 %v1665, %v1705
    %v1707 = vpop.f32.mrb[0].mxu0
    %v1708 = vpop.f32.mrb[0].mxu0
    %1709 = vdwg.mxu0
    %1710 = vmatprep.subr.bf16.mxu0 %v1295
    %1711 = vmatpush1.bf16.msra.mxu0 %v1294
    %1712 = vmatprep.subr.bf16.mxu0 %v1302
    %1713 = vmatpush1.bf16.msra.mxu0 %v1301
    %1714 = vmatprep.subr.bf16.mxu0 %v1309
    %1715 = vmatpush1.bf16.msra.mxu0 %v1308
    %1716 = vmatprep.subr.bf16.mxu0 %v1316
    %1717 = vmatpush1.bf16.msra.mxu0 %v1315
    %1718 = vmatprep.subr.bf16.mxu0 %v1323
    %1719 = vmatpush1.bf16.msra.mxu0 %v1322
    %1720 = vmatprep.subr.bf16.mxu0 %v1330
    %1721 = vmatpush1.bf16.msra.mxu0 %v1329
    %1722 = vmatprep.subr.bf16.mxu0 %v1337
    %1723 = vmatpush1.bf16.msra.mxu0 %v1336
    %1724 = vmatprep.subr.bf16.mxu0 %v1344
    %1725 = vmatpush1.bf16.msra.mxu0 %v1343
    %1726 = vmatprep.subr.bf16.mxu0 %v1351
    %1727 = vmatpush1.bf16.msra.mxu0 %v1350
    %1728 = vmatprep.subr.bf16.mxu0 %v1358
    %1729 = vmatpush1.bf16.msra.mxu0 %v1357
    %1730 = vmatprep.subr.bf16.mxu0 %v1365
    %1731 = vmatpush1.bf16.msra.mxu0 %v1364
    %1732 = vmatprep.subr.bf16.mxu0 %v1372
    %1733 = vmatpush1.bf16.msra.mxu0 %v1371
    %1734 = vmatprep.subr.bf16.mxu0 %v1379
    %1735 = vmatpush1.bf16.msra.mxu0 %v1378
    %1736 = vmatprep.subr.bf16.mxu0 %v1386
    %1737 = vmatpush1.bf16.msra.mxu0 %v1385
    %1738 = vmatprep.subr.bf16.mxu0 %v1393
    %1739 = vmatpush1.bf16.msra.mxu0 %v1392
    %1740 = vmatprep.subr.bf16.mxu0 %v1400
    %1741 = vmatpush1.bf16.msra.mxu0 %v1399
    %1742 = vmatprep.mubr.bf16.mxu0 %v533
    %1743 = vmatmul.mubr.bf16.gmra.mrb[0].mxu0 %v532
    %v1744 = vpop.f32.mrb[0].mxu0
    %v1745 = vadd.f32 %v740, %v1744
    %v1746 = vpop.f32.mrb[0].mxu0
    %v1747 = vadd.f32 %v744, %v1746
    %v1748 = vpop.f32.mrb[0].mxu0
    %v1749 = vpop.f32.mrb[0].mxu0
    %1750 = vdwg.mxu0
    %1751 = vmatprep.subr.bf16.mxu0 %v1407
    %1752 = vmatpush1.bf16.msra.mxu0 %v1406
    %1753 = vmatprep.subr.bf16.mxu0 %v1414
    %1754 = vmatpush1.bf16.msra.mxu0 %v1413
    %1755 = vmatprep.subr.bf16.mxu0 %v1421
    %1756 = vmatpush1.bf16.msra.mxu0 %v1420
    %1757 = vmatprep.subr.bf16.mxu0 %v1428
    %1758 = vmatpush1.bf16.msra.mxu0 %v1427
    %1759 = vmatprep.subr.bf16.mxu0 %v1435
    %1760 = vmatpush1.bf16.msra.mxu0 %v1434
    %1761 = vmatprep.subr.bf16.mxu0 %v1442
    %1762 = vmatpush1.bf16.msra.mxu0 %v1441
    %1763 = vmatprep.subr.bf16.mxu0 %v1449
    %1764 = vmatpush1.bf16.msra.mxu0 %v1448
    %1765 = vmatprep.subr.bf16.mxu0 %v1456
    %1766 = vmatpush1.bf16.msra.mxu0 %v1455
    %1767 = vmatprep.subr.bf16.mxu0 0
    %1768 = vmatpush1.bf16.msra.mxu0 0
    %1769 = vmatprep.subr.bf16.mxu0 0
    %1770 = vmatpush1.bf16.msra.mxu0 0
    %1771 = vmatprep.subr.bf16.mxu0 0
    %1772 = vmatpush1.bf16.msra.mxu0 0
    %1773 = vmatprep.subr.bf16.mxu0 0
    %1774 = vmatpush1.bf16.msra.mxu0 0
    %1775 = vmatprep.subr.bf16.mxu0 0
    %1776 = vmatpush1.bf16.msra.mxu0 0
    %1777 = vmatprep.subr.bf16.mxu0 0
    %1778 = vmatpush1.bf16.msra.mxu0 0
    %1779 = vmatprep.subr.bf16.mxu0 0
    %1780 = vmatpush1.bf16.msra.mxu0 0
    %1781 = vmatprep.subr.bf16.mxu0 0
    %1782 = vmatpush1.bf16.msra.mxu0 0
    %1783 = vmatprep.mubr.bf16.mxu0 0
    %1784 = vmatmul.mubr.bf16.gmra.mrb[0].mxu0 %v534
    %v1785 = vpop.f32.mrb[0].mxu0
    %v1786 = vadd.f32 %v1745, %v1785
    %v1787 = vpop.f32.mrb[0].mxu0
    %v1788 = vadd.f32 %v1747, %v1787
    %v1789 = vpop.f32.mrb[0].mxu0
    %v1790 = vpop.f32.mrb[0].mxu0
    %1791 = vdwg.mxu0
    %1792 = vmatprep.subr.bf16.mxu0 %v1297
    %1793 = vmatpush1.bf16.msra.mxu0 %v1296
    %1794 = vmatprep.subr.bf16.mxu0 %v1304
    %1795 = vmatpush1.bf16.msra.mxu0 %v1303
    %1796 = vmatprep.subr.bf16.mxu0 %v1311
    %1797 = vmatpush1.bf16.msra.mxu0 %v1310
    %1798 = vmatprep.subr.bf16.mxu0 %v1318
    %1799 = vmatpush1.bf16.msra.mxu0 %v1317
    %1800 = vmatprep.subr.bf16.mxu0 %v1325
    %1801 = vmatpush1.bf16.msra.mxu0 %v1324
    %1802 = vmatprep.subr.bf16.mxu0 %v1332
    %1803 = vmatpush1.bf16.msra.mxu0 %v1331
    %1804 = vmatprep.subr.bf16.mxu0 %v1339
    %1805 = vmatpush1.bf16.msra.mxu0 %v1338
    %1806 = vmatprep.subr.bf16.mxu0 %v1346
    %1807 = vmatpush1.bf16.msra.mxu0 %v1345
    %1808 = vmatprep.subr.bf16.mxu0 %v1353
    %1809 = vmatpush1.bf16.msra.mxu0 %v1352
    %1810 = vmatprep.subr.bf16.mxu0 %v1360
    %1811 = vmatpush1.bf16.msra.mxu0 %v1359
    %1812 = vmatprep.subr.bf16.mxu0 %v1367
    %1813 = vmatpush1.bf16.msra.mxu0 %v1366
    %1814 = vmatprep.subr.bf16.mxu0 %v1374
    %1815 = vmatpush1.bf16.msra.mxu0 %v1373
    %1816 = vmatprep.subr.bf16.mxu0 %v1381
    %1817 = vmatpush1.bf16.msra.mxu0 %v1380
    %1818 = vmatprep.subr.bf16.mxu0 %v1388
    %1819 = vmatpush1.bf16.msra.mxu0 %v1387
    %1820 = vmatprep.subr.bf16.mxu0 %v1395
    %1821 = vmatpush1.bf16.msra.mxu0 %v1394
    %1822 = vmatprep.subr.bf16.mxu0 %v1402
    %1823 = vmatpush1.bf16.msra.mxu0 %v1401
    %1824 = vmatprep.mubr.bf16.mxu0 %v533
    %1825 = vmatmul.mubr.bf16.gmra.mrb[0].mxu0 %v532
    %v1826 = vpop.f32.mrb[0].mxu0
    %v1827 = vadd.f32 %v748, %v1826
    %v1828 = vpop.f32.mrb[0].mxu0
    %v1829 = vadd.f32 %v752, %v1828
    %v1830 = vpop.f32.mrb[0].mxu0
    %v1831 = vpop.f32.mrb[0].mxu0
    %1832 = vdwg.mxu0
    %1833 = vmatprep.subr.bf16.mxu0 %v1409
    %1834 = vmatpush1.bf16.msra.mxu0 %v1408
    %1835 = vmatprep.subr.bf16.mxu0 %v1416
    %1836 = vmatpush1.bf16.msra.mxu0 %v1415
    %1837 = vmatprep.subr.bf16.mxu0 %v1423
    %1838 = vmatpush1.bf16.msra.mxu0 %v1422
    %1839 = vmatprep.subr.bf16.mxu0 %v1430
    %1840 = vmatpush1.bf16.msra.mxu0 %v1429
    %1841 = vmatprep.subr.bf16.mxu0 %v1437
    %1842 = vmatpush1.bf16.msra.mxu0 %v1436
    %1843 = vmatprep.subr.bf16.mxu0 %v1444
    %1844 = vmatpush1.bf16.msra.mxu0 %v1443
    %1845 = vmatprep.subr.bf16.mxu0 %v1451
    %1846 = vmatpush1.bf16.msra.mxu0 %v1450
    %1847 = vmatprep.subr.bf16.mxu0 %v1458
    %1848 = vmatpush1.bf16.msra.mxu0 %v1457
    %1849 = vmatprep.subr.bf16.mxu0 0
    %1850 = vmatpush1.bf16.msra.mxu0 0
    %1851 = vmatprep.subr.bf16.mxu0 0
    %1852 = vmatpush1.bf16.msra.mxu0 0
    %1853 = vmatprep.subr.bf16.mxu0 0
    %1854 = vmatpush1.bf16.msra.mxu0 0
    %1855 = vmatprep.subr.bf16.mxu0 0
    %1856 = vmatpush1.bf16.msra.mxu0 0
    %1857 = vmatprep.subr.bf16.mxu0 0
    %1858 = vmatpush1.bf16.msra.mxu0 0
    %1859 = vmatprep.subr.bf16.mxu0 0
    %1860 = vmatpush1.bf16.msra.mxu0 0
    %1861 = vmatprep.subr.bf16.mxu0 0
    %1862 = vmatpush1.bf16.msra.mxu0 0
    %1863 = vmatprep.subr.bf16.mxu0 0
    %1864 = vmatpush1.bf16.msra.mxu0 0
    %1865 = vmatprep.mubr.bf16.mxu0 0
    %1866 = vmatmul.mubr.bf16.gmra.mrb[0].mxu0 %v534
    %v1867 = vpop.f32.mrb[0].mxu0
    %v1868 = vadd.f32 %v1827, %v1867
    %v1869 = vpop.f32.mrb[0].mxu0
    %v1870 = vadd.f32 %v1829, %v1869
    %v1871 = vpop.f32.mrb[0].mxu0
    %v1872 = vpop.f32.mrb[0].mxu0
    %1873 = vdwg.mxu0
    %1874 = vmatprep.subr.bf16.mxu0 0
    %1875 = vmatpush1.bf16.msra.mxu0 %v1298
    %1876 = vmatprep.subr.bf16.mxu0 0
    %1877 = vmatpush1.bf16.msra.mxu0 %v1305
    %1878 = vmatprep.subr.bf16.mxu0 0
    %1879 = vmatpush1.bf16.msra.mxu0 %v1312
    %1880 = vmatprep.subr.bf16.mxu0 0
    %1881 = vmatpush1.bf16.msra.mxu0 %v1319
    %1882 = vmatprep.subr.bf16.mxu0 0
    %1883 = vmatpush1.bf16.msra.mxu0 %v1326
    %1884 = vmatprep.subr.bf16.mxu0 0
    %1885 = vmatpush1.bf16.msra.mxu0 %v1333
    %1886 = vmatprep.subr.bf16.mxu0 0
    %1887 = vmatpush1.bf16.msra.mxu0 %v1340
    %1888 = vmatprep.subr.bf16.mxu0 0
    %1889 = vmatpush1.bf16.msra.mxu0 %v1347
    %1890 = vmatprep.subr.bf16.mxu0 0
    %1891 = vmatpush1.bf16.msra.mxu0 %v1354
    %1892 = vmatprep.subr.bf16.mxu0 0
    %1893 = vmatpush1.bf16.msra.mxu0 %v1361
    %1894 = vmatprep.subr.bf16.mxu0 0
    %1895 = vmatpush1.bf16.msra.mxu0 %v1368
    %1896 = vmatprep.subr.bf16.mxu0 0
    %1897 = vmatpush1.bf16.msra.mxu0 %v1375
    %1898 = vmatprep.subr.bf16.mxu0 0
    %1899 = vmatpush1.bf16.msra.mxu0 %v1382
    %1900 = vmatprep.subr.bf16.mxu0 0
    %1901 = vmatpush1.bf16.msra.mxu0 %v1389
    %1902 = vmatprep.subr.bf16.mxu0 0
    %1903 = vmatpush1.bf16.msra.mxu0 %v1396
    %1904 = vmatprep.subr.bf16.mxu0 0
    %1905 = vmatpush1.bf16.msra.mxu0 %v1403
    %1906 = vmatprep.mubr.bf16.mxu0 %v533
    %1907 = vmatmul.mubr.bf16.gmra.mrb[0].mxu0 %v532
    %v1908 = vpop.f32.mrb[0].mxu0
    %v1909 = vadd.f32 %v756, %v1908
    %v1910 = vpop.f32.mrb[0].mxu0
    %v1911 = vpop.f32.mrb[0].mxu0
    %v1912 = vpop.f32.mrb[0].mxu0
    %1913 = vdwg.mxu0
    %1914 = vmatprep.subr.bf16.mxu0 0
    %1915 = vmatpush1.bf16.msra.mxu0 %v1410
    %1916 = vmatprep.subr.bf16.mxu0 0
    %1917 = vmatpush1.bf16.msra.mxu0 %v1417
    %1918 = vmatprep.subr.bf16.mxu0 0
    %1919 = vmatpush1.bf16.msra.mxu0 %v1424
    %1920 = vmatprep.subr.bf16.mxu0 0
    %1921 = vmatpush1.bf16.msra.mxu0 %v1431
    %1922 = vmatprep.subr.bf16.mxu0 0
    %1923 = vmatpush1.bf16.msra.mxu0 %v1438
    %1924 = vmatprep.subr.bf16.mxu0 0
    %1925 = vmatpush1.bf16.msra.mxu0 %v1445
    %1926 = vmatprep.subr.bf16.mxu0 0
    %1927 = vmatpush1.bf16.msra.mxu0 %v1452
    %1928 = vmatprep.subr.bf16.mxu0 0
    %1929 = vmatpush1.bf16.msra.mxu0 %v1459
    %1930 = vmatprep.subr.bf16.mxu0 0
    %1931 = vmatpush1.bf16.msra.mxu0 0
    %1932 = vmatprep.subr.bf16.mxu0 0
    %1933 = vmatpush1.bf16.msra.mxu0 0
    %1934 = vmatprep.subr.bf16.mxu0 0
    %1935 = vmatpush1.bf16.msra.mxu0 0
    %1936 = vmatprep.subr.bf16.mxu0 0
    %1937 = vmatpush1.bf16.msra.mxu0 0
    %1938 = vmatprep.subr.bf16.mxu0 0
    %1939 = vmatpush1.bf16.msra.mxu0 0
    %1940 = vmatprep.subr.bf16.mxu0 0
    %1941 = vmatpush1.bf16.msra.mxu0 0
    %1942 = vmatprep.subr.bf16.mxu0 0
    %1943 = vmatpush1.bf16.msra.mxu0 0
    %1944 = vmatprep.subr.bf16.mxu0 0
    %1945 = vmatpush1.bf16.msra.mxu0 0
    %1946 = vmatprep.mubr.bf16.mxu0 0
    %1947 = vmatmul.mubr.bf16.gmra.mrb[0].mxu0 %v534
    %v1948 = vpop.f32.mrb[0].mxu0
    %v1949 = vadd.f32 %v1909, %v1948
    %v1950 = vpop.f32.mrb[0].mxu0
    %v1951 = vpop.f32.mrb[0].mxu0
    %v1952 = vpop.f32.mrb[0].mxu0
    %1953 = vdwg.mxu0
    %v1954 = vmax.f32 %v1704, 0.0
    %v1955 = vmax.f32 %v1706, 0.0
    %v1956 = vmax.f32 %v1786, 0.0
    %v1957 = vmax.f32 %v1788, 0.0
    %v1958 = vmax.f32 %v1868, 0.0
    %v1959 = vmax.f32 %v1870, 0.0
    %v1960 = vmax.f32 %v1949, 0.0
    %v1961 = vpack.c.bf16 %v1954, %v1954
    %v1962 = vpack.c.bf16 %v1955, %v1955
    %v1963 = vpack.c.bf16 %v1956, %v1956
    %v1964 = vpack.c.bf16 %v1957, %v1957
    %v1965 = vpack.c.bf16 %v1958, %v1958
    %v1966 = vpack.c.bf16 %v1959, %v1959
    %v1967 = vpack.c.bf16 %v1960, %v1960
    // Predicated region
    $region74: #{decoder_forward.1} parent=1 // pred_check
      %p1968 = pneg %p134
    $region75: #{decoder_forward.1} parent=1 // pred_check_branch
      %1970 = sbr.rel (%p1968) target = $region77
    $region76: #{decoder_forward.1} parent=1 // pred_region
      %s1971 = smul.u32 4, 112
      %s1972 = smul.u32 %s1971, 13
      %s1973 = sshll.u32 %s1972, 4
      %1974 = dma.done [#allocation4], %s1973
    $region77: #{decoder_forward.1} parent=1 // pred_fallthru
      _
    %v1975 = vld [vmem:[#allocation2] sm:$0xff]
    %v1976 = vld [vmem:[#allocation2 + $0x8] sm:$0xff]
    %v1977 = vld [vmem:[#allocation2 + $0x10] sm:$0xff]
    %v1978 = vld [vmem:[#allocation2 + $0x18] sm:$0xff]
    %v1979 = vld [vmem:[#allocation2 + $0x20] sm:$0xff]
    %v1980 = vld [vmem:[#allocation2 + $0x28] sm:$0xff]
    %v1981 = vld [vmem:[#allocation2 + $0x30] sm:$0xff]
    %v1982 = vld [vmem:[#allocation2 + $0x38] sm:$0xff]
    %v1983 = vld [vmem:[#allocation2 + $0x40] sm:$0xff]
    %v1984 = vld [vmem:[#allocation2 + $0x48] sm:$0xff]
    %v1985 = vld [vmem:[#allocation2 + $0x50] sm:$0xff]
    %v1986 = vld [vmem:[#allocation2 + $0x58] sm:$0xff]
    %v1987 = vld [vmem:[#allocation2 + $0x60] sm:$0xff]
    %v1988 = vld [vmem:[#allocation2 + $0x68] sm:$0xff]
    %v1989 = vld [vmem:[#allocation2 + $0x70] sm:$0xff]
    %v1990 = vld [vmem:[#allocation2 + $0x78] sm:$0xff]
    %v1991 = vld [vmem:[#allocation2 + $0x80] sm:$0xff]
    %v1992 = vld [vmem:[#allocation2 + $0x88] sm:$0xff]
    %v1993 = vld [vmem:[#allocation2 + $0x90] sm:$0xff]
    %v1994 = vld [vmem:[#allocation2 + $0x98] sm:$0xff]
    %v1995 = vld [vmem:[#allocation2 + $0xa0] sm:$0xff]
    %v1996 = vld [vmem:[#allocation2 + $0xa8] sm:$0xff]
    %v1997 = vld [vmem:[#allocation2 + $0xb0] sm:$0xff]
    %v1998 = vld [vmem:[#allocation2 + $0xb8] sm:$0xff]
    %v1999 = vld [vmem:[#allocation2 + $0xc0] sm:$0xff]
    %v2000 = vld [vmem:[#allocation2 + $0xc8] sm:$0xff]
    %v2001 = vld [vmem:[#allocation2 + $0xd0] sm:$0xff]
    %v2002 = vld [vmem:[#allocation2 + $0xd8] sm:$0xff]
    %v2003 = vld [vmem:[#allocation2 + $0xe0] sm:$0xff]
    %v2004 = vld [vmem:[#allocation2 + $0xe8] sm:$0xff]
    %v2005 = vld [vmem:[#allocation2 + $0xf0] sm:$0xff]
    %v2006 = vld [vmem:[#allocation2 + $0xf8] sm:$0xff]
    %v2007 = vld [vmem:[#allocation2 + $0x100] sm:$0xff]
    %v2008 = vld [vmem:[#allocation2 + $0x108] sm:$0xff]
    %v2009 = vld [vmem:[#allocation2 + $0x110] sm:$0xff]
    %v2010 = vld [vmem:[#allocation2 + $0x118] sm:$0xff]
    %v2011 = vld [vmem:[#allocation2 + $0x120] sm:$0xff]
    %v2012 = vld [vmem:[#allocation2 + $0x128] sm:$0xff]
    %v2013 = vld [vmem:[#allocation2 + $0x130] sm:$0xff]
    %v2014 = vld [vmem:[#allocation2 + $0x138] sm:$0xff]
    %v2015 = vld [vmem:[#allocation2 + $0x140] sm:$0xff]
    %v2016 = vld [vmem:[#allocation2 + $0x148] sm:$0xff]
    %v2017 = vld [vmem:[#allocation2 + $0x150] sm:$0xff]
    %v2018 = vld [vmem:[#allocation2 + $0x158] sm:$0xff]
    %v2019 = vld [vmem:[#allocation2 + $0x160] sm:$0xff]
    %v2020 = vld [vmem:[#allocation2 + $0x168] sm:$0xff]
    %v2021 = vld [vmem:[#allocation2 + $0x170] sm:$0xff]
    %v2022 = vld [vmem:[#allocation2 + $0x178] sm:$0xff]
    %v2023 = vld [vmem:[#allocation2 + $0x180] sm:$0xff]
    %v2024 = vld [vmem:[#allocation2 + $0x188] sm:$0xff]
    %v2025 = vld [vmem:[#allocation2 + $0x190] sm:$0xff]
    %v2026 = vld [vmem:[#allocation2 + $0x198] sm:$0xff]
    %v2027 = vld [vmem:[#allocation2 + $0x1a0] sm:$0xff]
    %v2028 = vld [vmem:[#allocation2 + $0x1a8] sm:$0xff]
    %v2029 = vld [vmem:[#allocation2 + $0x1b0] sm:$0xff]
    %v2030 = vld [vmem:[#allocation2 + $0x1b8] sm:$0xff]
    %v2031 = vld [vmem:[#allocation2 + $0x1c0] sm:$0xff]
    %v2032 = vld [vmem:[#allocation2 + $0x1c8] sm:$0xff]
    %v2033 = vld [vmem:[#allocation2 + $0x1d0] sm:$0xff]
    %v2034 = vld [vmem:[#allocation2 + $0x1d8] sm:$0xff]
    %v2035 = vld [vmem:[#allocation2 + $0x1e0] sm:$0xff]
    %v2036 = vld [vmem:[#allocation2 + $0x1e8] sm:$0xff]
    %v2037 = vld [vmem:[#allocation2 + $0x1f0] sm:$0xff]
    %v2038 = vld [vmem:[#allocation2 + $0x1f8] sm:$0xff]
    %v2039 = vld [vmem:[#allocation2 + $0x200] sm:$0xff]
    %v2040 = vld [vmem:[#allocation2 + $0x208] sm:$0xff]
    %v2041 = vld [vmem:[#allocation2 + $0x210] sm:$0xff]
    %v2042 = vld [vmem:[#allocation2 + $0x218] sm:$0xff]
    %v2043 = vld [vmem:[#allocation2 + $0x220] sm:$0xff]
    %v2044 = vld [vmem:[#allocation2 + $0x228] sm:$0xff]
    %v2045 = vld [vmem:[#allocation2 + $0x230] sm:$0xff]
    %v2046 = vld [vmem:[#allocation2 + $0x238] sm:$0xff]
    %v2047 = vld [vmem:[#allocation2 + $0x240] sm:$0xff]
    %v2048 = vld [vmem:[#allocation2 + $0x248] sm:$0xff]
    %v2049 = vld [vmem:[#allocation2 + $0x250] sm:$0xff]
    %v2050 = vld [vmem:[#allocation2 + $0x258] sm:$0xff]
    %v2051 = vld [vmem:[#allocation2 + $0x260] sm:$0xff]
    %v2052 = vld [vmem:[#allocation2 + $0x268] sm:$0xff]
    %v2053 = vld [vmem:[#allocation2 + $0x270] sm:$0xff]
    %v2054 = vld [vmem:[#allocation2 + $0x278] sm:$0xff]
    %v2055 = vld [vmem:[#allocation2 + $0x280] sm:$0xff]
    %v2056 = vld [vmem:[#allocation2 + $0x288] sm:$0xff]
    %v2057 = vld [vmem:[#allocation2 + $0x290] sm:$0xff]
    %v2058 = vld [vmem:[#allocation2 + $0x298] sm:$0xff]
    %v2059 = vld [vmem:[#allocation2 + $0x2a0] sm:$0xff]
    %v2060 = vld [vmem:[#allocation2 + $0x2a8] sm:$0xff]
    %v2061 = vld [vmem:[#allocation2 + $0x2b0] sm:$0xff]
    %v2062 = vld [vmem:[#allocation2 + $0x2b8] sm:$0xff]
    %v2063 = vld [vmem:[#allocation2 + $0x2c0] sm:$0xff]
    %v2064 = vld [vmem:[#allocation2 + $0x2c8] sm:$0xff]
    %v2065 = vld [vmem:[#allocation2 + $0x2d0] sm:$0xff]
    %v2066 = vld [vmem:[#allocation2 + $0x2d8] sm:$0xff]
    %v2067 = vld [vmem:[#allocation2 + $0x2e0] sm:$0xff]
    %v2068 = vld [vmem:[#allocation2 + $0x2e8] sm:$0xff]
    %v2069 = vld [vmem:[#allocation2 + $0x2f0] sm:$0xff]
    %v2070 = vld [vmem:[#allocation2 + $0x2f8] sm:$0xff]
    %v2071 = vld [vmem:[#allocation2 + $0x300] sm:$0xff]
    %v2072 = vld [vmem:[#allocation2 + $0x308] sm:$0xff]
    %v2073 = vld [vmem:[#allocation2 + $0x310] sm:$0xff]
    %v2074 = vld [vmem:[#allocation2 + $0x318] sm:$0xff]
    %v2075 = vld [vmem:[#allocation2 + $0x320] sm:$0xff]
    %v2076 = vld [vmem:[#allocation2 + $0x328] sm:$0xff]
    %v2077 = vld [vmem:[#allocation2 + $0x330] sm:$0xff]
    %v2078 = vld [vmem:[#allocation2 + $0x338] sm:$0xff]
    %v2079 = vld [vmem:[#allocation2 + $0x340] sm:$0xff]
    %v2080 = vld [vmem:[#allocation2 + $0x348] sm:$0xff]
    %v2081 = vld [vmem:[#allocation2 + $0x350] sm:$0xff]
    %v2082 = vld [vmem:[#allocation2 + $0x358] sm:$0xff]
    %v2083 = vld [vmem:[#allocation2 + $0x360] sm:$0xff]
    %v2084 = vld [vmem:[#allocation2 + $0x368] sm:$0xff]
    %v2085 = vld [vmem:[#allocation2 + $0x370] sm:$0xff]
    %v2086 = vld [vmem:[#allocation2 + $0x378] sm:$0xff]
    %v2087 = vld [vmem:[#allocation2 + $0x380] sm:$0xff]
    %v2088 = vld [vmem:[#allocation2 + $0x388] sm:$0xff]
    %v2089 = vld [vmem:[#allocation2 + $0x390] sm:$0xff]
    %v2090 = vld [vmem:[#allocation2 + $0x398] sm:$0xff]
    %v2091 = vld [vmem:[#allocation2 + $0x3a0] sm:$0xff]
    %v2092 = vld [vmem:[#allocation2 + $0x3a8] sm:$0xff]
    %v2093 = vld [vmem:[#allocation2 + $0x3b0] sm:$0xff]
    %v2094 = vld [vmem:[#allocation2 + $0x3b8] sm:$0xff]
    %v2095 = vld [vmem:[#allocation2 + $0x3c0] sm:$0xff]
    %v2096 = vld [vmem:[#allocation2 + $0x3c8] sm:$0xff]
    %v2097 = vld [vmem:[#allocation2 + $0x3d0] sm:$0xff]
    %v2098 = vld [vmem:[#allocation2 + $0x3d8] sm:$0xff]
    %v2099 = vld [vmem:[#allocation2 + $0x3e0] sm:$0xff]
    %v2100 = vld [vmem:[#allocation2 + $0x3e8] sm:$0xff]
    %v2101 = vld [vmem:[#allocation2 + $0x3f0] sm:$0xff]
    %v2102 = vld [vmem:[#allocation2 + $0x3f8] sm:$0xff]
    %v2103 = vld [vmem:[#allocation2 + $0x400] sm:$0xff]
    %v2104 = vld [vmem:[#allocation2 + $0x408] sm:$0xff]
    %v2105 = vld [vmem:[#allocation2 + $0x410] sm:$0xff]
    %v2106 = vld [vmem:[#allocation2 + $0x418] sm:$0xff]
    %v2107 = vld [vmem:[#allocation2 + $0x420] sm:$0xff]
    %v2108 = vld [vmem:[#allocation2 + $0x428] sm:$0xff]
    %v2109 = vld [vmem:[#allocation2 + $0x430] sm:$0xff]
    %v2110 = vld [vmem:[#allocation2 + $0x438] sm:$0xff]
    %v2111 = vld [vmem:[#allocation2 + $0x440] sm:$0xff]
    %v2112 = vld [vmem:[#allocation2 + $0x448] sm:$0xff]
    %v2113 = vld [vmem:[#allocation2 + $0x450] sm:$0xff]
    %v2114 = vld [vmem:[#allocation2 + $0x458] sm:$0xff]
    %v2115 = vld [vmem:[#allocation2 + $0x460] sm:$0xff]
    %v2116 = vld [vmem:[#allocation2 + $0x468] sm:$0xff]
    %v2117 = vld [vmem:[#allocation2 + $0x470] sm:$0xff]
    %v2118 = vld [vmem:[#allocation2 + $0x478] sm:$0xff]
    %v2119 = vld [vmem:[#allocation2 + $0x480] sm:$0xff]
    %v2120 = vld [vmem:[#allocation2 + $0x488] sm:$0xff]
    %v2121 = vld [vmem:[#allocation2 + $0x490] sm:$0xff]
    %v2122 = vld [vmem:[#allocation2 + $0x498] sm:$0xff]
    %v2123 = vld [vmem:[#allocation2 + $0x4a0] sm:$0xff]
    %v2124 = vld [vmem:[#allocation2 + $0x4a8] sm:$0xff]
    %v2125 = vld [vmem:[#allocation2 + $0x4b0] sm:$0xff]
    %v2126 = vld [vmem:[#allocation2 + $0x4b8] sm:$0xff]
    %v2127 = vld [vmem:[#allocation2 + $0x4c0] sm:$0xff]
    %v2128 = vld [vmem:[#allocation2 + $0x4c8] sm:$0xff]
    %v2129 = vld [vmem:[#allocation2 + $0x4d0] sm:$0xff]
    %v2130 = vld [vmem:[#allocation2 + $0x4d8] sm:$0xff]
    %v2131 = vld [vmem:[#allocation2 + $0x4e0] sm:$0xff]
    %v2132 = vld [vmem:[#allocation2 + $0x4e8] sm:$0xff]
    %v2133 = vld [vmem:[#allocation2 + $0x4f0] sm:$0xff]
    %v2134 = vld [vmem:[#allocation2 + $0x4f8] sm:$0xff]
    %v2135 = vld [vmem:[#allocation2 + $0x500] sm:$0xff]
    %v2136 = vld [vmem:[#allocation2 + $0x508] sm:$0xff]
    %v2137 = vld [vmem:[#allocation2 + $0x510] sm:$0xff]
    %v2138 = vld [vmem:[#allocation2 + $0x518] sm:$0xff]
    %v2139 = vld [vmem:[#allocation2 + $0x520] sm:$0xff]
    %v2140 = vld [vmem:[#allocation2 + $0x528] sm:$0xff]
    %v2141 = vld [vmem:[#allocation2 + $0x530] sm:$0xff]
    %v2142 = vld [vmem:[#allocation2 + $0x538] sm:$0xff]
    %v2143 = vld [vmem:[#allocation2 + $0x540] sm:$0xff]
    %v2144 = vld [vmem:[#allocation2 + $0x548] sm:$0xff]
    %v2145 = vld [vmem:[#allocation2 + $0x550] sm:$0xff]
    %v2146 = vld [vmem:[#allocation2 + $0x558] sm:$0xff]
    %v2147 = vld [vmem:[#allocation2 + $0x560] sm:$0xff]
    %v2148 = vld [vmem:[#allocation2 + $0x568] sm:$0xff]
    %v2149 = vld [vmem:[#allocation2 + $0x570] sm:$0xff]
    %v2150 = vld [vmem:[#allocation2 + $0x578] sm:$0xff]
    %v2151 = vld [vmem:[#allocation2 + $0x580] sm:$0xff]
    %v2152 = vld [vmem:[#allocation2 + $0x588] sm:$0xff]
    %v2153 = vld [vmem:[#allocation2 + $0x590] sm:$0xff]
    %v2154 = vld [vmem:[#allocation2 + $0x598] sm:$0xff]
    %v2155 = vld [vmem:[#allocation2 + $0x5a0] sm:$0xff]
    %v2156 = vld [vmem:[#allocation2 + $0x5a8] sm:$0xff]
    %v2157 = vld [vmem:[#allocation2 + $0x5b0] sm:$0xff]
    %v2158 = vld [vmem:[#allocation2 + $0x5b8] sm:$0xff]
    %v2159 = vld [vmem:[#allocation2 + $0x5c0] sm:$0xff]
    %v2160 = vld [vmem:[#allocation2 + $0x5c8] sm:$0xff]
    %v2161 = vld [vmem:[#allocation2 + $0x5d0] sm:$0xff]
    %v2162 = vld [vmem:[#allocation2 + $0x5d8] sm:$0xff]
    %v2163 = vld [vmem:[#allocation2 + $0x5e0] sm:$0xff]
    %v2164 = vld [vmem:[#allocation2 + $0x5e8] sm:$0xff]
    %v2165 = vld [vmem:[#allocation2 + $0x5f0] sm:$0xff]
    %v2166 = vld [vmem:[#allocation2 + $0x5f8] sm:$0xff]
    %v2167 = vld [vmem:[#allocation2 + $0x600] sm:$0xff]
    %v2168 = vld [vmem:[#allocation2 + $0x608] sm:$0xff]
    %v2169 = vld [vmem:[#allocation2 + $0x610] sm:$0xff]
    %v2170 = vld [vmem:[#allocation2 + $0x618] sm:$0xff]
    %v2171 = vld [vmem:[#allocation2 + $0x620] sm:$0xff]
    %v2172 = vld [vmem:[#allocation2 + $0x628] sm:$0xff]
    %v2173 = vld [vmem:[#allocation2 + $0x630] sm:$0xff]
    %v2174 = vld [vmem:[#allocation2 + $0x638] sm:$0xff]
    %v2175 = vld [vmem:[#allocation2 + $0x640] sm:$0xff]
    %v2176 = vld [vmem:[#allocation2 + $0x648] sm:$0xff]
    %v2177 = vld [vmem:[#allocation2 + $0x650] sm:$0xff]
    %v2178 = vld [vmem:[#allocation2 + $0x658] sm:$0xff]
    %v2179 = vld [vmem:[#allocation2 + $0x660] sm:$0xff]
    %v2180 = vld [vmem:[#allocation2 + $0x668] sm:$0xff]
    %v2181 = vld [vmem:[#allocation2 + $0x670] sm:$0xff]
    %v2182 = vld [vmem:[#allocation2 + $0x678] sm:$0xff]
    %v2183 = vld [vmem:[#allocation2 + $0x680] sm:$0xff]
    %v2184 = vld [vmem:[#allocation2 + $0x688] sm:$0xff]
    %v2185 = vld [vmem:[#allocation2 + $0x690] sm:$0xff]
    %v2186 = vld [vmem:[#allocation2 + $0x698] sm:$0xff]
    %v2187 = vld [vmem:[#allocation2 + $0x6a0] sm:$0xff]
    %v2188 = vld [vmem:[#allocation2 + $0x6a8] sm:$0xff]
    %v2189 = vld [vmem:[#allocation2 + $0x6b0] sm:$0xff]
    %v2190 = vld [vmem:[#allocation2 + $0x6b8] sm:$0xff]
    %v2191 = vld [vmem:[#allocation2 + $0x6c0] sm:$0xff]
    %v2192 = vld [vmem:[#allocation2 + $0x6c8] sm:$0xff]
    %v2193 = vld [vmem:[#allocation2 + $0x6d0] sm:$0xff]
    %v2194 = vld [vmem:[#allocation2 + $0x6d8] sm:$0xff]
    %v2195 = vld [vmem:[#allocation2 + $0x6e0] sm:$0xff]
    %v2196 = vld [vmem:[#allocation2 + $0x6e8] sm:$0xff]
    %v2197 = vld [vmem:[#allocation2 + $0x6f0] sm:$0xff]
    %v2198 = vld [vmem:[#allocation2 + $0x6f8] sm:$0xff]
    %v2199 = vld [vmem:[#allocation2 + $0x700] sm:$0xff]
    %v2200 = vld [vmem:[#allocation2 + $0x708] sm:$0xff]
    %v2201 = vld [vmem:[#allocation2 + $0x710] sm:$0xff]
    %v2202 = vld [vmem:[#allocation2 + $0x718] sm:$0xff]
    %v2203 = vld [vmem:[#allocation2 + $0x720] sm:$0xff]
    %v2204 = vld [vmem:[#allocation2 + $0x728] sm:$0xff]
    %v2205 = vld [vmem:[#allocation2 + $0x730] sm:$0xff]
    %v2206 = vld [vmem:[#allocation2 + $0x738] sm:$0xff]
    %v2207 = vld [vmem:[#allocation2 + $0x740] sm:$0xff]
    %v2208 = vld [vmem:[#allocation2 + $0x748] sm:$0xff]
    %v2209 = vld [vmem:[#allocation2 + $0x750] sm:$0xff]
    %v2210 = vld [vmem:[#allocation2 + $0x758] sm:$0xff]
    %v2211 = vld [vmem:[#allocation2 + $0x760] sm:$0xff]
    %v2212 = vld [vmem:[#allocation2 + $0x768] sm:$0xff]
    %v2213 = vld [vmem:[#allocation2 + $0x770] sm:$0xff]
    %v2214 = vld [vmem:[#allocation2 + $0x778] sm:$0xff]
    %v2215 = vld [vmem:[#allocation2 + $0x780] sm:$0xff]
    %v2216 = vld [vmem:[#allocation2 + $0x788] sm:$0xff]
    %v2217 = vld [vmem:[#allocation2 + $0x790] sm:$0xff]
    %v2218 = vld [vmem:[#allocation2 + $0x798] sm:$0xff]
    %v2219 = vld [vmem:[#allocation2 + $0x7a0] sm:$0xff]
    %v2220 = vld [vmem:[#allocation2 + $0x7a8] sm:$0xff]
    %v2221 = vld [vmem:[#allocation2 + $0x7b0] sm:$0xff]
    %v2222 = vld [vmem:[#allocation2 + $0x7b8] sm:$0xff]
    %v2223 = vld [vmem:[#allocation2 + $0x7c0] sm:$0xff]
    %v2224 = vld [vmem:[#allocation2 + $0x7c8] sm:$0xff]
    %v2225 = vld [vmem:[#allocation2 + $0x7d0] sm:$0xff]
    %v2226 = vld [vmem:[#allocation2 + $0x7d8] sm:$0xff]
    %v2227 = vld [vmem:[#allocation2 + $0x7e0] sm:$0xff]
    %v2228 = vld [vmem:[#allocation2 + $0x7e8] sm:$0xff]
    %v2229 = vld [vmem:[#allocation2 + $0x7f0] sm:$0xff]
    %v2230 = vld [vmem:[#allocation2 + $0x7f8] sm:$0xff]
    %v2231 = vld [vmem:[#allocation2 + $0x800] sm:$0xff]
    %v2232 = vld [vmem:[#allocation2 + $0x808] sm:$0xff]
    %v2233 = vld [vmem:[#allocation2 + $0x810] sm:$0xff]
    %v2234 = vld [vmem:[#allocation2 + $0x818] sm:$0xff]
    %v2235 = vld [vmem:[#allocation2 + $0x820] sm:$0xff]
    %v2236 = vld [vmem:[#allocation2 + $0x828] sm:$0xff]
    %v2237 = vld [vmem:[#allocation2 + $0x830] sm:$0xff]
    %v2238 = vld [vmem:[#allocation2 + $0x838] sm:$0xff]
    %v2239 = vld [vmem:[#allocation2 + $0x840] sm:$0xff]
    %v2240 = vld [vmem:[#allocation2 + $0x848] sm:$0xff]
    %v2241 = vld [vmem:[#allocation2 + $0x850] sm:$0xff]
    %v2242 = vld [vmem:[#allocation2 + $0x858] sm:$0xff]
    %v2243 = vld [vmem:[#allocation2 + $0x860] sm:$0xff]
    %v2244 = vld [vmem:[#allocation2 + $0x868] sm:$0xff]
    %v2245 = vld [vmem:[#allocation2 + $0x870] sm:$0xff]
    %v2246 = vld [vmem:[#allocation2 + $0x878] sm:$0xff]
    %v2247 = vld [vmem:[#allocation2 + $0x880] sm:$0xff]
    %v2248 = vld [vmem:[#allocation2 + $0x888] sm:$0xff]
    %v2249 = vld [vmem:[#allocation2 + $0x890] sm:$0xff]
    %v2250 = vld [vmem:[#allocation2 + $0x898] sm:$0xff]
    %v2251 = vld [vmem:[#allocation2 + $0x8a0] sm:$0xff]
    %v2252 = vld [vmem:[#allocation2 + $0x8a8] sm:$0xff]
    %v2253 = vld [vmem:[#allocation2 + $0x8b0] sm:$0xff]
    %v2254 = vld [vmem:[#allocation2 + $0x8b8] sm:$0xff]
    %v2255 = vld [vmem:[#allocation2 + $0x8c0] sm:$0xff]
    %v2256 = vld [vmem:[#allocation2 + $0x8c8] sm:$0xff]
    %v2257 = vld [vmem:[#allocation2 + $0x8d0] sm:$0xff]
    %v2258 = vld [vmem:[#allocation2 + $0x8d8] sm:$0xff]
    %v2259 = vld [vmem:[#allocation2 + $0x8e0] sm:$0xff]
    %v2260 = vld [vmem:[#allocation2 + $0x8e8] sm:$0xff]
    %v2261 = vld [vmem:[#allocation2 + $0x8f0] sm:$0xff]
    %v2262 = vld [vmem:[#allocation2 + $0x8f8] sm:$0xff]
    %v2263 = vld [vmem:[#allocation2 + $0x900] sm:$0xff]
    %v2264 = vld [vmem:[#allocation2 + $0x908] sm:$0xff]
    %v2265 = vld [vmem:[#allocation2 + $0x910] sm:$0xff]
    %v2266 = vld [vmem:[#allocation2 + $0x918] sm:$0xff]
    %v2267 = vld [vmem:[#allocation2 + $0x920] sm:$0xff]
    %v2268 = vld [vmem:[#allocation2 + $0x928] sm:$0xff]
    %v2269 = vld [vmem:[#allocation2 + $0x930] sm:$0xff]
    %v2270 = vld [vmem:[#allocation2 + $0x938] sm:$0xff]
    %v2271 = vld [vmem:[#allocation2 + $0x940] sm:$0xff]
    %v2272 = vld [vmem:[#allocation2 + $0x948] sm:$0xff]
    %v2273 = vld [vmem:[#allocation2 + $0x950] sm:$0xff]
    %v2274 = vld [vmem:[#allocation2 + $0x958] sm:$0xff]
    %v2275 = vld [vmem:[#allocation2 + $0x960] sm:$0xff]
    %v2276 = vld [vmem:[#allocation2 + $0x968] sm:$0xff]
    %v2277 = vld [vmem:[#allocation2 + $0x970] sm:$0xff]
    %v2278 = vld [vmem:[#allocation2 + $0x978] sm:$0xff]
    %v2279 = vld [vmem:[#allocation2 + $0x980] sm:$0xff]
    %v2280 = vld [vmem:[#allocation2 + $0x988] sm:$0xff]
    %v2281 = vld [vmem:[#allocation2 + $0x990] sm:$0xff]
    %v2282 = vld [vmem:[#allocation2 + $0x998] sm:$0xff]
    %v2283 = vld [vmem:[#allocation2 + $0x9a0] sm:$0xff]
    %v2284 = vld [vmem:[#allocation2 + $0x9a8] sm:$0xff]
    %v2285 = vld [vmem:[#allocation2 + $0x9b0] sm:$0xff]
    %v2286 = vld [vmem:[#allocation2 + $0x9b8] sm:$0xff]
    %v2287 = vld [vmem:[#allocation2 + $0x9c0] sm:$0xff]
    %v2288 = vld [vmem:[#allocation2 + $0x9c8] sm:$0xff]
    %v2289 = vld [vmem:[#allocation2 + $0x9d0] sm:$0xff]
    %v2290 = vld [vmem:[#allocation2 + $0x9d8] sm:$0xff]
    %v2291 = vld [vmem:[#allocation2 + $0x9e0] sm:$0xff]
    %v2292 = vld [vmem:[#allocation2 + $0x9e8] sm:$0xff]
    %v2293 = vld [vmem:[#allocation2 + $0x9f0] sm:$0xff]
    %v2294 = vld [vmem:[#allocation2 + $0x9f8] sm:$0xff]
    %v2295 = vld [vmem:[#allocation2 + $0xa00] sm:$0xff]
    %v2296 = vld [vmem:[#allocation2 + $0xa08] sm:$0xff]
    %v2297 = vld [vmem:[#allocation2 + $0xa10] sm:$0xff]
    %v2298 = vld [vmem:[#allocation2 + $0xa18] sm:$0xff]
    %v2299 = vld [vmem:[#allocation2 + $0xa20] sm:$0xff]
    %v2300 = vld [vmem:[#allocation2 + $0xa28] sm:$0xff]
    %v2301 = vld [vmem:[#allocation2 + $0xa30] sm:$0xff]
    %v2302 = vld [vmem:[#allocation2 + $0xa38] sm:$0xff]
    %v2303 = vld [vmem:[#allocation2 + $0xa40] sm:$0xff]
    %v2304 = vld [vmem:[#allocation2 + $0xa48] sm:$0xff]
    %v2305 = vld [vmem:[#allocation2 + $0xa50] sm:$0xff]
    %v2306 = vld [vmem:[#allocation2 + $0xa58] sm:$0xff]
    %v2307 = vld [vmem:[#allocation2 + $0xa60] sm:$0xff]
    %v2308 = vld [vmem:[#allocation2 + $0xa68] sm:$0xff]
    %v2309 = vld [vmem:[#allocation2 + $0xa70] sm:$0xff]
    %v2310 = vld [vmem:[#allocation2 + $0xa78] sm:$0xff]
    %v2311 = vld [vmem:[#allocation2 + $0xa80] sm:$0xff]
    %v2312 = vld [vmem:[#allocation2 + $0xa88] sm:$0xff]
    %v2313 = vld [vmem:[#allocation2 + $0xa90] sm:$0xff]
    %v2314 = vld [vmem:[#allocation2 + $0xa98] sm:$0xff]
    %v2315 = vld [vmem:[#allocation2 + $0xaa0] sm:$0xff]
    %v2316 = vld [vmem:[#allocation2 + $0xaa8] sm:$0xff]
    %v2317 = vld [vmem:[#allocation2 + $0xab0] sm:$0xff]
    %v2318 = vld [vmem:[#allocation2 + $0xab8] sm:$0xff]
    %v2319 = vld [vmem:[#allocation2 + $0xac0] sm:$0xff]
    %v2320 = vld [vmem:[#allocation2 + $0xac8] sm:$0xff]
    %v2321 = vld [vmem:[#allocation2 + $0xad0] sm:$0xff]
    %v2322 = vld [vmem:[#allocation2 + $0xad8] sm:$0xff]
    %v2323 = vld [vmem:[#allocation2 + $0xae0] sm:$0xff]
    %v2324 = vld [vmem:[#allocation2 + $0xae8] sm:$0xff]
    %v2325 = vld [vmem:[#allocation2 + $0xaf0] sm:$0xff]
    %v2326 = vld [vmem:[#allocation2 + $0xaf8] sm:$0xff]
    %v2327 = vld [vmem:[#allocation2 + $0xb00] sm:$0xff]
    %v2328 = vld [vmem:[#allocation2 + $0xb08] sm:$0xff]
    %v2329 = vld [vmem:[#allocation2 + $0xb10] sm:$0xff]
    %v2330 = vld [vmem:[#allocation2 + $0xb18] sm:$0xff]
    %v2331 = vld [vmem:[#allocation2 + $0xb20] sm:$0xff]
    %v2332 = vld [vmem:[#allocation2 + $0xb28] sm:$0xff]
    %v2333 = vld [vmem:[#allocation2 + $0xb30] sm:$0xff]
    %v2334 = vld [vmem:[#allocation2 + $0xb38] sm:$0xff]
    %v2335 = vld [vmem:[#allocation2 + $0xb40] sm:$0xff]
    %v2336 = vld [vmem:[#allocation2 + $0xb48] sm:$0xff]
    %v2337 = vld [vmem:[#allocation2 + $0xb50] sm:$0xff]
    %v2338 = vld [vmem:[#allocation2 + $0xb58] sm:$0xff]
    %v2339 = vld [vmem:[#allocation2 + $0xb60] sm:$0xff]
    %v2340 = vld [vmem:[#allocation2 + $0xb68] sm:$0xff]
    %v2341 = vld [vmem:[#allocation2 + $0xb70] sm:$0xff]
    %v2342 = vld [vmem:[#allocation2 + $0xb78] sm:$0xff]
    %v2343 = vld [vmem:[#allocation2 + $0xb80] sm:$0xff]
    %v2344 = vld [vmem:[#allocation2 + $0xb88] sm:$0xff]
    %v2345 = vld [vmem:[#allocation2 + $0xb90] sm:$0xff]
    %v2346 = vld [vmem:[#allocation2 + $0xb98] sm:$0xff]
    %v2347 = vld [vmem:[#allocation2 + $0xba0] sm:$0xff]
    %v2348 = vld [vmem:[#allocation2 + $0xba8] sm:$0xff]
    %v2349 = vld [vmem:[#allocation2 + $0xbb0] sm:$0xff]
    %v2350 = vld [vmem:[#allocation2 + $0xbb8] sm:$0xff]
    %v2351 = vld [vmem:[#allocation2 + $0xbc0] sm:$0xff]
    %v2352 = vld [vmem:[#allocation2 + $0xbc8] sm:$0xff]
    %v2353 = vld [vmem:[#allocation2 + $0xbd0] sm:$0xff]
    %v2354 = vld [vmem:[#allocation2 + $0xbd8] sm:$0xff]
    %v2355 = vld [vmem:[#allocation2 + $0xbe0] sm:$0xff]
    %v2356 = vld [vmem:[#allocation2 + $0xbe8] sm:$0xff]
    %v2357 = vld [vmem:[#allocation2 + $0xbf0] sm:$0xff]
    %v2358 = vld [vmem:[#allocation2 + $0xbf8] sm:$0xff]
    %v2359 = vld [vmem:[#allocation2 + $0xc00] sm:$0xff]
    %v2360 = vld [vmem:[#allocation2 + $0xc08] sm:$0xff]
    %v2361 = vld [vmem:[#allocation2 + $0xc10] sm:$0xff]
    %v2362 = vld [vmem:[#allocation2 + $0xc18] sm:$0xff]
    %v2363 = vld [vmem:[#allocation2 + $0xc20] sm:$0xff]
    %v2364 = vld [vmem:[#allocation2 + $0xc28] sm:$0xff]
    %v2365 = vld [vmem:[#allocation2 + $0xc30] sm:$0xff]
    %v2366 = vld [vmem:[#allocation2 + $0xc38] sm:$0xff]
    %v2367 = vld [vmem:[#allocation2 + $0xc40] sm:$0xff]
    %v2368 = vld [vmem:[#allocation2 + $0xc48] sm:$0xff]
    %v2369 = vld [vmem:[#allocation2 + $0xc50] sm:$0xff]
    %v2370 = vld [vmem:[#allocation2 + $0xc58] sm:$0xff]
    %v2371 = vld [vmem:[#allocation2 + $0xc60] sm:$0xff]
    %v2372 = vld [vmem:[#allocation2 + $0xc68] sm:$0xff]
    %v2373 = vld [vmem:[#allocation2 + $0xc70] sm:$0xff]
    %v2374 = vld [vmem:[#allocation2 + $0xc78] sm:$0xff]
    %v2375 = vld [vmem:[#allocation2 + $0xc80] sm:$0xff]
    %v2376 = vld [vmem:[#allocation2 + $0xc88] sm:$0xff]
    %v2377 = vld [vmem:[#allocation2 + $0xc90] sm:$0xff]
    %v2378 = vld [vmem:[#allocation2 + $0xc98] sm:$0xff]
    %v2379 = vld [vmem:[#allocation2 + $0xca0] sm:$0xff]
    %v2380 = vld [vmem:[#allocation2 + $0xca8] sm:$0xff]
    %v2381 = vld [vmem:[#allocation2 + $0xcb0] sm:$0xff]
    %v2382 = vld [vmem:[#allocation2 + $0xcb8] sm:$0xff]
    %v2383 = vld [vmem:[#allocation2 + $0xcc0] sm:$0xff]
    %v2384 = vld [vmem:[#allocation2 + $0xcc8] sm:$0xff]
    %v2385 = vld [vmem:[#allocation2 + $0xcd0] sm:$0xff]
    %v2386 = vld [vmem:[#allocation2 + $0xcd8] sm:$0xff]
    %v2387 = vld [vmem:[#allocation2 + $0xce0] sm:$0xff]
    %v2388 = vld [vmem:[#allocation2 + $0xce8] sm:$0xff]
    %v2389 = vld [vmem:[#allocation2 + $0xcf0] sm:$0xff]
    %v2390 = vld [vmem:[#allocation2 + $0xcf8] sm:$0xff]
    %v2391 = vld [vmem:[#allocation2 + $0xd00] sm:$0xff]
    %v2392 = vld [vmem:[#allocation2 + $0xd08] sm:$0xff]
    %v2393 = vld [vmem:[#allocation2 + $0xd10] sm:$0xff]
    %v2394 = vld [vmem:[#allocation2 + $0xd18] sm:$0xff]
    %v2395 = vld [vmem:[#allocation2 + $0xd20] sm:$0xff]
    %v2396 = vld [vmem:[#allocation2 + $0xd28] sm:$0xff]
    %v2397 = vld [vmem:[#allocation2 + $0xd30] sm:$0xff]
    %v2398 = vld [vmem:[#allocation2 + $0xd38] sm:$0xff]
    %v2399 = vld [vmem:[#allocation2 + $0xd40] sm:$0xff]
    %v2400 = vld [vmem:[#allocation2 + $0xd48] sm:$0xff]
    %v2401 = vld [vmem:[#allocation2 + $0xd50] sm:$0xff]
    %v2402 = vld [vmem:[#allocation2 + $0xd58] sm:$0xff]
    %v2403 = vld [vmem:[#allocation2 + $0xd60] sm:$0xff]
    %v2404 = vld [vmem:[#allocation2 + $0xd68] sm:$0xff]
    %v2405 = vld [vmem:[#allocation2 + $0xd70] sm:$0xff]
    %v2406 = vld [vmem:[#allocation2 + $0xd78] sm:$0xff]
    %v2407 = vld [vmem:[#allocation2 + $0xd80] sm:$0xff]
    %v2408 = vld [vmem:[#allocation2 + $0xd88] sm:$0xff]
    %v2409 = vld [vmem:[#allocation2 + $0xd90] sm:$0xff]
    %v2410 = vld [vmem:[#allocation2 + $0xd98] sm:$0xff]
    %v2411 = vld [vmem:[#allocation2 + $0xda0] sm:$0xff]
    %v2412 = vld [vmem:[#allocation2 + $0xda8] sm:$0xff]
    %v2413 = vld [vmem:[#allocation2 + $0xdb0] sm:$0xff]
    %v2414 = vld [vmem:[#allocation2 + $0xdb8] sm:$0xff]
    %v2415 = vld [vmem:[#allocation2 + $0xdc0] sm:$0xff]
    %v2416 = vld [vmem:[#allocation2 + $0xdc8] sm:$0xff]
    %v2417 = vld [vmem:[#allocation2 + $0xdd0] sm:$0xff]
    %v2418 = vld [vmem:[#allocation2 + $0xdd8] sm:$0xff]
    %v2419 = vld [vmem:[#allocation2 + $0xde0] sm:$0xff]
    %v2420 = vld [vmem:[#allocation2 + $0xde8] sm:$0xff]
    %v2421 = vld [vmem:[#allocation2 + $0xdf0] sm:$0xff]
    %v2422 = vld [vmem:[#allocation2 + $0xdf8] sm:$0xff]
    %v2423 = vld [vmem:[#allocation2 + $0xe00] sm:$0xff]
    %v2424 = vld [vmem:[#allocation2 + $0xe08] sm:$0xff]
    %v2425 = vld [vmem:[#allocation2 + $0xe10] sm:$0xff]
    %v2426 = vld [vmem:[#allocation2 + $0xe18] sm:$0xff]
    %v2427 = vld [vmem:[#allocation2 + $0xe20] sm:$0xff]
    %v2428 = vld [vmem:[#allocation2 + $0xe28] sm:$0xff]
    %v2429 = vld [vmem:[#allocation2 + $0xe30] sm:$0xff]
    %v2430 = vld [vmem:[#allocation2 + $0xe38] sm:$0xff]
    %v2431 = vld [vmem:[#allocation2 + $0xe40] sm:$0xff]
    %v2432 = vld [vmem:[#allocation2 + $0xe48] sm:$0xff]
    %v2433 = vld [vmem:[#allocation2 + $0xe50] sm:$0xff]
    %v2434 = vld [vmem:[#allocation2 + $0xe58] sm:$0xff]
    %v2435 = vld [vmem:[#allocation2 + $0xe60] sm:$0xff]
    %v2436 = vld [vmem:[#allocation2 + $0xe68] sm:$0xff]
    %v2437 = vld [vmem:[#allocation2 + $0xe70] sm:$0xff]
    %v2438 = vld [vmem:[#allocation2 + $0xe78] sm:$0xff]
    %v2439 = vld [vmem:[#allocation2 + $0xe80] sm:$0xff]
    %v2440 = vld [vmem:[#allocation2 + $0xe88] sm:$0xff]
    %v2441 = vld [vmem:[#allocation2 + $0xe90] sm:$0xff]
    %v2442 = vld [vmem:[#allocation2 + $0xe98] sm:$0xff]
    %v2443 = vld [vmem:[#allocation2 + $0xea0] sm:$0xff]
    %v2444 = vld [vmem:[#allocation2 + $0xea8] sm:$0xff]
    %v2445 = vld [vmem:[#allocation2 + $0xeb0] sm:$0xff]
    %v2446 = vld [vmem:[#allocation2 + $0xeb8] sm:$0xff]
    %v2447 = vld [vmem:[#allocation2 + $0xec0] sm:$0xff]
    %v2448 = vld [vmem:[#allocation2 + $0xec8] sm:$0xff]
    %v2449 = vld [vmem:[#allocation2 + $0xed0] sm:$0xff]
    %v2450 = vld [vmem:[#allocation2 + $0xed8] sm:$0xff]
    %v2451 = vld [vmem:[#allocation2 + $0xee0] sm:$0xff]
    %v2452 = vld [vmem:[#allocation2 + $0xee8] sm:$0xff]
    %v2453 = vld [vmem:[#allocation2 + $0xef0] sm:$0xff]
    %v2454 = vld [vmem:[#allocation2 + $0xef8] sm:$0xff]
    %v2455 = vld [vmem:[#allocation2 + $0xf00] sm:$0xff]
    %v2456 = vld [vmem:[#allocation2 + $0xf08] sm:$0xff]
    %v2457 = vld [vmem:[#allocation2 + $0xf10] sm:$0xff]
    %v2458 = vld [vmem:[#allocation2 + $0xf18] sm:$0xff]
    %v2459 = vld [vmem:[#allocation2 + $0xf20] sm:$0xff]
    %v2460 = vld [vmem:[#allocation2 + $0xf28] sm:$0xff]
    %v2461 = vld [vmem:[#allocation2 + $0xf30] sm:$0xff]
    %v2462 = vld [vmem:[#allocation2 + $0xf38] sm:$0xff]
    %v2463 = vld [vmem:[#allocation2 + $0xf40] sm:$0xff]
    %v2464 = vld [vmem:[#allocation2 + $0xf48] sm:$0xff]
    %v2465 = vld [vmem:[#allocation2 + $0xf50] sm:$0xff]
    %v2466 = vld [vmem:[#allocation2 + $0xf58] sm:$0xff]
    %v2467 = vld [vmem:[#allocation2 + $0xf60] sm:$0xff]
    %v2468 = vld [vmem:[#allocation2 + $0xf68] sm:$0xff]
    %v2469 = vld [vmem:[#allocation2 + $0xf70] sm:$0xff]
    %v2470 = vld [vmem:[#allocation2 + $0xf78] sm:$0xff]
    %v2471 = vld [vmem:[#allocation2 + $0xf80] sm:$0xff]
    %v2472 = vld [vmem:[#allocation2 + $0xf88] sm:$0xff]
    %v2473 = vld [vmem:[#allocation2 + $0xf90] sm:$0xff]
    %v2474 = vld [vmem:[#allocation2 + $0xf98] sm:$0xff]
    %v2475 = vld [vmem:[#allocation2 + $0xfa0] sm:$0xff]
    %v2476 = vld [vmem:[#allocation2 + $0xfa8] sm:$0xff]
    %v2477 = vld [vmem:[#allocation2 + $0xfb0] sm:$0xff]
    %v2478 = vld [vmem:[#allocation2 + $0xfb8] sm:$0xff]
    %v2479 = vld [vmem:[#allocation2 + $0xfc0] sm:$0xff]
    %v2480 = vld [vmem:[#allocation2 + $0xfc8] sm:$0xff]
    %v2481 = vld [vmem:[#allocation2 + $0xfd0] sm:$0xff]
    %v2482 = vld [vmem:[#allocation2 + $0xfd8] sm:$0xff]
    %v2483 = vld [vmem:[#allocation2 + $0xfe0] sm:$0xff]
    %v2484 = vld [vmem:[#allocation2 + $0xfe8] sm:$0xff]
    %v2485 = vld [vmem:[#allocation2 + $0xff0] sm:$0xff]
    %v2486 = vld [vmem:[#allocation2 + $0xff8] sm:$0xff]
    %v2487 = vld [vmem:[#allocation2 + $0x1000] sm:$0xff]
    %v2488 = vld [vmem:[#allocation2 + $0x1008] sm:$0xff]
    %v2489 = vld [vmem:[#allocation2 + $0x1010] sm:$0xff]
    %v2490 = vld [vmem:[#allocation2 + $0x1018] sm:$0xff]
    %v2491 = vld [vmem:[#allocation2 + $0x1020] sm:$0xff]
    %v2492 = vld [vmem:[#allocation2 + $0x1028] sm:$0xff]
    %v2493 = vld [vmem:[#allocation2 + $0x1030] sm:$0xff]
    %v2494 = vld [vmem:[#allocation2 + $0x1038] sm:$0xff]
    %v2495 = vld [vmem:[#allocation2 + $0x1040] sm:$0xff]
    %v2496 = vld [vmem:[#allocation2 + $0x1048] sm:$0xff]
    %v2497 = vld [vmem:[#allocation2 + $0x1050] sm:$0xff]
    %v2498 = vld [vmem:[#allocation2 + $0x1058] sm:$0xff]
    %v2499 = vld [vmem:[#allocation2 + $0x1060] sm:$0xff]
    %v2500 = vld [vmem:[#allocation2 + $0x1068] sm:$0xff]
    %v2501 = vld [vmem:[#allocation2 + $0x1070] sm:$0xff]
    %v2502 = vld [vmem:[#allocation2 + $0x1078] sm:$0xff]
    %v2503 = vld [vmem:[#allocation2 + $0x1080] sm:$0xff]
    %v2504 = vld [vmem:[#allocation2 + $0x1088] sm:$0xff]
    %v2505 = vld [vmem:[#allocation2 + $0x1090] sm:$0xff]
    %v2506 = vld [vmem:[#allocation2 + $0x1098] sm:$0xff]
    %v2507 = vld [vmem:[#allocation2 + $0x10a0] sm:$0xff]
    %v2508 = vld [vmem:[#allocation2 + $0x10a8] sm:$0xff]
    %v2509 = vld [vmem:[#allocation2 + $0x10b0] sm:$0xff]
    %v2510 = vld [vmem:[#allocation2 + $0x10b8] sm:$0xff]
    %v2511 = vld [vmem:[#allocation2 + $0x10c0] sm:$0xff]
    %v2512 = vld [vmem:[#allocation2 + $0x10c8] sm:$0xff]
    %v2513 = vld [vmem:[#allocation2 + $0x10d0] sm:$0xff]
    %v2514 = vld [vmem:[#allocation2 + $0x10d8] sm:$0xff]
    %v2515 = vld [vmem:[#allocation2 + $0x10e0] sm:$0xff]
    %v2516 = vld [vmem:[#allocation2 + $0x10e8] sm:$0xff]
    %v2517 = vld [vmem:[#allocation2 + $0x10f0] sm:$0xff]
    %v2518 = vld [vmem:[#allocation2 + $0x10f8] sm:$0xff]
    %v2519 = vld [vmem:[#allocation2 + $0x1100] sm:$0xff]
    %v2520 = vld [vmem:[#allocation2 + $0x1108] sm:$0xff]
    %v2521 = vld [vmem:[#allocation2 + $0x1110] sm:$0xff]
    %v2522 = vld [vmem:[#allocation2 + $0x1118] sm:$0xff]
    %v2523 = vld [vmem:[#allocation2 + $0x1120] sm:$0xff]
    %v2524 = vld [vmem:[#allocation2 + $0x1128] sm:$0xff]
    %v2525 = vld [vmem:[#allocation2 + $0x1130] sm:$0xff]
    %v2526 = vld [vmem:[#allocation2 + $0x1138] sm:$0xff]
    %v2527 = vld [vmem:[#allocation2 + $0x1140] sm:$0xff]
    %v2528 = vld [vmem:[#allocation2 + $0x1148] sm:$0xff]
    %v2529 = vld [vmem:[#allocation2 + $0x1150] sm:$0xff]
    %v2530 = vld [vmem:[#allocation2 + $0x1158] sm:$0xff]
    %v2531 = vld [vmem:[#allocation2 + $0x1160] sm:$0xff]
    %v2532 = vld [vmem:[#allocation2 + $0x1168] sm:$0xff]
    %v2533 = vld [vmem:[#allocation2 + $0x1170] sm:$0xff]
    %v2534 = vld [vmem:[#allocation2 + $0x1178] sm:$0xff]
    %v2535 = vld [vmem:[#allocation2 + $0x1180] sm:$0xff]
    %v2536 = vld [vmem:[#allocation2 + $0x1188] sm:$0xff]
    %v2537 = vld [vmem:[#allocation2 + $0x1190] sm:$0xff]
    %v2538 = vld [vmem:[#allocation2 + $0x1198] sm:$0xff]
    %v2539 = vld [vmem:[#allocation2 + $0x11a0] sm:$0xff]
    %v2540 = vld [vmem:[#allocation2 + $0x11a8] sm:$0xff]
    %v2541 = vld [vmem:[#allocation2 + $0x11b0] sm:$0xff]
    %v2542 = vld [vmem:[#allocation2 + $0x11b8] sm:$0xff]
    %v2543 = vld [vmem:[#allocation2 + $0x11c0] sm:$0xff]
    %v2544 = vld [vmem:[#allocation2 + $0x11c8] sm:$0xff]
    %v2545 = vld [vmem:[#allocation2 + $0x11d0] sm:$0xff]
    %v2546 = vld [vmem:[#allocation2 + $0x11d8] sm:$0xff]
    %v2547 = vld [vmem:[#allocation2 + $0x11e0] sm:$0xff]
    %v2548 = vld [vmem:[#allocation2 + $0x11e8] sm:$0xff]
    %v2549 = vld [vmem:[#allocation2 + $0x11f0] sm:$0xff]
    %v2550 = vld [vmem:[#allocation2 + $0x11f8] sm:$0xff]
    %v2551 = vld [vmem:[#allocation2 + $0x1200] sm:$0xff]
    %v2552 = vld [vmem:[#allocation2 + $0x1208] sm:$0xff]
    %v2553 = vld [vmem:[#allocation2 + $0x1210] sm:$0xff]
    %v2554 = vld [vmem:[#allocation2 + $0x1218] sm:$0xff]
    %v2555 = vld [vmem:[#allocation2 + $0x1220] sm:$0xff]
    %v2556 = vld [vmem:[#allocation2 + $0x1228] sm:$0xff]
    %v2557 = vld [vmem:[#allocation2 + $0x1230] sm:$0xff]
    %v2558 = vld [vmem:[#allocation2 + $0x1238] sm:$0xff]
    %v2559 = vld [vmem:[#allocation2 + $0x1240] sm:$0xff]
    %v2560 = vld [vmem:[#allocation2 + $0x1248] sm:$0xff]
    %v2561 = vld [vmem:[#allocation2 + $0x1250] sm:$0xff]
    %v2562 = vld [vmem:[#allocation2 + $0x1258] sm:$0xff]
    %v2563 = vld [vmem:[#allocation2 + $0x1260] sm:$0xff]
    %v2564 = vld [vmem:[#allocation2 + $0x1268] sm:$0xff]
    %v2565 = vld [vmem:[#allocation2 + $0x1270] sm:$0xff]
    %v2566 = vld [vmem:[#allocation2 + $0x1278] sm:$0xff]
    %v2567 = vld [vmem:[#allocation2 + $0x1280] sm:$0xff]
    %v2568 = vld [vmem:[#allocation2 + $0x1288] sm:$0xff]
    %v2569 = vld [vmem:[#allocation2 + $0x1290] sm:$0xff]
    %v2570 = vld [vmem:[#allocation2 + $0x1298] sm:$0xff]
    %v2571 = vld [vmem:[#allocation2 + $0x12a0] sm:$0xff]
    %v2572 = vld [vmem:[#allocation2 + $0x12a8] sm:$0xff]
    %v2573 = vld [vmem:[#allocation2 + $0x12b0] sm:$0xff]
    %v2574 = vld [vmem:[#allocation2 + $0x12b8] sm:$0xff]
    %v2575 = vld [vmem:[#allocation2 + $0x12c0] sm:$0xff]
    %v2576 = vld [vmem:[#allocation2 + $0x12c8] sm:$0xff]
    %v2577 = vld [vmem:[#allocation2 + $0x12d0] sm:$0xff]
    %v2578 = vld [vmem:[#allocation2 + $0x12d8] sm:$0xff]
    %v2579 = vld [vmem:[#allocation2 + $0x12e0] sm:$0xff]
    %v2580 = vld [vmem:[#allocation2 + $0x12e8] sm:$0xff]
    %v2581 = vld [vmem:[#allocation2 + $0x12f0] sm:$0xff]
    %v2582 = vld [vmem:[#allocation2 + $0x12f8] sm:$0xff]
    %v2583 = vld [vmem:[#allocation2 + $0x1300] sm:$0xff]
    %v2584 = vld [vmem:[#allocation2 + $0x1308] sm:$0xff]
    %v2585 = vld [vmem:[#allocation2 + $0x1310] sm:$0xff]
    %v2586 = vld [vmem:[#allocation2 + $0x1318] sm:$0xff]
    %v2587 = vld [vmem:[#allocation2 + $0x1320] sm:$0xff]
    %v2588 = vld [vmem:[#allocation2 + $0x1328] sm:$0xff]
    %v2589 = vld [vmem:[#allocation2 + $0x1330] sm:$0xff]
    %v2590 = vld [vmem:[#allocation2 + $0x1338] sm:$0xff]
    %v2591 = vld [vmem:[#allocation2 + $0x1340] sm:$0xff]
    %v2592 = vld [vmem:[#allocation2 + $0x1348] sm:$0xff]
    %v2593 = vld [vmem:[#allocation2 + $0x1350] sm:$0xff]
    %v2594 = vld [vmem:[#allocation2 + $0x1358] sm:$0xff]
    %v2595 = vld [vmem:[#allocation2 + $0x1360] sm:$0xff]
    %v2596 = vld [vmem:[#allocation2 + $0x1368] sm:$0xff]
    %v2597 = vld [vmem:[#allocation2 + $0x1370] sm:$0xff]
    %v2598 = vld [vmem:[#allocation2 + $0x1378] sm:$0xff]
    %v2599 = vld [vmem:[#allocation2 + $0x1380] sm:$0xff]
    %v2600 = vld [vmem:[#allocation2 + $0x1388] sm:$0xff]
    %v2601 = vld [vmem:[#allocation2 + $0x1390] sm:$0xff]
    %v2602 = vld [vmem:[#allocation2 + $0x1398] sm:$0xff]
    %v2603 = vld [vmem:[#allocation2 + $0x13a0] sm:$0xff]
    %v2604 = vld [vmem:[#allocation2 + $0x13a8] sm:$0xff]
    %v2605 = vld [vmem:[#allocation2 + $0x13b0] sm:$0xff]
    %v2606 = vld [vmem:[#allocation2 + $0x13b8] sm:$0xff]
    %v2607 = vld [vmem:[#allocation2 + $0x13c0] sm:$0xff]
    %v2608 = vld [vmem:[#allocation2 + $0x13c8] sm:$0xff]
    %v2609 = vld [vmem:[#allocation2 + $0x13d0] sm:$0xff]
    %v2610 = vld [vmem:[#allocation2 + $0x13d8] sm:$0xff]
    %v2611 = vld [vmem:[#allocation2 + $0x13e0] sm:$0xff]
    %v2612 = vld [vmem:[#allocation2 + $0x13e8] sm:$0xff]
    %v2613 = vld [vmem:[#allocation2 + $0x13f0] sm:$0xff]
    %v2614 = vld [vmem:[#allocation2 + $0x13f8] sm:$0xff]
    %v2615 = vld [vmem:[#allocation2 + $0x1400] sm:$0xff]
    %v2616 = vld [vmem:[#allocation2 + $0x1408] sm:$0xff]
    %v2617 = vld [vmem:[#allocation2 + $0x1410] sm:$0xff]
    %v2618 = vld [vmem:[#allocation2 + $0x1418] sm:$0xff]
    %v2619 = vld [vmem:[#allocation2 + $0x1420] sm:$0xff]
    %v2620 = vld [vmem:[#allocation2 + $0x1428] sm:$0xff]
    %v2621 = vld [vmem:[#allocation2 + $0x1430] sm:$0xff]
    %v2622 = vld [vmem:[#allocation2 + $0x1438] sm:$0xff]
    %v2623 = vld [vmem:[#allocation2 + $0x1440] sm:$0xff]
    %v2624 = vld [vmem:[#allocation2 + $0x1448] sm:$0xff]
    %v2625 = vld [vmem:[#allocation2 + $0x1450] sm:$0xff]
    %v2626 = vld [vmem:[#allocation2 + $0x1458] sm:$0xff]
    %v2627 = vld [vmem:[#allocation2 + $0x1460] sm:$0xff]
    %v2628 = vld [vmem:[#allocation2 + $0x1468] sm:$0xff]
    %v2629 = vld [vmem:[#allocation2 + $0x1470] sm:$0xff]
    %v2630 = vld [vmem:[#allocation2 + $0x1478] sm:$0xff]
    %v2631 = vld [vmem:[#allocation2 + $0x1480] sm:$0xff]
    %v2632 = vld [vmem:[#allocation2 + $0x1488] sm:$0xff]
    %v2633 = vld [vmem:[#allocation2 + $0x1490] sm:$0xff]
    %v2634 = vld [vmem:[#allocation2 + $0x1498] sm:$0xff]
    %v2635 = vld [vmem:[#allocation2 + $0x14a0] sm:$0xff]
    %v2636 = vld [vmem:[#allocation2 + $0x14a8] sm:$0xff]
    %v2637 = vld [vmem:[#allocation2 + $0x14b0] sm:$0xff]
    %v2638 = vld [vmem:[#allocation2 + $0x14b8] sm:$0xff]
    %v2639 = vld [vmem:[#allocation2 + $0x14c0] sm:$0xff]
    %v2640 = vld [vmem:[#allocation2 + $0x14c8] sm:$0xff]
    %v2641 = vld [vmem:[#allocation2 + $0x14d0] sm:$0xff]
    %v2642 = vld [vmem:[#allocation2 + $0x14d8] sm:$0xff]
    %v2643 = vld [vmem:[#allocation2 + $0x14e0] sm:$0xff]
    %v2644 = vld [vmem:[#allocation2 + $0x14e8] sm:$0xff]
    %v2645 = vld [vmem:[#allocation2 + $0x14f0] sm:$0xff]
    %v2646 = vld [vmem:[#allocation2 + $0x14f8] sm:$0xff]
    %v2647 = vld [vmem:[#allocation2 + $0x1500] sm:$0xff]
    %v2648 = vld [vmem:[#allocation2 + $0x1508] sm:$0xff]
    %v2649 = vld [vmem:[#allocation2 + $0x1510] sm:$0xff]
    %v2650 = vld [vmem:[#allocation2 + $0x1518] sm:$0xff]
    %v2651 = vld [vmem:[#allocation2 + $0x1520] sm:$0xff]
    %v2652 = vld [vmem:[#allocation2 + $0x1528] sm:$0xff]
    %v2653 = vld [vmem:[#allocation2 + $0x1530] sm:$0xff]
    %v2654 = vld [vmem:[#allocation2 + $0x1538] sm:$0xff]
    %v2655 = vld [vmem:[#allocation2 + $0x1540] sm:$0xff]
    %v2656 = vld [vmem:[#allocation2 + $0x1548] sm:$0xff]
    %v2657 = vld [vmem:[#allocation2 + $0x1550] sm:$0xff]
    %v2658 = vld [vmem:[#allocation2 + $0x1558] sm:$0xff]
    %v2659 = vld [vmem:[#allocation2 + $0x1560] sm:$0xff]
    %v2660 = vld [vmem:[#allocation2 + $0x1568] sm:$0xff]
    %v2661 = vld [vmem:[#allocation2 + $0x1570] sm:$0xff]
    %v2662 = vld [vmem:[#allocation2 + $0x1578] sm:$0xff]
    %v2663 = vld [vmem:[#allocation2 + $0x1580] sm:$0xff]
    %v2664 = vld [vmem:[#allocation2 + $0x1588] sm:$0xff]
    %v2665 = vld [vmem:[#allocation2 + $0x1590] sm:$0xff]
    %v2666 = vld [vmem:[#allocation2 + $0x1598] sm:$0xff]
    %v2667 = vld [vmem:[#allocation2 + $0x15a0] sm:$0xff]
    %v2668 = vld [vmem:[#allocation2 + $0x15a8] sm:$0xff]
    %v2669 = vld [vmem:[#allocation2 + $0x15b0] sm:$0xff]
    %v2670 = vld [vmem:[#allocation2 + $0x15b8] sm:$0xff]
    %v2671 = vld [vmem:[#allocation2 + $0x15c0] sm:$0xff]
    %v2672 = vld [vmem:[#allocation2 + $0x15c8] sm:$0xff]
    %v2673 = vld [vmem:[#allocation2 + $0x15d0] sm:$0xff]
    %v2674 = vld [vmem:[#allocation2 + $0x15d8] sm:$0xff]
    %v2675 = vld [vmem:[#allocation2 + $0x15e0] sm:$0xff]
    %v2676 = vld [vmem:[#allocation2 + $0x15e8] sm:$0xff]
    %v2677 = vld [vmem:[#allocation2 + $0x15f0] sm:$0xff]
    %v2678 = vld [vmem:[#allocation2 + $0x15f8] sm:$0xff]
    %v2679 = vld [vmem:[#allocation2 + $0x1600] sm:$0xff]
    %v2680 = vld [vmem:[#allocation2 + $0x1608] sm:$0xff]
    %v2681 = vld [vmem:[#allocation2 + $0x1610] sm:$0xff]
    %v2682 = vld [vmem:[#allocation2 + $0x1618] sm:$0xff]
    %v2683 = vld [vmem:[#allocation2 + $0x1620] sm:$0xff]
    %v2684 = vld [vmem:[#allocation2 + $0x1628] sm:$0xff]
    %v2685 = vld [vmem:[#allocation2 + $0x1630] sm:$0xff]
    %v2686 = vld [vmem:[#allocation2 + $0x1638] sm:$0xff]
    %v2687 = vld [vmem:[#allocation2 + $0x1640] sm:$0xff]
    %v2688 = vld [vmem:[#allocation2 + $0x1648] sm:$0xff]
    %v2689 = vld [vmem:[#allocation2 + $0x1650] sm:$0xff]
    %v2690 = vld [vmem:[#allocation2 + $0x1658] sm:$0xff]
    %v2691 = vld [vmem:[#allocation2 + $0x1660] sm:$0xff]
    %v2692 = vld [vmem:[#allocation2 + $0x1668] sm:$0xff]
    %v2693 = vld [vmem:[#allocation2 + $0x1670] sm:$0xff]
    %v2694 = vld [vmem:[#allocation2 + $0x1678] sm:$0xff]
    %v2695 = vld [vmem:[#allocation2 + $0x1680] sm:$0xff]
    %v2696 = vld [vmem:[#allocation2 + $0x1688] sm:$0xff]
    %v2697 = vld [vmem:[#allocation2 + $0x1690] sm:$0xff]
    %v2698 = vld [vmem:[#allocation2 + $0x1698] sm:$0xff]
    %v2699 = vld [vmem:[#allocation2 + $0x16a0] sm:$0xff]
    %v2700 = vld [vmem:[#allocation2 + $0x16a8] sm:$0xff]
    %v2701 = vld [vmem:[#allocation2 + $0x16b0] sm:$0xff]
    %v2702 = vld [vmem:[#allocation2 + $0x16b8] sm:$0xff]
    %v2703 = vld [vmem:[#allocation15] sm:$0xff]
    %v2704 = vld [vmem:[#allocation15 + $0x8] sm:$0x1f]
    %v2707 = vlaneseq
    %v2708 = vshrl.u32 %v2707, 7
    %v2709 = vsub.s32 0, %v2708
    %v2710 = vrot.slane %v2703, %v2709
    %v2711 = vlaneseq
    %v2712 = vshrl.u32 %v2711, 7
    %v2713 = vsub.s32 1, %v2712
    %v2714 = vrot.slane %v2703, %v2713
    %v2715 = vlaneseq
    %v2716 = vshrl.u32 %v2715, 7
    %v2717 = vsub.s32 2, %v2716
    %v2718 = vrot.slane %v2703, %v2717
    %v2719 = vlaneseq
    %v2720 = vshrl.u32 %v2719, 7
    %v2721 = vsub.s32 3, %v2720
    %v2722 = vrot.slane %v2703, %v2721
    %v2723 = vlaneseq
    %v2724 = vshrl.u32 %v2723, 7
    %v2725 = vsub.s32 4, %v2724
    %v2726 = vrot.slane %v2703, %v2725
    %v2727 = vlaneseq
    %v2728 = vshrl.u32 %v2727, 7
    %v2729 = vsub.s32 5, %v2728
    %v2730 = vrot.slane %v2703, %v2729
    %v2731 = vlaneseq
    %v2732 = vshrl.u32 %v2731, 7
    %v2733 = vsub.s32 6, %v2732
    %v2734 = vrot.slane %v2703, %v2733
    %v2735 = vlaneseq
    %v2736 = vshrl.u32 %v2735, 7
    %v2737 = vsub.s32 7, %v2736
    %v2738 = vrot.slane %v2703, %v2737
    %v2739 = vlaneseq
    %v2740 = vshrl.u32 %v2739, 7
    %v2741 = vsub.s32 0, %v2740
    %v2742 = vrot.slane %v2704, %v2741
    %v2743 = vlaneseq
    %v2744 = vshrl.u32 %v2743, 7
    %v2745 = vsub.s32 1, %v2744
    %v2746 = vrot.slane %v2704, %v2745
    %v2747 = vlaneseq
    %v2748 = vshrl.u32 %v2747, 7
    %v2749 = vsub.s32 2, %v2748
    %v2750 = vrot.slane %v2704, %v2749
    %v2751 = vlaneseq
    %v2752 = vshrl.u32 %v2751, 7
    %v2753 = vsub.s32 3, %v2752
    %v2754 = vrot.slane %v2704, %v2753
    %v2755 = vlaneseq
    %v2756 = vshrl.u32 %v2755, 7
    %v2757 = vsub.s32 4, %v2756
    %v2758 = vrot.slane %v2704, %v2757
    %2772 = vmatprep.subr.bf16.mxu0 %v1976
    %2773 = vmatpush1.bf16.msra.mxu0 %v1975
    %2774 = vmatprep.subr.bf16.mxu0 %v1989
    %2775 = vmatpush1.bf16.msra.mxu0 %v1988
    %2776 = vmatprep.subr.bf16.mxu0 %v2002
    %2777 = vmatpush1.bf16.msra.mxu0 %v2001
    %2778 = vmatprep.subr.bf16.mxu0 %v2015
    %2779 = vmatpush1.bf16.msra.mxu0 %v2014
    %2780 = vmatprep.subr.bf16.mxu0 %v2028
    %2781 = vmatpush1.bf16.msra.mxu0 %v2027
    %2782 = vmatprep.subr.bf16.mxu0 %v2041
    %2783 = vmatpush1.bf16.msra.mxu0 %v2040
    %2784 = vmatprep.subr.bf16.mxu0 %v2054
    %2785 = vmatpush1.bf16.msra.mxu0 %v2053
    %2786 = vmatprep.subr.bf16.mxu0 %v2067
    %2787 = vmatpush1.bf16.msra.mxu0 %v2066
    %2788 = vmatprep.subr.bf16.mxu0 %v2080
    %2789 = vmatpush1.bf16.msra.mxu0 %v2079
    %2790 = vmatprep.subr.bf16.mxu0 %v2093
    %2791 = vmatpush1.bf16.msra.mxu0 %v2092
    %2792 = vmatprep.subr.bf16.mxu0 %v2106
    %2793 = vmatpush1.bf16.msra.mxu0 %v2105
    %2794 = vmatprep.subr.bf16.mxu0 %v2119
    %2795 = vmatpush1.bf16.msra.mxu0 %v2118
    %2796 = vmatprep.subr.bf16.mxu0 %v2132
    %2797 = vmatpush1.bf16.msra.mxu0 %v2131
    %2798 = vmatprep.subr.bf16.mxu0 %v2145
    %2799 = vmatpush1.bf16.msra.mxu0 %v2144
    %2800 = vmatprep.subr.bf16.mxu0 %v2158
    %2801 = vmatpush1.bf16.msra.mxu0 %v2157
    %2802 = vmatprep.subr.bf16.mxu0 %v2171
    %2803 = vmatpush1.bf16.msra.mxu0 %v2170
    %2804 = vmatprep.mubr.bf16.mxu0 %v1962
    %2805 = vmatmul.mubr.bf16.gmra.mrb[0].mxu0 %v1961
    %v2806 = vpop.f32.mrb[0].mxu0
    %v2807 = vadd.f32 %v2710, %v2806
    %v2808 = vpop.f32.mrb[0].mxu0
    %v2809 = vadd.f32 %v2714, %v2808
    %v2810 = vpop.f32.mrb[0].mxu0
    %v2811 = vpop.f32.mrb[0].mxu0
    %2812 = vdwg.mxu0
    %2813 = vmatprep.subr.bf16.mxu0 %v2184
    %2814 = vmatpush1.bf16.msra.mxu0 %v2183
    %2815 = vmatprep.subr.bf16.mxu0 %v2197
    %2816 = vmatpush1.bf16.msra.mxu0 %v2196
    %2817 = vmatprep.subr.bf16.mxu0 %v2210
    %2818 = vmatpush1.bf16.msra.mxu0 %v2209
    %2819 = vmatprep.subr.bf16.mxu0 %v2223
    %2820 = vmatpush1.bf16.msra.mxu0 %v2222
    %2821 = vmatprep.subr.bf16.mxu0 %v2236
    %2822 = vmatpush1.bf16.msra.mxu0 %v2235
    %2823 = vmatprep.subr.bf16.mxu0 %v2249
    %2824 = vmatpush1.bf16.msra.mxu0 %v2248
    %2825 = vmatprep.subr.bf16.mxu0 %v2262
    %2826 = vmatpush1.bf16.msra.mxu0 %v2261
    %2827 = vmatprep.subr.bf16.mxu0 %v2275
    %2828 = vmatpush1.bf16.msra.mxu0 %v2274
    %2829 = vmatprep.subr.bf16.mxu0 %v2288
    %2830 = vmatpush1.bf16.msra.mxu0 %v2287
    %2831 = vmatprep.subr.bf16.mxu0 %v2301
    %2832 = vmatpush1.bf16.msra.mxu0 %v2300
    %2833 = vmatprep.subr.bf16.mxu0 %v2314
    %2834 = vmatpush1.bf16.msra.mxu0 %v2313
    %2835 = vmatprep.subr.bf16.mxu0 %v2327
    %2836 = vmatpush1.bf16.msra.mxu0 %v2326
    %2837 = vmatprep.subr.bf16.mxu0 %v2340
    %2838 = vmatpush1.bf16.msra.mxu0 %v2339
    %2839 = vmatprep.subr.bf16.mxu0 %v2353
    %2840 = vmatpush1.bf16.msra.mxu0 %v2352
    %2841 = vmatprep.subr.bf16.mxu0 %v2366
    %2842 = vmatpush1.bf16.msra.mxu0 %v2365
    %2843 = vmatprep.subr.bf16.mxu0 %v2379
    %2844 = vmatpush1.bf16.msra.mxu0 %v2378
    %2845 = vmatprep.mubr.bf16.mxu0 %v1964
    %2846 = vmatmul.mubr.bf16.gmra.mrb[0].mxu0 %v1963
    %v2847 = vpop.f32.mrb[0].mxu0
    %v2848 = vadd.f32 %v2807, %v2847
    %v2849 = vpop.f32.mrb[0].mxu0
    %v2850 = vadd.f32 %v2809, %v2849
    %v2851 = vpop.f32.mrb[0].mxu0
    %v2852 = vpop.f32.mrb[0].mxu0
    %2853 = vdwg.mxu0
    %2854 = vmatprep.subr.bf16.mxu0 %v2392
    %2855 = vmatpush1.bf16.msra.mxu0 %v2391
    %2856 = vmatprep.subr.bf16.mxu0 %v2405
    %2857 = vmatpush1.bf16.msra.mxu0 %v2404
    %2858 = vmatprep.subr.bf16.mxu0 %v2418
    %2859 = vmatpush1.bf16.msra.mxu0 %v2417
    %2860 = vmatprep.subr.bf16.mxu0 %v2431
    %2861 = vmatpush1.bf16.msra.mxu0 %v2430
    %2862 = vmatprep.subr.bf16.mxu0 %v2444
    %2863 = vmatpush1.bf16.msra.mxu0 %v2443
    %2864 = vmatprep.subr.bf16.mxu0 %v2457
    %2865 = vmatpush1.bf16.msra.mxu0 %v2456
    %2866 = vmatprep.subr.bf16.mxu0 %v2470
    %2867 = vmatpush1.bf16.msra.mxu0 %v2469
    %2868 = vmatprep.subr.bf16.mxu0 %v2483
    %2869 = vmatpush1.bf16.msra.mxu0 %v2482
    %2870 = vmatprep.subr.bf16.mxu0 %v2496
    %2871 = vmatpush1.bf16.msra.mxu0 %v2495
    %2872 = vmatprep.subr.bf16.mxu0 %v2509
    %2873 = vmatpush1.bf16.msra.mxu0 %v2508
    %2874 = vmatprep.subr.bf16.mxu0 %v2522
    %2875 = vmatpush1.bf16.msra.mxu0 %v2521
    %2876 = vmatprep.subr.bf16.mxu0 %v2535
    %2877 = vmatpush1.bf16.msra.mxu0 %v2534
    %2878 = vmatprep.subr.bf16.mxu0 %v2548
    %2879 = vmatpush1.bf16.msra.mxu0 %v2547
    %2880 = vmatprep.subr.bf16.mxu0 %v2561
    %2881 = vmatpush1.bf16.msra.mxu0 %v2560
    %2882 = vmatprep.subr.bf16.mxu0 %v2574
    %2883 = vmatpush1.bf16.msra.mxu0 %v2573
    %2884 = vmatprep.subr.bf16.mxu0 %v2587
    %2885 = vmatpush1.bf16.msra.mxu0 %v2586
    %2886 = vmatprep.mubr.bf16.mxu0 %v1966
    %2887 = vmatmul.mubr.bf16.gmra.mrb[0].mxu0 %v1965
    %v2888 = vpop.f32.mrb[0].mxu0
    %v2889 = vadd.f32 %v2848, %v2888
    %v2890 = vpop.f32.mrb[0].mxu0
    %v2891 = vadd.f32 %v2850, %v2890
    %v2892 = vpop.f32.mrb[0].mxu0
    %v2893 = vpop.f32.mrb[0].mxu0
    %2894 = vdwg.mxu0
    %2895 = vmatprep.subr.bf16.mxu0 %v2600
    %2896 = vmatpush1.bf16.msra.mxu0 %v2599
    %2897 = vmatprep.subr.bf16.mxu0 %v2613
    %2898 = vmatpush1.bf16.msra.mxu0 %v2612
    %2899 = vmatprep.subr.bf16.mxu0 %v2626
    %2900 = vmatpush1.bf16.msra.mxu0 %v2625
    %2901 = vmatprep.subr.bf16.mxu0 %v2639
    %2902 = vmatpush1.bf16.msra.mxu0 %v2638
    %2903 = vmatprep.subr.bf16.mxu0 %v2652
    %2904 = vmatpush1.bf16.msra.mxu0 %v2651
    %2905 = vmatprep.subr.bf16.mxu0 %v2665
    %2906 = vmatpush1.bf16.msra.mxu0 %v2664
    %2907 = vmatprep.subr.bf16.mxu0 %v2678
    %2908 = vmatpush1.bf16.msra.mxu0 %v2677
    %2909 = vmatprep.subr.bf16.mxu0 %v2691
    %2910 = vmatpush1.bf16.msra.mxu0 %v2690
    %2911 = vmatprep.subr.bf16.mxu0 0
    %2912 = vmatpush1.bf16.msra.mxu0 0
    %2913 = vmatprep.subr.bf16.mxu0 0
    %2914 = vmatpush1.bf16.msra.mxu0 0
    %2915 = vmatprep.subr.bf16.mxu0 0
    %2916 = vmatpush1.bf16.msra.mxu0 0
    %2917 = vmatprep.subr.bf16.mxu0 0
    %2918 = vmatpush1.bf16.msra.mxu0 0
    %2919 = vmatprep.subr.bf16.mxu0 0
    %2920 = vmatpush1.bf16.msra.mxu0 0
    %2921 = vmatprep.subr.bf16.mxu0 0
    %2922 = vmatpush1.bf16.msra.mxu0 0
    %2923 = vmatprep.subr.bf16.mxu0 0
    %2924 = vmatpush1.bf16.msra.mxu0 0
    %2925 = vmatprep.subr.bf16.mxu0 0
    %2926 = vmatpush1.bf16.msra.mxu0 0
    %2927 = vmatprep.mubr.bf16.mxu0 0
    %2928 = vmatmul.mubr.bf16.gmra.mrb[0].mxu0 %v1967
    %v2929 = vpop.f32.mrb[0].mxu0
    %v2930 = vadd.f32 %v2889, %v2929
    %v2931 = vpop.f32.mrb[0].mxu0
    %v2932 = vadd.f32 %v2891, %v2931
    %v2933 = vpop.f32.mrb[0].mxu0
    %v2934 = vpop.f32.mrb[0].mxu0
    %2935 = vdwg.mxu0
    %2936 = vmatprep.subr.bf16.mxu0 %v1978
    %2937 = vmatpush1.bf16.msra.mxu0 %v1977
    %2938 = vmatprep.subr.bf16.mxu0 %v1991
    %2939 = vmatpush1.bf16.msra.mxu0 %v1990
    %2940 = vmatprep.subr.bf16.mxu0 %v2004
    %2941 = vmatpush1.bf16.msra.mxu0 %v2003
    %2942 = vmatprep.subr.bf16.mxu0 %v2017
    %2943 = vmatpush1.bf16.msra.mxu0 %v2016
    %2944 = vmatprep.subr.bf16.mxu0 %v2030
    %2945 = vmatpush1.bf16.msra.mxu0 %v2029
    %2946 = vmatprep.subr.bf16.mxu0 %v2043
    %2947 = vmatpush1.bf16.msra.mxu0 %v2042
    %2948 = vmatprep.subr.bf16.mxu0 %v2056
    %2949 = vmatpush1.bf16.msra.mxu0 %v2055
    %2950 = vmatprep.subr.bf16.mxu0 %v2069
    %2951 = vmatpush1.bf16.msra.mxu0 %v2068
    %2952 = vmatprep.subr.bf16.mxu0 %v2082
    %2953 = vmatpush1.bf16.msra.mxu0 %v2081
    %2954 = vmatprep.subr.bf16.mxu0 %v2095
    %2955 = vmatpush1.bf16.msra.mxu0 %v2094
    %2956 = vmatprep.subr.bf16.mxu0 %v2108
    %2957 = vmatpush1.bf16.msra.mxu0 %v2107
    %2958 = vmatprep.subr.bf16.mxu0 %v2121
    %2959 = vmatpush1.bf16.msra.mxu0 %v2120
    %2960 = vmatprep.subr.bf16.mxu0 %v2134
    %2961 = vmatpush1.bf16.msra.mxu0 %v2133
    %2962 = vmatprep.subr.bf16.mxu0 %v2147
    %2963 = vmatpush1.bf16.msra.mxu0 %v2146
    %2964 = vmatprep.subr.bf16.mxu0 %v2160
    %2965 = vmatpush1.bf16.msra.mxu0 %v2159
    %2966 = vmatprep.subr.bf16.mxu0 %v2173
    %2967 = vmatpush1.bf16.msra.mxu0 %v2172
    %2968 = vmatprep.mubr.bf16.mxu0 %v1962
    %2969 = vmatmul.mubr.bf16.gmra.mrb[0].mxu0 %v1961
    %v2970 = vpop.f32.mrb[0].mxu0
    %v2971 = vadd.f32 %v2718, %v2970
    %v2972 = vpop.f32.mrb[0].mxu0
    %v2973 = vadd.f32 %v2722, %v2972
    %v2974 = vpop.f32.mrb[0].mxu0
    %v2975 = vpop.f32.mrb[0].mxu0
    %2976 = vdwg.mxu0
    %2977 = vmatprep.subr.bf16.mxu0 %v2186
    %2978 = vmatpush1.bf16.msra.mxu0 %v2185
    %2979 = vmatprep.subr.bf16.mxu0 %v2199
    %2980 = vmatpush1.bf16.msra.mxu0 %v2198
    %2981 = vmatprep.subr.bf16.mxu0 %v2212
    %2982 = vmatpush1.bf16.msra.mxu0 %v2211
    %2983 = vmatprep.subr.bf16.mxu0 %v2225
    %2984 = vmatpush1.bf16.msra.mxu0 %v2224
    %2985 = vmatprep.subr.bf16.mxu0 %v2238
    %2986 = vmatpush1.bf16.msra.mxu0 %v2237
    %2987 = vmatprep.subr.bf16.mxu0 %v2251
    %2988 = vmatpush1.bf16.msra.mxu0 %v2250
    %2989 = vmatprep.subr.bf16.mxu0 %v2264
    %2990 = vmatpush1.bf16.msra.mxu0 %v2263
    %2991 = vmatprep.subr.bf16.mxu0 %v2277
    %2992 = vmatpush1.bf16.msra.mxu0 %v2276
    %2993 = vmatprep.subr.bf16.mxu0 %v2290
    %2994 = vmatpush1.bf16.msra.mxu0 %v2289
    %2995 = vmatprep.subr.bf16.mxu0 %v2303
    %2996 = vmatpush1.bf16.msra.mxu0 %v2302
    %2997 = vmatprep.subr.bf16.mxu0 %v2316
    %2998 = vmatpush1.bf16.msra.mxu0 %v2315
    %2999 = vmatprep.subr.bf16.mxu0 %v2329
    %3000 = vmatpush1.bf16.msra.mxu0 %v2328
    %3001 = vmatprep.subr.bf16.mxu0 %v2342
    %3002 = vmatpush1.bf16.msra.mxu0 %v2341
    %3003 = vmatprep.subr.bf16.mxu0 %v2355
    %3004 = vmatpush1.bf16.msra.mxu0 %v2354
    %3005 = vmatprep.subr.bf16.mxu0 %v2368
    %3006 = vmatpush1.bf16.msra.mxu0 %v2367
    %3007 = vmatprep.subr.bf16.mxu0 %v2381
    %3008 = vmatpush1.bf16.msra.mxu0 %v2380
    %3009 = vmatprep.mubr.bf16.mxu0 %v1964
    %3010 = vmatmul.mubr.bf16.gmra.mrb[0].mxu0 %v1963
    %v3011 = vpop.f32.mrb[0].mxu0
    %v3012 = vadd.f32 %v2971, %v3011
    %v3013 = vpop.f32.mrb[0].mxu0
    %v3014 = vadd.f32 %v2973, %v3013
    %v3015 = vpop.f32.mrb[0].mxu0
    %v3016 = vpop.f32.mrb[0].mxu0
    %3017 = vdwg.mxu0
    %3018 = vmatprep.subr.bf16.mxu0 %v2394
    %3019 = vmatpush1.bf16.msra.mxu0 %v2393
    %3020 = vmatprep.subr.bf16.mxu0 %v2407
    %3021 = vmatpush1.bf16.msra.mxu0 %v2406
    %3022 = vmatprep.subr.bf16.mxu0 %v2420
    %3023 = vmatpush1.bf16.msra.mxu0 %v2419
    %3024 = vmatprep.subr.bf16.mxu0 %v2433
    %3025 = vmatpush1.bf16.msra.mxu0 %v2432
    %3026 = vmatprep.subr.bf16.mxu0 %v2446
    %3027 = vmatpush1.bf16.msra.mxu0 %v2445
    %3028 = vmatprep.subr.bf16.mxu0 %v2459
    %3029 = vmatpush1.bf16.msra.mxu0 %v2458
    %3030 = vmatprep.subr.bf16.mxu0 %v2472
    %3031 = vmatpush1.bf16.msra.mxu0 %v2471
    %3032 = vmatprep.subr.bf16.mxu0 %v2485
    %3033 = vmatpush1.bf16.msra.mxu0 %v2484
    %3034 = vmatprep.subr.bf16.mxu0 %v2498
    %3035 = vmatpush1.bf16.msra.mxu0 %v2497
    %3036 = vmatprep.subr.bf16.mxu0 %v2511
    %3037 = vmatpush1.bf16.msra.mxu0 %v2510
    %3038 = vmatprep.subr.bf16.mxu0 %v2524
    %3039 = vmatpush1.bf16.msra.mxu0 %v2523
    %3040 = vmatprep.subr.bf16.mxu0 %v2537
    %3041 = vmatpush1.bf16.msra.mxu0 %v2536
    %3042 = vmatprep.subr.bf16.mxu0 %v2550
    %3043 = vmatpush1.bf16.msra.mxu0 %v2549
    %3044 = vmatprep.subr.bf16.mxu0 %v2563
    %3045 = vmatpush1.bf16.msra.mxu0 %v2562
    %3046 = vmatprep.subr.bf16.mxu0 %v2576
    %3047 = vmatpush1.bf16.msra.mxu0 %v2575
    %3048 = vmatprep.subr.bf16.mxu0 %v2589
    %3049 = vmatpush1.bf16.msra.mxu0 %v2588
    %3050 = vmatprep.mubr.bf16.mxu0 %v1966
    %3051 = vmatmul.mubr.bf16.gmra.mrb[0].mxu0 %v1965
    %v3052 = vpop.f32.mrb[0].mxu0
    %v3053 = vadd.f32 %v3012, %v3052
    %v3054 = vpop.f32.mrb[0].mxu0
    %v3055 = vadd.f32 %v3014, %v3054
    %v3056 = vpop.f32.mrb[0].mxu0
    %v3057 = vpop.f32.mrb[0].mxu0
    %3058 = vdwg.mxu0
    %3059 = vmatprep.subr.bf16.mxu0 %v2602
    %3060 = vmatpush1.bf16.msra.mxu0 %v2601
    %3061 = vmatprep.subr.bf16.mxu0 %v2615
    %3062 = vmatpush1.bf16.msra.mxu0 %v2614
    %3063 = vmatprep.subr.bf16.mxu0 %v2628
    %3064 = vmatpush1.bf16.msra.mxu0 %v2627
    %3065 = vmatprep.subr.bf16.mxu0 %v2641
    %3066 = vmatpush1.bf16.msra.mxu0 %v2640
    %3067 = vmatprep.subr.bf16.mxu0 %v2654
    %3068 = vmatpush1.bf16.msra.mxu0 %v2653
    %3069 = vmatprep.subr.bf16.mxu0 %v2667
    %3070 = vmatpush1.bf16.msra.mxu0 %v2666
    %3071 = vmatprep.subr.bf16.mxu0 %v2680
    %3072 = vmatpush1.bf16.msra.mxu0 %v2679
    %3073 = vmatprep.subr.bf16.mxu0 %v2693
    %3074 = vmatpush1.bf16.msra.mxu0 %v2692
    %3075 = vmatprep.subr.bf16.mxu0 0
    %3076 = vmatpush1.bf16.msra.mxu0 0
    %3077 = vmatprep.subr.bf16.mxu0 0
    %3078 = vmatpush1.bf16.msra.mxu0 0
    %3079 = vmatprep.subr.bf16.mxu0 0
    %3080 = vmatpush1.bf16.msra.mxu0 0
    %3081 = vmatprep.subr.bf16.mxu0 0
    %3082 = vmatpush1.bf16.msra.mxu0 0
    %3083 = vmatprep.subr.bf16.mxu0 0
    %3084 = vmatpush1.bf16.msra.mxu0 0
    %3085 = vmatprep.subr.bf16.mxu0 0
    %3086 = vmatpush1.bf16.msra.mxu0 0
    %3087 = vmatprep.subr.bf16.mxu0 0
    %3088 = vmatpush1.bf16.msra.mxu0 0
    %3089 = vmatprep.subr.bf16.mxu0 0
    %3090 = vmatpush1.bf16.msra.mxu0 0
    %3091 = vmatprep.mubr.bf16.mxu0 0
    %3092 = vmatmul.mubr.bf16.gmra.mrb[0].mxu0 %v1967
    %v3093 = vpop.f32.mrb[0].mxu0
    %v3094 = vadd.f32 %v3053, %v3093
    %v3095 = vpop.f32.mrb[0].mxu0
    %v3096 = vadd.f32 %v3055, %v3095
    %v3097 = vpop.f32.mrb[0].mxu0
    %v3098 = vpop.f32.mrb[0].mxu0
    %3099 = vdwg.mxu0
    %3100 = vmatprep.subr.bf16.mxu0 %v1980
    %3101 = vmatpush1.bf16.msra.mxu0 %v1979
    %3102 = vmatprep.subr.bf16.mxu0 %v1993
    %3103 = vmatpush1.bf16.msra.mxu0 %v1992
    %3104 = vmatprep.subr.bf16.mxu0 %v2006
    %3105 = vmatpush1.bf16.msra.mxu0 %v2005
    %3106 = vmatprep.subr.bf16.mxu0 %v2019
    %3107 = vmatpush1.bf16.msra.mxu0 %v2018
    %3108 = vmatprep.subr.bf16.mxu0 %v2032
    %3109 = vmatpush1.bf16.msra.mxu0 %v2031
    %3110 = vmatprep.subr.bf16.mxu0 %v2045
    %3111 = vmatpush1.bf16.msra.mxu0 %v2044
    %3112 = vmatprep.subr.bf16.mxu0 %v2058
    %3113 = vmatpush1.bf16.msra.mxu0 %v2057
    %3114 = vmatprep.subr.bf16.mxu0 %v2071
    %3115 = vmatpush1.bf16.msra.mxu0 %v2070
    %3116 = vmatprep.subr.bf16.mxu0 %v2084
    %3117 = vmatpush1.bf16.msra.mxu0 %v2083
    %3118 = vmatprep.subr.bf16.mxu0 %v2097
    %3119 = vmatpush1.bf16.msra.mxu0 %v2096
    %3120 = vmatprep.subr.bf16.mxu0 %v2110
    %3121 = vmatpush1.bf16.msra.mxu0 %v2109
    %3122 = vmatprep.subr.bf16.mxu0 %v2123
    %3123 = vmatpush1.bf16.msra.mxu0 %v2122
    %3124 = vmatprep.subr.bf16.mxu0 %v2136
    %3125 = vmatpush1.bf16.msra.mxu0 %v2135
    %3126 = vmatprep.subr.bf16.mxu0 %v2149
    %3127 = vmatpush1.bf16.msra.mxu0 %v2148
    %3128 = vmatprep.subr.bf16.mxu0 %v2162
    %3129 = vmatpush1.bf16.msra.mxu0 %v2161
    %3130 = vmatprep.subr.bf16.mxu0 %v2175
    %3131 = vmatpush1.bf16.msra.mxu0 %v2174
    %3132 = vmatprep.mubr.bf16.mxu0 %v1962
    %3133 = vmatmul.mubr.bf16.gmra.mrb[0].mxu0 %v1961
    %v3134 = vpop.f32.mrb[0].mxu0
    %v3135 = vadd.f32 %v2726, %v3134
    %v3136 = vpop.f32.mrb[0].mxu0
    %v3137 = vadd.f32 %v2730, %v3136
    %v3138 = vpop.f32.mrb[0].mxu0
    %v3139 = vpop.f32.mrb[0].mxu0
    %3140 = vdwg.mxu0
    %3141 = vmatprep.subr.bf16.mxu0 %v2188
    %3142 = vmatpush1.bf16.msra.mxu0 %v2187
    %3143 = vmatprep.subr.bf16.mxu0 %v2201
    %3144 = vmatpush1.bf16.msra.mxu0 %v2200
    %3145 = vmatprep.subr.bf16.mxu0 %v2214
    %3146 = vmatpush1.bf16.msra.mxu0 %v2213
    %3147 = vmatprep.subr.bf16.mxu0 %v2227
    %3148 = vmatpush1.bf16.msra.mxu0 %v2226
    %3149 = vmatprep.subr.bf16.mxu0 %v2240
    %3150 = vmatpush1.bf16.msra.mxu0 %v2239
    %3151 = vmatprep.subr.bf16.mxu0 %v2253
    %3152 = vmatpush1.bf16.msra.mxu0 %v2252
    %3153 = vmatprep.subr.bf16.mxu0 %v2266
    %3154 = vmatpush1.bf16.msra.mxu0 %v2265
    %3155 = vmatprep.subr.bf16.mxu0 %v2279
    %3156 = vmatpush1.bf16.msra.mxu0 %v2278
    %3157 = vmatprep.subr.bf16.mxu0 %v2292
    %3158 = vmatpush1.bf16.msra.mxu0 %v2291
    %3159 = vmatprep.subr.bf16.mxu0 %v2305
    %3160 = vmatpush1.bf16.msra.mxu0 %v2304
    %3161 = vmatprep.subr.bf16.mxu0 %v2318
    %3162 = vmatpush1.bf16.msra.mxu0 %v2317
    %3163 = vmatprep.subr.bf16.mxu0 %v2331
    %3164 = vmatpush1.bf16.msra.mxu0 %v2330
    %3165 = vmatprep.subr.bf16.mxu0 %v2344
    %3166 = vmatpush1.bf16.msra.mxu0 %v2343
    %3167 = vmatprep.subr.bf16.mxu0 %v2357
    %3168 = vmatpush1.bf16.msra.mxu0 %v2356
    %3169 = vmatprep.subr.bf16.mxu0 %v2370
    %3170 = vmatpush1.bf16.msra.mxu0 %v2369
    %3171 = vmatprep.subr.bf16.mxu0 %v2383
    %3172 = vmatpush1.bf16.msra.mxu0 %v2382
    %3173 = vmatprep.mubr.bf16.mxu0 %v1964
    %3174 = vmatmul.mubr.bf16.gmra.mrb[0].mxu0 %v1963
    %v3175 = vpop.f32.mrb[0].mxu0
    %v3176 = vadd.f32 %v3135, %v3175
    %v3177 = vpop.f32.mrb[0].mxu0
    %v3178 = vadd.f32 %v3137, %v3177
    %v3179 = vpop.f32.mrb[0].mxu0
    %v3180 = vpop.f32.mrb[0].mxu0
    %3181 = vdwg.mxu0
    %3182 = vmatprep.subr.bf16.mxu0 %v2396
    %3183 = vmatpush1.bf16.msra.mxu0 %v2395
    %3184 = vmatprep.subr.bf16.mxu0 %v2409
    %3185 = vmatpush1.bf16.msra.mxu0 %v2408
    %3186 = vmatprep.subr.bf16.mxu0 %v2422
    %3187 = vmatpush1.bf16.msra.mxu0 %v2421
    %3188 = vmatprep.subr.bf16.mxu0 %v2435
    %3189 = vmatpush1.bf16.msra.mxu0 %v2434
    %3190 = vmatprep.subr.bf16.mxu0 %v2448
    %3191 = vmatpush1.bf16.msra.mxu0 %v2447
    %3192 = vmatprep.subr.bf16.mxu0 %v2461
    %3193 = vmatpush1.bf16.msra.mxu0 %v2460
    %3194 = vmatprep.subr.bf16.mxu0 %v2474
    %3195 = vmatpush1.bf16.msra.mxu0 %v2473
    %3196 = vmatprep.subr.bf16.mxu0 %v2487
    %3197 = vmatpush1.bf16.msra.mxu0 %v2486
    %3198 = vmatprep.subr.bf16.mxu0 %v2500
    %3199 = vmatpush1.bf16.msra.mxu0 %v2499
    %3200 = vmatprep.subr.bf16.mxu0 %v2513
    %3201 = vmatpush1.bf16.msra.mxu0 %v2512
    %3202 = vmatprep.subr.bf16.mxu0 %v2526
    %3203 = vmatpush1.bf16.msra.mxu0 %v2525
    %3204 = vmatprep.subr.bf16.mxu0 %v2539
    %3205 = vmatpush1.bf16.msra.mxu0 %v2538
    %3206 = vmatprep.subr.bf16.mxu0 %v2552
    %3207 = vmatpush1.bf16.msra.mxu0 %v2551
    %3208 = vmatprep.subr.bf16.mxu0 %v2565
    %3209 = vmatpush1.bf16.msra.mxu0 %v2564
    %3210 = vmatprep.subr.bf16.mxu0 %v2578
    %3211 = vmatpush1.bf16.msra.mxu0 %v2577
    %3212 = vmatprep.subr.bf16.mxu0 %v2591
    %3213 = vmatpush1.bf16.msra.mxu0 %v2590
    %3214 = vmatprep.mubr.bf16.mxu0 %v1966
    %3215 = vmatmul.mubr.bf16.gmra.mrb[0].mxu0 %v1965
    %v3216 = vpop.f32.mrb[0].mxu0
    %v3217 = vadd.f32 %v3176, %v3216
    %v3218 = vpop.f32.mrb[0].mxu0
    %v3219 = vadd.f32 %v3178, %v3218
    %v3220 = vpop.f32.mrb[0].mxu0
    %v3221 = vpop.f32.mrb[0].mxu0
    %3222 = vdwg.mxu0
    %3223 = vmatprep.subr.bf16.mxu0 %v2604
    %3224 = vmatpush1.bf16.msra.mxu0 %v2603
    %3225 = vmatprep.subr.bf16.mxu0 %v2617
    %3226 = vmatpush1.bf16.msra.mxu0 %v2616
    %3227 = vmatprep.subr.bf16.mxu0 %v2630
    %3228 = vmatpush1.bf16.msra.mxu0 %v2629
    %3229 = vmatprep.subr.bf16.mxu0 %v2643
    %3230 = vmatpush1.bf16.msra.mxu0 %v2642
    %3231 = vmatprep.subr.bf16.mxu0 %v2656
    %3232 = vmatpush1.bf16.msra.mxu0 %v2655
    %3233 = vmatprep.subr.bf16.mxu0 %v2669
    %3234 = vmatpush1.bf16.msra.mxu0 %v2668
    %3235 = vmatprep.subr.bf16.mxu0 %v2682
    %3236 = vmatpush1.bf16.msra.mxu0 %v2681
    %3237 = vmatprep.subr.bf16.mxu0 %v2695
    %3238 = vmatpush1.bf16.msra.mxu0 %v2694
    %3239 = vmatprep.subr.bf16.mxu0 0
    %3240 = vmatpush1.bf16.msra.mxu0 0
    %3241 = vmatprep.subr.bf16.mxu0 0
    %3242 = vmatpush1.bf16.msra.mxu0 0
    %3243 = vmatprep.subr.bf16.mxu0 0
    %3244 = vmatpush1.bf16.msra.mxu0 0
    %3245 = vmatprep.subr.bf16.mxu0 0
    %3246 = vmatpush1.bf16.msra.mxu0 0
    %3247 = vmatprep.subr.bf16.mxu0 0
    %3248 = vmatpush1.bf16.msra.mxu0 0
    %3249 = vmatprep.subr.bf16.mxu0 0
    %3250 = vmatpush1.bf16.msra.mxu0 0
    %3251 = vmatprep.subr.bf16.mxu0 0
    %3252 = vmatpush1.bf16.msra.mxu0 0
    %3253 = vmatprep.subr.bf16.mxu0 0
    %3254 = vmatpush1.bf16.msra.mxu0 0
    %3255 = vmatprep.mubr.bf16.mxu0 0
    %3256 = vmatmul.mubr.bf16.gmra.mrb[0].mxu0 %v1967
    %v3257 = vpop.f32.mrb[0].mxu0
    %v3258 = vadd.f32 %v3217, %v3257
    %v3259 = vpop.f32.mrb[0].mxu0
    %v3260 = vadd.f32 %v3219, %v3259
    %v3261 = vpop.f32.mrb[0].mxu0
    %v3262 = vpop.f32.mrb[0].mxu0
    %3263 = vdwg.mxu0
    %3264 = vmatprep.subr.bf16.mxu0 %v1982
    %3265 = vmatpush1.bf16.msra.mxu0 %v1981
    %3266 = vmatprep.subr.bf16.mxu0 %v1995
    %3267 = vmatpush1.bf16.msra.mxu0 %v1994
    %3268 = vmatprep.subr.bf16.mxu0 %v2008
    %3269 = vmatpush1.bf16.msra.mxu0 %v2007
    %3270 = vmatprep.subr.bf16.mxu0 %v2021
    %3271 = vmatpush1.bf16.msra.mxu0 %v2020
    %3272 = vmatprep.subr.bf16.mxu0 %v2034
    %3273 = vmatpush1.bf16.msra.mxu0 %v2033
    %3274 = vmatprep.subr.bf16.mxu0 %v2047
    %3275 = vmatpush1.bf16.msra.mxu0 %v2046
    %3276 = vmatprep.subr.bf16.mxu0 %v2060
    %3277 = vmatpush1.bf16.msra.mxu0 %v2059
    %3278 = vmatprep.subr.bf16.mxu0 %v2073
    %3279 = vmatpush1.bf16.msra.mxu0 %v2072
    %3280 = vmatprep.subr.bf16.mxu0 %v2086
    %3281 = vmatpush1.bf16.msra.mxu0 %v2085
    %3282 = vmatprep.subr.bf16.mxu0 %v2099
    %3283 = vmatpush1.bf16.msra.mxu0 %v2098
    %3284 = vmatprep.subr.bf16.mxu0 %v2112
    %3285 = vmatpush1.bf16.msra.mxu0 %v2111
    %3286 = vmatprep.subr.bf16.mxu0 %v2125
    %3287 = vmatpush1.bf16.msra.mxu0 %v2124
    %3288 = vmatprep.subr.bf16.mxu0 %v2138
    %3289 = vmatpush1.bf16.msra.mxu0 %v2137
    %3290 = vmatprep.subr.bf16.mxu0 %v2151
    %3291 = vmatpush1.bf16.msra.mxu0 %v2150
    %3292 = vmatprep.subr.bf16.mxu0 %v2164
    %3293 = vmatpush1.bf16.msra.mxu0 %v2163
    %3294 = vmatprep.subr.bf16.mxu0 %v2177
    %3295 = vmatpush1.bf16.msra.mxu0 %v2176
    %3296 = vmatprep.mubr.bf16.mxu0 %v1962
    %3297 = vmatmul.mubr.bf16.gmra.mrb[0].mxu0 %v1961
    %v3298 = vpop.f32.mrb[0].mxu0
    %v3299 = vadd.f32 %v2734, %v3298
    %v3300 = vpop.f32.mrb[0].mxu0
    %v3301 = vadd.f32 %v2738, %v3300
    %v3302 = vpop.f32.mrb[0].mxu0
    %v3303 = vpop.f32.mrb[0].mxu0
    %3304 = vdwg.mxu0
    %3305 = vmatprep.subr.bf16.mxu0 %v2190
    %3306 = vmatpush1.bf16.msra.mxu0 %v2189
    %3307 = vmatprep.subr.bf16.mxu0 %v2203
    %3308 = vmatpush1.bf16.msra.mxu0 %v2202
    %3309 = vmatprep.subr.bf16.mxu0 %v2216
    %3310 = vmatpush1.bf16.msra.mxu0 %v2215
    %3311 = vmatprep.subr.bf16.mxu0 %v2229
    %3312 = vmatpush1.bf16.msra.mxu0 %v2228
    %3313 = vmatprep.subr.bf16.mxu0 %v2242
    %3314 = vmatpush1.bf16.msra.mxu0 %v2241
    %3315 = vmatprep.subr.bf16.mxu0 %v2255
    %3316 = vmatpush1.bf16.msra.mxu0 %v2254
    %3317 = vmatprep.subr.bf16.mxu0 %v2268
    %3318 = vmatpush1.bf16.msra.mxu0 %v2267
    %3319 = vmatprep.subr.bf16.mxu0 %v2281
    %3320 = vmatpush1.bf16.msra.mxu0 %v2280
    %3321 = vmatprep.subr.bf16.mxu0 %v2294
    %3322 = vmatpush1.bf16.msra.mxu0 %v2293
    %3323 = vmatprep.subr.bf16.mxu0 %v2307
    %3324 = vmatpush1.bf16.msra.mxu0 %v2306
    %3325 = vmatprep.subr.bf16.mxu0 %v2320
    %3326 = vmatpush1.bf16.msra.mxu0 %v2319
    %3327 = vmatprep.subr.bf16.mxu0 %v2333
    %3328 = vmatpush1.bf16.msra.mxu0 %v2332
    %3329 = vmatprep.subr.bf16.mxu0 %v2346
    %3330 = vmatpush1.bf16.msra.mxu0 %v2345
    %3331 = vmatprep.subr.bf16.mxu0 %v2359
    %3332 = vmatpush1.bf16.msra.mxu0 %v2358
    %3333 = vmatprep.subr.bf16.mxu0 %v2372
    %3334 = vmatpush1.bf16.msra.mxu0 %v2371
    %3335 = vmatprep.subr.bf16.mxu0 %v2385
    %3336 = vmatpush1.bf16.msra.mxu0 %v2384
    %3337 = vmatprep.mubr.bf16.mxu0 %v1964
    %3338 = vmatmul.mubr.bf16.gmra.mrb[0].mxu0 %v1963
    %v3339 = vpop.f32.mrb[0].mxu0
    %v3340 = vadd.f32 %v3299, %v3339
    %v3341 = vpop.f32.mrb[0].mxu0
    %v3342 = vadd.f32 %v3301, %v3341
    %v3343 = vpop.f32.mrb[0].mxu0
    %v3344 = vpop.f32.mrb[0].mxu0
    %3345 = vdwg.mxu0
    %3346 = vmatprep.subr.bf16.mxu0 %v2398
    %3347 = vmatpush1.bf16.msra.mxu0 %v2397
    %3348 = vmatprep.subr.bf16.mxu0 %v2411
    %3349 = vmatpush1.bf16.msra.mxu0 %v2410
    %3350 = vmatprep.subr.bf16.mxu0 %v2424
    %3351 = vmatpush1.bf16.msra.mxu0 %v2423
    %3352 = vmatprep.subr.bf16.mxu0 %v2437
    %3353 = vmatpush1.bf16.msra.mxu0 %v2436
    %3354 = vmatprep.subr.bf16.mxu0 %v2450
    %3355 = vmatpush1.bf16.msra.mxu0 %v2449
    %3356 = vmatprep.subr.bf16.mxu0 %v2463
    %3357 = vmatpush1.bf16.msra.mxu0 %v2462
    %3358 = vmatprep.subr.bf16.mxu0 %v2476
    %3359 = vmatpush1.bf16.msra.mxu0 %v2475
    %3360 = vmatprep.subr.bf16.mxu0 %v2489
    %3361 = vmatpush1.bf16.msra.mxu0 %v2488
    %3362 = vmatprep.subr.bf16.mxu0 %v2502
    %3363 = vmatpush1.bf16.msra.mxu0 %v2501
    %3364 = vmatprep.subr.bf16.mxu0 %v2515
    %3365 = vmatpush1.bf16.msra.mxu0 %v2514
    %3366 = vmatprep.subr.bf16.mxu0 %v2528
    %3367 = vmatpush1.bf16.msra.mxu0 %v2527
    %3368 = vmatprep.subr.bf16.mxu0 %v2541
    %3369 = vmatpush1.bf16.msra.mxu0 %v2540
    %3370 = vmatprep.subr.bf16.mxu0 %v2554
    %3371 = vmatpush1.bf16.msra.mxu0 %v2553
    %3372 = vmatprep.subr.bf16.mxu0 %v2567
    %3373 = vmatpush1.bf16.msra.mxu0 %v2566
    %3374 = vmatprep.subr.bf16.mxu0 %v2580
    %3375 = vmatpush1.bf16.msra.mxu0 %v2579
    %3376 = vmatprep.subr.bf16.mxu0 %v2593
    %3377 = vmatpush1.bf16.msra.mxu0 %v2592
    %3378 = vmatprep.mubr.bf16.mxu0 %v1966
    %3379 = vmatmul.mubr.bf16.gmra.mrb[0].mxu0 %v1965
    %v3380 = vpop.f32.mrb[0].mxu0
    %v3381 = vadd.f32 %v3340, %v3380
    %v3382 = vpop.f32.mrb[0].mxu0
    %v3383 = vadd.f32 %v3342, %v3382
    %v3384 = vpop.f32.mrb[0].mxu0
    %v3385 = vpop.f32.mrb[0].mxu0
    %3386 = vdwg.mxu0
    %3387 = vmatprep.subr.bf16.mxu0 %v2606
    %3388 = vmatpush1.bf16.msra.mxu0 %v2605
    %3389 = vmatprep.subr.bf16.mxu0 %v2619
    %3390 = vmatpush1.bf16.msra.mxu0 %v2618
    %3391 = vmatprep.subr.bf16.mxu0 %v2632
    %3392 = vmatpush1.bf16.msra.mxu0 %v2631
    %3393 = vmatprep.subr.bf16.mxu0 %v2645
    %3394 = vmatpush1.bf16.msra.mxu0 %v2644
    %3395 = vmatprep.subr.bf16.mxu0 %v2658
    %3396 = vmatpush1.bf16.msra.mxu0 %v2657
    %3397 = vmatprep.subr.bf16.mxu0 %v2671
    %3398 = vmatpush1.bf16.msra.mxu0 %v2670
    %3399 = vmatprep.subr.bf16.mxu0 %v2684
    %3400 = vmatpush1.bf16.msra.mxu0 %v2683
    %3401 = vmatprep.subr.bf16.mxu0 %v2697
    %3402 = vmatpush1.bf16.msra.mxu0 %v2696
    %3403 = vmatprep.subr.bf16.mxu0 0
    %3404 = vmatpush1.bf16.msra.mxu0 0
    %3405 = vmatprep.subr.bf16.mxu0 0
    %3406 = vmatpush1.bf16.msra.mxu0 0
    %3407 = vmatprep.subr.bf16.mxu0 0
    %3408 = vmatpush1.bf16.msra.mxu0 0
    %3409 = vmatprep.subr.bf16.mxu0 0
    %3410 = vmatpush1.bf16.msra.mxu0 0
    %3411 = vmatprep.subr.bf16.mxu0 0
    %3412 = vmatpush1.bf16.msra.mxu0 0
    %3413 = vmatprep.subr.bf16.mxu0 0
    %3414 = vmatpush1.bf16.msra.mxu0 0
    %3415 = vmatprep.subr.bf16.mxu0 0
    %3416 = vmatpush1.bf16.msra.mxu0 0
    %3417 = vmatprep.subr.bf16.mxu0 0
    %3418 = vmatpush1.bf16.msra.mxu0 0
    %3419 = vmatprep.mubr.bf16.mxu0 0
    %3420 = vmatmul.mubr.bf16.gmra.mrb[0].mxu0 %v1967
    %v3421 = vpop.f32.mrb[0].mxu0
    %v3422 = vadd.f32 %v3381, %v3421
    %v3423 = vpop.f32.mrb[0].mxu0
    %v3424 = vadd.f32 %v3383, %v3423
    %v3425 = vpop.f32.mrb[0].mxu0
    %v3426 = vpop.f32.mrb[0].mxu0
    %3427 = vdwg.mxu0
    %3428 = vmatprep.subr.bf16.mxu0 %v1984
    %3429 = vmatpush1.bf16.msra.mxu0 %v1983
    %3430 = vmatprep.subr.bf16.mxu0 %v1997
    %3431 = vmatpush1.bf16.msra.mxu0 %v1996
    %3432 = vmatprep.subr.bf16.mxu0 %v2010
    %3433 = vmatpush1.bf16.msra.mxu0 %v2009
    %3434 = vmatprep.subr.bf16.mxu0 %v2023
    %3435 = vmatpush1.bf16.msra.mxu0 %v2022
    %3436 = vmatprep.subr.bf16.mxu0 %v2036
    %3437 = vmatpush1.bf16.msra.mxu0 %v2035
    %3438 = vmatprep.subr.bf16.mxu0 %v2049
    %3439 = vmatpush1.bf16.msra.mxu0 %v2048
    %3440 = vmatprep.subr.bf16.mxu0 %v2062
    %3441 = vmatpush1.bf16.msra.mxu0 %v2061
    %3442 = vmatprep.subr.bf16.mxu0 %v2075
    %3443 = vmatpush1.bf16.msra.mxu0 %v2074
    %3444 = vmatprep.subr.bf16.mxu0 %v2088
    %3445 = vmatpush1.bf16.msra.mxu0 %v2087
    %3446 = vmatprep.subr.bf16.mxu0 %v2101
    %3447 = vmatpush1.bf16.msra.mxu0 %v2100
    %3448 = vmatprep.subr.bf16.mxu0 %v2114
    %3449 = vmatpush1.bf16.msra.mxu0 %v2113
    %3450 = vmatprep.subr.bf16.mxu0 %v2127
    %3451 = vmatpush1.bf16.msra.mxu0 %v2126
    %3452 = vmatprep.subr.bf16.mxu0 %v2140
    %3453 = vmatpush1.bf16.msra.mxu0 %v2139
    %3454 = vmatprep.subr.bf16.mxu0 %v2153
    %3455 = vmatpush1.bf16.msra.mxu0 %v2152
    %3456 = vmatprep.subr.bf16.mxu0 %v2166
    %3457 = vmatpush1.bf16.msra.mxu0 %v2165
    %3458 = vmatprep.subr.bf16.mxu0 %v2179
    %3459 = vmatpush1.bf16.msra.mxu0 %v2178
    %3460 = vmatprep.mubr.bf16.mxu0 %v1962
    %3461 = vmatmul.mubr.bf16.gmra.mrb[0].mxu0 %v1961
    %v3462 = vpop.f32.mrb[0].mxu0
    %v3463 = vadd.f32 %v2742, %v3462
    %v3464 = vpop.f32.mrb[0].mxu0
    %v3465 = vadd.f32 %v2746, %v3464
    %v3466 = vpop.f32.mrb[0].mxu0
    %v3467 = vpop.f32.mrb[0].mxu0
    %3468 = vdwg.mxu0
    %3469 = vmatprep.subr.bf16.mxu0 %v2192
    %3470 = vmatpush1.bf16.msra.mxu0 %v2191
    %3471 = vmatprep.subr.bf16.mxu0 %v2205
    %3472 = vmatpush1.bf16.msra.mxu0 %v2204
    %3473 = vmatprep.subr.bf16.mxu0 %v2218
    %3474 = vmatpush1.bf16.msra.mxu0 %v2217
    %3475 = vmatprep.subr.bf16.mxu0 %v2231
    %3476 = vmatpush1.bf16.msra.mxu0 %v2230
    %3477 = vmatprep.subr.bf16.mxu0 %v2244
    %3478 = vmatpush1.bf16.msra.mxu0 %v2243
    %3479 = vmatprep.subr.bf16.mxu0 %v2257
    %3480 = vmatpush1.bf16.msra.mxu0 %v2256
    %3481 = vmatprep.subr.bf16.mxu0 %v2270
    %3482 = vmatpush1.bf16.msra.mxu0 %v2269
    %3483 = vmatprep.subr.bf16.mxu0 %v2283
    %3484 = vmatpush1.bf16.msra.mxu0 %v2282
    %3485 = vmatprep.subr.bf16.mxu0 %v2296
    %3486 = vmatpush1.bf16.msra.mxu0 %v2295
    %3487 = vmatprep.subr.bf16.mxu0 %v2309
    %3488 = vmatpush1.bf16.msra.mxu0 %v2308
    %3489 = vmatprep.subr.bf16.mxu0 %v2322
    %3490 = vmatpush1.bf16.msra.mxu0 %v2321
    %3491 = vmatprep.subr.bf16.mxu0 %v2335
    %3492 = vmatpush1.bf16.msra.mxu0 %v2334
    %3493 = vmatprep.subr.bf16.mxu0 %v2348
    %3494 = vmatpush1.bf16.msra.mxu0 %v2347
    %3495 = vmatprep.subr.bf16.mxu0 %v2361
    %3496 = vmatpush1.bf16.msra.mxu0 %v2360
    %3497 = vmatprep.subr.bf16.mxu0 %v2374
    %3498 = vmatpush1.bf16.msra.mxu0 %v2373
    %3499 = vmatprep.subr.bf16.mxu0 %v2387
    %3500 = vmatpush1.bf16.msra.mxu0 %v2386
    %3501 = vmatprep.mubr.bf16.mxu0 %v1964
    %3502 = vmatmul.mubr.bf16.gmra.mrb[0].mxu0 %v1963
    %v3503 = vpop.f32.mrb[0].mxu0
    %v3504 = vadd.f32 %v3463, %v3503
    %v3505 = vpop.f32.mrb[0].mxu0
    %v3506 = vadd.f32 %v3465, %v3505
    %v3507 = vpop.f32.mrb[0].mxu0
    %v3508 = vpop.f32.mrb[0].mxu0
    %3509 = vdwg.mxu0
    %3510 = vmatprep.subr.bf16.mxu0 %v2400
    %3511 = vmatpush1.bf16.msra.mxu0 %v2399
    %3512 = vmatprep.subr.bf16.mxu0 %v2413
    %3513 = vmatpush1.bf16.msra.mxu0 %v2412
    %3514 = vmatprep.subr.bf16.mxu0 %v2426
    %3515 = vmatpush1.bf16.msra.mxu0 %v2425
    %3516 = vmatprep.subr.bf16.mxu0 %v2439
    %3517 = vmatpush1.bf16.msra.mxu0 %v2438
    %3518 = vmatprep.subr.bf16.mxu0 %v2452
    %3519 = vmatpush1.bf16.msra.mxu0 %v2451
    %3520 = vmatprep.subr.bf16.mxu0 %v2465
    %3521 = vmatpush1.bf16.msra.mxu0 %v2464
    %3522 = vmatprep.subr.bf16.mxu0 %v2478
    %3523 = vmatpush1.bf16.msra.mxu0 %v2477
    %3524 = vmatprep.subr.bf16.mxu0 %v2491
    %3525 = vmatpush1.bf16.msra.mxu0 %v2490
    %3526 = vmatprep.subr.bf16.mxu0 %v2504
    %3527 = vmatpush1.bf16.msra.mxu0 %v2503
    %3528 = vmatprep.subr.bf16.mxu0 %v2517
    %3529 = vmatpush1.bf16.msra.mxu0 %v2516
    %3530 = vmatprep.subr.bf16.mxu0 %v2530
    %3531 = vmatpush1.bf16.msra.mxu0 %v2529
    %3532 = vmatprep.subr.bf16.mxu0 %v2543
    %3533 = vmatpush1.bf16.msra.mxu0 %v2542
    %3534 = vmatprep.subr.bf16.mxu0 %v2556
    %3535 = vmatpush1.bf16.msra.mxu0 %v2555
    %3536 = vmatprep.subr.bf16.mxu0 %v2569
    %3537 = vmatpush1.bf16.msra.mxu0 %v2568
    %3538 = vmatprep.subr.bf16.mxu0 %v2582
    %3539 = vmatpush1.bf16.msra.mxu0 %v2581
    %3540 = vmatprep.subr.bf16.mxu0 %v2595
    %3541 = vmatpush1.bf16.msra.mxu0 %v2594
    %3542 = vmatprep.mubr.bf16.mxu0 %v1966
    %3543 = vmatmul.mubr.bf16.gmra.mrb[0].mxu0 %v1965
    %v3544 = vpop.f32.mrb[0].mxu0
    %v3545 = vadd.f32 %v3504, %v3544
    %v3546 = vpop.f32.mrb[0].mxu0
    %v3547 = vadd.f32 %v3506, %v3546
    %v3548 = vpop.f32.mrb[0].mxu0
    %v3549 = vpop.f32.mrb[0].mxu0
    %3550 = vdwg.mxu0
    %3551 = vmatprep.subr.bf16.mxu0 %v2608
    %3552 = vmatpush1.bf16.msra.mxu0 %v2607
    %3553 = vmatprep.subr.bf16.mxu0 %v2621
    %3554 = vmatpush1.bf16.msra.mxu0 %v2620
    %3555 = vmatprep.subr.bf16.mxu0 %v2634
    %3556 = vmatpush1.bf16.msra.mxu0 %v2633
    %3557 = vmatprep.subr.bf16.mxu0 %v2647
    %3558 = vmatpush1.bf16.msra.mxu0 %v2646
    %3559 = vmatprep.subr.bf16.mxu0 %v2660
    %3560 = vmatpush1.bf16.msra.mxu0 %v2659
    %3561 = vmatprep.subr.bf16.mxu0 %v2673
    %3562 = vmatpush1.bf16.msra.mxu0 %v2672
    %3563 = vmatprep.subr.bf16.mxu0 %v2686
    %3564 = vmatpush1.bf16.msra.mxu0 %v2685
    %3565 = vmatprep.subr.bf16.mxu0 %v2699
    %3566 = vmatpush1.bf16.msra.mxu0 %v2698
    %3567 = vmatprep.subr.bf16.mxu0 0
    %3568 = vmatpush1.bf16.msra.mxu0 0
    %3569 = vmatprep.subr.bf16.mxu0 0
    %3570 = vmatpush1.bf16.msra.mxu0 0
    %3571 = vmatprep.subr.bf16.mxu0 0
    %3572 = vmatpush1.bf16.msra.mxu0 0
    %3573 = vmatprep.subr.bf16.mxu0 0
    %3574 = vmatpush1.bf16.msra.mxu0 0
    %3575 = vmatprep.subr.bf16.mxu0 0
    %3576 = vmatpush1.bf16.msra.mxu0 0
    %3577 = vmatprep.subr.bf16.mxu0 0
    %3578 = vmatpush1.bf16.msra.mxu0 0
    %3579 = vmatprep.subr.bf16.mxu0 0
    %3580 = vmatpush1.bf16.msra.mxu0 0
    %3581 = vmatprep.subr.bf16.mxu0 0
    %3582 = vmatpush1.bf16.msra.mxu0 0
    %3583 = vmatprep.mubr.bf16.mxu0 0
    %3584 = vmatmul.mubr.bf16.gmra.mrb[0].mxu0 %v1967
    %v3585 = vpop.f32.mrb[0].mxu0
    %v3586 = vadd.f32 %v3545, %v3585
    %v3587 = vpop.f32.mrb[0].mxu0
    %v3588 = vadd.f32 %v3547, %v3587
    %v3589 = vpop.f32.mrb[0].mxu0
    %v3590 = vpop.f32.mrb[0].mxu0
    %3591 = vdwg.mxu0
    %3592 = vmatprep.subr.bf16.mxu0 %v1986
    %3593 = vmatpush1.bf16.msra.mxu0 %v1985
    %3594 = vmatprep.subr.bf16.mxu0 %v1999
    %3595 = vmatpush1.bf16.msra.mxu0 %v1998
    %3596 = vmatprep.subr.bf16.mxu0 %v2012
    %3597 = vmatpush1.bf16.msra.mxu0 %v2011
    %3598 = vmatprep.subr.bf16.mxu0 %v2025
    %3599 = vmatpush1.bf16.msra.mxu0 %v2024
    %3600 = vmatprep.subr.bf16.mxu0 %v2038
    %3601 = vmatpush1.bf16.msra.mxu0 %v2037
    %3602 = vmatprep.subr.bf16.mxu0 %v2051
    %3603 = vmatpush1.bf16.msra.mxu0 %v2050
    %3604 = vmatprep.subr.bf16.mxu0 %v2064
    %3605 = vmatpush1.bf16.msra.mxu0 %v2063
    %3606 = vmatprep.subr.bf16.mxu0 %v2077
    %3607 = vmatpush1.bf16.msra.mxu0 %v2076
    %3608 = vmatprep.subr.bf16.mxu0 %v2090
    %3609 = vmatpush1.bf16.msra.mxu0 %v2089
    %3610 = vmatprep.subr.bf16.mxu0 %v2103
    %3611 = vmatpush1.bf16.msra.mxu0 %v2102
    %3612 = vmatprep.subr.bf16.mxu0 %v2116
    %3613 = vmatpush1.bf16.msra.mxu0 %v2115
    %3614 = vmatprep.subr.bf16.mxu0 %v2129
    %3615 = vmatpush1.bf16.msra.mxu0 %v2128
    %3616 = vmatprep.subr.bf16.mxu0 %v2142
    %3617 = vmatpush1.bf16.msra.mxu0 %v2141
    %3618 = vmatprep.subr.bf16.mxu0 %v2155
    %3619 = vmatpush1.bf16.msra.mxu0 %v2154
    %3620 = vmatprep.subr.bf16.mxu0 %v2168
    %3621 = vmatpush1.bf16.msra.mxu0 %v2167
    %3622 = vmatprep.subr.bf16.mxu0 %v2181
    %3623 = vmatpush1.bf16.msra.mxu0 %v2180
    %3624 = vmatprep.mubr.bf16.mxu0 %v1962
    %3625 = vmatmul.mubr.bf16.gmra.mrb[0].mxu0 %v1961
    %v3626 = vpop.f32.mrb[0].mxu0
    %v3627 = vadd.f32 %v2750, %v3626
    %v3628 = vpop.f32.mrb[0].mxu0
    %v3629 = vadd.f32 %v2754, %v3628
    %v3630 = vpop.f32.mrb[0].mxu0
    %v3631 = vpop.f32.mrb[0].mxu0
    %3632 = vdwg.mxu0
    %3633 = vmatprep.subr.bf16.mxu0 %v2194
    %3634 = vmatpush1.bf16.msra.mxu0 %v2193
    %3635 = vmatprep.subr.bf16.mxu0 %v2207
    %3636 = vmatpush1.bf16.msra.mxu0 %v2206
    %3637 = vmatprep.subr.bf16.mxu0 %v2220
    %3638 = vmatpush1.bf16.msra.mxu0 %v2219
    %3639 = vmatprep.subr.bf16.mxu0 %v2233
    %3640 = vmatpush1.bf16.msra.mxu0 %v2232
    %3641 = vmatprep.subr.bf16.mxu0 %v2246
    %3642 = vmatpush1.bf16.msra.mxu0 %v2245
    %3643 = vmatprep.subr.bf16.mxu0 %v2259
    %3644 = vmatpush1.bf16.msra.mxu0 %v2258
    %3645 = vmatprep.subr.bf16.mxu0 %v2272
    %3646 = vmatpush1.bf16.msra.mxu0 %v2271
    %3647 = vmatprep.subr.bf16.mxu0 %v2285
    %3648 = vmatpush1.bf16.msra.mxu0 %v2284
    %3649 = vmatprep.subr.bf16.mxu0 %v2298
    %3650 = vmatpush1.bf16.msra.mxu0 %v2297
    %3651 = vmatprep.subr.bf16.mxu0 %v2311
    %3652 = vmatpush1.bf16.msra.mxu0 %v2310
    %3653 = vmatprep.subr.bf16.mxu0 %v2324
    %3654 = vmatpush1.bf16.msra.mxu0 %v2323
    %3655 = vmatprep.subr.bf16.mxu0 %v2337
    %3656 = vmatpush1.bf16.msra.mxu0 %v2336
    %3657 = vmatprep.subr.bf16.mxu0 %v2350
    %3658 = vmatpush1.bf16.msra.mxu0 %v2349
    %3659 = vmatprep.subr.bf16.mxu0 %v2363
    %3660 = vmatpush1.bf16.msra.mxu0 %v2362
    %3661 = vmatprep.subr.bf16.mxu0 %v2376
    %3662 = vmatpush1.bf16.msra.mxu0 %v2375
    %3663 = vmatprep.subr.bf16.mxu0 %v2389
    %3664 = vmatpush1.bf16.msra.mxu0 %v2388
    %3665 = vmatprep.mubr.bf16.mxu0 %v1964
    %3666 = vmatmul.mubr.bf16.gmra.mrb[0].mxu0 %v1963
    %v3667 = vpop.f32.mrb[0].mxu0
    %v3668 = vadd.f32 %v3627, %v3667
    %v3669 = vpop.f32.mrb[0].mxu0
    %v3670 = vadd.f32 %v3629, %v3669
    %v3671 = vpop.f32.mrb[0].mxu0
    %v3672 = vpop.f32.mrb[0].mxu0
    %3673 = vdwg.mxu0
    %3674 = vmatprep.subr.bf16.mxu0 %v2402
    %3675 = vmatpush1.bf16.msra.mxu0 %v2401
    %3676 = vmatprep.subr.bf16.mxu0 %v2415
    %3677 = vmatpush1.bf16.msra.mxu0 %v2414
    %3678 = vmatprep.subr.bf16.mxu0 %v2428
    %3679 = vmatpush1.bf16.msra.mxu0 %v2427
    %3680 = vmatprep.subr.bf16.mxu0 %v2441
    %3681 = vmatpush1.bf16.msra.mxu0 %v2440
    %3682 = vmatprep.subr.bf16.mxu0 %v2454
    %3683 = vmatpush1.bf16.msra.mxu0 %v2453
    %3684 = vmatprep.subr.bf16.mxu0 %v2467
    %3685 = vmatpush1.bf16.msra.mxu0 %v2466
    %3686 = vmatprep.subr.bf16.mxu0 %v2480
    %3687 = vmatpush1.bf16.msra.mxu0 %v2479
    %3688 = vmatprep.subr.bf16.mxu0 %v2493
    %3689 = vmatpush1.bf16.msra.mxu0 %v2492
    %3690 = vmatprep.subr.bf16.mxu0 %v2506
    %3691 = vmatpush1.bf16.msra.mxu0 %v2505
    %3692 = vmatprep.subr.bf16.mxu0 %v2519
    %3693 = vmatpush1.bf16.msra.mxu0 %v2518
    %3694 = vmatprep.subr.bf16.mxu0 %v2532
    %3695 = vmatpush1.bf16.msra.mxu0 %v2531
    %3696 = vmatprep.subr.bf16.mxu0 %v2545
    %3697 = vmatpush1.bf16.msra.mxu0 %v2544
    %3698 = vmatprep.subr.bf16.mxu0 %v2558
    %3699 = vmatpush1.bf16.msra.mxu0 %v2557
    %3700 = vmatprep.subr.bf16.mxu0 %v2571
    %3701 = vmatpush1.bf16.msra.mxu0 %v2570
    %3702 = vmatprep.subr.bf16.mxu0 %v2584
    %3703 = vmatpush1.bf16.msra.mxu0 %v2583
    %3704 = vmatprep.subr.bf16.mxu0 %v2597
    %3705 = vmatpush1.bf16.msra.mxu0 %v2596
    %3706 = vmatprep.mubr.bf16.mxu0 %v1966
    %3707 = vmatmul.mubr.bf16.gmra.mrb[0].mxu0 %v1965
    %v3708 = vpop.f32.mrb[0].mxu0
    %v3709 = vadd.f32 %v3668, %v3708
    %v3710 = vpop.f32.mrb[0].mxu0
    %v3711 = vadd.f32 %v3670, %v3710
    %v3712 = vpop.f32.mrb[0].mxu0
    %v3713 = vpop.f32.mrb[0].mxu0
    %3714 = vdwg.mxu0
    %3715 = vmatprep.subr.bf16.mxu0 %v2610
    %3716 = vmatpush1.bf16.msra.mxu0 %v2609
    %3717 = vmatprep.subr.bf16.mxu0 %v2623
    %3718 = vmatpush1.bf16.msra.mxu0 %v2622
    %3719 = vmatprep.subr.bf16.mxu0 %v2636
    %3720 = vmatpush1.bf16.msra.mxu0 %v2635
    %3721 = vmatprep.subr.bf16.mxu0 %v2649
    %3722 = vmatpush1.bf16.msra.mxu0 %v2648
    %3723 = vmatprep.subr.bf16.mxu0 %v2662
    %3724 = vmatpush1.bf16.msra.mxu0 %v2661
    %3725 = vmatprep.subr.bf16.mxu0 %v2675
    %3726 = vmatpush1.bf16.msra.mxu0 %v2674
    %3727 = vmatprep.subr.bf16.mxu0 %v2688
    %3728 = vmatpush1.bf16.msra.mxu0 %v2687
    %3729 = vmatprep.subr.bf16.mxu0 %v2701
    %3730 = vmatpush1.bf16.msra.mxu0 %v2700
    %3731 = vmatprep.subr.bf16.mxu0 0
    %3732 = vmatpush1.bf16.msra.mxu0 0
    %3733 = vmatprep.subr.bf16.mxu0 0
    %3734 = vmatpush1.bf16.msra.mxu0 0
    %3735 = vmatprep.subr.bf16.mxu0 0
    %3736 = vmatpush1.bf16.msra.mxu0 0
    %3737 = vmatprep.subr.bf16.mxu0 0
    %3738 = vmatpush1.bf16.msra.mxu0 0
    %3739 = vmatprep.subr.bf16.mxu0 0
    %3740 = vmatpush1.bf16.msra.mxu0 0
    %3741 = vmatprep.subr.bf16.mxu0 0
    %3742 = vmatpush1.bf16.msra.mxu0 0
    %3743 = vmatprep.subr.bf16.mxu0 0
    %3744 = vmatpush1.bf16.msra.mxu0 0
    %3745 = vmatprep.subr.bf16.mxu0 0
    %3746 = vmatpush1.bf16.msra.mxu0 0
    %3747 = vmatprep.mubr.bf16.mxu0 0
    %3748 = vmatmul.mubr.bf16.gmra.mrb[0].mxu0 %v1967
    %v3749 = vpop.f32.mrb[0].mxu0
    %v3750 = vadd.f32 %v3709, %v3749
    %v3751 = vpop.f32.mrb[0].mxu0
    %v3752 = vadd.f32 %v3711, %v3751
    %v3753 = vpop.f32.mrb[0].mxu0
    %v3754 = vpop.f32.mrb[0].mxu0
    %3755 = vdwg.mxu0
    %3756 = vmatprep.subr.bf16.mxu0 0
    %3757 = vmatpush1.bf16.msra.mxu0 %v1987
    %3758 = vmatprep.subr.bf16.mxu0 0
    %3759 = vmatpush1.bf16.msra.mxu0 %v2000
    %3760 = vmatprep.subr.bf16.mxu0 0
    %3761 = vmatpush1.bf16.msra.mxu0 %v2013
    %3762 = vmatprep.subr.bf16.mxu0 0
    %3763 = vmatpush1.bf16.msra.mxu0 %v2026
    %3764 = vmatprep.subr.bf16.mxu0 0
    %3765 = vmatpush1.bf16.msra.mxu0 %v2039
    %3766 = vmatprep.subr.bf16.mxu0 0
    %3767 = vmatpush1.bf16.msra.mxu0 %v2052
    %3768 = vmatprep.subr.bf16.mxu0 0
    %3769 = vmatpush1.bf16.msra.mxu0 %v2065
    %3770 = vmatprep.subr.bf16.mxu0 0
    %3771 = vmatpush1.bf16.msra.mxu0 %v2078
    %3772 = vmatprep.subr.bf16.mxu0 0
    %3773 = vmatpush1.bf16.msra.mxu0 %v2091
    %3774 = vmatprep.subr.bf16.mxu0 0
    %3775 = vmatpush1.bf16.msra.mxu0 %v2104
    %3776 = vmatprep.subr.bf16.mxu0 0
    %3777 = vmatpush1.bf16.msra.mxu0 %v2117
    %3778 = vmatprep.subr.bf16.mxu0 0
    %3779 = vmatpush1.bf16.msra.mxu0 %v2130
    %3780 = vmatprep.subr.bf16.mxu0 0
    %3781 = vmatpush1.bf16.msra.mxu0 %v2143
    %3782 = vmatprep.subr.bf16.mxu0 0
    %3783 = vmatpush1.bf16.msra.mxu0 %v2156
    %3784 = vmatprep.subr.bf16.mxu0 0
    %3785 = vmatpush1.bf16.msra.mxu0 %v2169
    %3786 = vmatprep.subr.bf16.mxu0 0
    %3787 = vmatpush1.bf16.msra.mxu0 %v2182
    %3788 = vmatprep.mubr.bf16.mxu0 %v1962
    %3789 = vmatmul.mubr.bf16.gmra.mrb[0].mxu0 %v1961
    %v3790 = vpop.f32.mrb[0].mxu0
    %v3791 = vadd.f32 %v2758, %v3790
    %v3792 = vpop.f32.mrb[0].mxu0
    %v3793 = vpop.f32.mrb[0].mxu0
    %v3794 = vpop.f32.mrb[0].mxu0
    %3795 = vdwg.mxu0
    %3796 = vmatprep.subr.bf16.mxu0 0
    %3797 = vmatpush1.bf16.msra.mxu0 %v2195
    %3798 = vmatprep.subr.bf16.mxu0 0
    %3799 = vmatpush1.bf16.msra.mxu0 %v2208
    %3800 = vmatprep.subr.bf16.mxu0 0
    %3801 = vmatpush1.bf16.msra.mxu0 %v2221
    %3802 = vmatprep.subr.bf16.mxu0 0
    %3803 = vmatpush1.bf16.msra.mxu0 %v2234
    %3804 = vmatprep.subr.bf16.mxu0 0
    %3805 = vmatpush1.bf16.msra.mxu0 %v2247
    %3806 = vmatprep.subr.bf16.mxu0 0
    %3807 = vmatpush1.bf16.msra.mxu0 %v2260
    %3808 = vmatprep.subr.bf16.mxu0 0
    %3809 = vmatpush1.bf16.msra.mxu0 %v2273
    %3810 = vmatprep.subr.bf16.mxu0 0
    %3811 = vmatpush1.bf16.msra.mxu0 %v2286
    %3812 = vmatprep.subr.bf16.mxu0 0
    %3813 = vmatpush1.bf16.msra.mxu0 %v2299
    %3814 = vmatprep.subr.bf16.mxu0 0
    %3815 = vmatpush1.bf16.msra.mxu0 %v2312
    %3816 = vmatprep.subr.bf16.mxu0 0
    %3817 = vmatpush1.bf16.msra.mxu0 %v2325
    %3818 = vmatprep.subr.bf16.mxu0 0
    %3819 = vmatpush1.bf16.msra.mxu0 %v2338
    %3820 = vmatprep.subr.bf16.mxu0 0
    %3821 = vmatpush1.bf16.msra.mxu0 %v2351
    %3822 = vmatprep.subr.bf16.mxu0 0
    %3823 = vmatpush1.bf16.msra.mxu0 %v2364
    %3824 = vmatprep.subr.bf16.mxu0 0
    %3825 = vmatpush1.bf16.msra.mxu0 %v2377
    %3826 = vmatprep.subr.bf16.mxu0 0
    %3827 = vmatpush1.bf16.msra.mxu0 %v2390
    %3828 = vmatprep.mubr.bf16.mxu0 %v1964
    %3829 = vmatmul.mubr.bf16.gmra.mrb[0].mxu0 %v1963
    %v3830 = vpop.f32.mrb[0].mxu0
    %v3831 = vadd.f32 %v3791, %v3830
    %v3832 = vpop.f32.mrb[0].mxu0
    %v3833 = vpop.f32.mrb[0].mxu0
    %v3834 = vpop.f32.mrb[0].mxu0
    %3835 = vdwg.mxu0
    %3836 = vmatprep.subr.bf16.mxu0 0
    %3837 = vmatpush1.bf16.msra.mxu0 %v2403
    %3838 = vmatprep.subr.bf16.mxu0 0
    %3839 = vmatpush1.bf16.msra.mxu0 %v2416
    %3840 = vmatprep.subr.bf16.mxu0 0
    %3841 = vmatpush1.bf16.msra.mxu0 %v2429
    %3842 = vmatprep.subr.bf16.mxu0 0
    %3843 = vmatpush1.bf16.msra.mxu0 %v2442
    %3844 = vmatprep.subr.bf16.mxu0 0
    %3845 = vmatpush1.bf16.msra.mxu0 %v2455
    %3846 = vmatprep.subr.bf16.mxu0 0
    %3847 = vmatpush1.bf16.msra.mxu0 %v2468
    %3848 = vmatprep.subr.bf16.mxu0 0
    %3849 = vmatpush1.bf16.msra.mxu0 %v2481
    %3850 = vmatprep.subr.bf16.mxu0 0
    %3851 = vmatpush1.bf16.msra.mxu0 %v2494
    %3852 = vmatprep.subr.bf16.mxu0 0
    %3853 = vmatpush1.bf16.msra.mxu0 %v2507
    %3854 = vmatprep.subr.bf16.mxu0 0
    %3855 = vmatpush1.bf16.msra.mxu0 %v2520
    %3856 = vmatprep.subr.bf16.mxu0 0
    %3857 = vmatpush1.bf16.msra.mxu0 %v2533
    %3858 = vmatprep.subr.bf16.mxu0 0
    %3859 = vmatpush1.bf16.msra.mxu0 %v2546
    %3860 = vmatprep.subr.bf16.mxu0 0
    %3861 = vmatpush1.bf16.msra.mxu0 %v2559
    %3862 = vmatprep.subr.bf16.mxu0 0
    %3863 = vmatpush1.bf16.msra.mxu0 %v2572
    %3864 = vmatprep.subr.bf16.mxu0 0
    %3865 = vmatpush1.bf16.msra.mxu0 %v2585
    %3866 = vmatprep.subr.bf16.mxu0 0
    %3867 = vmatpush1.bf16.msra.mxu0 %v2598
    %3868 = vmatprep.mubr.bf16.mxu0 %v1966
    %3869 = vmatmul.mubr.bf16.gmra.mrb[0].mxu0 %v1965
    %v3870 = vpop.f32.mrb[0].mxu0
    %v3871 = vadd.f32 %v3831, %v3870
    %v3872 = vpop.f32.mrb[0].mxu0
    %v3873 = vpop.f32.mrb[0].mxu0
    %v3874 = vpop.f32.mrb[0].mxu0
    %3875 = vdwg.mxu0
    %3876 = vmatprep.subr.bf16.mxu0 0
    %3877 = vmatpush1.bf16.msra.mxu0 %v2611
    %3878 = vmatprep.subr.bf16.mxu0 0
    %3879 = vmatpush1.bf16.msra.mxu0 %v2624
    %3880 = vmatprep.subr.bf16.mxu0 0
    %3881 = vmatpush1.bf16.msra.mxu0 %v2637
    %3882 = vmatprep.subr.bf16.mxu0 0
    %3883 = vmatpush1.bf16.msra.mxu0 %v2650
    %3884 = vmatprep.subr.bf16.mxu0 0
    %3885 = vmatpush1.bf16.msra.mxu0 %v2663
    %3886 = vmatprep.subr.bf16.mxu0 0
    %3887 = vmatpush1.bf16.msra.mxu0 %v2676
    %3888 = vmatprep.subr.bf16.mxu0 0
    %3889 = vmatpush1.bf16.msra.mxu0 %v2689
    %3890 = vmatprep.subr.bf16.mxu0 0
    %3891 = vmatpush1.bf16.msra.mxu0 %v2702
    %3892 = vmatprep.subr.bf16.mxu0 0
    %3893 = vmatpush1.bf16.msra.mxu0 0
    %3894 = vmatprep.subr.bf16.mxu0 0
    %3895 = vmatpush1.bf16.msra.mxu0 0
    %3896 = vmatprep.subr.bf16.mxu0 0
    %3897 = vmatpush1.bf16.msra.mxu0 0
    %3898 = vmatprep.subr.bf16.mxu0 0
    %3899 = vmatpush1.bf16.msra.mxu0 0
    %3900 = vmatprep.subr.bf16.mxu0 0
    %3901 = vmatpush1.bf16.msra.mxu0 0
    %3902 = vmatprep.subr.bf16.mxu0 0
    %3903 = vmatpush1.bf16.msra.mxu0 0
    %3904 = vmatprep.subr.bf16.mxu0 0
    %3905 = vmatpush1.bf16.msra.mxu0 0
    %3906 = vmatprep.subr.bf16.mxu0 0
    %3907 = vmatpush1.bf16.msra.mxu0 0
    %3908 = vmatprep.mubr.bf16.mxu0 0
    %3909 = vmatmul.mubr.bf16.gmra.mrb[0].mxu0 %v1967
    %v3910 = vpop.f32.mrb[0].mxu0
    %v3911 = vadd.f32 %v3871, %v3910
    %v3912 = vpop.f32.mrb[0].mxu0
    %v3913 = vpop.f32.mrb[0].mxu0
    %v3914 = vpop.f32.mrb[0].mxu0
    %3915 = vdwg.mxu0
    %v3916 = vmax.f32 %v2930, 0.0
    %v3917 = vmax.f32 %v2932, 0.0
    %v3918 = vmax.f32 %v3094, 0.0
    %v3919 = vmax.f32 %v3096, 0.0
    %v3920 = vmax.f32 %v3258, 0.0
    %v3921 = vmax.f32 %v3260, 0.0
    %v3922 = vmax.f32 %v3422, 0.0
    %v3923 = vmax.f32 %v3424, 0.0
    %v3924 = vmax.f32 %v3586, 0.0
    %v3925 = vmax.f32 %v3588, 0.0
    %v3926 = vmax.f32 %v3750, 0.0
    %v3927 = vmax.f32 %v3752, 0.0
    %v3928 = vmax.f32 %v3911, 0.0
    %v3929 = vpack.c.bf16 %v3916, %v3916
    %v3930 = vpack.c.bf16 %v3917, %v3917
    %v3931 = vpack.c.bf16 %v3918, %v3918
    %v3932 = vpack.c.bf16 %v3919, %v3919
    %v3933 = vpack.c.bf16 %v3920, %v3920
    %v3934 = vpack.c.bf16 %v3921, %v3921
    %v3935 = vpack.c.bf16 %v3922, %v3922
    %v3936 = vpack.c.bf16 %v3923, %v3923
    %v3937 = vpack.c.bf16 %v3924, %v3924
    %v3938 = vpack.c.bf16 %v3925, %v3925
    %v3939 = vpack.c.bf16 %v3926, %v3926
    %v3940 = vpack.c.bf16 %v3927, %v3927
    %v3941 = vpack.c.bf16 %v3928, %v3928
    // Predicated region
    $region78: #{decoder_forward.1} parent=1 // pred_check
      %p3942 = pneg %p134
    $region79: #{decoder_forward.1} parent=1 // pred_check_branch
      %3944 = sbr.rel (%p3942) target = $region81
    $region80: #{decoder_forward.1} parent=1 // pred_region
      %s3945 = scalar_lea.sflag [#allocation4], 1
      %s3946 = smul.u32 4, 208
      %s3947 = smul.u32 %s3946, 7
      %s3948 = sshll.u32 %s3947, 4
      %3949 = dma.done %s3945, %s3948
    $region81: #{decoder_forward.1} parent=1 // pred_fallthru
      _
    %v3950 = vld [vmem:[#allocation3] sm:$0xff]
    %v3951 = vld [vmem:[#allocation3 + $0x8] sm:$0xff]
    %v3952 = vld [vmem:[#allocation3 + $0x10] sm:$0xff]
    %v3953 = vld [vmem:[#allocation3 + $0x18] sm:$0xff]
    %v3954 = vld [vmem:[#allocation3 + $0x20] sm:$0xff]
    %v3955 = vld [vmem:[#allocation3 + $0x28] sm:$0xff]
    %v3956 = vld [vmem:[#allocation3 + $0x30] sm:$0xff]
    %v3957 = vld [vmem:[#allocation3 + $0x38] sm:$0xff]
    %v3958 = vld [vmem:[#allocation3 + $0x40] sm:$0xff]
    %v3959 = vld [vmem:[#allocation3 + $0x48] sm:$0xff]
    %v3960 = vld [vmem:[#allocation3 + $0x50] sm:$0xff]
    %v3961 = vld [vmem:[#allocation3 + $0x58] sm:$0xff]
    %v3962 = vld [vmem:[#allocation3 + $0x60] sm:$0xff]
    %v3963 = vld [vmem:[#allocation3 + $0x68] sm:$0xff]
    %v3964 = vld [vmem:[#allocation3 + $0x70] sm:$0xff]
    %v3965 = vld [vmem:[#allocation3 + $0x78] sm:$0xff]
    %v3966 = vld [vmem:[#allocation3 + $0x80] sm:$0xff]
    %v3967 = vld [vmem:[#allocation3 + $0x88] sm:$0xff]
    %v3968 = vld [vmem:[#allocation3 + $0x90] sm:$0xff]
    %v3969 = vld [vmem:[#allocation3 + $0x98] sm:$0xff]
    %v3970 = vld [vmem:[#allocation3 + $0xa0] sm:$0xff]
    %v3971 = vld [vmem:[#allocation3 + $0xa8] sm:$0xff]
    %v3972 = vld [vmem:[#allocation3 + $0xb0] sm:$0xff]
    %v3973 = vld [vmem:[#allocation3 + $0xb8] sm:$0xff]
    %v3974 = vld [vmem:[#allocation3 + $0xc0] sm:$0xff]
    %v3975 = vld [vmem:[#allocation3 + $0xc8] sm:$0xff]
    %v3976 = vld [vmem:[#allocation3 + $0xd0] sm:$0xff]
    %v3977 = vld [vmem:[#allocation3 + $0xd8] sm:$0xff]
    %v3978 = vld [vmem:[#allocation3 + $0xe0] sm:$0xff]
    %v3979 = vld [vmem:[#allocation3 + $0xe8] sm:$0xff]
    %v3980 = vld [vmem:[#allocation3 + $0xf0] sm:$0xff]
    %v3981 = vld [vmem:[#allocation3 + $0xf8] sm:$0xff]
    %v3982 = vld [vmem:[#allocation3 + $0x100] sm:$0xff]
    %v3983 = vld [vmem:[#allocation3 + $0x108] sm:$0xff]
    %v3984 = vld [vmem:[#allocation3 + $0x110] sm:$0xff]
    %v3985 = vld [vmem:[#allocation3 + $0x118] sm:$0xff]
    %v3986 = vld [vmem:[#allocation3 + $0x120] sm:$0xff]
    %v3987 = vld [vmem:[#allocation3 + $0x128] sm:$0xff]
    %v3988 = vld [vmem:[#allocation3 + $0x130] sm:$0xff]
    %v3989 = vld [vmem:[#allocation3 + $0x138] sm:$0xff]
    %v3990 = vld [vmem:[#allocation3 + $0x140] sm:$0xff]
    %v3991 = vld [vmem:[#allocation3 + $0x148] sm:$0xff]
    %v3992 = vld [vmem:[#allocation3 + $0x150] sm:$0xff]
    %v3993 = vld [vmem:[#allocation3 + $0x158] sm:$0xff]
    %v3994 = vld [vmem:[#allocation3 + $0x160] sm:$0xff]
    %v3995 = vld [vmem:[#allocation3 + $0x168] sm:$0xff]
    %v3996 = vld [vmem:[#allocation3 + $0x170] sm:$0xff]
    %v3997 = vld [vmem:[#allocation3 + $0x178] sm:$0xff]
    %v3998 = vld [vmem:[#allocation3 + $0x180] sm:$0xff]
    %v3999 = vld [vmem:[#allocation3 + $0x188] sm:$0xff]
    %v4000 = vld [vmem:[#allocation3 + $0x190] sm:$0xff]
    %v4001 = vld [vmem:[#allocation3 + $0x198] sm:$0xff]
    %v4002 = vld [vmem:[#allocation3 + $0x1a0] sm:$0xff]
    %v4003 = vld [vmem:[#allocation3 + $0x1a8] sm:$0xff]
    %v4004 = vld [vmem:[#allocation3 + $0x1b0] sm:$0xff]
    %v4005 = vld [vmem:[#allocation3 + $0x1b8] sm:$0xff]
    %v4006 = vld [vmem:[#allocation3 + $0x1c0] sm:$0xff]
    %v4007 = vld [vmem:[#allocation3 + $0x1c8] sm:$0xff]
    %v4008 = vld [vmem:[#allocation3 + $0x1d0] sm:$0xff]
    %v4009 = vld [vmem:[#allocation3 + $0x1d8] sm:$0xff]
    %v4010 = vld [vmem:[#allocation3 + $0x1e0] sm:$0xff]
    %v4011 = vld [vmem:[#allocation3 + $0x1e8] sm:$0xff]
    %v4012 = vld [vmem:[#allocation3 + $0x1f0] sm:$0xff]
    %v4013 = vld [vmem:[#allocation3 + $0x1f8] sm:$0xff]
    %v4014 = vld [vmem:[#allocation3 + $0x200] sm:$0xff]
    %v4015 = vld [vmem:[#allocation3 + $0x208] sm:$0xff]
    %v4016 = vld [vmem:[#allocation3 + $0x210] sm:$0xff]
    %v4017 = vld [vmem:[#allocation3 + $0x218] sm:$0xff]
    %v4018 = vld [vmem:[#allocation3 + $0x220] sm:$0xff]
    %v4019 = vld [vmem:[#allocation3 + $0x228] sm:$0xff]
    %v4020 = vld [vmem:[#allocation3 + $0x230] sm:$0xff]
    %v4021 = vld [vmem:[#allocation3 + $0x238] sm:$0xff]
    %v4022 = vld [vmem:[#allocation3 + $0x240] sm:$0xff]
    %v4023 = vld [vmem:[#allocation3 + $0x248] sm:$0xff]
    %v4024 = vld [vmem:[#allocation3 + $0x250] sm:$0xff]
    %v4025 = vld [vmem:[#allocation3 + $0x258] sm:$0xff]
    %v4026 = vld [vmem:[#allocation3 + $0x260] sm:$0xff]
    %v4027 = vld [vmem:[#allocation3 + $0x268] sm:$0xff]
    %v4028 = vld [vmem:[#allocation3 + $0x270] sm:$0xff]
    %v4029 = vld [vmem:[#allocation3 + $0x278] sm:$0xff]
    %v4030 = vld [vmem:[#allocation3 + $0x280] sm:$0xff]
    %v4031 = vld [vmem:[#allocation3 + $0x288] sm:$0xff]
    %v4032 = vld [vmem:[#allocation3 + $0x290] sm:$0xff]
    %v4033 = vld [vmem:[#allocation3 + $0x298] sm:$0xff]
    %v4034 = vld [vmem:[#allocation3 + $0x2a0] sm:$0xff]
    %v4035 = vld [vmem:[#allocation3 + $0x2a8] sm:$0xff]
    %v4036 = vld [vmem:[#allocation3 + $0x2b0] sm:$0xff]
    %v4037 = vld [vmem:[#allocation3 + $0x2b8] sm:$0xff]
    %v4038 = vld [vmem:[#allocation3 + $0x2c0] sm:$0xff]
    %v4039 = vld [vmem:[#allocation3 + $0x2c8] sm:$0xff]
    %v4040 = vld [vmem:[#allocation3 + $0x2d0] sm:$0xff]
    %v4041 = vld [vmem:[#allocation3 + $0x2d8] sm:$0xff]
    %v4042 = vld [vmem:[#allocation3 + $0x2e0] sm:$0xff]
    %v4043 = vld [vmem:[#allocation3 + $0x2e8] sm:$0xff]
    %v4044 = vld [vmem:[#allocation3 + $0x2f0] sm:$0xff]
    %v4045 = vld [vmem:[#allocation3 + $0x2f8] sm:$0xff]
    %v4046 = vld [vmem:[#allocation3 + $0x300] sm:$0xff]
    %v4047 = vld [vmem:[#allocation3 + $0x308] sm:$0xff]
    %v4048 = vld [vmem:[#allocation3 + $0x310] sm:$0xff]
    %v4049 = vld [vmem:[#allocation3 + $0x318] sm:$0xff]
    %v4050 = vld [vmem:[#allocation3 + $0x320] sm:$0xff]
    %v4051 = vld [vmem:[#allocation3 + $0x328] sm:$0xff]
    %v4052 = vld [vmem:[#allocation3 + $0x330] sm:$0xff]
    %v4053 = vld [vmem:[#allocation3 + $0x338] sm:$0xff]
    %v4054 = vld [vmem:[#allocation3 + $0x340] sm:$0xff]
    %v4055 = vld [vmem:[#allocation3 + $0x348] sm:$0xff]
    %v4056 = vld [vmem:[#allocation3 + $0x350] sm:$0xff]
    %v4057 = vld [vmem:[#allocation3 + $0x358] sm:$0xff]
    %v4058 = vld [vmem:[#allocation3 + $0x360] sm:$0xff]
    %v4059 = vld [vmem:[#allocation3 + $0x368] sm:$0xff]
    %v4060 = vld [vmem:[#allocation3 + $0x370] sm:$0xff]
    %v4061 = vld [vmem:[#allocation3 + $0x378] sm:$0xff]
    %v4062 = vld [vmem:[#allocation3 + $0x380] sm:$0xff]
    %v4063 = vld [vmem:[#allocation3 + $0x388] sm:$0xff]
    %v4064 = vld [vmem:[#allocation3 + $0x390] sm:$0xff]
    %v4065 = vld [vmem:[#allocation3 + $0x398] sm:$0xff]
    %v4066 = vld [vmem:[#allocation3 + $0x3a0] sm:$0xff]
    %v4067 = vld [vmem:[#allocation3 + $0x3a8] sm:$0xff]
    %v4068 = vld [vmem:[#allocation3 + $0x3b0] sm:$0xff]
    %v4069 = vld [vmem:[#allocation3 + $0x3b8] sm:$0xff]
    %v4070 = vld [vmem:[#allocation3 + $0x3c0] sm:$0xff]
    %v4071 = vld [vmem:[#allocation3 + $0x3c8] sm:$0xff]
    %v4072 = vld [vmem:[#allocation3 + $0x3d0] sm:$0xff]
    %v4073 = vld [vmem:[#allocation3 + $0x3d8] sm:$0xff]
    %v4074 = vld [vmem:[#allocation3 + $0x3e0] sm:$0xff]
    %v4075 = vld [vmem:[#allocation3 + $0x3e8] sm:$0xff]
    %v4076 = vld [vmem:[#allocation3 + $0x3f0] sm:$0xff]
    %v4077 = vld [vmem:[#allocation3 + $0x3f8] sm:$0xff]
    %v4078 = vld [vmem:[#allocation3 + $0x400] sm:$0xff]
    %v4079 = vld [vmem:[#allocation3 + $0x408] sm:$0xff]
    %v4080 = vld [vmem:[#allocation3 + $0x410] sm:$0xff]
    %v4081 = vld [vmem:[#allocation3 + $0x418] sm:$0xff]
    %v4082 = vld [vmem:[#allocation3 + $0x420] sm:$0xff]
    %v4083 = vld [vmem:[#allocation3 + $0x428] sm:$0xff]
    %v4084 = vld [vmem:[#allocation3 + $0x430] sm:$0xff]
    %v4085 = vld [vmem:[#allocation3 + $0x438] sm:$0xff]
    %v4086 = vld [vmem:[#allocation3 + $0x440] sm:$0xff]
    %v4087 = vld [vmem:[#allocation3 + $0x448] sm:$0xff]
    %v4088 = vld [vmem:[#allocation3 + $0x450] sm:$0xff]
    %v4089 = vld [vmem:[#allocation3 + $0x458] sm:$0xff]
    %v4090 = vld [vmem:[#allocation3 + $0x460] sm:$0xff]
    %v4091 = vld [vmem:[#allocation3 + $0x468] sm:$0xff]
    %v4092 = vld [vmem:[#allocation3 + $0x470] sm:$0xff]
    %v4093 = vld [vmem:[#allocation3 + $0x478] sm:$0xff]
    %v4094 = vld [vmem:[#allocation3 + $0x480] sm:$0xff]
    %v4095 = vld [vmem:[#allocation3 + $0x488] sm:$0xff]
    %v4096 = vld [vmem:[#allocation3 + $0x490] sm:$0xff]
    %v4097 = vld [vmem:[#allocation3 + $0x498] sm:$0xff]
    %v4098 = vld [vmem:[#allocation3 + $0x4a0] sm:$0xff]
    %v4099 = vld [vmem:[#allocation3 + $0x4a8] sm:$0xff]
    %v4100 = vld [vmem:[#allocation3 + $0x4b0] sm:$0xff]
    %v4101 = vld [vmem:[#allocation3 + $0x4b8] sm:$0xff]
    %v4102 = vld [vmem:[#allocation3 + $0x4c0] sm:$0xff]
    %v4103 = vld [vmem:[#allocation3 + $0x4c8] sm:$0xff]
    %v4104 = vld [vmem:[#allocation3 + $0x4d0] sm:$0xff]
    %v4105 = vld [vmem:[#allocation3 + $0x4d8] sm:$0xff]
    %v4106 = vld [vmem:[#allocation3 + $0x4e0] sm:$0xff]
    %v4107 = vld [vmem:[#allocation3 + $0x4e8] sm:$0xff]
    %v4108 = vld [vmem:[#allocation3 + $0x4f0] sm:$0xff]
    %v4109 = vld [vmem:[#allocation3 + $0x4f8] sm:$0xff]
    %v4110 = vld [vmem:[#allocation3 + $0x500] sm:$0xff]
    %v4111 = vld [vmem:[#allocation3 + $0x508] sm:$0xff]
    %v4112 = vld [vmem:[#allocation3 + $0x510] sm:$0xff]
    %v4113 = vld [vmem:[#allocation3 + $0x518] sm:$0xff]
    %v4114 = vld [vmem:[#allocation3 + $0x520] sm:$0xff]
    %v4115 = vld [vmem:[#allocation3 + $0x528] sm:$0xff]
    %v4116 = vld [vmem:[#allocation3 + $0x530] sm:$0xff]
    %v4117 = vld [vmem:[#allocation3 + $0x538] sm:$0xff]
    %v4118 = vld [vmem:[#allocation3 + $0x540] sm:$0xff]
    %v4119 = vld [vmem:[#allocation3 + $0x548] sm:$0xff]
    %v4120 = vld [vmem:[#allocation3 + $0x550] sm:$0xff]
    %v4121 = vld [vmem:[#allocation3 + $0x558] sm:$0xff]
    %v4122 = vld [vmem:[#allocation3 + $0x560] sm:$0xff]
    %v4123 = vld [vmem:[#allocation3 + $0x568] sm:$0xff]
    %v4124 = vld [vmem:[#allocation3 + $0x570] sm:$0xff]
    %v4125 = vld [vmem:[#allocation3 + $0x578] sm:$0xff]
    %v4126 = vld [vmem:[#allocation3 + $0x580] sm:$0xff]
    %v4127 = vld [vmem:[#allocation3 + $0x588] sm:$0xff]
    %v4128 = vld [vmem:[#allocation3 + $0x590] sm:$0xff]
    %v4129 = vld [vmem:[#allocation3 + $0x598] sm:$0xff]
    %v4130 = vld [vmem:[#allocation3 + $0x5a0] sm:$0xff]
    %v4131 = vld [vmem:[#allocation3 + $0x5a8] sm:$0xff]
    %v4132 = vld [vmem:[#allocation3 + $0x5b0] sm:$0xff]
    %v4133 = vld [vmem:[#allocation3 + $0x5b8] sm:$0xff]
    %v4134 = vld [vmem:[#allocation3 + $0x5c0] sm:$0xff]
    %v4135 = vld [vmem:[#allocation3 + $0x5c8] sm:$0xff]
    %v4136 = vld [vmem:[#allocation3 + $0x5d0] sm:$0xff]
    %v4137 = vld [vmem:[#allocation3 + $0x5d8] sm:$0xff]
    %v4138 = vld [vmem:[#allocation3 + $0x5e0] sm:$0xff]
    %v4139 = vld [vmem:[#allocation3 + $0x5e8] sm:$0xff]
    %v4140 = vld [vmem:[#allocation3 + $0x5f0] sm:$0xff]
    %v4141 = vld [vmem:[#allocation3 + $0x5f8] sm:$0xff]
    %v4142 = vld [vmem:[#allocation3 + $0x600] sm:$0xff]
    %v4143 = vld [vmem:[#allocation3 + $0x608] sm:$0xff]
    %v4144 = vld [vmem:[#allocation3 + $0x610] sm:$0xff]
    %v4145 = vld [vmem:[#allocation3 + $0x618] sm:$0xff]
    %v4146 = vld [vmem:[#allocation3 + $0x620] sm:$0xff]
    %v4147 = vld [vmem:[#allocation3 + $0x628] sm:$0xff]
    %v4148 = vld [vmem:[#allocation3 + $0x630] sm:$0xff]
    %v4149 = vld [vmem:[#allocation3 + $0x638] sm:$0xff]
    %v4150 = vld [vmem:[#allocation3 + $0x640] sm:$0xff]
    %v4151 = vld [vmem:[#allocation3 + $0x648] sm:$0xff]
    %v4152 = vld [vmem:[#allocation3 + $0x650] sm:$0xff]
    %v4153 = vld [vmem:[#allocation3 + $0x658] sm:$0xff]
    %v4154 = vld [vmem:[#allocation3 + $0x660] sm:$0xff]
    %v4155 = vld [vmem:[#allocation3 + $0x668] sm:$0xff]
    %v4156 = vld [vmem:[#allocation3 + $0x670] sm:$0xff]
    %v4157 = vld [vmem:[#allocation3 + $0x678] sm:$0xff]
    %v4158 = vld [vmem:[#allocation3 + $0x680] sm:$0xff]
    %v4159 = vld [vmem:[#allocation3 + $0x688] sm:$0xff]
    %v4160 = vld [vmem:[#allocation3 + $0x690] sm:$0xff]
    %v4161 = vld [vmem:[#allocation3 + $0x698] sm:$0xff]
    %v4162 = vld [vmem:[#allocation3 + $0x6a0] sm:$0xff]
    %v4163 = vld [vmem:[#allocation3 + $0x6a8] sm:$0xff]
    %v4164 = vld [vmem:[#allocation3 + $0x6b0] sm:$0xff]
    %v4165 = vld [vmem:[#allocation3 + $0x6b8] sm:$0xff]
    %v4166 = vld [vmem:[#allocation3 + $0x6c0] sm:$0xff]
    %v4167 = vld [vmem:[#allocation3 + $0x6c8] sm:$0xff]
    %v4168 = vld [vmem:[#allocation3 + $0x6d0] sm:$0xff]
    %v4169 = vld [vmem:[#allocation3 + $0x6d8] sm:$0xff]
    %v4170 = vld [vmem:[#allocation3 + $0x6e0] sm:$0xff]
    %v4171 = vld [vmem:[#allocation3 + $0x6e8] sm:$0xff]
    %v4172 = vld [vmem:[#allocation3 + $0x6f0] sm:$0xff]
    %v4173 = vld [vmem:[#allocation3 + $0x6f8] sm:$0xff]
    %v4174 = vld [vmem:[#allocation3 + $0x700] sm:$0xff]
    %v4175 = vld [vmem:[#allocation3 + $0x708] sm:$0xff]
    %v4176 = vld [vmem:[#allocation3 + $0x710] sm:$0xff]
    %v4177 = vld [vmem:[#allocation3 + $0x718] sm:$0xff]
    %v4178 = vld [vmem:[#allocation3 + $0x720] sm:$0xff]
    %v4179 = vld [vmem:[#allocation3 + $0x728] sm:$0xff]
    %v4180 = vld [vmem:[#allocation3 + $0x730] sm:$0xff]
    %v4181 = vld [vmem:[#allocation3 + $0x738] sm:$0xff]
    %v4182 = vld [vmem:[#allocation3 + $0x740] sm:$0xff]
    %v4183 = vld [vmem:[#allocation3 + $0x748] sm:$0xff]
    %v4184 = vld [vmem:[#allocation3 + $0x750] sm:$0xff]
    %v4185 = vld [vmem:[#allocation3 + $0x758] sm:$0xff]
    %v4186 = vld [vmem:[#allocation3 + $0x760] sm:$0xff]
    %v4187 = vld [vmem:[#allocation3 + $0x768] sm:$0xff]
    %v4188 = vld [vmem:[#allocation3 + $0x770] sm:$0xff]
    %v4189 = vld [vmem:[#allocation3 + $0x778] sm:$0xff]
    %v4190 = vld [vmem:[#allocation3 + $0x780] sm:$0xff]
    %v4191 = vld [vmem:[#allocation3 + $0x788] sm:$0xff]
    %v4192 = vld [vmem:[#allocation3 + $0x790] sm:$0xff]
    %v4193 = vld [vmem:[#allocation3 + $0x798] sm:$0xff]
    %v4194 = vld [vmem:[#allocation3 + $0x7a0] sm:$0xff]
    %v4195 = vld [vmem:[#allocation3 + $0x7a8] sm:$0xff]
    %v4196 = vld [vmem:[#allocation3 + $0x7b0] sm:$0xff]
    %v4197 = vld [vmem:[#allocation3 + $0x7b8] sm:$0xff]
    %v4198 = vld [vmem:[#allocation3 + $0x7c0] sm:$0xff]
    %v4199 = vld [vmem:[#allocation3 + $0x7c8] sm:$0xff]
    %v4200 = vld [vmem:[#allocation3 + $0x7d0] sm:$0xff]
    %v4201 = vld [vmem:[#allocation3 + $0x7d8] sm:$0xff]
    %v4202 = vld [vmem:[#allocation3 + $0x7e0] sm:$0xff]
    %v4203 = vld [vmem:[#allocation3 + $0x7e8] sm:$0xff]
    %v4204 = vld [vmem:[#allocation3 + $0x7f0] sm:$0xff]
    %v4205 = vld [vmem:[#allocation3 + $0x7f8] sm:$0xff]
    %v4206 = vld [vmem:[#allocation3 + $0x800] sm:$0xff]
    %v4207 = vld [vmem:[#allocation3 + $0x808] sm:$0xff]
    %v4208 = vld [vmem:[#allocation3 + $0x810] sm:$0xff]
    %v4209 = vld [vmem:[#allocation3 + $0x818] sm:$0xff]
    %v4210 = vld [vmem:[#allocation3 + $0x820] sm:$0xff]
    %v4211 = vld [vmem:[#allocation3 + $0x828] sm:$0xff]
    %v4212 = vld [vmem:[#allocation3 + $0x830] sm:$0xff]
    %v4213 = vld [vmem:[#allocation3 + $0x838] sm:$0xff]
    %v4214 = vld [vmem:[#allocation3 + $0x840] sm:$0xff]
    %v4215 = vld [vmem:[#allocation3 + $0x848] sm:$0xff]
    %v4216 = vld [vmem:[#allocation3 + $0x850] sm:$0xff]
    %v4217 = vld [vmem:[#allocation3 + $0x858] sm:$0xff]
    %v4218 = vld [vmem:[#allocation3 + $0x860] sm:$0xff]
    %v4219 = vld [vmem:[#allocation3 + $0x868] sm:$0xff]
    %v4220 = vld [vmem:[#allocation3 + $0x870] sm:$0xff]
    %v4221 = vld [vmem:[#allocation3 + $0x878] sm:$0xff]
    %v4222 = vld [vmem:[#allocation3 + $0x880] sm:$0xff]
    %v4223 = vld [vmem:[#allocation3 + $0x888] sm:$0xff]
    %v4224 = vld [vmem:[#allocation3 + $0x890] sm:$0xff]
    %v4225 = vld [vmem:[#allocation3 + $0x898] sm:$0xff]
    %v4226 = vld [vmem:[#allocation3 + $0x8a0] sm:$0xff]
    %v4227 = vld [vmem:[#allocation3 + $0x8a8] sm:$0xff]
    %v4228 = vld [vmem:[#allocation3 + $0x8b0] sm:$0xff]
    %v4229 = vld [vmem:[#allocation3 + $0x8b8] sm:$0xff]
    %v4230 = vld [vmem:[#allocation3 + $0x8c0] sm:$0xff]
    %v4231 = vld [vmem:[#allocation3 + $0x8c8] sm:$0xff]
    %v4232 = vld [vmem:[#allocation3 + $0x8d0] sm:$0xff]
    %v4233 = vld [vmem:[#allocation3 + $0x8d8] sm:$0xff]
    %v4234 = vld [vmem:[#allocation3 + $0x8e0] sm:$0xff]
    %v4235 = vld [vmem:[#allocation3 + $0x8e8] sm:$0xff]
    %v4236 = vld [vmem:[#allocation3 + $0x8f0] sm:$0xff]
    %v4237 = vld [vmem:[#allocation3 + $0x8f8] sm:$0xff]
    %v4238 = vld [vmem:[#allocation3 + $0x900] sm:$0xff]
    %v4239 = vld [vmem:[#allocation3 + $0x908] sm:$0xff]
    %v4240 = vld [vmem:[#allocation3 + $0x910] sm:$0xff]
    %v4241 = vld [vmem:[#allocation3 + $0x918] sm:$0xff]
    %v4242 = vld [vmem:[#allocation3 + $0x920] sm:$0xff]
    %v4243 = vld [vmem:[#allocation3 + $0x928] sm:$0xff]
    %v4244 = vld [vmem:[#allocation3 + $0x930] sm:$0xff]
    %v4245 = vld [vmem:[#allocation3 + $0x938] sm:$0xff]
    %v4246 = vld [vmem:[#allocation3 + $0x940] sm:$0xff]
    %v4247 = vld [vmem:[#allocation3 + $0x948] sm:$0xff]
    %v4248 = vld [vmem:[#allocation3 + $0x950] sm:$0xff]
    %v4249 = vld [vmem:[#allocation3 + $0x958] sm:$0xff]
    %v4250 = vld [vmem:[#allocation3 + $0x960] sm:$0xff]
    %v4251 = vld [vmem:[#allocation3 + $0x968] sm:$0xff]
    %v4252 = vld [vmem:[#allocation3 + $0x970] sm:$0xff]
    %v4253 = vld [vmem:[#allocation3 + $0x978] sm:$0xff]
    %v4254 = vld [vmem:[#allocation3 + $0x980] sm:$0xff]
    %v4255 = vld [vmem:[#allocation3 + $0x988] sm:$0xff]
    %v4256 = vld [vmem:[#allocation3 + $0x990] sm:$0xff]
    %v4257 = vld [vmem:[#allocation3 + $0x998] sm:$0xff]
    %v4258 = vld [vmem:[#allocation3 + $0x9a0] sm:$0xff]
    %v4259 = vld [vmem:[#allocation3 + $0x9a8] sm:$0xff]
    %v4260 = vld [vmem:[#allocation3 + $0x9b0] sm:$0xff]
    %v4261 = vld [vmem:[#allocation3 + $0x9b8] sm:$0xff]
    %v4262 = vld [vmem:[#allocation3 + $0x9c0] sm:$0xff]
    %v4263 = vld [vmem:[#allocation3 + $0x9c8] sm:$0xff]
    %v4264 = vld [vmem:[#allocation3 + $0x9d0] sm:$0xff]
    %v4265 = vld [vmem:[#allocation3 + $0x9d8] sm:$0xff]
    %v4266 = vld [vmem:[#allocation3 + $0x9e0] sm:$0xff]
    %v4267 = vld [vmem:[#allocation3 + $0x9e8] sm:$0xff]
    %v4268 = vld [vmem:[#allocation3 + $0x9f0] sm:$0xff]
    %v4269 = vld [vmem:[#allocation3 + $0x9f8] sm:$0xff]
    %v4270 = vld [vmem:[#allocation3 + $0xa00] sm:$0xff]
    %v4271 = vld [vmem:[#allocation3 + $0xa08] sm:$0xff]
    %v4272 = vld [vmem:[#allocation3 + $0xa10] sm:$0xff]
    %v4273 = vld [vmem:[#allocation3 + $0xa18] sm:$0xff]
    %v4274 = vld [vmem:[#allocation3 + $0xa20] sm:$0xff]
    %v4275 = vld [vmem:[#allocation3 + $0xa28] sm:$0xff]
    %v4276 = vld [vmem:[#allocation3 + $0xa30] sm:$0xff]
    %v4277 = vld [vmem:[#allocation3 + $0xa38] sm:$0xff]
    %v4278 = vld [vmem:[#allocation3 + $0xa40] sm:$0xff]
    %v4279 = vld [vmem:[#allocation3 + $0xa48] sm:$0xff]
    %v4280 = vld [vmem:[#allocation3 + $0xa50] sm:$0xff]
    %v4281 = vld [vmem:[#allocation3 + $0xa58] sm:$0xff]
    %v4282 = vld [vmem:[#allocation3 + $0xa60] sm:$0xff]
    %v4283 = vld [vmem:[#allocation3 + $0xa68] sm:$0xff]
    %v4284 = vld [vmem:[#allocation3 + $0xa70] sm:$0xff]
    %v4285 = vld [vmem:[#allocation3 + $0xa78] sm:$0xff]
    %v4286 = vld [vmem:[#allocation3 + $0xa80] sm:$0xff]
    %v4287 = vld [vmem:[#allocation3 + $0xa88] sm:$0xff]
    %v4288 = vld [vmem:[#allocation3 + $0xa90] sm:$0xff]
    %v4289 = vld [vmem:[#allocation3 + $0xa98] sm:$0xff]
    %v4290 = vld [vmem:[#allocation3 + $0xaa0] sm:$0xff]
    %v4291 = vld [vmem:[#allocation3 + $0xaa8] sm:$0xff]
    %v4292 = vld [vmem:[#allocation3 + $0xab0] sm:$0xff]
    %v4293 = vld [vmem:[#allocation3 + $0xab8] sm:$0xff]
    %v4294 = vld [vmem:[#allocation3 + $0xac0] sm:$0xff]
    %v4295 = vld [vmem:[#allocation3 + $0xac8] sm:$0xff]
    %v4296 = vld [vmem:[#allocation3 + $0xad0] sm:$0xff]
    %v4297 = vld [vmem:[#allocation3 + $0xad8] sm:$0xff]
    %v4298 = vld [vmem:[#allocation3 + $0xae0] sm:$0xff]
    %v4299 = vld [vmem:[#allocation3 + $0xae8] sm:$0xff]
    %v4300 = vld [vmem:[#allocation3 + $0xaf0] sm:$0xff]
    %v4301 = vld [vmem:[#allocation3 + $0xaf8] sm:$0xff]
    %v4302 = vld [vmem:[#allocation3 + $0xb00] sm:$0xff]
    %v4303 = vld [vmem:[#allocation3 + $0xb08] sm:$0xff]
    %v4304 = vld [vmem:[#allocation3 + $0xb10] sm:$0xff]
    %v4305 = vld [vmem:[#allocation3 + $0xb18] sm:$0xff]
    %v4306 = vld [vmem:[#allocation3 + $0xb20] sm:$0xff]
    %v4307 = vld [vmem:[#allocation3 + $0xb28] sm:$0xff]
    %v4308 = vld [vmem:[#allocation3 + $0xb30] sm:$0xff]
    %v4309 = vld [vmem:[#allocation3 + $0xb38] sm:$0xff]
    %v4310 = vld [vmem:[#allocation3 + $0xb40] sm:$0xff]
    %v4311 = vld [vmem:[#allocation3 + $0xb48] sm:$0xff]
    %v4312 = vld [vmem:[#allocation3 + $0xb50] sm:$0xff]
    %v4313 = vld [vmem:[#allocation3 + $0xb58] sm:$0xff]
    %v4314 = vld [vmem:[#allocation3 + $0xb60] sm:$0xff]
    %v4315 = vld [vmem:[#allocation3 + $0xb68] sm:$0xff]
    %v4316 = vld [vmem:[#allocation3 + $0xb70] sm:$0xff]
    %v4317 = vld [vmem:[#allocation3 + $0xb78] sm:$0xff]
    %v4318 = vld [vmem:[#allocation3 + $0xb80] sm:$0xff]
    %v4319 = vld [vmem:[#allocation3 + $0xb88] sm:$0xff]
    %v4320 = vld [vmem:[#allocation3 + $0xb90] sm:$0xff]
    %v4321 = vld [vmem:[#allocation3 + $0xb98] sm:$0xff]
    %v4322 = vld [vmem:[#allocation3 + $0xba0] sm:$0xff]
    %v4323 = vld [vmem:[#allocation3 + $0xba8] sm:$0xff]
    %v4324 = vld [vmem:[#allocation3 + $0xbb0] sm:$0xff]
    %v4325 = vld [vmem:[#allocation3 + $0xbb8] sm:$0xff]
    %v4326 = vld [vmem:[#allocation3 + $0xbc0] sm:$0xff]
    %v4327 = vld [vmem:[#allocation3 + $0xbc8] sm:$0xff]
    %v4328 = vld [vmem:[#allocation3 + $0xbd0] sm:$0xff]
    %v4329 = vld [vmem:[#allocation3 + $0xbd8] sm:$0xff]
    %v4330 = vld [vmem:[#allocation3 + $0xbe0] sm:$0xff]
    %v4331 = vld [vmem:[#allocation3 + $0xbe8] sm:$0xff]
    %v4332 = vld [vmem:[#allocation3 + $0xbf0] sm:$0xff]
    %v4333 = vld [vmem:[#allocation3 + $0xbf8] sm:$0xff]
    %v4334 = vld [vmem:[#allocation3 + $0xc00] sm:$0xff]
    %v4335 = vld [vmem:[#allocation3 + $0xc08] sm:$0xff]
    %v4336 = vld [vmem:[#allocation3 + $0xc10] sm:$0xff]
    %v4337 = vld [vmem:[#allocation3 + $0xc18] sm:$0xff]
    %v4338 = vld [vmem:[#allocation3 + $0xc20] sm:$0xff]
    %v4339 = vld [vmem:[#allocation3 + $0xc28] sm:$0xff]
    %v4340 = vld [vmem:[#allocation3 + $0xc30] sm:$0xff]
    %v4341 = vld [vmem:[#allocation3 + $0xc38] sm:$0xff]
    %v4342 = vld [vmem:[#allocation3 + $0xc40] sm:$0xff]
    %v4343 = vld [vmem:[#allocation3 + $0xc48] sm:$0xff]
    %v4344 = vld [vmem:[#allocation3 + $0xc50] sm:$0xff]
    %v4345 = vld [vmem:[#allocation3 + $0xc58] sm:$0xff]
    %v4346 = vld [vmem:[#allocation3 + $0xc60] sm:$0xff]
    %v4347 = vld [vmem:[#allocation3 + $0xc68] sm:$0xff]
    %v4348 = vld [vmem:[#allocation3 + $0xc70] sm:$0xff]
    %v4349 = vld [vmem:[#allocation3 + $0xc78] sm:$0xff]
    %v4350 = vld [vmem:[#allocation3 + $0xc80] sm:$0xff]
    %v4351 = vld [vmem:[#allocation3 + $0xc88] sm:$0xff]
    %v4352 = vld [vmem:[#allocation3 + $0xc90] sm:$0xff]
    %v4353 = vld [vmem:[#allocation3 + $0xc98] sm:$0xff]
    %v4354 = vld [vmem:[#allocation3 + $0xca0] sm:$0xff]
    %v4355 = vld [vmem:[#allocation3 + $0xca8] sm:$0xff]
    %v4356 = vld [vmem:[#allocation3 + $0xcb0] sm:$0xff]
    %v4357 = vld [vmem:[#allocation3 + $0xcb8] sm:$0xff]
    %v4358 = vld [vmem:[#allocation3 + $0xcc0] sm:$0xff]
    %v4359 = vld [vmem:[#allocation3 + $0xcc8] sm:$0xff]
    %v4360 = vld [vmem:[#allocation3 + $0xcd0] sm:$0xff]
    %v4361 = vld [vmem:[#allocation3 + $0xcd8] sm:$0xff]
    %v4362 = vld [vmem:[#allocation3 + $0xce0] sm:$0xff]
    %v4363 = vld [vmem:[#allocation3 + $0xce8] sm:$0xff]
    %v4364 = vld [vmem:[#allocation3 + $0xcf0] sm:$0xff]
    %v4365 = vld [vmem:[#allocation3 + $0xcf8] sm:$0xff]
    %v4366 = vld [vmem:[#allocation3 + $0xd00] sm:$0xff]
    %v4367 = vld [vmem:[#allocation3 + $0xd08] sm:$0xff]
    %v4368 = vld [vmem:[#allocation3 + $0xd10] sm:$0xff]
    %v4369 = vld [vmem:[#allocation3 + $0xd18] sm:$0xff]
    %v4370 = vld [vmem:[#allocation3 + $0xd20] sm:$0xff]
    %v4371 = vld [vmem:[#allocation3 + $0xd28] sm:$0xff]
    %v4372 = vld [vmem:[#allocation3 + $0xd30] sm:$0xff]
    %v4373 = vld [vmem:[#allocation3 + $0xd38] sm:$0xff]
    %v4374 = vld [vmem:[#allocation3 + $0xd40] sm:$0xff]
    %v4375 = vld [vmem:[#allocation3 + $0xd48] sm:$0xff]
    %v4376 = vld [vmem:[#allocation3 + $0xd50] sm:$0xff]
    %v4377 = vld [vmem:[#allocation3 + $0xd58] sm:$0xff]
    %v4378 = vld [vmem:[#allocation3 + $0xd60] sm:$0xff]
    %v4379 = vld [vmem:[#allocation3 + $0xd68] sm:$0xff]
    %v4380 = vld [vmem:[#allocation3 + $0xd70] sm:$0xff]
    %v4381 = vld [vmem:[#allocation3 + $0xd78] sm:$0xff]
    %v4382 = vld [vmem:[#allocation3 + $0xd80] sm:$0xff]
    %v4383 = vld [vmem:[#allocation3 + $0xd88] sm:$0xff]
    %v4384 = vld [vmem:[#allocation3 + $0xd90] sm:$0xff]
    %v4385 = vld [vmem:[#allocation3 + $0xd98] sm:$0xff]
    %v4386 = vld [vmem:[#allocation3 + $0xda0] sm:$0xff]
    %v4387 = vld [vmem:[#allocation3 + $0xda8] sm:$0xff]
    %v4388 = vld [vmem:[#allocation3 + $0xdb0] sm:$0xff]
    %v4389 = vld [vmem:[#allocation3 + $0xdb8] sm:$0xff]
    %v4390 = vld [vmem:[#allocation3 + $0xdc0] sm:$0xff]
    %v4391 = vld [vmem:[#allocation3 + $0xdc8] sm:$0xff]
    %v4392 = vld [vmem:[#allocation3 + $0xdd0] sm:$0xff]
    %v4393 = vld [vmem:[#allocation3 + $0xdd8] sm:$0xff]
    %v4394 = vld [vmem:[#allocation3 + $0xde0] sm:$0xff]
    %v4395 = vld [vmem:[#allocation3 + $0xde8] sm:$0xff]
    %v4396 = vld [vmem:[#allocation3 + $0xdf0] sm:$0xff]
    %v4397 = vld [vmem:[#allocation3 + $0xdf8] sm:$0xff]
    %v4398 = vld [vmem:[#allocation3 + $0xe00] sm:$0xff]
    %v4399 = vld [vmem:[#allocation3 + $0xe08] sm:$0xff]
    %v4400 = vld [vmem:[#allocation3 + $0xe10] sm:$0xff]
    %v4401 = vld [vmem:[#allocation3 + $0xe18] sm:$0xff]
    %v4402 = vld [vmem:[#allocation3 + $0xe20] sm:$0xff]
    %v4403 = vld [vmem:[#allocation3 + $0xe28] sm:$0xff]
    %v4404 = vld [vmem:[#allocation3 + $0xe30] sm:$0xff]
    %v4405 = vld [vmem:[#allocation3 + $0xe38] sm:$0xff]
    %v4406 = vld [vmem:[#allocation3 + $0xe40] sm:$0xff]
    %v4407 = vld [vmem:[#allocation3 + $0xe48] sm:$0xff]
    %v4408 = vld [vmem:[#allocation3 + $0xe50] sm:$0xff]
    %v4409 = vld [vmem:[#allocation3 + $0xe58] sm:$0xff]
    %v4410 = vld [vmem:[#allocation3 + $0xe60] sm:$0xff]
    %v4411 = vld [vmem:[#allocation3 + $0xe68] sm:$0xff]
    %v4412 = vld [vmem:[#allocation3 + $0xe70] sm:$0xff]
    %v4413 = vld [vmem:[#allocation3 + $0xe78] sm:$0xff]
    %v4414 = vld [vmem:[#allocation3 + $0xe80] sm:$0xff]
    %v4415 = vld [vmem:[#allocation3 + $0xe88] sm:$0xff]
    %v4416 = vld [vmem:[#allocation3 + $0xe90] sm:$0xff]
    %v4417 = vld [vmem:[#allocation3 + $0xe98] sm:$0xff]
    %v4418 = vld [vmem:[#allocation3 + $0xea0] sm:$0xff]
    %v4419 = vld [vmem:[#allocation3 + $0xea8] sm:$0xff]
    %v4420 = vld [vmem:[#allocation3 + $0xeb0] sm:$0xff]
    %v4421 = vld [vmem:[#allocation3 + $0xeb8] sm:$0xff]
    %v4422 = vld [vmem:[#allocation3 + $0xec0] sm:$0xff]
    %v4423 = vld [vmem:[#allocation3 + $0xec8] sm:$0xff]
    %v4424 = vld [vmem:[#allocation3 + $0xed0] sm:$0xff]
    %v4425 = vld [vmem:[#allocation3 + $0xed8] sm:$0xff]
    %v4426 = vld [vmem:[#allocation3 + $0xee0] sm:$0xff]
    %v4427 = vld [vmem:[#allocation3 + $0xee8] sm:$0xff]
    %v4428 = vld [vmem:[#allocation3 + $0xef0] sm:$0xff]
    %v4429 = vld [vmem:[#allocation3 + $0xef8] sm:$0xff]
    %v4430 = vld [vmem:[#allocation3 + $0xf00] sm:$0xff]
    %v4431 = vld [vmem:[#allocation3 + $0xf08] sm:$0xff]
    %v4432 = vld [vmem:[#allocation3 + $0xf10] sm:$0xff]
    %v4433 = vld [vmem:[#allocation3 + $0xf18] sm:$0xff]
    %v4434 = vld [vmem:[#allocation3 + $0xf20] sm:$0xff]
    %v4435 = vld [vmem:[#allocation3 + $0xf28] sm:$0xff]
    %v4436 = vld [vmem:[#allocation3 + $0xf30] sm:$0xff]
    %v4437 = vld [vmem:[#allocation3 + $0xf38] sm:$0xff]
    %v4438 = vld [vmem:[#allocation3 + $0xf40] sm:$0xff]
    %v4439 = vld [vmem:[#allocation3 + $0xf48] sm:$0xff]
    %v4440 = vld [vmem:[#allocation3 + $0xf50] sm:$0xff]
    %v4441 = vld [vmem:[#allocation3 + $0xf58] sm:$0xff]
    %v4442 = vld [vmem:[#allocation3 + $0xf60] sm:$0xff]
    %v4443 = vld [vmem:[#allocation3 + $0xf68] sm:$0xff]
    %v4444 = vld [vmem:[#allocation3 + $0xf70] sm:$0xff]
    %v4445 = vld [vmem:[#allocation3 + $0xf78] sm:$0xff]
    %v4446 = vld [vmem:[#allocation3 + $0xf80] sm:$0xff]
    %v4447 = vld [vmem:[#allocation3 + $0xf88] sm:$0xff]
    %v4448 = vld [vmem:[#allocation3 + $0xf90] sm:$0xff]
    %v4449 = vld [vmem:[#allocation3 + $0xf98] sm:$0xff]
    %v4450 = vld [vmem:[#allocation3 + $0xfa0] sm:$0xff]
    %v4451 = vld [vmem:[#allocation3 + $0xfa8] sm:$0xff]
    %v4452 = vld [vmem:[#allocation3 + $0xfb0] sm:$0xff]
    %v4453 = vld [vmem:[#allocation3 + $0xfb8] sm:$0xff]
    %v4454 = vld [vmem:[#allocation3 + $0xfc0] sm:$0xff]
    %v4455 = vld [vmem:[#allocation3 + $0xfc8] sm:$0xff]
    %v4456 = vld [vmem:[#allocation3 + $0xfd0] sm:$0xff]
    %v4457 = vld [vmem:[#allocation3 + $0xfd8] sm:$0xff]
    %v4458 = vld [vmem:[#allocation3 + $0xfe0] sm:$0xff]
    %v4459 = vld [vmem:[#allocation3 + $0xfe8] sm:$0xff]
    %v4460 = vld [vmem:[#allocation3 + $0xff0] sm:$0xff]
    %v4461 = vld [vmem:[#allocation3 + $0xff8] sm:$0xff]
    %v4462 = vld [vmem:[#allocation3 + $0x1000] sm:$0xff]
    %v4463 = vld [vmem:[#allocation3 + $0x1008] sm:$0xff]
    %v4464 = vld [vmem:[#allocation3 + $0x1010] sm:$0xff]
    %v4465 = vld [vmem:[#allocation3 + $0x1018] sm:$0xff]
    %v4466 = vld [vmem:[#allocation3 + $0x1020] sm:$0xff]
    %v4467 = vld [vmem:[#allocation3 + $0x1028] sm:$0xff]
    %v4468 = vld [vmem:[#allocation3 + $0x1030] sm:$0xff]
    %v4469 = vld [vmem:[#allocation3 + $0x1038] sm:$0xff]
    %v4470 = vld [vmem:[#allocation3 + $0x1040] sm:$0xff]
    %v4471 = vld [vmem:[#allocation3 + $0x1048] sm:$0xff]
    %v4472 = vld [vmem:[#allocation3 + $0x1050] sm:$0xff]
    %v4473 = vld [vmem:[#allocation3 + $0x1058] sm:$0xff]
    %v4474 = vld [vmem:[#allocation3 + $0x1060] sm:$0xff]
    %v4475 = vld [vmem:[#allocation3 + $0x1068] sm:$0xff]
    %v4476 = vld [vmem:[#allocation3 + $0x1070] sm:$0xff]
    %v4477 = vld [vmem:[#allocation3 + $0x1078] sm:$0xff]
    %v4478 = vld [vmem:[#allocation3 + $0x1080] sm:$0xff]
    %v4479 = vld [vmem:[#allocation3 + $0x1088] sm:$0xff]
    %v4480 = vld [vmem:[#allocation3 + $0x1090] sm:$0xff]
    %v4481 = vld [vmem:[#allocation3 + $0x1098] sm:$0xff]
    %v4482 = vld [vmem:[#allocation3 + $0x10a0] sm:$0xff]
    %v4483 = vld [vmem:[#allocation3 + $0x10a8] sm:$0xff]
    %v4484 = vld [vmem:[#allocation3 + $0x10b0] sm:$0xff]
    %v4485 = vld [vmem:[#allocation3 + $0x10b8] sm:$0xff]
    %v4486 = vld [vmem:[#allocation3 + $0x10c0] sm:$0xff]
    %v4487 = vld [vmem:[#allocation3 + $0x10c8] sm:$0xff]
    %v4488 = vld [vmem:[#allocation3 + $0x10d0] sm:$0xff]
    %v4489 = vld [vmem:[#allocation3 + $0x10d8] sm:$0xff]
    %v4490 = vld [vmem:[#allocation3 + $0x10e0] sm:$0xff]
    %v4491 = vld [vmem:[#allocation3 + $0x10e8] sm:$0xff]
    %v4492 = vld [vmem:[#allocation3 + $0x10f0] sm:$0xff]
    %v4493 = vld [vmem:[#allocation3 + $0x10f8] sm:$0xff]
    %v4494 = vld [vmem:[#allocation3 + $0x1100] sm:$0xff]
    %v4495 = vld [vmem:[#allocation3 + $0x1108] sm:$0xff]
    %v4496 = vld [vmem:[#allocation3 + $0x1110] sm:$0xff]
    %v4497 = vld [vmem:[#allocation3 + $0x1118] sm:$0xff]
    %v4498 = vld [vmem:[#allocation3 + $0x1120] sm:$0xff]
    %v4499 = vld [vmem:[#allocation3 + $0x1128] sm:$0xff]
    %v4500 = vld [vmem:[#allocation3 + $0x1130] sm:$0xff]
    %v4501 = vld [vmem:[#allocation3 + $0x1138] sm:$0xff]
    %v4502 = vld [vmem:[#allocation3 + $0x1140] sm:$0xff]
    %v4503 = vld [vmem:[#allocation3 + $0x1148] sm:$0xff]
    %v4504 = vld [vmem:[#allocation3 + $0x1150] sm:$0xff]
    %v4505 = vld [vmem:[#allocation3 + $0x1158] sm:$0xff]
    %v4506 = vld [vmem:[#allocation3 + $0x1160] sm:$0xff]
    %v4507 = vld [vmem:[#allocation3 + $0x1168] sm:$0xff]
    %v4508 = vld [vmem:[#allocation3 + $0x1170] sm:$0xff]
    %v4509 = vld [vmem:[#allocation3 + $0x1178] sm:$0xff]
    %v4510 = vld [vmem:[#allocation3 + $0x1180] sm:$0xff]
    %v4511 = vld [vmem:[#allocation3 + $0x1188] sm:$0xff]
    %v4512 = vld [vmem:[#allocation3 + $0x1190] sm:$0xff]
    %v4513 = vld [vmem:[#allocation3 + $0x1198] sm:$0xff]
    %v4514 = vld [vmem:[#allocation3 + $0x11a0] sm:$0xff]
    %v4515 = vld [vmem:[#allocation3 + $0x11a8] sm:$0xff]
    %v4516 = vld [vmem:[#allocation3 + $0x11b0] sm:$0xff]
    %v4517 = vld [vmem:[#allocation3 + $0x11b8] sm:$0xff]
    %v4518 = vld [vmem:[#allocation3 + $0x11c0] sm:$0xff]
    %v4519 = vld [vmem:[#allocation3 + $0x11c8] sm:$0xff]
    %v4520 = vld [vmem:[#allocation3 + $0x11d0] sm:$0xff]
    %v4521 = vld [vmem:[#allocation3 + $0x11d8] sm:$0xff]
    %v4522 = vld [vmem:[#allocation3 + $0x11e0] sm:$0xff]
    %v4523 = vld [vmem:[#allocation3 + $0x11e8] sm:$0xff]
    %v4524 = vld [vmem:[#allocation3 + $0x11f0] sm:$0xff]
    %v4525 = vld [vmem:[#allocation3 + $0x11f8] sm:$0xff]
    %v4526 = vld [vmem:[#allocation3 + $0x1200] sm:$0xff]
    %v4527 = vld [vmem:[#allocation3 + $0x1208] sm:$0xff]
    %v4528 = vld [vmem:[#allocation3 + $0x1210] sm:$0xff]
    %v4529 = vld [vmem:[#allocation3 + $0x1218] sm:$0xff]
    %v4530 = vld [vmem:[#allocation3 + $0x1220] sm:$0xff]
    %v4531 = vld [vmem:[#allocation3 + $0x1228] sm:$0xff]
    %v4532 = vld [vmem:[#allocation3 + $0x1230] sm:$0xff]
    %v4533 = vld [vmem:[#allocation3 + $0x1238] sm:$0xff]
    %v4534 = vld [vmem:[#allocation3 + $0x1240] sm:$0xff]
    %v4535 = vld [vmem:[#allocation3 + $0x1248] sm:$0xff]
    %v4536 = vld [vmem:[#allocation3 + $0x1250] sm:$0xff]
    %v4537 = vld [vmem:[#allocation3 + $0x1258] sm:$0xff]
    %v4538 = vld [vmem:[#allocation3 + $0x1260] sm:$0xff]
    %v4539 = vld [vmem:[#allocation3 + $0x1268] sm:$0xff]
    %v4540 = vld [vmem:[#allocation3 + $0x1270] sm:$0xff]
    %v4541 = vld [vmem:[#allocation3 + $0x1278] sm:$0xff]
    %v4542 = vld [vmem:[#allocation3 + $0x1280] sm:$0xff]
    %v4543 = vld [vmem:[#allocation3 + $0x1288] sm:$0xff]
    %v4544 = vld [vmem:[#allocation3 + $0x1290] sm:$0xff]
    %v4545 = vld [vmem:[#allocation3 + $0x1298] sm:$0xff]
    %v4546 = vld [vmem:[#allocation3 + $0x12a0] sm:$0xff]
    %v4547 = vld [vmem:[#allocation3 + $0x12a8] sm:$0xff]
    %v4548 = vld [vmem:[#allocation3 + $0x12b0] sm:$0xff]
    %v4549 = vld [vmem:[#allocation3 + $0x12b8] sm:$0xff]
    %v4550 = vld [vmem:[#allocation3 + $0x12c0] sm:$0xff]
    %v4551 = vld [vmem:[#allocation3 + $0x12c8] sm:$0xff]
    %v4552 = vld [vmem:[#allocation3 + $0x12d0] sm:$0xff]
    %v4553 = vld [vmem:[#allocation3 + $0x12d8] sm:$0xff]
    %v4554 = vld [vmem:[#allocation3 + $0x12e0] sm:$0xff]
    %v4555 = vld [vmem:[#allocation3 + $0x12e8] sm:$0xff]
    %v4556 = vld [vmem:[#allocation3 + $0x12f0] sm:$0xff]
    %v4557 = vld [vmem:[#allocation3 + $0x12f8] sm:$0xff]
    %v4558 = vld [vmem:[#allocation3 + $0x1300] sm:$0xff]
    %v4559 = vld [vmem:[#allocation3 + $0x1308] sm:$0xff]
    %v4560 = vld [vmem:[#allocation3 + $0x1310] sm:$0xff]
    %v4561 = vld [vmem:[#allocation3 + $0x1318] sm:$0xff]
    %v4562 = vld [vmem:[#allocation3 + $0x1320] sm:$0xff]
    %v4563 = vld [vmem:[#allocation3 + $0x1328] sm:$0xff]
    %v4564 = vld [vmem:[#allocation3 + $0x1330] sm:$0xff]
    %v4565 = vld [vmem:[#allocation3 + $0x1338] sm:$0xff]
    %v4566 = vld [vmem:[#allocation3 + $0x1340] sm:$0xff]
    %v4567 = vld [vmem:[#allocation3 + $0x1348] sm:$0xff]
    %v4568 = vld [vmem:[#allocation3 + $0x1350] sm:$0xff]
    %v4569 = vld [vmem:[#allocation3 + $0x1358] sm:$0xff]
    %v4570 = vld [vmem:[#allocation3 + $0x1360] sm:$0xff]
    %v4571 = vld [vmem:[#allocation3 + $0x1368] sm:$0xff]
    %v4572 = vld [vmem:[#allocation3 + $0x1370] sm:$0xff]
    %v4573 = vld [vmem:[#allocation3 + $0x1378] sm:$0xff]
    %v4574 = vld [vmem:[#allocation3 + $0x1380] sm:$0xff]
    %v4575 = vld [vmem:[#allocation3 + $0x1388] sm:$0xff]
    %v4576 = vld [vmem:[#allocation3 + $0x1390] sm:$0xff]
    %v4577 = vld [vmem:[#allocation3 + $0x1398] sm:$0xff]
    %v4578 = vld [vmem:[#allocation3 + $0x13a0] sm:$0xff]
    %v4579 = vld [vmem:[#allocation3 + $0x13a8] sm:$0xff]
    %v4580 = vld [vmem:[#allocation3 + $0x13b0] sm:$0xff]
    %v4581 = vld [vmem:[#allocation3 + $0x13b8] sm:$0xff]
    %v4582 = vld [vmem:[#allocation3 + $0x13c0] sm:$0xff]
    %v4583 = vld [vmem:[#allocation3 + $0x13c8] sm:$0xff]
    %v4584 = vld [vmem:[#allocation3 + $0x13d0] sm:$0xff]
    %v4585 = vld [vmem:[#allocation3 + $0x13d8] sm:$0xff]
    %v4586 = vld [vmem:[#allocation3 + $0x13e0] sm:$0xff]
    %v4587 = vld [vmem:[#allocation3 + $0x13e8] sm:$0xff]
    %v4588 = vld [vmem:[#allocation3 + $0x13f0] sm:$0xff]
    %v4589 = vld [vmem:[#allocation3 + $0x13f8] sm:$0xff]
    %v4590 = vld [vmem:[#allocation3 + $0x1400] sm:$0xff]
    %v4591 = vld [vmem:[#allocation3 + $0x1408] sm:$0xff]
    %v4592 = vld [vmem:[#allocation3 + $0x1410] sm:$0xff]
    %v4593 = vld [vmem:[#allocation3 + $0x1418] sm:$0xff]
    %v4594 = vld [vmem:[#allocation3 + $0x1420] sm:$0xff]
    %v4595 = vld [vmem:[#allocation3 + $0x1428] sm:$0xff]
    %v4596 = vld [vmem:[#allocation3 + $0x1430] sm:$0xff]
    %v4597 = vld [vmem:[#allocation3 + $0x1438] sm:$0xff]
    %v4598 = vld [vmem:[#allocation3 + $0x1440] sm:$0xff]
    %v4599 = vld [vmem:[#allocation3 + $0x1448] sm:$0xff]
    %v4600 = vld [vmem:[#allocation3 + $0x1450] sm:$0xff]
    %v4601 = vld [vmem:[#allocation3 + $0x1458] sm:$0xff]
    %v4602 = vld [vmem:[#allocation3 + $0x1460] sm:$0xff]
    %v4603 = vld [vmem:[#allocation3 + $0x1468] sm:$0xff]
    %v4604 = vld [vmem:[#allocation3 + $0x1470] sm:$0xff]
    %v4605 = vld [vmem:[#allocation3 + $0x1478] sm:$0xff]
    %v4606 = vld [vmem:[#allocation3 + $0x1480] sm:$0xff]
    %v4607 = vld [vmem:[#allocation3 + $0x1488] sm:$0xff]
    %v4608 = vld [vmem:[#allocation3 + $0x1490] sm:$0xff]
    %v4609 = vld [vmem:[#allocation3 + $0x1498] sm:$0xff]
    %v4610 = vld [vmem:[#allocation3 + $0x14a0] sm:$0xff]
    %v4611 = vld [vmem:[#allocation3 + $0x14a8] sm:$0xff]
    %v4612 = vld [vmem:[#allocation3 + $0x14b0] sm:$0xff]
    %v4613 = vld [vmem:[#allocation3 + $0x14b8] sm:$0xff]
    %v4614 = vld [vmem:[#allocation3 + $0x14c0] sm:$0xff]
    %v4615 = vld [vmem:[#allocation3 + $0x14c8] sm:$0xff]
    %v4616 = vld [vmem:[#allocation3 + $0x14d0] sm:$0xff]
    %v4617 = vld [vmem:[#allocation3 + $0x14d8] sm:$0xff]
    %v4618 = vld [vmem:[#allocation3 + $0x14e0] sm:$0xff]
    %v4619 = vld [vmem:[#allocation3 + $0x14e8] sm:$0xff]
    %v4620 = vld [vmem:[#allocation3 + $0x14f0] sm:$0xff]
    %v4621 = vld [vmem:[#allocation3 + $0x14f8] sm:$0xff]
    %v4622 = vld [vmem:[#allocation3 + $0x1500] sm:$0xff]
    %v4623 = vld [vmem:[#allocation3 + $0x1508] sm:$0xff]
    %v4624 = vld [vmem:[#allocation3 + $0x1510] sm:$0xff]
    %v4625 = vld [vmem:[#allocation3 + $0x1518] sm:$0xff]
    %v4626 = vld [vmem:[#allocation3 + $0x1520] sm:$0xff]
    %v4627 = vld [vmem:[#allocation3 + $0x1528] sm:$0xff]
    %v4628 = vld [vmem:[#allocation3 + $0x1530] sm:$0xff]
    %v4629 = vld [vmem:[#allocation3 + $0x1538] sm:$0xff]
    %v4630 = vld [vmem:[#allocation3 + $0x1540] sm:$0xff]
    %v4631 = vld [vmem:[#allocation3 + $0x1548] sm:$0xff]
    %v4632 = vld [vmem:[#allocation3 + $0x1550] sm:$0xff]
    %v4633 = vld [vmem:[#allocation3 + $0x1558] sm:$0xff]
    %v4634 = vld [vmem:[#allocation3 + $0x1560] sm:$0xff]
    %v4635 = vld [vmem:[#allocation3 + $0x1568] sm:$0xff]
    %v4636 = vld [vmem:[#allocation3 + $0x1570] sm:$0xff]
    %v4637 = vld [vmem:[#allocation3 + $0x1578] sm:$0xff]
    %v4638 = vld [vmem:[#allocation3 + $0x1580] sm:$0xff]
    %v4639 = vld [vmem:[#allocation3 + $0x1588] sm:$0xff]
    %v4640 = vld [vmem:[#allocation3 + $0x1590] sm:$0xff]
    %v4641 = vld [vmem:[#allocation3 + $0x1598] sm:$0xff]
    %v4642 = vld [vmem:[#allocation3 + $0x15a0] sm:$0xff]
    %v4643 = vld [vmem:[#allocation3 + $0x15a8] sm:$0xff]
    %v4644 = vld [vmem:[#allocation3 + $0x15b0] sm:$0xff]
    %v4645 = vld [vmem:[#allocation3 + $0x15b8] sm:$0xff]
    %v4646 = vld [vmem:[#allocation3 + $0x15c0] sm:$0xff]
    %v4647 = vld [vmem:[#allocation3 + $0x15c8] sm:$0xff]
    %v4648 = vld [vmem:[#allocation3 + $0x15d0] sm:$0xff]
    %v4649 = vld [vmem:[#allocation3 + $0x15d8] sm:$0xff]
    %v4650 = vld [vmem:[#allocation3 + $0x15e0] sm:$0xff]
    %v4651 = vld [vmem:[#allocation3 + $0x15e8] sm:$0xff]
    %v4652 = vld [vmem:[#allocation3 + $0x15f0] sm:$0xff]
    %v4653 = vld [vmem:[#allocation3 + $0x15f8] sm:$0xff]
    %v4654 = vld [vmem:[#allocation3 + $0x1600] sm:$0xff]
    %v4655 = vld [vmem:[#allocation3 + $0x1608] sm:$0xff]
    %v4656 = vld [vmem:[#allocation3 + $0x1610] sm:$0xff]
    %v4657 = vld [vmem:[#allocation3 + $0x1618] sm:$0xff]
    %v4658 = vld [vmem:[#allocation3 + $0x1620] sm:$0xff]
    %v4659 = vld [vmem:[#allocation3 + $0x1628] sm:$0xff]
    %v4660 = vld [vmem:[#allocation3 + $0x1630] sm:$0xff]
    %v4661 = vld [vmem:[#allocation3 + $0x1638] sm:$0xff]
    %v4662 = vld [vmem:[#allocation3 + $0x1640] sm:$0xff]
    %v4663 = vld [vmem:[#allocation3 + $0x1648] sm:$0xff]
    %v4664 = vld [vmem:[#allocation3 + $0x1650] sm:$0xff]
    %v4665 = vld [vmem:[#allocation3 + $0x1658] sm:$0xff]
    %v4666 = vld [vmem:[#allocation3 + $0x1660] sm:$0xff]
    %v4667 = vld [vmem:[#allocation3 + $0x1668] sm:$0xff]
    %v4668 = vld [vmem:[#allocation3 + $0x1670] sm:$0xff]
    %v4669 = vld [vmem:[#allocation3 + $0x1678] sm:$0xff]
    %v4670 = vld [vmem:[#allocation3 + $0x1680] sm:$0xff]
    %v4671 = vld [vmem:[#allocation3 + $0x1688] sm:$0xff]
    %v4672 = vld [vmem:[#allocation3 + $0x1690] sm:$0xff]
    %v4673 = vld [vmem:[#allocation3 + $0x1698] sm:$0xff]
    %v4674 = vld [vmem:[#allocation3 + $0x16a0] sm:$0xff]
    %v4675 = vld [vmem:[#allocation3 + $0x16a8] sm:$0xff]
    %v4676 = vld [vmem:[#allocation3 + $0x16b0] sm:$0xff]
    %v4677 = vld [vmem:[#allocation3 + $0x16b8] sm:$0xff]
    %v4678 = vld [vmem:[#allocation16] sm:$0xff]
    %v4680 = vlaneseq
    %v4681 = vshrl.u32 %v4680, 7
    %v4682 = vsub.s32 0, %v4681
    %v4683 = vrot.slane %v4678, %v4682
    %v4684 = vlaneseq
    %v4685 = vshrl.u32 %v4684, 7
    %v4686 = vsub.s32 1, %v4685
    %v4687 = vrot.slane %v4678, %v4686
    %v4688 = vlaneseq
    %v4689 = vshrl.u32 %v4688, 7
    %v4690 = vsub.s32 2, %v4689
    %v4691 = vrot.slane %v4678, %v4690
    %v4692 = vlaneseq
    %v4693 = vshrl.u32 %v4692, 7
    %v4694 = vsub.s32 3, %v4693
    %v4695 = vrot.slane %v4678, %v4694
    %v4696 = vlaneseq
    %v4697 = vshrl.u32 %v4696, 7
    %v4698 = vsub.s32 4, %v4697
    %v4699 = vrot.slane %v4678, %v4698
    %v4700 = vlaneseq
    %v4701 = vshrl.u32 %v4700, 7
    %v4702 = vsub.s32 5, %v4701
    %v4703 = vrot.slane %v4678, %v4702
    %v4704 = vlaneseq
    %v4705 = vshrl.u32 %v4704, 7
    %v4706 = vsub.s32 6, %v4705
    %v4707 = vrot.slane %v4678, %v4706
    %4715 = vmatprep.subr.bf16.mxu0 %v3951
    %4716 = vmatpush1.bf16.msra.mxu0 %v3950
    %4717 = vmatprep.subr.bf16.mxu0 %v3958
    %4718 = vmatpush1.bf16.msra.mxu0 %v3957
    %4719 = vmatprep.subr.bf16.mxu0 %v3965
    %4720 = vmatpush1.bf16.msra.mxu0 %v3964
    %4721 = vmatprep.subr.bf16.mxu0 %v3972
    %4722 = vmatpush1.bf16.msra.mxu0 %v3971
    %4723 = vmatprep.subr.bf16.mxu0 %v3979
    %4724 = vmatpush1.bf16.msra.mxu0 %v3978
    %4725 = vmatprep.subr.bf16.mxu0 %v3986
    %4726 = vmatpush1.bf16.msra.mxu0 %v3985
    %4727 = vmatprep.subr.bf16.mxu0 %v3993
    %4728 = vmatpush1.bf16.msra.mxu0 %v3992
    %4729 = vmatprep.subr.bf16.mxu0 %v4000
    %4730 = vmatpush1.bf16.msra.mxu0 %v3999
    %4731 = vmatprep.subr.bf16.mxu0 %v4007
    %4732 = vmatpush1.bf16.msra.mxu0 %v4006
    %4733 = vmatprep.subr.bf16.mxu0 %v4014
    %4734 = vmatpush1.bf16.msra.mxu0 %v4013
    %4735 = vmatprep.subr.bf16.mxu0 %v4021
    %4736 = vmatpush1.bf16.msra.mxu0 %v4020
    %4737 = vmatprep.subr.bf16.mxu0 %v4028
    %4738 = vmatpush1.bf16.msra.mxu0 %v4027
    %4739 = vmatprep.subr.bf16.mxu0 %v4035
    %4740 = vmatpush1.bf16.msra.mxu0 %v4034
    %4741 = vmatprep.subr.bf16.mxu0 %v4042
    %4742 = vmatpush1.bf16.msra.mxu0 %v4041
    %4743 = vmatprep.subr.bf16.mxu0 %v4049
    %4744 = vmatpush1.bf16.msra.mxu0 %v4048
    %4745 = vmatprep.subr.bf16.mxu0 %v4056
    %4746 = vmatpush1.bf16.msra.mxu0 %v4055
    %4747 = vmatprep.mubr.bf16.mxu0 %v3930
    %4748 = vmatmul.mubr.bf16.gmra.mrb[0].mxu0 %v3929
    %v4749 = vpop.f32.mrb[0].mxu0
    %v4750 = vadd.f32 %v4683, %v4749
    %v4751 = vpop.f32.mrb[0].mxu0
    %v4752 = vadd.f32 %v4687, %v4751
    %v4753 = vpop.f32.mrb[0].mxu0
    %v4754 = vpop.f32.mrb[0].mxu0
    %4755 = vdwg.mxu0
    %4756 = vmatprep.subr.bf16.mxu0 %v4063
    %4757 = vmatpush1.bf16.msra.mxu0 %v4062
    %4758 = vmatprep.subr.bf16.mxu0 %v4070
    %4759 = vmatpush1.bf16.msra.mxu0 %v4069
    %4760 = vmatprep.subr.bf16.mxu0 %v4077
    %4761 = vmatpush1.bf16.msra.mxu0 %v4076
    %4762 = vmatprep.subr.bf16.mxu0 %v4084
    %4763 = vmatpush1.bf16.msra.mxu0 %v4083
    %4764 = vmatprep.subr.bf16.mxu0 %v4091
    %4765 = vmatpush1.bf16.msra.mxu0 %v4090
    %4766 = vmatprep.subr.bf16.mxu0 %v4098
    %4767 = vmatpush1.bf16.msra.mxu0 %v4097
    %4768 = vmatprep.subr.bf16.mxu0 %v4105
    %4769 = vmatpush1.bf16.msra.mxu0 %v4104
    %4770 = vmatprep.subr.bf16.mxu0 %v4112
    %4771 = vmatpush1.bf16.msra.mxu0 %v4111
    %4772 = vmatprep.subr.bf16.mxu0 %v4119
    %4773 = vmatpush1.bf16.msra.mxu0 %v4118
    %4774 = vmatprep.subr.bf16.mxu0 %v4126
    %4775 = vmatpush1.bf16.msra.mxu0 %v4125
    %4776 = vmatprep.subr.bf16.mxu0 %v4133
    %4777 = vmatpush1.bf16.msra.mxu0 %v4132
    %4778 = vmatprep.subr.bf16.mxu0 %v4140
    %4779 = vmatpush1.bf16.msra.mxu0 %v4139
    %4780 = vmatprep.subr.bf16.mxu0 %v4147
    %4781 = vmatpush1.bf16.msra.mxu0 %v4146
    %4782 = vmatprep.subr.bf16.mxu0 %v4154
    %4783 = vmatpush1.bf16.msra.mxu0 %v4153
    %4784 = vmatprep.subr.bf16.mxu0 %v4161
    %4785 = vmatpush1.bf16.msra.mxu0 %v4160
    %4786 = vmatprep.subr.bf16.mxu0 %v4168
    %4787 = vmatpush1.bf16.msra.mxu0 %v4167
    %4788 = vmatprep.mubr.bf16.mxu0 %v3932
    %4789 = vmatmul.mubr.bf16.gmra.mrb[0].mxu0 %v3931
    %v4790 = vpop.f32.mrb[0].mxu0
    %v4791 = vadd.f32 %v4750, %v4790
    %v4792 = vpop.f32.mrb[0].mxu0
    %v4793 = vadd.f32 %v4752, %v4792
    %v4794 = vpop.f32.mrb[0].mxu0
    %v4795 = vpop.f32.mrb[0].mxu0
    %4796 = vdwg.mxu0
    %4797 = vmatprep.subr.bf16.mxu0 %v4175
    %4798 = vmatpush1.bf16.msra.mxu0 %v4174
    %4799 = vmatprep.subr.bf16.mxu0 %v4182
    %4800 = vmatpush1.bf16.msra.mxu0 %v4181
    %4801 = vmatprep.subr.bf16.mxu0 %v4189
    %4802 = vmatpush1.bf16.msra.mxu0 %v4188
    %4803 = vmatprep.subr.bf16.mxu0 %v4196
    %4804 = vmatpush1.bf16.msra.mxu0 %v4195
    %4805 = vmatprep.subr.bf16.mxu0 %v4203
    %4806 = vmatpush1.bf16.msra.mxu0 %v4202
    %4807 = vmatprep.subr.bf16.mxu0 %v4210
    %4808 = vmatpush1.bf16.msra.mxu0 %v4209
    %4809 = vmatprep.subr.bf16.mxu0 %v4217
    %4810 = vmatpush1.bf16.msra.mxu0 %v4216
    %4811 = vmatprep.subr.bf16.mxu0 %v4224
    %4812 = vmatpush1.bf16.msra.mxu0 %v4223
    %4813 = vmatprep.subr.bf16.mxu0 %v4231
    %4814 = vmatpush1.bf16.msra.mxu0 %v4230
    %4815 = vmatprep.subr.bf16.mxu0 %v4238
    %4816 = vmatpush1.bf16.msra.mxu0 %v4237
    %4817 = vmatprep.subr.bf16.mxu0 %v4245
    %4818 = vmatpush1.bf16.msra.mxu0 %v4244
    %4819 = vmatprep.subr.bf16.mxu0 %v4252
    %4820 = vmatpush1.bf16.msra.mxu0 %v4251
    %4821 = vmatprep.subr.bf16.mxu0 %v4259
    %4822 = vmatpush1.bf16.msra.mxu0 %v4258
    %4823 = vmatprep.subr.bf16.mxu0 %v4266
    %4824 = vmatpush1.bf16.msra.mxu0 %v4265
    %4825 = vmatprep.subr.bf16.mxu0 %v4273
    %4826 = vmatpush1.bf16.msra.mxu0 %v4272
    %4827 = vmatprep.subr.bf16.mxu0 %v4280
    %4828 = vmatpush1.bf16.msra.mxu0 %v4279
    %4829 = vmatprep.mubr.bf16.mxu0 %v3934
    %4830 = vmatmul.mubr.bf16.gmra.mrb[0].mxu0 %v3933
    %v4831 = vpop.f32.mrb[0].mxu0
    %v4832 = vadd.f32 %v4791, %v4831
    %v4833 = vpop.f32.mrb[0].mxu0
    %v4834 = vadd.f32 %v4793, %v4833
    %v4835 = vpop.f32.mrb[0].mxu0
    %v4836 = vpop.f32.mrb[0].mxu0
    %4837 = vdwg.mxu0
    %4838 = vmatprep.subr.bf16.mxu0 %v4287
    %4839 = vmatpush1.bf16.msra.mxu0 %v4286
    %4840 = vmatprep.subr.bf16.mxu0 %v4294
    %4841 = vmatpush1.bf16.msra.mxu0 %v4293
    %4842 = vmatprep.subr.bf16.mxu0 %v4301
    %4843 = vmatpush1.bf16.msra.mxu0 %v4300
    %4844 = vmatprep.subr.bf16.mxu0 %v4308
    %4845 = vmatpush1.bf16.msra.mxu0 %v4307
    %4846 = vmatprep.subr.bf16.mxu0 %v4315
    %4847 = vmatpush1.bf16.msra.mxu0 %v4314
    %4848 = vmatprep.subr.bf16.mxu0 %v4322
    %4849 = vmatpush1.bf16.msra.mxu0 %v4321
    %4850 = vmatprep.subr.bf16.mxu0 %v4329
    %4851 = vmatpush1.bf16.msra.mxu0 %v4328
    %4852 = vmatprep.subr.bf16.mxu0 %v4336
    %4853 = vmatpush1.bf16.msra.mxu0 %v4335
    %4854 = vmatprep.subr.bf16.mxu0 %v4343
    %4855 = vmatpush1.bf16.msra.mxu0 %v4342
    %4856 = vmatprep.subr.bf16.mxu0 %v4350
    %4857 = vmatpush1.bf16.msra.mxu0 %v4349
    %4858 = vmatprep.subr.bf16.mxu0 %v4357
    %4859 = vmatpush1.bf16.msra.mxu0 %v4356
    %4860 = vmatprep.subr.bf16.mxu0 %v4364
    %4861 = vmatpush1.bf16.msra.mxu0 %v4363
    %4862 = vmatprep.subr.bf16.mxu0 %v4371
    %4863 = vmatpush1.bf16.msra.mxu0 %v4370
    %4864 = vmatprep.subr.bf16.mxu0 %v4378
    %4865 = vmatpush1.bf16.msra.mxu0 %v4377
    %4866 = vmatprep.subr.bf16.mxu0 %v4385
    %4867 = vmatpush1.bf16.msra.mxu0 %v4384
    %4868 = vmatprep.subr.bf16.mxu0 %v4392
    %4869 = vmatpush1.bf16.msra.mxu0 %v4391
    %4870 = vmatprep.mubr.bf16.mxu0 %v3936
    %4871 = vmatmul.mubr.bf16.gmra.mrb[0].mxu0 %v3935
    %v4872 = vpop.f32.mrb[0].mxu0
    %v4873 = vadd.f32 %v4832, %v4872
    %v4874 = vpop.f32.mrb[0].mxu0
    %v4875 = vadd.f32 %v4834, %v4874
    %v4876 = vpop.f32.mrb[0].mxu0
    %v4877 = vpop.f32.mrb[0].mxu0
    %4878 = vdwg.mxu0
    %4879 = vmatprep.subr.bf16.mxu0 %v4399
    %4880 = vmatpush1.bf16.msra.mxu0 %v4398
    %4881 = vmatprep.subr.bf16.mxu0 %v4406
    %4882 = vmatpush1.bf16.msra.mxu0 %v4405
    %4883 = vmatprep.subr.bf16.mxu0 %v4413
    %4884 = vmatpush1.bf16.msra.mxu0 %v4412
    %4885 = vmatprep.subr.bf16.mxu0 %v4420
    %4886 = vmatpush1.bf16.msra.mxu0 %v4419
    %4887 = vmatprep.subr.bf16.mxu0 %v4427
    %4888 = vmatpush1.bf16.msra.mxu0 %v4426
    %4889 = vmatprep.subr.bf16.mxu0 %v4434
    %4890 = vmatpush1.bf16.msra.mxu0 %v4433
    %4891 = vmatprep.subr.bf16.mxu0 %v4441
    %4892 = vmatpush1.bf16.msra.mxu0 %v4440
    %4893 = vmatprep.subr.bf16.mxu0 %v4448
    %4894 = vmatpush1.bf16.msra.mxu0 %v4447
    %4895 = vmatprep.subr.bf16.mxu0 %v4455
    %4896 = vmatpush1.bf16.msra.mxu0 %v4454
    %4897 = vmatprep.subr.bf16.mxu0 %v4462
    %4898 = vmatpush1.bf16.msra.mxu0 %v4461
    %4899 = vmatprep.subr.bf16.mxu0 %v4469
    %4900 = vmatpush1.bf16.msra.mxu0 %v4468
    %4901 = vmatprep.subr.bf16.mxu0 %v4476
    %4902 = vmatpush1.bf16.msra.mxu0 %v4475
    %4903 = vmatprep.subr.bf16.mxu0 %v4483
    %4904 = vmatpush1.bf16.msra.mxu0 %v4482
    %4905 = vmatprep.subr.bf16.mxu0 %v4490
    %4906 = vmatpush1.bf16.msra.mxu0 %v4489
    %4907 = vmatprep.subr.bf16.mxu0 %v4497
    %4908 = vmatpush1.bf16.msra.mxu0 %v4496
    %4909 = vmatprep.subr.bf16.mxu0 %v4504
    %4910 = vmatpush1.bf16.msra.mxu0 %v4503
    %4911 = vmatprep.mubr.bf16.mxu0 %v3938
    %4912 = vmatmul.mubr.bf16.gmra.mrb[0].mxu0 %v3937
    %v4913 = vpop.f32.mrb[0].mxu0
    %v4914 = vadd.f32 %v4873, %v4913
    %v4915 = vpop.f32.mrb[0].mxu0
    %v4916 = vadd.f32 %v4875, %v4915
    %v4917 = vpop.f32.mrb[0].mxu0
    %v4918 = vpop.f32.mrb[0].mxu0
    %4919 = vdwg.mxu0
    %4920 = vmatprep.subr.bf16.mxu0 %v4511
    %4921 = vmatpush1.bf16.msra.mxu0 %v4510
    %4922 = vmatprep.subr.bf16.mxu0 %v4518
    %4923 = vmatpush1.bf16.msra.mxu0 %v4517
    %4924 = vmatprep.subr.bf16.mxu0 %v4525
    %4925 = vmatpush1.bf16.msra.mxu0 %v4524
    %4926 = vmatprep.subr.bf16.mxu0 %v4532
    %4927 = vmatpush1.bf16.msra.mxu0 %v4531
    %4928 = vmatprep.subr.bf16.mxu0 %v4539
    %4929 = vmatpush1.bf16.msra.mxu0 %v4538
    %4930 = vmatprep.subr.bf16.mxu0 %v4546
    %4931 = vmatpush1.bf16.msra.mxu0 %v4545
    %4932 = vmatprep.subr.bf16.mxu0 %v4553
    %4933 = vmatpush1.bf16.msra.mxu0 %v4552
    %4934 = vmatprep.subr.bf16.mxu0 %v4560
    %4935 = vmatpush1.bf16.msra.mxu0 %v4559
    %4936 = vmatprep.subr.bf16.mxu0 %v4567
    %4937 = vmatpush1.bf16.msra.mxu0 %v4566
    %4938 = vmatprep.subr.bf16.mxu0 %v4574
    %4939 = vmatpush1.bf16.msra.mxu0 %v4573
    %4940 = vmatprep.subr.bf16.mxu0 %v4581
    %4941 = vmatpush1.bf16.msra.mxu0 %v4580
    %4942 = vmatprep.subr.bf16.mxu0 %v4588
    %4943 = vmatpush1.bf16.msra.mxu0 %v4587
    %4944 = vmatprep.subr.bf16.mxu0 %v4595
    %4945 = vmatpush1.bf16.msra.mxu0 %v4594
    %4946 = vmatprep.subr.bf16.mxu0 %v4602
    %4947 = vmatpush1.bf16.msra.mxu0 %v4601
    %4948 = vmatprep.subr.bf16.mxu0 %v4609
    %4949 = vmatpush1.bf16.msra.mxu0 %v4608
    %4950 = vmatprep.subr.bf16.mxu0 %v4616
    %4951 = vmatpush1.bf16.msra.mxu0 %v4615
    %4952 = vmatprep.mubr.bf16.mxu0 %v3940
    %4953 = vmatmul.mubr.bf16.gmra.mrb[0].mxu0 %v3939
    %v4954 = vpop.f32.mrb[0].mxu0
    %v4955 = vadd.f32 %v4914, %v4954
    %v4956 = vpop.f32.mrb[0].mxu0
    %v4957 = vadd.f32 %v4916, %v4956
    %v4958 = vpop.f32.mrb[0].mxu0
    %v4959 = vpop.f32.mrb[0].mxu0
    %4960 = vdwg.mxu0
    %4961 = vmatprep.subr.bf16.mxu0 %v4623
    %4962 = vmatpush1.bf16.msra.mxu0 %v4622
    %4963 = vmatprep.subr.bf16.mxu0 %v4630
    %4964 = vmatpush1.bf16.msra.mxu0 %v4629
    %4965 = vmatprep.subr.bf16.mxu0 %v4637
    %4966 = vmatpush1.bf16.msra.mxu0 %v4636
    %4967 = vmatprep.subr.bf16.mxu0 %v4644
    %4968 = vmatpush1.bf16.msra.mxu0 %v4643
    %4969 = vmatprep.subr.bf16.mxu0 %v4651
    %4970 = vmatpush1.bf16.msra.mxu0 %v4650
    %4971 = vmatprep.subr.bf16.mxu0 %v4658
    %4972 = vmatpush1.bf16.msra.mxu0 %v4657
    %4973 = vmatprep.subr.bf16.mxu0 %v4665
    %4974 = vmatpush1.bf16.msra.mxu0 %v4664
    %4975 = vmatprep.subr.bf16.mxu0 %v4672
    %4976 = vmatpush1.bf16.msra.mxu0 %v4671
    %4977 = vmatprep.subr.bf16.mxu0 0
    %4978 = vmatpush1.bf16.msra.mxu0 0
    %4979 = vmatprep.subr.bf16.mxu0 0
    %4980 = vmatpush1.bf16.msra.mxu0 0
    %4981 = vmatprep.subr.bf16.mxu0 0
    %4982 = vmatpush1.bf16.msra.mxu0 0
    %4983 = vmatprep.subr.bf16.mxu0 0
    %4984 = vmatpush1.bf16.msra.mxu0 0
    %4985 = vmatprep.subr.bf16.mxu0 0
    %4986 = vmatpush1.bf16.msra.mxu0 0
    %4987 = vmatprep.subr.bf16.mxu0 0
    %4988 = vmatpush1.bf16.msra.mxu0 0
    %4989 = vmatprep.subr.bf16.mxu0 0
    %4990 = vmatpush1.bf16.msra.mxu0 0
    %4991 = vmatprep.subr.bf16.mxu0 0
    %4992 = vmatpush1.bf16.msra.mxu0 0
    %4993 = vmatprep.mubr.bf16.mxu0 0
    %4994 = vmatmul.mubr.bf16.gmra.mrb[0].mxu0 %v3941
    %v4995 = vpop.f32.mrb[0].mxu0
    %v4996 = vadd.f32 %v4955, %v4995
    %v4997 = vpop.f32.mrb[0].mxu0
    %v4998 = vadd.f32 %v4957, %v4997
    %v4999 = vpop.f32.mrb[0].mxu0
    %v5000 = vpop.f32.mrb[0].mxu0
    %5001 = vdwg.mxu0
    %5002 = vmatprep.subr.bf16.mxu0 %v3953
    %5003 = vmatpush1.bf16.msra.mxu0 %v3952
    %5004 = vmatprep.subr.bf16.mxu0 %v3960
    %5005 = vmatpush1.bf16.msra.mxu0 %v3959
    %5006 = vmatprep.subr.bf16.mxu0 %v3967
    %5007 = vmatpush1.bf16.msra.mxu0 %v3966
    %5008 = vmatprep.subr.bf16.mxu0 %v3974
    %5009 = vmatpush1.bf16.msra.mxu0 %v3973
    %5010 = vmatprep.subr.bf16.mxu0 %v3981
    %5011 = vmatpush1.bf16.msra.mxu0 %v3980
    %5012 = vmatprep.subr.bf16.mxu0 %v3988
    %5013 = vmatpush1.bf16.msra.mxu0 %v3987
    %5014 = vmatprep.subr.bf16.mxu0 %v3995
    %5015 = vmatpush1.bf16.msra.mxu0 %v3994
    %5016 = vmatprep.subr.bf16.mxu0 %v4002
    %5017 = vmatpush1.bf16.msra.mxu0 %v4001
    %5018 = vmatprep.subr.bf16.mxu0 %v4009
    %5019 = vmatpush1.bf16.msra.mxu0 %v4008
    %5020 = vmatprep.subr.bf16.mxu0 %v4016
    %5021 = vmatpush1.bf16.msra.mxu0 %v4015
    %5022 = vmatprep.subr.bf16.mxu0 %v4023
    %5023 = vmatpush1.bf16.msra.mxu0 %v4022
    %5024 = vmatprep.subr.bf16.mxu0 %v4030
    %5025 = vmatpush1.bf16.msra.mxu0 %v4029
    %5026 = vmatprep.subr.bf16.mxu0 %v4037
    %5027 = vmatpush1.bf16.msra.mxu0 %v4036
    %5028 = vmatprep.subr.bf16.mxu0 %v4044
    %5029 = vmatpush1.bf16.msra.mxu0 %v4043
    %5030 = vmatprep.subr.bf16.mxu0 %v4051
    %5031 = vmatpush1.bf16.msra.mxu0 %v4050
    %5032 = vmatprep.subr.bf16.mxu0 %v4058
    %5033 = vmatpush1.bf16.msra.mxu0 %v4057
    %5034 = vmatprep.mubr.bf16.mxu0 %v3930
    %5035 = vmatmul.mubr.bf16.gmra.mrb[0].mxu0 %v3929
    %v5036 = vpop.f32.mrb[0].mxu0
    %v5037 = vadd.f32 %v4691, %v5036
    %v5038 = vpop.f32.mrb[0].mxu0
    %v5039 = vadd.f32 %v4695, %v5038
    %v5040 = vpop.f32.mrb[0].mxu0
    %v5041 = vpop.f32.mrb[0].mxu0
    %5042 = vdwg.mxu0
    %5043 = vmatprep.subr.bf16.mxu0 %v4065
    %5044 = vmatpush1.bf16.msra.mxu0 %v4064
    %5045 = vmatprep.subr.bf16.mxu0 %v4072
    %5046 = vmatpush1.bf16.msra.mxu0 %v4071
    %5047 = vmatprep.subr.bf16.mxu0 %v4079
    %5048 = vmatpush1.bf16.msra.mxu0 %v4078
    %5049 = vmatprep.subr.bf16.mxu0 %v4086
    %5050 = vmatpush1.bf16.msra.mxu0 %v4085
    %5051 = vmatprep.subr.bf16.mxu0 %v4093
    %5052 = vmatpush1.bf16.msra.mxu0 %v4092
    %5053 = vmatprep.subr.bf16.mxu0 %v4100
    %5054 = vmatpush1.bf16.msra.mxu0 %v4099
    %5055 = vmatprep.subr.bf16.mxu0 %v4107
    %5056 = vmatpush1.bf16.msra.mxu0 %v4106
    %5057 = vmatprep.subr.bf16.mxu0 %v4114
    %5058 = vmatpush1.bf16.msra.mxu0 %v4113
    %5059 = vmatprep.subr.bf16.mxu0 %v4121
    %5060 = vmatpush1.bf16.msra.mxu0 %v4120
    %5061 = vmatprep.subr.bf16.mxu0 %v4128
    %5062 = vmatpush1.bf16.msra.mxu0 %v4127
    %5063 = vmatprep.subr.bf16.mxu0 %v4135
    %5064 = vmatpush1.bf16.msra.mxu0 %v4134
    %5065 = vmatprep.subr.bf16.mxu0 %v4142
    %5066 = vmatpush1.bf16.msra.mxu0 %v4141
    %5067 = vmatprep.subr.bf16.mxu0 %v4149
    %5068 = vmatpush1.bf16.msra.mxu0 %v4148
    %5069 = vmatprep.subr.bf16.mxu0 %v4156
    %5070 = vmatpush1.bf16.msra.mxu0 %v4155
    %5071 = vmatprep.subr.bf16.mxu0 %v4163
    %5072 = vmatpush1.bf16.msra.mxu0 %v4162
    %5073 = vmatprep.subr.bf16.mxu0 %v4170
    %5074 = vmatpush1.bf16.msra.mxu0 %v4169
    %5075 = vmatprep.mubr.bf16.mxu0 %v3932
    %5076 = vmatmul.mubr.bf16.gmra.mrb[0].mxu0 %v3931
    %v5077 = vpop.f32.mrb[0].mxu0
    %v5078 = vadd.f32 %v5037, %v5077
    %v5079 = vpop.f32.mrb[0].mxu0
    %v5080 = vadd.f32 %v5039, %v5079
    %v5081 = vpop.f32.mrb[0].mxu0
    %v5082 = vpop.f32.mrb[0].mxu0
    %5083 = vdwg.mxu0
    %5084 = vmatprep.subr.bf16.mxu0 %v4177
    %5085 = vmatpush1.bf16.msra.mxu0 %v4176
    %5086 = vmatprep.subr.bf16.mxu0 %v4184
    %5087 = vmatpush1.bf16.msra.mxu0 %v4183
    %5088 = vmatprep.subr.bf16.mxu0 %v4191
    %5089 = vmatpush1.bf16.msra.mxu0 %v4190
    %5090 = vmatprep.subr.bf16.mxu0 %v4198
    %5091 = vmatpush1.bf16.msra.mxu0 %v4197
    %5092 = vmatprep.subr.bf16.mxu0 %v4205
    %5093 = vmatpush1.bf16.msra.mxu0 %v4204
    %5094 = vmatprep.subr.bf16.mxu0 %v4212
    %5095 = vmatpush1.bf16.msra.mxu0 %v4211
    %5096 = vmatprep.subr.bf16.mxu0 %v4219
    %5097 = vmatpush1.bf16.msra.mxu0 %v4218
    %5098 = vmatprep.subr.bf16.mxu0 %v4226
    %5099 = vmatpush1.bf16.msra.mxu0 %v4225
    %5100 = vmatprep.subr.bf16.mxu0 %v4233
    %5101 = vmatpush1.bf16.msra.mxu0 %v4232
    %5102 = vmatprep.subr.bf16.mxu0 %v4240
    %5103 = vmatpush1.bf16.msra.mxu0 %v4239
    %5104 = vmatprep.subr.bf16.mxu0 %v4247
    %5105 = vmatpush1.bf16.msra.mxu0 %v4246
    %5106 = vmatprep.subr.bf16.mxu0 %v4254
    %5107 = vmatpush1.bf16.msra.mxu0 %v4253
    %5108 = vmatprep.subr.bf16.mxu0 %v4261
    %5109 = vmatpush1.bf16.msra.mxu0 %v4260
    %5110 = vmatprep.subr.bf16.mxu0 %v4268
    %5111 = vmatpush1.bf16.msra.mxu0 %v4267
    %5112 = vmatprep.subr.bf16.mxu0 %v4275
    %5113 = vmatpush1.bf16.msra.mxu0 %v4274
    %5114 = vmatprep.subr.bf16.mxu0 %v4282
    %5115 = vmatpush1.bf16.msra.mxu0 %v4281
    %5116 = vmatprep.mubr.bf16.mxu0 %v3934
    %5117 = vmatmul.mubr.bf16.gmra.mrb[0].mxu0 %v3933
    %v5118 = vpop.f32.mrb[0].mxu0
    %v5119 = vadd.f32 %v5078, %v5118
    %v5120 = vpop.f32.mrb[0].mxu0
    %v5121 = vadd.f32 %v5080, %v5120
    %v5122 = vpop.f32.mrb[0].mxu0
    %v5123 = vpop.f32.mrb[0].mxu0
    %5124 = vdwg.mxu0
    %5125 = vmatprep.subr.bf16.mxu0 %v4289
    %5126 = vmatpush1.bf16.msra.mxu0 %v4288
    %5127 = vmatprep.subr.bf16.mxu0 %v4296
    %5128 = vmatpush1.bf16.msra.mxu0 %v4295
    %5129 = vmatprep.subr.bf16.mxu0 %v4303
    %5130 = vmatpush1.bf16.msra.mxu0 %v4302
    %5131 = vmatprep.subr.bf16.mxu0 %v4310
    %5132 = vmatpush1.bf16.msra.mxu0 %v4309
    %5133 = vmatprep.subr.bf16.mxu0 %v4317
    %5134 = vmatpush1.bf16.msra.mxu0 %v4316
    %5135 = vmatprep.subr.bf16.mxu0 %v4324
    %5136 = vmatpush1.bf16.msra.mxu0 %v4323
    %5137 = vmatprep.subr.bf16.mxu0 %v4331
    %5138 = vmatpush1.bf16.msra.mxu0 %v4330
    %5139 = vmatprep.subr.bf16.mxu0 %v4338
    %5140 = vmatpush1.bf16.msra.mxu0 %v4337
    %5141 = vmatprep.subr.bf16.mxu0 %v4345
    %5142 = vmatpush1.bf16.msra.mxu0 %v4344
    %5143 = vmatprep.subr.bf16.mxu0 %v4352
    %5144 = vmatpush1.bf16.msra.mxu0 %v4351
    %5145 = vmatprep.subr.bf16.mxu0 %v4359
    %5146 = vmatpush1.bf16.msra.mxu0 %v4358
    %5147 = vmatprep.subr.bf16.mxu0 %v4366
    %5148 = vmatpush1.bf16.msra.mxu0 %v4365
    %5149 = vmatprep.subr.bf16.mxu0 %v4373
    %5150 = vmatpush1.bf16.msra.mxu0 %v4372
    %5151 = vmatprep.subr.bf16.mxu0 %v4380
    %5152 = vmatpush1.bf16.msra.mxu0 %v4379
    %5153 = vmatprep.subr.bf16.mxu0 %v4387
    %5154 = vmatpush1.bf16.msra.mxu0 %v4386
    %5155 = vmatprep.subr.bf16.mxu0 %v4394
    %5156 = vmatpush1.bf16.msra.mxu0 %v4393
    %5157 = vmatprep.mubr.bf16.mxu0 %v3936
    %5158 = vmatmul.mubr.bf16.gmra.mrb[0].mxu0 %v3935
    %v5159 = vpop.f32.mrb[0].mxu0
    %v5160 = vadd.f32 %v5119, %v5159
    %v5161 = vpop.f32.mrb[0].mxu0
    %v5162 = vadd.f32 %v5121, %v5161
    %v5163 = vpop.f32.mrb[0].mxu0
    %v5164 = vpop.f32.mrb[0].mxu0
    %5165 = vdwg.mxu0
    %5166 = vmatprep.subr.bf16.mxu0 %v4401
    %5167 = vmatpush1.bf16.msra.mxu0 %v4400
    %5168 = vmatprep.subr.bf16.mxu0 %v4408
    %5169 = vmatpush1.bf16.msra.mxu0 %v4407
    %5170 = vmatprep.subr.bf16.mxu0 %v4415
    %5171 = vmatpush1.bf16.msra.mxu0 %v4414
    %5172 = vmatprep.subr.bf16.mxu0 %v4422
    %5173 = vmatpush1.bf16.msra.mxu0 %v4421
    %5174 = vmatprep.subr.bf16.mxu0 %v4429
    %5175 = vmatpush1.bf16.msra.mxu0 %v4428
    %5176 = vmatprep.subr.bf16.mxu0 %v4436
    %5177 = vmatpush1.bf16.msra.mxu0 %v4435
    %5178 = vmatprep.subr.bf16.mxu0 %v4443
    %5179 = vmatpush1.bf16.msra.mxu0 %v4442
    %5180 = vmatprep.subr.bf16.mxu0 %v4450
    %5181 = vmatpush1.bf16.msra.mxu0 %v4449
    %5182 = vmatprep.subr.bf16.mxu0 %v4457
    %5183 = vmatpush1.bf16.msra.mxu0 %v4456
    %5184 = vmatprep.subr.bf16.mxu0 %v4464
    %5185 = vmatpush1.bf16.msra.mxu0 %v4463
    %5186 = vmatprep.subr.bf16.mxu0 %v4471
    %5187 = vmatpush1.bf16.msra.mxu0 %v4470
    %5188 = vmatprep.subr.bf16.mxu0 %v4478
    %5189 = vmatpush1.bf16.msra.mxu0 %v4477
    %5190 = vmatprep.subr.bf16.mxu0 %v4485
    %5191 = vmatpush1.bf16.msra.mxu0 %v4484
    %5192 = vmatprep.subr.bf16.mxu0 %v4492
    %5193 = vmatpush1.bf16.msra.mxu0 %v4491
    %5194 = vmatprep.subr.bf16.mxu0 %v4499
    %5195 = vmatpush1.bf16.msra.mxu0 %v4498
    %5196 = vmatprep.subr.bf16.mxu0 %v4506
    %5197 = vmatpush1.bf16.msra.mxu0 %v4505
    %5198 = vmatprep.mubr.bf16.mxu0 %v3938
    %5199 = vmatmul.mubr.bf16.gmra.mrb[0].mxu0 %v3937
    %v5200 = vpop.f32.mrb[0].mxu0
    %v5201 = vadd.f32 %v5160, %v5200
    %v5202 = vpop.f32.mrb[0].mxu0
    %v5203 = vadd.f32 %v5162, %v5202
    %v5204 = vpop.f32.mrb[0].mxu0
    %v5205 = vpop.f32.mrb[0].mxu0
    %5206 = vdwg.mxu0
    %5207 = vmatprep.subr.bf16.mxu0 %v4513
    %5208 = vmatpush1.bf16.msra.mxu0 %v4512
    %5209 = vmatprep.subr.bf16.mxu0 %v4520
    %5210 = vmatpush1.bf16.msra.mxu0 %v4519
    %5211 = vmatprep.subr.bf16.mxu0 %v4527
    %5212 = vmatpush1.bf16.msra.mxu0 %v4526
    %5213 = vmatprep.subr.bf16.mxu0 %v4534
    %5214 = vmatpush1.bf16.msra.mxu0 %v4533
    %5215 = vmatprep.subr.bf16.mxu0 %v4541
    %5216 = vmatpush1.bf16.msra.mxu0 %v4540
    %5217 = vmatprep.subr.bf16.mxu0 %v4548
    %5218 = vmatpush1.bf16.msra.mxu0 %v4547
    %5219 = vmatprep.subr.bf16.mxu0 %v4555
    %5220 = vmatpush1.bf16.msra.mxu0 %v4554
    %5221 = vmatprep.subr.bf16.mxu0 %v4562
    %5222 = vmatpush1.bf16.msra.mxu0 %v4561
    %5223 = vmatprep.subr.bf16.mxu0 %v4569
    %5224 = vmatpush1.bf16.msra.mxu0 %v4568
    %5225 = vmatprep.subr.bf16.mxu0 %v4576
    %5226 = vmatpush1.bf16.msra.mxu0 %v4575
    %5227 = vmatprep.subr.bf16.mxu0 %v4583
    %5228 = vmatpush1.bf16.msra.mxu0 %v4582
    %5229 = vmatprep.subr.bf16.mxu0 %v4590
    %5230 = vmatpush1.bf16.msra.mxu0 %v4589
    %5231 = vmatprep.subr.bf16.mxu0 %v4597
    %5232 = vmatpush1.bf16.msra.mxu0 %v4596
    %5233 = vmatprep.subr.bf16.mxu0 %v4604
    %5234 = vmatpush1.bf16.msra.mxu0 %v4603
    %5235 = vmatprep.subr.bf16.mxu0 %v4611
    %5236 = vmatpush1.bf16.msra.mxu0 %v4610
    %5237 = vmatprep.subr.bf16.mxu0 %v4618
    %5238 = vmatpush1.bf16.msra.mxu0 %v4617
    %5239 = vmatprep.mubr.bf16.mxu0 %v3940
    %5240 = vmatmul.mubr.bf16.gmra.mrb[0].mxu0 %v3939
    %v5241 = vpop.f32.mrb[0].mxu0
    %v5242 = vadd.f32 %v5201, %v5241
    %v5243 = vpop.f32.mrb[0].mxu0
    %v5244 = vadd.f32 %v5203, %v5243
    %v5245 = vpop.f32.mrb[0].mxu0
    %v5246 = vpop.f32.mrb[0].mxu0
    %5247 = vdwg.mxu0
    %5248 = vmatprep.subr.bf16.mxu0 %v4625
    %5249 = vmatpush1.bf16.msra.mxu0 %v4624
    %5250 = vmatprep.subr.bf16.mxu0 %v4632
    %5251 = vmatpush1.bf16.msra.mxu0 %v4631
    %5252 = vmatprep.subr.bf16.mxu0 %v4639
    %5253 = vmatpush1.bf16.msra.mxu0 %v4638
    %5254 = vmatprep.subr.bf16.mxu0 %v4646
    %5255 = vmatpush1.bf16.msra.mxu0 %v4645
    %5256 = vmatprep.subr.bf16.mxu0 %v4653
    %5257 = vmatpush1.bf16.msra.mxu0 %v4652
    %5258 = vmatprep.subr.bf16.mxu0 %v4660
    %5259 = vmatpush1.bf16.msra.mxu0 %v4659
    %5260 = vmatprep.subr.bf16.mxu0 %v4667
    %5261 = vmatpush1.bf16.msra.mxu0 %v4666
    %5262 = vmatprep.subr.bf16.mxu0 %v4674
    %5263 = vmatpush1.bf16.msra.mxu0 %v4673
    %5264 = vmatprep.subr.bf16.mxu0 0
    %5265 = vmatpush1.bf16.msra.mxu0 0
    %5266 = vmatprep.subr.bf16.mxu0 0
    %5267 = vmatpush1.bf16.msra.mxu0 0
    %5268 = vmatprep.subr.bf16.mxu0 0
    %5269 = vmatpush1.bf16.msra.mxu0 0
    %5270 = vmatprep.subr.bf16.mxu0 0
    %5271 = vmatpush1.bf16.msra.mxu0 0
    %5272 = vmatprep.subr.bf16.mxu0 0
    %5273 = vmatpush1.bf16.msra.mxu0 0
    %5274 = vmatprep.subr.bf16.mxu0 0
    %5275 = vmatpush1.bf16.msra.mxu0 0
    %5276 = vmatprep.subr.bf16.mxu0 0
    %5277 = vmatpush1.bf16.msra.mxu0 0
    %5278 = vmatprep.subr.bf16.mxu0 0
    %5279 = vmatpush1.bf16.msra.mxu0 0
    %5280 = vmatprep.mubr.bf16.mxu0 0
    %5281 = vmatmul.mubr.bf16.gmra.mrb[0].mxu0 %v3941
    %v5282 = vpop.f32.mrb[0].mxu0
    %v5283 = vadd.f32 %v5242, %v5282
    %v5284 = vpop.f32.mrb[0].mxu0
    %v5285 = vadd.f32 %v5244, %v5284
    %v5286 = vpop.f32.mrb[0].mxu0
    %v5287 = vpop.f32.mrb[0].mxu0
    %5288 = vdwg.mxu0
    %5289 = vmatprep.subr.bf16.mxu0 %v3955
    %5290 = vmatpush1.bf16.msra.mxu0 %v3954
    %5291 = vmatprep.subr.bf16.mxu0 %v3962
    %5292 = vmatpush1.bf16.msra.mxu0 %v3961
    %5293 = vmatprep.subr.bf16.mxu0 %v3969
    %5294 = vmatpush1.bf16.msra.mxu0 %v3968
    %5295 = vmatprep.subr.bf16.mxu0 %v3976
    %5296 = vmatpush1.bf16.msra.mxu0 %v3975
    %5297 = vmatprep.subr.bf16.mxu0 %v3983
    %5298 = vmatpush1.bf16.msra.mxu0 %v3982
    %5299 = vmatprep.subr.bf16.mxu0 %v3990
    %5300 = vmatpush1.bf16.msra.mxu0 %v3989
    %5301 = vmatprep.subr.bf16.mxu0 %v3997
    %5302 = vmatpush1.bf16.msra.mxu0 %v3996
    %5303 = vmatprep.subr.bf16.mxu0 %v4004
    %5304 = vmatpush1.bf16.msra.mxu0 %v4003
    %5305 = vmatprep.subr.bf16.mxu0 %v4011
    %5306 = vmatpush1.bf16.msra.mxu0 %v4010
    %5307 = vmatprep.subr.bf16.mxu0 %v4018
    %5308 = vmatpush1.bf16.msra.mxu0 %v4017
    %5309 = vmatprep.subr.bf16.mxu0 %v4025
    %5310 = vmatpush1.bf16.msra.mxu0 %v4024
    %5311 = vmatprep.subr.bf16.mxu0 %v4032
    %5312 = vmatpush1.bf16.msra.mxu0 %v4031
    %5313 = vmatprep.subr.bf16.mxu0 %v4039
    %5314 = vmatpush1.bf16.msra.mxu0 %v4038
    %5315 = vmatprep.subr.bf16.mxu0 %v4046
    %5316 = vmatpush1.bf16.msra.mxu0 %v4045
    %5317 = vmatprep.subr.bf16.mxu0 %v4053
    %5318 = vmatpush1.bf16.msra.mxu0 %v4052
    %5319 = vmatprep.subr.bf16.mxu0 %v4060
    %5320 = vmatpush1.bf16.msra.mxu0 %v4059
    %5321 = vmatprep.mubr.bf16.mxu0 %v3930
    %5322 = vmatmul.mubr.bf16.gmra.mrb[0].mxu0 %v3929
    %v5323 = vpop.f32.mrb[0].mxu0
    %v5324 = vadd.f32 %v4699, %v5323
    %v5325 = vpop.f32.mrb[0].mxu0
    %v5326 = vadd.f32 %v4703, %v5325
    %v5327 = vpop.f32.mrb[0].mxu0
    %v5328 = vpop.f32.mrb[0].mxu0
    %5329 = vdwg.mxu0
    %5330 = vmatprep.subr.bf16.mxu0 %v4067
    %5331 = vmatpush1.bf16.msra.mxu0 %v4066
    %5332 = vmatprep.subr.bf16.mxu0 %v4074
    %5333 = vmatpush1.bf16.msra.mxu0 %v4073
    %5334 = vmatprep.subr.bf16.mxu0 %v4081
    %5335 = vmatpush1.bf16.msra.mxu0 %v4080
    %5336 = vmatprep.subr.bf16.mxu0 %v4088
    %5337 = vmatpush1.bf16.msra.mxu0 %v4087
    %5338 = vmatprep.subr.bf16.mxu0 %v4095
    %5339 = vmatpush1.bf16.msra.mxu0 %v4094
    %5340 = vmatprep.subr.bf16.mxu0 %v4102
    %5341 = vmatpush1.bf16.msra.mxu0 %v4101
    %5342 = vmatprep.subr.bf16.mxu0 %v4109
    %5343 = vmatpush1.bf16.msra.mxu0 %v4108
    %5344 = vmatprep.subr.bf16.mxu0 %v4116
    %5345 = vmatpush1.bf16.msra.mxu0 %v4115
    %5346 = vmatprep.subr.bf16.mxu0 %v4123
    %5347 = vmatpush1.bf16.msra.mxu0 %v4122
    %5348 = vmatprep.subr.bf16.mxu0 %v4130
    %5349 = vmatpush1.bf16.msra.mxu0 %v4129
    %5350 = vmatprep.subr.bf16.mxu0 %v4137
    %5351 = vmatpush1.bf16.msra.mxu0 %v4136
    %5352 = vmatprep.subr.bf16.mxu0 %v4144
    %5353 = vmatpush1.bf16.msra.mxu0 %v4143
    %5354 = vmatprep.subr.bf16.mxu0 %v4151
    %5355 = vmatpush1.bf16.msra.mxu0 %v4150
    %5356 = vmatprep.subr.bf16.mxu0 %v4158
    %5357 = vmatpush1.bf16.msra.mxu0 %v4157
    %5358 = vmatprep.subr.bf16.mxu0 %v4165
    %5359 = vmatpush1.bf16.msra.mxu0 %v4164
    %5360 = vmatprep.subr.bf16.mxu0 %v4172
    %5361 = vmatpush1.bf16.msra.mxu0 %v4171
    %5362 = vmatprep.mubr.bf16.mxu0 %v3932
    %5363 = vmatmul.mubr.bf16.gmra.mrb[0].mxu0 %v3931
    %v5364 = vpop.f32.mrb[0].mxu0
    %v5365 = vadd.f32 %v5324, %v5364
    %v5366 = vpop.f32.mrb[0].mxu0
    %v5367 = vadd.f32 %v5326, %v5366
    %v5368 = vpop.f32.mrb[0].mxu0
    %v5369 = vpop.f32.mrb[0].mxu0
    %5370 = vdwg.mxu0
    %5371 = vmatprep.subr.bf16.mxu0 %v4179
    %5372 = vmatpush1.bf16.msra.mxu0 %v4178
    %5373 = vmatprep.subr.bf16.mxu0 %v4186
    %5374 = vmatpush1.bf16.msra.mxu0 %v4185
    %5375 = vmatprep.subr.bf16.mxu0 %v4193
    %5376 = vmatpush1.bf16.msra.mxu0 %v4192
    %5377 = vmatprep.subr.bf16.mxu0 %v4200
    %5378 = vmatpush1.bf16.msra.mxu0 %v4199
    %5379 = vmatprep.subr.bf16.mxu0 %v4207
    %5380 = vmatpush1.bf16.msra.mxu0 %v4206
    %5381 = vmatprep.subr.bf16.mxu0 %v4214
    %5382 = vmatpush1.bf16.msra.mxu0 %v4213
    %5383 = vmatprep.subr.bf16.mxu0 %v4221
    %5384 = vmatpush1.bf16.msra.mxu0 %v4220
    %5385 = vmatprep.subr.bf16.mxu0 %v4228
    %5386 = vmatpush1.bf16.msra.mxu0 %v4227
    %5387 = vmatprep.subr.bf16.mxu0 %v4235
    %5388 = vmatpush1.bf16.msra.mxu0 %v4234
    %5389 = vmatprep.subr.bf16.mxu0 %v4242
    %5390 = vmatpush1.bf16.msra.mxu0 %v4241
    %5391 = vmatprep.subr.bf16.mxu0 %v4249
    %5392 = vmatpush1.bf16.msra.mxu0 %v4248
    %5393 = vmatprep.subr.bf16.mxu0 %v4256
    %5394 = vmatpush1.bf16.msra.mxu0 %v4255
    %5395 = vmatprep.subr.bf16.mxu0 %v4263
    %5396 = vmatpush1.bf16.msra.mxu0 %v4262
    %5397 = vmatprep.subr.bf16.mxu0 %v4270
    %5398 = vmatpush1.bf16.msra.mxu0 %v4269
    %5399 = vmatprep.subr.bf16.mxu0 %v4277
    %5400 = vmatpush1.bf16.msra.mxu0 %v4276
    %5401 = vmatprep.subr.bf16.mxu0 %v4284
    %5402 = vmatpush1.bf16.msra.mxu0 %v4283
    %5403 = vmatprep.mubr.bf16.mxu0 %v3934
    %5404 = vmatmul.mubr.bf16.gmra.mrb[0].mxu0 %v3933
    %v5405 = vpop.f32.mrb[0].mxu0
    %v5406 = vadd.f32 %v5365, %v5405
    %v5407 = vpop.f32.mrb[0].mxu0
    %v5408 = vadd.f32 %v5367, %v5407
    %v5409 = vpop.f32.mrb[0].mxu0
    %v5410 = vpop.f32.mrb[0].mxu0
    %5411 = vdwg.mxu0
    %5412 = vmatprep.subr.bf16.mxu0 %v4291
    %5413 = vmatpush1.bf16.msra.mxu0 %v4290
    %5414 = vmatprep.subr.bf16.mxu0 %v4298
    %5415 = vmatpush1.bf16.msra.mxu0 %v4297
    %5416 = vmatprep.subr.bf16.mxu0 %v4305
    %5417 = vmatpush1.bf16.msra.mxu0 %v4304
    %5418 = vmatprep.subr.bf16.mxu0 %v4312
    %5419 = vmatpush1.bf16.msra.mxu0 %v4311
    %5420 = vmatprep.subr.bf16.mxu0 %v4319
    %5421 = vmatpush1.bf16.msra.mxu0 %v4318
    %5422 = vmatprep.subr.bf16.mxu0 %v4326
    %5423 = vmatpush1.bf16.msra.mxu0 %v4325
    %5424 = vmatprep.subr.bf16.mxu0 %v4333
    %5425 = vmatpush1.bf16.msra.mxu0 %v4332
    %5426 = vmatprep.subr.bf16.mxu0 %v4340
    %5427 = vmatpush1.bf16.msra.mxu0 %v4339
    %5428 = vmatprep.subr.bf16.mxu0 %v4347
    %5429 = vmatpush1.bf16.msra.mxu0 %v4346
    %5430 = vmatprep.subr.bf16.mxu0 %v4354
    %5431 = vmatpush1.bf16.msra.mxu0 %v4353
    %5432 = vmatprep.subr.bf16.mxu0 %v4361
    %5433 = vmatpush1.bf16.msra.mxu0 %v4360
    %5434 = vmatprep.subr.bf16.mxu0 %v4368
    %5435 = vmatpush1.bf16.msra.mxu0 %v4367
    %5436 = vmatprep.subr.bf16.mxu0 %v4375
    %5437 = vmatpush1.bf16.msra.mxu0 %v4374
    %5438 = vmatprep.subr.bf16.mxu0 %v4382
    %5439 = vmatpush1.bf16.msra.mxu0 %v4381
    %5440 = vmatprep.subr.bf16.mxu0 %v4389
    %5441 = vmatpush1.bf16.msra.mxu0 %v4388
    %5442 = vmatprep.subr.bf16.mxu0 %v4396
    %5443 = vmatpush1.bf16.msra.mxu0 %v4395
    %5444 = vmatprep.mubr.bf16.mxu0 %v3936
    %5445 = vmatmul.mubr.bf16.gmra.mrb[0].mxu0 %v3935
    %v5446 = vpop.f32.mrb[0].mxu0
    %v5447 = vadd.f32 %v5406, %v5446
    %v5448 = vpop.f32.mrb[0].mxu0
    %v5449 = vadd.f32 %v5408, %v5448
    %v5450 = vpop.f32.mrb[0].mxu0
    %v5451 = vpop.f32.mrb[0].mxu0
    %5452 = vdwg.mxu0
    %5453 = vmatprep.subr.bf16.mxu0 %v4403
    %5454 = vmatpush1.bf16.msra.mxu0 %v4402
    %5455 = vmatprep.subr.bf16.mxu0 %v4410
    %5456 = vmatpush1.bf16.msra.mxu0 %v4409
    %5457 = vmatprep.subr.bf16.mxu0 %v4417
    %5458 = vmatpush1.bf16.msra.mxu0 %v4416
    %5459 = vmatprep.subr.bf16.mxu0 %v4424
    %5460 = vmatpush1.bf16.msra.mxu0 %v4423
    %5461 = vmatprep.subr.bf16.mxu0 %v4431
    %5462 = vmatpush1.bf16.msra.mxu0 %v4430
    %5463 = vmatprep.subr.bf16.mxu0 %v4438
    %5464 = vmatpush1.bf16.msra.mxu0 %v4437
    %5465 = vmatprep.subr.bf16.mxu0 %v4445
    %5466 = vmatpush1.bf16.msra.mxu0 %v4444
    %5467 = vmatprep.subr.bf16.mxu0 %v4452
    %5468 = vmatpush1.bf16.msra.mxu0 %v4451
    %5469 = vmatprep.subr.bf16.mxu0 %v4459
    %5470 = vmatpush1.bf16.msra.mxu0 %v4458
    %5471 = vmatprep.subr.bf16.mxu0 %v4466
    %5472 = vmatpush1.bf16.msra.mxu0 %v4465
    %5473 = vmatprep.subr.bf16.mxu0 %v4473
    %5474 = vmatpush1.bf16.msra.mxu0 %v4472
    %5475 = vmatprep.subr.bf16.mxu0 %v4480
    %5476 = vmatpush1.bf16.msra.mxu0 %v4479
    %5477 = vmatprep.subr.bf16.mxu0 %v4487
    %5478 = vmatpush1.bf16.msra.mxu0 %v4486
    %5479 = vmatprep.subr.bf16.mxu0 %v4494
    %5480 = vmatpush1.bf16.msra.mxu0 %v4493
    %5481 = vmatprep.subr.bf16.mxu0 %v4501
    %5482 = vmatpush1.bf16.msra.mxu0 %v4500
    %5483 = vmatprep.subr.bf16.mxu0 %v4508
    %5484 = vmatpush1.bf16.msra.mxu0 %v4507
    %5485 = vmatprep.mubr.bf16.mxu0 %v3938
    %5486 = vmatmul.mubr.bf16.gmra.mrb[0].mxu0 %v3937
    %v5487 = vpop.f32.mrb[0].mxu0
    %v5488 = vadd.f32 %v5447, %v5487
    %v5489 = vpop.f32.mrb[0].mxu0
    %v5490 = vadd.f32 %v5449, %v5489
    %v5491 = vpop.f32.mrb[0].mxu0
    %v5492 = vpop.f32.mrb[0].mxu0
    %5493 = vdwg.mxu0
    %5494 = vmatprep.subr.bf16.mxu0 %v4515
    %5495 = vmatpush1.bf16.msra.mxu0 %v4514
    %5496 = vmatprep.subr.bf16.mxu0 %v4522
    %5497 = vmatpush1.bf16.msra.mxu0 %v4521
    %5498 = vmatprep.subr.bf16.mxu0 %v4529
    %5499 = vmatpush1.bf16.msra.mxu0 %v4528
    %5500 = vmatprep.subr.bf16.mxu0 %v4536
    %5501 = vmatpush1.bf16.msra.mxu0 %v4535
    %5502 = vmatprep.subr.bf16.mxu0 %v4543
    %5503 = vmatpush1.bf16.msra.mxu0 %v4542
    %5504 = vmatprep.subr.bf16.mxu0 %v4550
    %5505 = vmatpush1.bf16.msra.mxu0 %v4549
    %5506 = vmatprep.subr.bf16.mxu0 %v4557
    %5507 = vmatpush1.bf16.msra.mxu0 %v4556
    %5508 = vmatprep.subr.bf16.mxu0 %v4564
    %5509 = vmatpush1.bf16.msra.mxu0 %v4563
    %5510 = vmatprep.subr.bf16.mxu0 %v4571
    %5511 = vmatpush1.bf16.msra.mxu0 %v4570
    %5512 = vmatprep.subr.bf16.mxu0 %v4578
    %5513 = vmatpush1.bf16.msra.mxu0 %v4577
    %5514 = vmatprep.subr.bf16.mxu0 %v4585
    %5515 = vmatpush1.bf16.msra.mxu0 %v4584
    %5516 = vmatprep.subr.bf16.mxu0 %v4592
    %5517 = vmatpush1.bf16.msra.mxu0 %v4591
    %5518 = vmatprep.subr.bf16.mxu0 %v4599
    %5519 = vmatpush1.bf16.msra.mxu0 %v4598
    %5520 = vmatprep.subr.bf16.mxu0 %v4606
    %5521 = vmatpush1.bf16.msra.mxu0 %v4605
    %5522 = vmatprep.subr.bf16.mxu0 %v4613
    %5523 = vmatpush1.bf16.msra.mxu0 %v4612
    %5524 = vmatprep.subr.bf16.mxu0 %v4620
    %5525 = vmatpush1.bf16.msra.mxu0 %v4619
    %5526 = vmatprep.mubr.bf16.mxu0 %v3940
    %5527 = vmatmul.mubr.bf16.gmra.mrb[0].mxu0 %v3939
    %v5528 = vpop.f32.mrb[0].mxu0
    %v5529 = vadd.f32 %v5488, %v5528
    %v5530 = vpop.f32.mrb[0].mxu0
    %v5531 = vadd.f32 %v5490, %v5530
    %v5532 = vpop.f32.mrb[0].mxu0
    %v5533 = vpop.f32.mrb[0].mxu0
    %5534 = vdwg.mxu0
    %5535 = vmatprep.subr.bf16.mxu0 %v4627
    %5536 = vmatpush1.bf16.msra.mxu0 %v4626
    %5537 = vmatprep.subr.bf16.mxu0 %v4634
    %5538 = vmatpush1.bf16.msra.mxu0 %v4633
    %5539 = vmatprep.subr.bf16.mxu0 %v4641
    %5540 = vmatpush1.bf16.msra.mxu0 %v4640
    %5541 = vmatprep.subr.bf16.mxu0 %v4648
    %5542 = vmatpush1.bf16.msra.mxu0 %v4647
    %5543 = vmatprep.subr.bf16.mxu0 %v4655
    %5544 = vmatpush1.bf16.msra.mxu0 %v4654
    %5545 = vmatprep.subr.bf16.mxu0 %v4662
    %5546 = vmatpush1.bf16.msra.mxu0 %v4661
    %5547 = vmatprep.subr.bf16.mxu0 %v4669
    %5548 = vmatpush1.bf16.msra.mxu0 %v4668
    %5549 = vmatprep.subr.bf16.mxu0 %v4676
    %5550 = vmatpush1.bf16.msra.mxu0 %v4675
    %5551 = vmatprep.subr.bf16.mxu0 0
    %5552 = vmatpush1.bf16.msra.mxu0 0
    %5553 = vmatprep.subr.bf16.mxu0 0
    %5554 = vmatpush1.bf16.msra.mxu0 0
    %5555 = vmatprep.subr.bf16.mxu0 0
    %5556 = vmatpush1.bf16.msra.mxu0 0
    %5557 = vmatprep.subr.bf16.mxu0 0
    %5558 = vmatpush1.bf16.msra.mxu0 0
    %5559 = vmatprep.subr.bf16.mxu0 0
    %5560 = vmatpush1.bf16.msra.mxu0 0
    %5561 = vmatprep.subr.bf16.mxu0 0
    %5562 = vmatpush1.bf16.msra.mxu0 0
    %5563 = vmatprep.subr.bf16.mxu0 0
    %5564 = vmatpush1.bf16.msra.mxu0 0
    %5565 = vmatprep.subr.bf16.mxu0 0
    %5566 = vmatpush1.bf16.msra.mxu0 0
    %5567 = vmatprep.mubr.bf16.mxu0 0
    %5568 = vmatmul.mubr.bf16.gmra.mrb[0].mxu0 %v3941
    %v5569 = vpop.f32.mrb[0].mxu0
    %v5570 = vadd.f32 %v5529, %v5569
    %v5571 = vpop.f32.mrb[0].mxu0
    %v5572 = vadd.f32 %v5531, %v5571
    %v5573 = vpop.f32.mrb[0].mxu0
    %v5574 = vpop.f32.mrb[0].mxu0
    %5575 = vdwg.mxu0
    %5576 = vmatprep.subr.bf16.mxu0 0
    %5577 = vmatpush1.bf16.msra.mxu0 %v3956
    %5578 = vmatprep.subr.bf16.mxu0 0
    %5579 = vmatpush1.bf16.msra.mxu0 %v3963
    %5580 = vmatprep.subr.bf16.mxu0 0
    %5581 = vmatpush1.bf16.msra.mxu0 %v3970
    %5582 = vmatprep.subr.bf16.mxu0 0
    %5583 = vmatpush1.bf16.msra.mxu0 %v3977
    %5584 = vmatprep.subr.bf16.mxu0 0
    %5585 = vmatpush1.bf16.msra.mxu0 %v3984
    %5586 = vmatprep.subr.bf16.mxu0 0
    %5587 = vmatpush1.bf16.msra.mxu0 %v3991
    %5588 = vmatprep.subr.bf16.mxu0 0
    %5589 = vmatpush1.bf16.msra.mxu0 %v3998
    %5590 = vmatprep.subr.bf16.mxu0 0
    %5591 = vmatpush1.bf16.msra.mxu0 %v4005
    %5592 = vmatprep.subr.bf16.mxu0 0
    %5593 = vmatpush1.bf16.msra.mxu0 %v4012
    %5594 = vmatprep.subr.bf16.mxu0 0
    %5595 = vmatpush1.bf16.msra.mxu0 %v4019
    %5596 = vmatprep.subr.bf16.mxu0 0
    %5597 = vmatpush1.bf16.msra.mxu0 %v4026
    %5598 = vmatprep.subr.bf16.mxu0 0
    %5599 = vmatpush1.bf16.msra.mxu0 %v4033
    %5600 = vmatprep.subr.bf16.mxu0 0
    %5601 = vmatpush1.bf16.msra.mxu0 %v4040
    %5602 = vmatprep.subr.bf16.mxu0 0
    %5603 = vmatpush1.bf16.msra.mxu0 %v4047
    %5604 = vmatprep.subr.bf16.mxu0 0
    %5605 = vmatpush1.bf16.msra.mxu0 %v4054
    %5606 = vmatprep.subr.bf16.mxu0 0
    %5607 = vmatpush1.bf16.msra.mxu0 %v4061
    %5608 = vmatprep.mubr.bf16.mxu0 %v3930
    %5609 = vmatmul.mubr.bf16.gmra.mrb[0].mxu0 %v3929
    %v5610 = vpop.f32.mrb[0].mxu0
    %v5611 = vadd.f32 %v4707, %v5610
    %v5612 = vpop.f32.mrb[0].mxu0
    %v5613 = vpop.f32.mrb[0].mxu0
    %v5614 = vpop.f32.mrb[0].mxu0
    %5615 = vdwg.mxu0
    %5616 = vmatprep.subr.bf16.mxu0 0
    %5617 = vmatpush1.bf16.msra.mxu0 %v4068
    %5618 = vmatprep.subr.bf16.mxu0 0
    %5619 = vmatpush1.bf16.msra.mxu0 %v4075
    %5620 = vmatprep.subr.bf16.mxu0 0
    %5621 = vmatpush1.bf16.msra.mxu0 %v4082
    %5622 = vmatprep.subr.bf16.mxu0 0
    %5623 = vmatpush1.bf16.msra.mxu0 %v4089
    %5624 = vmatprep.subr.bf16.mxu0 0
    %5625 = vmatpush1.bf16.msra.mxu0 %v4096
    %5626 = vmatprep.subr.bf16.mxu0 0
    %5627 = vmatpush1.bf16.msra.mxu0 %v4103
    %5628 = vmatprep.subr.bf16.mxu0 0
    %5629 = vmatpush1.bf16.msra.mxu0 %v4110
    %5630 = vmatprep.subr.bf16.mxu0 0
    %5631 = vmatpush1.bf16.msra.mxu0 %v4117
    %5632 = vmatprep.subr.bf16.mxu0 0
    %5633 = vmatpush1.bf16.msra.mxu0 %v4124
    %5634 = vmatprep.subr.bf16.mxu0 0
    %5635 = vmatpush1.bf16.msra.mxu0 %v4131
    %5636 = vmatprep.subr.bf16.mxu0 0
    %5637 = vmatpush1.bf16.msra.mxu0 %v4138
    %5638 = vmatprep.subr.bf16.mxu0 0
    %5639 = vmatpush1.bf16.msra.mxu0 %v4145
    %5640 = vmatprep.subr.bf16.mxu0 0
    %5641 = vmatpush1.bf16.msra.mxu0 %v4152
    %5642 = vmatprep.subr.bf16.mxu0 0
    %5643 = vmatpush1.bf16.msra.mxu0 %v4159
    %5644 = vmatprep.subr.bf16.mxu0 0
    %5645 = vmatpush1.bf16.msra.mxu0 %v4166
    %5646 = vmatprep.subr.bf16.mxu0 0
    %5647 = vmatpush1.bf16.msra.mxu0 %v4173
    %5648 = vmatprep.mubr.bf16.mxu0 %v3932
    %5649 = vmatmul.mubr.bf16.gmra.mrb[0].mxu0 %v3931
    %v5650 = vpop.f32.mrb[0].mxu0
    %v5651 = vadd.f32 %v5611, %v5650
    %v5652 = vpop.f32.mrb[0].mxu0
    %v5653 = vpop.f32.mrb[0].mxu0
    %v5654 = vpop.f32.mrb[0].mxu0
    %5655 = vdwg.mxu0
    %5656 = vmatprep.subr.bf16.mxu0 0
    %5657 = vmatpush1.bf16.msra.mxu0 %v4180
    %5658 = vmatprep.subr.bf16.mxu0 0
    %5659 = vmatpush1.bf16.msra.mxu0 %v4187
    %5660 = vmatprep.subr.bf16.mxu0 0
    %5661 = vmatpush1.bf16.msra.mxu0 %v4194
    %5662 = vmatprep.subr.bf16.mxu0 0
    %5663 = vmatpush1.bf16.msra.mxu0 %v4201
    %5664 = vmatprep.subr.bf16.mxu0 0
    %5665 = vmatpush1.bf16.msra.mxu0 %v4208
    %5666 = vmatprep.subr.bf16.mxu0 0
    %5667 = vmatpush1.bf16.msra.mxu0 %v4215
    %5668 = vmatprep.subr.bf16.mxu0 0
    %5669 = vmatpush1.bf16.msra.mxu0 %v4222
    %5670 = vmatprep.subr.bf16.mxu0 0
    %5671 = vmatpush1.bf16.msra.mxu0 %v4229
    %5672 = vmatprep.subr.bf16.mxu0 0
    %5673 = vmatpush1.bf16.msra.mxu0 %v4236
    %5674 = vmatprep.subr.bf16.mxu0 0
    %5675 = vmatpush1.bf16.msra.mxu0 %v4243
    %5676 = vmatprep.subr.bf16.mxu0 0
    %5677 = vmatpush1.bf16.msra.mxu0 %v4250
    %5678 = vmatprep.subr.bf16.mxu0 0
    %5679 = vmatpush1.bf16.msra.mxu0 %v4257
    %5680 = vmatprep.subr.bf16.mxu0 0
    %5681 = vmatpush1.bf16.msra.mxu0 %v4264
    %5682 = vmatprep.subr.bf16.mxu0 0
    %5683 = vmatpush1.bf16.msra.mxu0 %v4271
    %5684 = vmatprep.subr.bf16.mxu0 0
    %5685 = vmatpush1.bf16.msra.mxu0 %v4278
    %5686 = vmatprep.subr.bf16.mxu0 0
    %5687 = vmatpush1.bf16.msra.mxu0 %v4285
    %5688 = vmatprep.mubr.bf16.mxu0 %v3934
    %5689 = vmatmul.mubr.bf16.gmra.mrb[0].mxu0 %v3933
    %v5690 = vpop.f32.mrb[0].mxu0
    %v5691 = vadd.f32 %v5651, %v5690
    %v5692 = vpop.f32.mrb[0].mxu0
    %v5693 = vpop.f32.mrb[0].mxu0
    %v5694 = vpop.f32.mrb[0].mxu0
    %5695 = vdwg.mxu0
    %5696 = vmatprep.subr.bf16.mxu0 0
    %5697 = vmatpush1.bf16.msra.mxu0 %v4292
    %5698 = vmatprep.subr.bf16.mxu0 0
    %5699 = vmatpush1.bf16.msra.mxu0 %v4299
    %5700 = vmatprep.subr.bf16.mxu0 0
    %5701 = vmatpush1.bf16.msra.mxu0 %v4306
    %5702 = vmatprep.subr.bf16.mxu0 0
    %5703 = vmatpush1.bf16.msra.mxu0 %v4313
    %5704 = vmatprep.subr.bf16.mxu0 0
    %5705 = vmatpush1.bf16.msra.mxu0 %v4320
    %5706 = vmatprep.subr.bf16.mxu0 0
    %5707 = vmatpush1.bf16.msra.mxu0 %v4327
    %5708 = vmatprep.subr.bf16.mxu0 0
    %5709 = vmatpush1.bf16.msra.mxu0 %v4334
    %5710 = vmatprep.subr.bf16.mxu0 0
    %5711 = vmatpush1.bf16.msra.mxu0 %v4341
    %5712 = vmatprep.subr.bf16.mxu0 0
    %5713 = vmatpush1.bf16.msra.mxu0 %v4348
    %5714 = vmatprep.subr.bf16.mxu0 0
    %5715 = vmatpush1.bf16.msra.mxu0 %v4355
    %5716 = vmatprep.subr.bf16.mxu0 0
    %5717 = vmatpush1.bf16.msra.mxu0 %v4362
    %5718 = vmatprep.subr.bf16.mxu0 0
    %5719 = vmatpush1.bf16.msra.mxu0 %v4369
    %5720 = vmatprep.subr.bf16.mxu0 0
    %5721 = vmatpush1.bf16.msra.mxu0 %v4376
    %5722 = vmatprep.subr.bf16.mxu0 0
    %5723 = vmatpush1.bf16.msra.mxu0 %v4383
    %5724 = vmatprep.subr.bf16.mxu0 0
    %5725 = vmatpush1.bf16.msra.mxu0 %v4390
    %5726 = vmatprep.subr.bf16.mxu0 0
    %5727 = vmatpush1.bf16.msra.mxu0 %v4397
    %5728 = vmatprep.mubr.bf16.mxu0 %v3936
    %5729 = vmatmul.mubr.bf16.gmra.mrb[0].mxu0 %v3935
    %v5730 = vpop.f32.mrb[0].mxu0
    %v5731 = vadd.f32 %v5691, %v5730
    %v5732 = vpop.f32.mrb[0].mxu0
    %v5733 = vpop.f32.mrb[0].mxu0
    %v5734 = vpop.f32.mrb[0].mxu0
    %5735 = vdwg.mxu0
    %5736 = vmatprep.subr.bf16.mxu0 0
    %5737 = vmatpush1.bf16.msra.mxu0 %v4404
    %5738 = vmatprep.subr.bf16.mxu0 0
    %5739 = vmatpush1.bf16.msra.mxu0 %v4411
    %5740 = vmatprep.subr.bf16.mxu0 0
    %5741 = vmatpush1.bf16.msra.mxu0 %v4418
    %5742 = vmatprep.subr.bf16.mxu0 0
    %5743 = vmatpush1.bf16.msra.mxu0 %v4425
    %5744 = vmatprep.subr.bf16.mxu0 0
    %5745 = vmatpush1.bf16.msra.mxu0 %v4432
    %5746 = vmatprep.subr.bf16.mxu0 0
    %5747 = vmatpush1.bf16.msra.mxu0 %v4439
    %5748 = vmatprep.subr.bf16.mxu0 0
    %5749 = vmatpush1.bf16.msra.mxu0 %v4446
    %5750 = vmatprep.subr.bf16.mxu0 0
    %5751 = vmatpush1.bf16.msra.mxu0 %v4453
    %5752 = vmatprep.subr.bf16.mxu0 0
    %5753 = vmatpush1.bf16.msra.mxu0 %v4460
    %5754 = vmatprep.subr.bf16.mxu0 0
    %5755 = vmatpush1.bf16.msra.mxu0 %v4467
    %5756 = vmatprep.subr.bf16.mxu0 0
    %5757 = vmatpush1.bf16.msra.mxu0 %v4474
    %5758 = vmatprep.subr.bf16.mxu0 0
    %5759 = vmatpush1.bf16.msra.mxu0 %v4481
    %5760 = vmatprep.subr.bf16.mxu0 0
    %5761 = vmatpush1.bf16.msra.mxu0 %v4488
    %5762 = vmatprep.subr.bf16.mxu0 0
    %5763 = vmatpush1.bf16.msra.mxu0 %v4495
    %5764 = vmatprep.subr.bf16.mxu0 0
    %5765 = vmatpush1.bf16.msra.mxu0 %v4502
    %5766 = vmatprep.subr.bf16.mxu0 0
    %5767 = vmatpush1.bf16.msra.mxu0 %v4509
    %5768 = vmatprep.mubr.bf16.mxu0 %v3938
    %5769 = vmatmul.mubr.bf16.gmra.mrb[0].mxu0 %v3937
    %v5770 = vpop.f32.mrb[0].mxu0
    %v5771 = vadd.f32 %v5731, %v5770
    %v5772 = vpop.f32.mrb[0].mxu0
    %v5773 = vpop.f32.mrb[0].mxu0
    %v5774 = vpop.f32.mrb[0].mxu0
    %5775 = vdwg.mxu0
    %5776 = vmatprep.subr.bf16.mxu0 0
    %5777 = vmatpush1.bf16.msra.mxu0 %v4516
    %5778 = vmatprep.subr.bf16.mxu0 0
    %5779 = vmatpush1.bf16.msra.mxu0 %v4523
    %5780 = vmatprep.subr.bf16.mxu0 0
    %5781 = vmatpush1.bf16.msra.mxu0 %v4530
    %5782 = vmatprep.subr.bf16.mxu0 0
    %5783 = vmatpush1.bf16.msra.mxu0 %v4537
    %5784 = vmatprep.subr.bf16.mxu0 0
    %5785 = vmatpush1.bf16.msra.mxu0 %v4544
    %5786 = vmatprep.subr.bf16.mxu0 0
    %5787 = vmatpush1.bf16.msra.mxu0 %v4551
    %5788 = vmatprep.subr.bf16.mxu0 0
    %5789 = vmatpush1.bf16.msra.mxu0 %v4558
    %5790 = vmatprep.subr.bf16.mxu0 0
    %5791 = vmatpush1.bf16.msra.mxu0 %v4565
    %5792 = vmatprep.subr.bf16.mxu0 0
    %5793 = vmatpush1.bf16.msra.mxu0 %v4572
    %5794 = vmatprep.subr.bf16.mxu0 0
    %5795 = vmatpush1.bf16.msra.mxu0 %v4579
    %5796 = vmatprep.subr.bf16.mxu0 0
    %5797 = vmatpush1.bf16.msra.mxu0 %v4586
    %5798 = vmatprep.subr.bf16.mxu0 0
    %5799 = vmatpush1.bf16.msra.mxu0 %v4593
    %5800 = vmatprep.subr.bf16.mxu0 0
    %5801 = vmatpush1.bf16.msra.mxu0 %v4600
    %5802 = vmatprep.subr.bf16.mxu0 0
    %5803 = vmatpush1.bf16.msra.mxu0 %v4607
    %5804 = vmatprep.subr.bf16.mxu0 0
    %5805 = vmatpush1.bf16.msra.mxu0 %v4614
    %5806 = vmatprep.subr.bf16.mxu0 0
    %5807 = vmatpush1.bf16.msra.mxu0 %v4621
    %5808 = vmatprep.mubr.bf16.mxu0 %v3940
    %5809 = vmatmul.mubr.bf16.gmra.mrb[0].mxu0 %v3939
    %v5810 = vpop.f32.mrb[0].mxu0
    %v5811 = vadd.f32 %v5771, %v5810
    %v5812 = vpop.f32.mrb[0].mxu0
    %v5813 = vpop.f32.mrb[0].mxu0
    %v5814 = vpop.f32.mrb[0].mxu0
    %5815 = vdwg.mxu0
    %5816 = vmatprep.subr.bf16.mxu0 0
    %5817 = vmatpush1.bf16.msra.mxu0 %v4628
    %5818 = vmatprep.subr.bf16.mxu0 0
    %5819 = vmatpush1.bf16.msra.mxu0 %v4635
    %5820 = vmatprep.subr.bf16.mxu0 0
    %5821 = vmatpush1.bf16.msra.mxu0 %v4642
    %5822 = vmatprep.subr.bf16.mxu0 0
    %5823 = vmatpush1.bf16.msra.mxu0 %v4649
    %5824 = vmatprep.subr.bf16.mxu0 0
    %5825 = vmatpush1.bf16.msra.mxu0 %v4656
    %5826 = vmatprep.subr.bf16.mxu0 0
    %5827 = vmatpush1.bf16.msra.mxu0 %v4663
    %5828 = vmatprep.subr.bf16.mxu0 0
    %5829 = vmatpush1.bf16.msra.mxu0 %v4670
    %5830 = vmatprep.subr.bf16.mxu0 0
    %5831 = vmatpush1.bf16.msra.mxu0 %v4677
    %5832 = vmatprep.subr.bf16.mxu0 0
    %5833 = vmatpush1.bf16.msra.mxu0 0
    %5834 = vmatprep.subr.bf16.mxu0 0
    %5835 = vmatpush1.bf16.msra.mxu0 0
    %5836 = vmatprep.subr.bf16.mxu0 0
    %5837 = vmatpush1.bf16.msra.mxu0 0
    %5838 = vmatprep.subr.bf16.mxu0 0
    %5839 = vmatpush1.bf16.msra.mxu0 0
    %5840 = vmatprep.subr.bf16.mxu0 0
    %5841 = vmatpush1.bf16.msra.mxu0 0
    %5842 = vmatprep.subr.bf16.mxu0 0
    %5843 = vmatpush1.bf16.msra.mxu0 0
    %5844 = vmatprep.subr.bf16.mxu0 0
    %5845 = vmatpush1.bf16.msra.mxu0 0
    %5846 = vmatprep.subr.bf16.mxu0 0
    %5847 = vmatpush1.bf16.msra.mxu0 0
    %5848 = vmatprep.mubr.bf16.mxu0 0
    %5849 = vmatmul.mubr.bf16.gmra.mrb[0].mxu0 %v3941
    %v5850 = vpop.f32.mrb[0].mxu0
    %v5851 = vadd.f32 %v5811, %v5850
    %v5852 = vpop.f32.mrb[0].mxu0
    %v5853 = vpop.f32.mrb[0].mxu0
    %v5854 = vpop.f32.mrb[0].mxu0
    %5855 = vdwg.mxu0
    %v5856 = vsub.f32 0.0, %v4996
    %v5857 = vsub.f32 0.0, %v4998
    %v5858 = vsub.f32 0.0, %v5283
    %v5859 = vsub.f32 0.0, %v5285
    %v5860 = vsub.f32 0.0, %v5570
    %v5861 = vsub.f32 0.0, %v5572
    %v5862 = vsub.f32 0.0, %v5851
    %v5863 = vmul.f32 %v5856, 1.442695
    %v5864 = vpow.pop %v5863
    %v5865 = vmul.f32 %v5857, 1.442695
    %v5866 = vpow.pop %v5865
    %v5867 = vmul.f32 %v5858, 1.442695
    %v5868 = vpow.pop %v5867
    %v5869 = vmul.f32 %v5859, 1.442695
    %v5870 = vpow.pop %v5869
    %v5871 = vmul.f32 %v5860, 1.442695
    %v5872 = vpow.pop %v5871
    %v5873 = vmul.f32 %v5861, 1.442695
    %v5874 = vpow.pop %v5873
    %v5875 = vmul.f32 %v5862, 1.442695
    %v5876 = vpow.pop %v5875
    %v5877 = vadd.f32 %v5864, 1.0
    %v5878 = vadd.f32 %v5866, 1.0
    %v5879 = vadd.f32 %v5868, 1.0
    %v5880 = vadd.f32 %v5870, 1.0
    %v5881 = vadd.f32 %v5872, 1.0
    %v5882 = vadd.f32 %v5874, 1.0
    %v5883 = vadd.f32 %v5876, 1.0
    %v5884 = vrcp.pop %v5877
    %v5885 = vrcp.pop %v5878
    %v5886 = vrcp.pop %v5879
    %v5887 = vrcp.pop %v5880
    %v5888 = vrcp.pop %v5881
    %v5889 = vrcp.pop %v5882
    %v5890 = vrcp.pop %v5883
    %v5898 = vcombine.low %v5884, %v5885
    %v5899 = vcombine.low %v5886, %v5887
    %v5901 = vunpack.c.l.s4 1983009808
    %v5902 = vunpack.c.0.s8 %v5901
    %v5903 = vlaneseq
    %v5904 = vshrl.u32 %v5903, 7
    %v5905 = vsub.s32 %v5902, %v5904
    %v5906 = vrot.slane %v5898, %v5905
    %v5908 = vunpack.c.l.s4 1983009808
    %v5909 = vunpack.c.0.s8 %v5908
    %v5910 = vlaneseq
    %v5911 = vshrl.u32 %v5910, 7
    %v5912 = vsub.s32 %v5909, %v5911
    %v5913 = vrot.slane %v5899, %v5912
    %v5914 = vcombine.low %v5906, %v5913
    %v5915 = vcombine.low %v5888, %v5889
    %v5917 = vunpack.c.l.s4 1983009808
    %v5918 = vunpack.c.0.s8 %v5917
    %v5919 = vlaneseq
    %v5920 = vshrl.u32 %v5919, 7
    %v5921 = vsub.s32 %v5918, %v5920
    %v5922 = vrot.slane %v5915, %v5921
    %v5924 = vunpack.c.l.s4 1983009808
    %v5925 = vunpack.c.0.s8 %v5924
    %v5926 = vlaneseq
    %v5927 = vshrl.u32 %v5926, 7
    %v5928 = vsub.s32 %v5925, %v5927
    %v5929 = vrot.slane %v5890, %v5928
    %v5930 = vcombine.low %v5922, %v5929
    %5933 = vst [vmem:[%s11] sm:$0xff] %v5914
    %5934 = vst [vmem:[%s11 + $0x8] sm:$0x3f] %v5930
    // Predicated region
    $region82: #{decoder_forward.1} parent=1 // pred_check
      _
    $region83: #{decoder_forward.1} parent=1 // pred_check_branch
      %5936 = sbr.rel (0) target = $region85
    $region84: #{decoder_forward.1} parent=1 // pred_region
      _
    $region85: #{decoder_forward.1} parent=1 // pred_fallthru
      _
    // Predicated region
    $region86: #{decoder_forward.1} parent=1 // pred_check
      _
    $region87: #{decoder_forward.1} parent=1 // pred_check_branch
      %5938 = sbr.rel (0) target = $region89
    $region88: #{decoder_forward.1} parent=1 // pred_region
      _
    $region89: #{decoder_forward.1} parent=1 // pred_fallthru
      _
    %5939 = vsyncpa [#allocation6], 1
    %5940 = vsyncpa [#allocation8], 1
    %5941 = vsyncpa [#allocation11], 1
    %5942 = vsyncpa [#allocation14], 1
    %5943 = vsyncpa [#allocation17], 1
  %5944 = vsyncmov [#allocation4]
  %s5945 = vpop.sfrf %5944
  %p5946 = scmp.eq.s32.totalorder %s5945, 0
  %p5947 = pneg %p5946
  %5949 = shalt.err (%p5947)
  %s5950 = scalar_lea.sflag [#allocation4], 1
  %5951 = vsyncmov %s5950
  %s5952 = vpop.sfrf %5951
  %p5953 = scmp.eq.s32.totalorder %s5952, 0
  %p5954 = pneg %p5953
  %5956 = shalt.err (%p5954)

</llo_original>
